<compile_context>
chip_gen: v6e
topology: v6e:2x2x1
jax: 0.10.0
libtpu: 0.0.40
codegen_flags: <defaults>
</compile_context>

<pallas_src>
import functools

import jax
import jax.numpy as jnp
from jax.experimental import pallas as pl
from jax.experimental.pallas import tpu as pltpu  # noqa: F401  (TPU backend assumed)


# ----------------------------------------------------------------------------
# Small deterministic stand-in for `cfgs`
# ----------------------------------------------------------------------------
CFG = dict(
    token_size=100,
    word_emb_size=32,
    hidden_size=32,        # rnn_cp hidden size (also classifier input dim)
    hidden_size_qo=32,     # rnn_qo hidden size
    flat_mlp_size=32,
    flat_glimpses=1,
    flat_out_size=32,
    dia_feat_size=32,
    input_size=16,
    max_que_token=8,
    max_opt_token=6,
    max_cp_token=10,
    max_dq_ans=4,
    divide_and_rule="False",
    use_ins_dia="False",
)


# ----------------------------------------------------------------------------
# The megakernel: whole Net forward in one pallas_call
# ----------------------------------------------------------------------------
def _net_megakernel(
    # activations (time-major sequences, mask, flattened diagram)
    xqo_f_ref, xqo_b_ref, xcp_f_ref, xcp_b_ref, omask_ref, dia_ref,
    # fused bidirectional GRU weights: rows [x_f|x_b|h_f|h_b] -> cols [gi_f|gi_b|gh_f|gh_b]
    wqo_ref, bqo_ref, wcp_ref, bcp_ref,
    # FlattenAtt (option path)
    fw1_ref, fb1_ref, fw2_ref, fb2_ref, fwm_ref, fbm_ref,
    # SimCLR stand-in projection
    scw_ref, scb_ref,
    # HMFN backbone stand-in (q/d/c projections)
    bqw_ref, bqb_ref, bdw_ref, bdb_ref, bcw_ref, bcb_ref,
    # flatten (weight-normed linear + ReLU; dropout = identity at inference)
    flw_ref, flb_ref,
    # output: cosine similarity per (batch, answer) row, shape (B*A, 1)
    out_ref,
    *, B, A, Tq, To, Hq, H,
):
    f32 = jnp.float32
    N = B * A

    def linear(x, w_ref, b_ref, relu=False):
        # bf16 MXU operands, f32 accumulation; bias/activation in f32.
        y = jnp.dot(x.astype(w_ref.dtype), w_ref[...],
                    preferred_element_type=f32) + b_ref[...]
        return jnp.maximum(y, 0.0) if relu else y

    def gru_cell(gi, gh, h, hd):
        # PyTorch gate order (r, z, n); b_hn already inside gh (matches torch GRU).
        r = jax.nn.sigmoid(gi[:, 0 * hd:1 * hd] + gh[:, 0 * hd:1 * hd])
        z = jax.nn.sigmoid(gi[:, 1 * hd:2 * hd] + gh[:, 1 * hd:2 * hd])
        n = jnp.tanh(gi[:, 2 * hd:3 * hd] + r * gh[:, 2 * hd:3 * hd])
        return (1.0 - z) * n + z * h

    def bigru(xf_ref, xb_ref, w_ref, b_ref, hd):
        """Fused fwd+bwd GRU; fully unrolled; one (rows,2E+2H)@(2E+2H,12H) dot / step."""
        T = xf_ref.shape[0]
        rows = xf_ref.shape[1]
        wdt = w_ref.dtype
        bias = b_ref[...]
        h_f = jnp.zeros((rows, hd), f32)
        h_b = jnp.zeros((rows, hd), f32)
        ys_f, ys_b = [], []
        for t in range(T):                       # static, fully unrolled (T <= 10)
            inp = jnp.concatenate(
                [xf_ref[t].astype(wdt), xb_ref[t].astype(wdt),
                 h_f.astype(wdt), h_b.astype(wdt)], axis=-1)
            g = jnp.dot(inp, w_ref[...], preferred_element_type=f32) + bias
            h_f = gru_cell(g[:, 0 * hd:3 * hd], g[:, 6 * hd:9 * hd], h_f, hd)
            h_b = gru_cell(g[:, 3 * hd:6 * hd], g[:, 9 * hd:12 * hd], h_b, hd)
            ys_f.append(h_f)
            ys_b.append(h_b)
        # ys_b[s] is the backward hidden for original time (seq_len - 1 - s).
        return ys_f, ys_b

    # ---- rnn_qo: joint batch [que rows 0:B (len Tq) | option rows B: (len To)] ----
    yq_f, yq_b = bigru(xqo_f_ref, xqo_b_ref, wqo_ref, bqo_ref, Hq)
    # ---- rnn_cp over the closest paragraph ----
    yc_f, yc_b = bigru(xcp_f_ref, xcp_b_ref, wcp_ref, bcp_ref, H)

    # ---- option path: FlattenAtt fused (MLP logits -> masked softmax -> pool -> merge) ----
    opt_y = [jnp.concatenate([yq_f[t][B:], yq_b[To - 1 - t][B:]], axis=-1)
             for t in range(To)]                                   # each (N, 2*Hq)
    opt_rows = jnp.concatenate(opt_y, axis=0)                      # (To*N, 2*Hq), N=8-aligned
    h1 = linear(opt_rows, fw1_ref, fb1_ref, relu=True)             # (To*N, M)
    lg_rows = (jnp.sum(h1 * fw2_ref[...], axis=-1, keepdims=True)
               + fb2_ref[...])                                     # (To*N, 1), glimpses=1
    logits = jnp.concatenate(
        [lg_rows[t * N:(t + 1) * N] for t in range(To)], axis=-1)  # (N, To)
    logits = jnp.where(omask_ref[...] > 0.5, -1e9, logits)         # masked_fill
    logits = logits - jnp.max(logits, axis=-1, keepdims=True)
    e = jnp.exp(logits)
    att = e / jnp.sum(e, axis=-1, keepdims=True)                   # softmax over sequence
    pooled = jnp.zeros((N, 2 * Hq), f32)
    for t in range(To):
        pooled = pooled + att[:, t:t + 1] * opt_y[t]
    opt_feat = linear(pooled, fwm_ref, fbm_ref)                    # (N, flat_out)

    # ---- question path: backbone q-projection, ReLU'd per step, summed over time ----
    # fusion_feat.sum(1) = (sum_t relu(q_t)) * gate  because the gate is time-independent.
    q_sum = jnp.zeros((B, H), f32)
    for t in range(Tq):
        qy = jnp.concatenate([yq_f[t][:B], yq_b[Tq - 1 - t][:B]], axis=-1)  # (B, 2*Hq)
        q_sum = q_sum + linear(qy, bqw_ref, bqb_ref, relu=True)

    # ---- paragraph path: mean over time, then backbone c-projection ----
    Tcp = xcp_f_ref.shape[0]
    cp_sum = jnp.zeros((B, 2 * H), f32)
    for t in range(Tcp):
        cp_sum = cp_sum + jnp.concatenate([yc_f[t], yc_b[Tcp - 1 - t]], axis=-1)
    c = linear(cp_sum * (1.0 / Tcp), bcw_ref, bcb_ref)             # (B, H)

    # ---- diagram path: SimCLR stand-in projection, then backbone d-projection ----
    dproj = linear(dia_ref[...], scw_ref, scb_ref, relu=True)      # (B, dia_feat)
    d = linear(dproj, bdw_ref, bdb_ref)                            # (B, H)

    # ---- gated fusion + flatten (weight-normed linear + ReLU; dropout = identity) ----
    gate = jax.nn.sigmoid(d) + jax.nn.sigmoid(c)                   # (B, H)
    flat = linear(q_sum * gate, flw_ref, flb_ref, relu=True)       # (B, flat_out)

    # ---- CosineSimilarity(dim=2): flat broadcast across answers vs opt_feat ----
    flat_rep = jnp.concatenate(
        [flat[b:b + 1, :] for b in range(B) for _ in range(A)], axis=0)  # (N, flat_out)
    dots = jnp.sum(opt_feat * flat_rep, axis=-1, keepdims=True)
    n_o = jnp.sqrt(jnp.sum(opt_feat * opt_feat, axis=-1, keepdims=True))
    n_f = jnp.sqrt(jnp.sum(flat_rep * flat_rep, axis=-1, keepdims=True))
    eps = 1e-8  # per-norm clamp, matching torch.nn.CosineSimilarity
    out_ref[...] = dots / (jnp.maximum(n_o, eps) * jnp.maximum(n_f, eps))


# ----------------------------------------------------------------------------
# Wrapper: embedding gather + layout prep (cheap XLA glue) + one pallas_call
# ----------------------------------------------------------------------------
def make_mask(ix):
    # torch make_mask: (sum(|feature|, dim=-1) == 0) with feature = ix.unsqueeze(2)
    return jnp.abs(ix) == 0


def net_forward(kparams, que_ix, opt_ix, dia, ins_dia, cp_ix, cfg=CFG):
    del ins_dia  # use_ins_dia == 'False' -> unused (matches reference control flow)
    B = que_ix.shape[0]
    A, Tq, To, Tcp = (cfg["max_dq_ans"], cfg["max_que_token"],
                      cfg["max_opt_token"], cfg["max_cp_token"])
    Hq, H = cfg["hidden_size_qo"], cfg["hidden_size"]
    N = B * A
    emb = kparams["embedding"]

    # Embedding lookups (gather stays in XLA), mask, diagram flatten.
    que_emb = jnp.take(emb, que_ix, axis=0)                        # (B, Tq, E)
    opt_ix2 = opt_ix.reshape(-1, To)                               # (N, To)
    opt_emb = jnp.take(emb, opt_ix2, axis=0)                       # (N, To, E)
    opt_maskf = make_mask(opt_ix2).astype(jnp.float32)             # 1.0 where padded
    cp_emb = jnp.take(emb, cp_ix, axis=0)                          # (B, Tcp, E)
    dia_flat = dia.reshape(B, -1)                                  # (B, 3*S*S)

    # Joint rnn_qo batch: que (len Tq) and options (len To) padded to a common T.
    # Backward-direction inputs are reversed per-sequence over their OWN length then
    # end-padded, so one joint recurrence loop is exact for both sequence lengths
    # (pad steps only ever run after every consumed output has been produced).
    Tmax = max(Tq, To)

    def pad_T(x):
        return jnp.pad(x, ((0, 0), (0, Tmax - x.shape[1]), (0, 0)))

    xqo_f = jnp.transpose(
        jnp.concatenate([pad_T(que_emb), pad_T(opt_emb)], axis=0), (1, 0, 2))
    xqo_b = jnp.transpose(
        jnp.concatenate([pad_T(que_emb[:, ::-1]), pad_T(opt_emb[:, ::-1])], axis=0),
        (1, 0, 2))                                                 # (Tmax, B+N, E)
    xcp_f = jnp.transpose(cp_emb, (1, 0, 2))                       # (Tcp, B, E)
    xcp_b = jnp.transpose(cp_emb[:, ::-1], (1, 0, 2))

    kernel = functools.partial(_net_megakernel, B=B, A=A, Tq=Tq, To=To, Hq=Hq, H=H)

    out = pl.pallas_call(
        kernel,
        out_shape=jax.ShapeDtypeStruct((N, 1), jnp.float32),
        # No grid / no BlockSpecs: every operand is a whole-array VMEM block
        # (total working set < 1 MiB), single kernel invocation.
    )(
        xqo_f, xqo_b, xcp_f, xcp_b, opt_maskf, dia_flat,
        kparams["wqo"], kparams["bqo"], kparams["wcp"], kparams["bcp"],
        kparams["fw1"], kparams["fb1"], kparams["fw2"], kparams["fb2"],
        kparams["fwm"], kparams["fbm"],
        kparams["scw"], kparams["scb"],
        kparams["bqw"], kparams["bqb"], kparams["bdw"], kparams["bdb"],
        kparams["bcw"], kparams["bcb"],
        kparams["flw"], kparams["flb"],
    )
    return out.reshape(B, A)


# ----------------------------------------------------------------------------
# Parameter preparation: fuse fwd/bwd GRU weights, cast matmul weights to bf16
# ----------------------------------------------------------------------------
def _fuse_bigru_weights(p, dtype):
    """Block-diagonal stack so one dot/step computes [gi_f | gi_b | gh_f | gh_b]."""
    E = p["wih_f"].shape[0]
    Hd = p["whh_f"].shape[0]
    W = jnp.zeros((2 * E + 2 * Hd, 12 * Hd), jnp.float32)
    W = W.at[0:E, 0:3 * Hd].set(p["wih_f"])
    W = W.at[E:2 * E, 3 * Hd:6 * Hd].set(p["wih_b"])
    W = W.at[2 * E:2 * E + Hd, 6 * Hd:9 * Hd].set(p["whh_f"])
    W = W.at[2 * E + Hd:, 9 * Hd:].set(p["whh_b"])
    bias = jnp.concatenate([p["bih_f"], p["bih_b"], p["bhh_f"], p["bhh_b"]])
    return W.astype(dtype), bias.reshape(1, -1).astype(jnp.float32)


def prepare_params(params, dtype=jnp.bfloat16):
    fo, sc, bb = params["flatten_opt"], params["simclr"], params["backbone"]
    wqo, bqo = _fuse_bigru_weights(params["rnn_qo"], dtype)
    wcp, bcp = _fuse_bigru_weights(params["rnn_cp"], dtype)

    def w(x):
        return x.astype(dtype)

    def b(x):
        return x.reshape(1, -1).astype(jnp.float32)

    return dict(
        embedding=params["embedding"],
        wqo=wqo, bqo=bqo, wcp=wcp, bcp=bcp,
        fw1=w(fo["mlp_w1"]), fb1=b(fo["mlp_b1"]),
        fw2=fo["mlp_w2"].reshape(1, -1).astype(jnp.float32),   # (1, M), used as mul+reduce
        fb2=fo["mlp_b2"].reshape(1, 1).astype(jnp.float32),
        fwm=w(fo["merge_w"]), fbm=b(fo["merge_b"]),
        scw=w(sc["proj_w"]), scb=b(sc["proj_b"]),
        bqw=w(bb["q_w"]), bqb=b(bb["q_b"]),
        bdw=w(bb["d_w"]), bdb=b(bb["d_b"]),
        bcw=w(bb["c_w"]), bcb=b(bb["c_b"]),
        flw=w(params["flatten_w"]), flb=b(params["flatten_b"]),
    )


# ----------------------------------------------------------------------------
# Deterministic parameter initialization (synthetic; no checkpoint)
# ----------------------------------------------------------------------------
def init_params(key, cfg=CFG):
    ks = iter(jax.random.split(key, 64))

    def w(shape, scale=None):
        s = scale if scale is not None else 1.0 / float(jnp.sqrt(shape[0]))
        return (s * jax.random.normal(next(ks), shape)).astype(jnp.float32)

    def b(n):
        return jnp.zeros((n,), jnp.float32)

    E, H, Hq = cfg["word_emb_size"], cfg["hidden_size"], cfg["hidden_size_qo"]
    F, M, S = cfg["flat_out_size"], cfg["flat_mlp_size"], cfg["input_size"]
    Dd, G = cfg["dia_feat_size"], cfg["flat_glimpses"]

    def gru_params(in_dim, hid):
        return dict(
            wih_f=w((in_dim, 3 * hid)), whh_f=w((hid, 3 * hid)),
            bih_f=b(3 * hid), bhh_f=b(3 * hid),
            wih_b=w((in_dim, 3 * hid)), whh_b=w((hid, 3 * hid)),
            bih_b=b(3 * hid), bhh_b=b(3 * hid),
        )

    def weight_normed(shape):
        # weight_norm(dim=None): w = g * v / ||v||_F; at init g == ||v||_F so w == v.
        v = w(shape)
        g = jnp.sqrt(jnp.sum(v * v))
        return g * v / jnp.sqrt(jnp.sum(v * v))

    return dict(
        embedding=w((cfg["token_size"], E), scale=1.0),
        rnn_qo=gru_params(E, Hq),
        rnn_cp=gru_params(E, H),
        flatten_opt=dict(
            mlp_w1=w((2 * Hq, M)), mlp_b1=b(M),
            mlp_w2=w((M, G)), mlp_b2=b(G),
            merge_w=w((2 * Hq * G, F)), merge_b=b(F),
        ),
        # TODO(synk): real SimCLR backbone (ResNet contrastive encoder) not in the
        # provided source; stand-in = flatten NCHW image -> projection head.
        simclr=dict(proj_w=w((3 * S * S, Dd)), proj_b=b(Dd)),
        # TODO(synk): HMFN_V1 internals not in the provided source; stand-in is a
        # gated multimodal fusion producing (B, T_que, hidden_size) like the original.
        backbone=dict(
            q_w=w((2 * Hq, H)), q_b=b(H),
            d_w=w((Dd, H)), d_b=b(H),
            c_w=w((2 * H, H)), c_b=b(H),
        ),
        flatten_w=weight_normed((H, F)), flatten_b=b(F),
    )


# ----------------------------------------------------------------------------
if __name__ == "__main__":
    cfg = CFG
    key = jax.random.PRNGKey(0)
    kp, kq, ko, kc, kd, ki = jax.random.split(key, 6)
    params = init_params(kp)
    kparams = prepare_params(params)

    B = 2
    que_ix = jax.random.randint(kq, (B, cfg["max_que_token"]), 0, cfg["token_size"],
                                dtype=jnp.int32)
    opt_ix = jax.random.randint(ko, (B, cfg["max_dq_ans"], cfg["max_opt_token"]), 0,
                                cfg["token_size"], dtype=jnp.int32)
    cp_ix = jax.random.randint(kc, (B, cfg["max_cp_token"]), 0, cfg["token_size"],
                               dtype=jnp.int32)
    dia = jax.random.normal(kd, (B, 3, cfg["input_size"], cfg["input_size"]),
                            dtype=jnp.float32)
    ins_dia = jax.random.normal(ki, (B, 2, 3, cfg["input_size"], cfg["input_size"]),
                                dtype=jnp.float32)

    fwd = jax.jit(net_forward)
    out = fwd(kparams, que_ix, opt_ix, dia, ins_dia, cp_ix)
    out = jax.block_until_ready(out)

    assert out.shape == (B, cfg["max_dq_ans"]) and out.dtype == jnp.float32
    assert bool(jnp.all(jnp.isfinite(out)))
    assert bool(jnp.all(jnp.abs(out) <= 1.001))  # cosine-similarity range sanity check
    print("KERNEL_OK")
</pallas_src>

<mosaic_0001>
module attributes {stable_mosaic.version = 11 : i64} {
  func.func @_net_megakernel(%arg0: memref<8x10x32xf32, #tpu.memory_space<vmem>>, %arg1: memref<8x10x32xf32, #tpu.memory_space<vmem>>, %arg2: memref<10x2x32xf32, #tpu.memory_space<vmem>>, %arg3: memref<10x2x32xf32, #tpu.memory_space<vmem>>, %arg4: memref<8x6xf32, #tpu.memory_space<vmem>>, %arg5: memref<2x768xf32, #tpu.memory_space<vmem>>, %arg6: memref<128x384xbf16, #tpu.memory_space<vmem>>, %arg7: memref<1x384xf32, #tpu.memory_space<vmem>>, %arg8: memref<128x384xbf16, #tpu.memory_space<vmem>>, %arg9: memref<1x384xf32, #tpu.memory_space<vmem>>, %arg10: memref<64x32xbf16, #tpu.memory_space<vmem>>, %arg11: memref<1x32xf32, #tpu.memory_space<vmem>>, %arg12: memref<1x32xf32, #tpu.memory_space<vmem>>, %arg13: memref<1x1xf32, #tpu.memory_space<vmem>>, %arg14: memref<64x32xbf16, #tpu.memory_space<vmem>>, %arg15: memref<1x32xf32, #tpu.memory_space<vmem>>, %arg16: memref<768x32xbf16, #tpu.memory_space<vmem>>, %arg17: memref<1x32xf32, #tpu.memory_space<vmem>>, %arg18: memref<64x32xbf16, #tpu.memory_space<vmem>>, %arg19: memref<1x32xf32, #tpu.memory_space<vmem>>, %arg20: memref<32x32xbf16, #tpu.memory_space<vmem>>, %arg21: memref<1x32xf32, #tpu.memory_space<vmem>>, %arg22: memref<64x32xbf16, #tpu.memory_space<vmem>>, %arg23: memref<1x32xf32, #tpu.memory_space<vmem>>, %arg24: memref<32x32xbf16, #tpu.memory_space<vmem>>, %arg25: memref<1x32xf32, #tpu.memory_space<vmem>>, %arg26: memref<8x1xf32, #tpu.memory_space<vmem>>) attributes {dimension_semantics = [], scalar_prefetch = 0 : i64, scratch_operands = 0 : i64, tpu.core_type = #tpu.core_type<tc>} {
    %c0 = arith.constant 0 : index
    %c0_0 = arith.constant 0 : index
    %0 = vector.load %arg7[%c0, %c0_0] : memref<1x384xf32, #tpu.memory_space<vmem>>, vector<1x384xf32>
    %cst = arith.constant 0.000000e+00 : f32
    %1 = vector.broadcast %cst : f32 to vector<10x32xf32>
    %cst_1 = arith.constant 0.000000e+00 : f32
    %2 = vector.broadcast %cst_1 : f32 to vector<10x32xf32>
    %c0_2 = arith.constant 0 : index
    %c0_3 = arith.constant 0 : index
    %c0_4 = arith.constant 0 : index
    %3 = vector.load %arg0[%c0_2, %c0_3, %c0_4] : memref<8x10x32xf32, #tpu.memory_space<vmem>>, vector<1x10x32xf32>
    %4 = vector.shape_cast %3 : vector<1x10x32xf32> to vector<10x32xf32>
    %5 = arith.truncf %4 : vector<10x32xf32> to vector<10x32xbf16>
    %c0_5 = arith.constant 0 : index
    %c0_6 = arith.constant 0 : index
    %c0_7 = arith.constant 0 : index
    %6 = vector.load %arg1[%c0_5, %c0_6, %c0_7] : memref<8x10x32xf32, #tpu.memory_space<vmem>>, vector<1x10x32xf32>
    %7 = vector.shape_cast %6 : vector<1x10x32xf32> to vector<10x32xf32>
    %8 = arith.truncf %7 : vector<10x32xf32> to vector<10x32xbf16>
    %9 = arith.truncf %1 : vector<10x32xf32> to vector<10x32xbf16>
    %10 = arith.truncf %2 : vector<10x32xf32> to vector<10x32xbf16>
    %11 = tpu.concatenate %5, %8, %9, %10 in 1 : vector<10x32xbf16>, vector<10x32xbf16>, vector<10x32xbf16>, vector<10x32xbf16> -> vector<10x128xbf16>
    %c0_8 = arith.constant 0 : index
    %c0_9 = arith.constant 0 : index
    %12 = vector.load %arg6[%c0_8, %c0_9] : memref<128x384xbf16, #tpu.memory_space<vmem>>, vector<128x384xbf16>
    %cst_10 = arith.constant dense<0.000000e+00> : vector<10x384xf32>
    %13 = tpu.matmul %11, %12, %cst_10 {dimension_numbers = #tpu.dot_dimension_numbers<[1], [0], [0], [1], [0, 0, 1, 1], [], []>} : vector<10x128xbf16>, vector<128x384xbf16>, vector<10x384xf32> -> vector<10x384xf32>
    %14 = vector.broadcast %0 : vector<1x384xf32> to vector<10x384xf32>
    %15 = arith.addf %13, %14 : vector<10x384xf32>
    %16 = vector.extract_strided_slice %15 {offsets = [0, 0], sizes = [10, 96], strides = [1, 1]} : vector<10x384xf32> to vector<10x96xf32>
    %17 = vector.extract_strided_slice %15 {offsets = [0, 192], sizes = [10, 96], strides = [1, 1]} : vector<10x384xf32> to vector<10x96xf32>
    %18 = vector.extract_strided_slice %16 {offsets = [0, 0], sizes = [10, 32], strides = [1, 1]} : vector<10x96xf32> to vector<10x32xf32>
    %19 = vector.extract_strided_slice %17 {offsets = [0, 0], sizes = [10, 32], strides = [1, 1]} : vector<10x96xf32> to vector<10x32xf32>
    %20 = arith.addf %18, %19 : vector<10x32xf32>
    %21 = arith.negf %20 : vector<10x32xf32>
    %22 = math.exp %21 : vector<10x32xf32>
    %cst_11 = arith.constant 1.000000e+00 : f32
    %23 = vector.broadcast %cst_11 : f32 to vector<10x32xf32>
    %24 = arith.addf %23, %22 : vector<10x32xf32>
    %25 = arith.divf %23, %24 : vector<10x32xf32>
    %26 = vector.extract_strided_slice %16 {offsets = [0, 32], sizes = [10, 32], strides = [1, 1]} : vector<10x96xf32> to vector<10x32xf32>
    %27 = vector.extract_strided_slice %17 {offsets = [0, 32], sizes = [10, 32], strides = [1, 1]} : vector<10x96xf32> to vector<10x32xf32>
    %28 = arith.addf %26, %27 : vector<10x32xf32>
    %29 = arith.negf %28 : vector<10x32xf32>
    %30 = math.exp %29 : vector<10x32xf32>
    %cst_12 = arith.constant 1.000000e+00 : f32
    %31 = vector.broadcast %cst_12 : f32 to vector<10x32xf32>
    %32 = arith.addf %31, %30 : vector<10x32xf32>
    %33 = arith.divf %31, %32 : vector<10x32xf32>
    %34 = vector.extract_strided_slice %16 {offsets = [0, 64], sizes = [10, 32], strides = [1, 1]} : vector<10x96xf32> to vector<10x32xf32>
    %35 = vector.extract_strided_slice %17 {offsets = [0, 64], sizes = [10, 32], strides = [1, 1]} : vector<10x96xf32> to vector<10x32xf32>
    %36 = arith.mulf %25, %35 : vector<10x32xf32>
    %37 = arith.addf %34, %36 : vector<10x32xf32>
    %38 = math.tanh %37 : vector<10x32xf32>
    %cst_13 = arith.constant 1.000000e+00 : f32
    %39 = vector.broadcast %cst_13 : f32 to vector<10x32xf32>
    %40 = arith.subf %39, %33 : vector<10x32xf32>
    %41 = arith.mulf %40, %38 : vector<10x32xf32>
    %42 = arith.mulf %33, %1 : vector<10x32xf32>
    %43 = arith.addf %41, %42 : vector<10x32xf32>
    %44 = vector.extract_strided_slice %15 {offsets = [0, 96], sizes = [10, 96], strides = [1, 1]} : vector<10x384xf32> to vector<10x96xf32>
    %45 = vector.extract_strided_slice %15 {offsets = [0, 288], sizes = [10, 96], strides = [1, 1]} : vector<10x384xf32> to vector<10x96xf32>
    %46 = vector.extract_strided_slice %44 {offsets = [0, 0], sizes = [10, 32], strides = [1, 1]} : vector<10x96xf32> to vector<10x32xf32>
    %47 = vector.extract_strided_slice %45 {offsets = [0, 0], sizes = [10, 32], strides = [1, 1]} : vector<10x96xf32> to vector<10x32xf32>
    %48 = arith.addf %46, %47 : vector<10x32xf32>
    %49 = arith.negf %48 : vector<10x32xf32>
    %50 = math.exp %49 : vector<10x32xf32>
    %cst_14 = arith.constant 1.000000e+00 : f32
    %51 = vector.broadcast %cst_14 : f32 to vector<10x32xf32>
    %52 = arith.addf %51, %50 : vector<10x32xf32>
    %53 = arith.divf %51, %52 : vector<10x32xf32>
    %54 = vector.extract_strided_slice %44 {offsets = [0, 32], sizes = [10, 32], strides = [1, 1]} : vector<10x96xf32> to vector<10x32xf32>
    %55 = vector.extract_strided_slice %45 {offsets = [0, 32], sizes = [10, 32], strides = [1, 1]} : vector<10x96xf32> to vector<10x32xf32>
    %56 = arith.addf %54, %55 : vector<10x32xf32>
    %57 = arith.negf %56 : vector<10x32xf32>
    %58 = math.exp %57 : vector<10x32xf32>
    %cst_15 = arith.constant 1.000000e+00 : f32
    %59 = vector.broadcast %cst_15 : f32 to vector<10x32xf32>
    %60 = arith.addf %59, %58 : vector<10x32xf32>
    %61 = arith.divf %59, %60 : vector<10x32xf32>
    %62 = vector.extract_strided_slice %44 {offsets = [0, 64], sizes = [10, 32], strides = [1, 1]} : vector<10x96xf32> to vector<10x32xf32>
    %63 = vector.extract_strided_slice %45 {offsets = [0, 64], sizes = [10, 32], strides = [1, 1]} : vector<10x96xf32> to vector<10x32xf32>
    %64 = arith.mulf %53, %63 : vector<10x32xf32>
    %65 = arith.addf %62, %64 : vector<10x32xf32>
    %66 = math.tanh %65 : vector<10x32xf32>
    %cst_16 = arith.constant 1.000000e+00 : f32
    %67 = vector.broadcast %cst_16 : f32 to vector<10x32xf32>
    %68 = arith.subf %67, %61 : vector<10x32xf32>
    %69 = arith.mulf %68, %66 : vector<10x32xf32>
    %70 = arith.mulf %61, %2 : vector<10x32xf32>
    %71 = arith.addf %69, %70 : vector<10x32xf32>
    %c1 = arith.constant 1 : index
    %c0_17 = arith.constant 0 : index
    %c0_18 = arith.constant 0 : index
    %72 = vector.load %arg0[%c1, %c0_17, %c0_18] : memref<8x10x32xf32, #tpu.memory_space<vmem>>, vector<1x10x32xf32>
    %73 = vector.shape_cast %72 : vector<1x10x32xf32> to vector<10x32xf32>
    %74 = arith.truncf %73 : vector<10x32xf32> to vector<10x32xbf16>
    %c1_19 = arith.constant 1 : index
    %c0_20 = arith.constant 0 : index
    %c0_21 = arith.constant 0 : index
    %75 = vector.load %arg1[%c1_19, %c0_20, %c0_21] : memref<8x10x32xf32, #tpu.memory_space<vmem>>, vector<1x10x32xf32>
    %76 = vector.shape_cast %75 : vector<1x10x32xf32> to vector<10x32xf32>
    %77 = arith.truncf %76 : vector<10x32xf32> to vector<10x32xbf16>
    %78 = arith.truncf %43 : vector<10x32xf32> to vector<10x32xbf16>
    %79 = arith.truncf %71 : vector<10x32xf32> to vector<10x32xbf16>
    %80 = tpu.concatenate %74, %77, %78, %79 in 1 : vector<10x32xbf16>, vector<10x32xbf16>, vector<10x32xbf16>, vector<10x32xbf16> -> vector<10x128xbf16>
    %c0_22 = arith.constant 0 : index
    %c0_23 = arith.constant 0 : index
    %81 = vector.load %arg6[%c0_22, %c0_23] : memref<128x384xbf16, #tpu.memory_space<vmem>>, vector<128x384xbf16>
    %cst_24 = arith.constant dense<0.000000e+00> : vector<10x384xf32>
    %82 = tpu.matmul %80, %81, %cst_24 {dimension_numbers = #tpu.dot_dimension_numbers<[1], [0], [0], [1], [0, 0, 1, 1], [], []>} : vector<10x128xbf16>, vector<128x384xbf16>, vector<10x384xf32> -> vector<10x384xf32>
    %83 = vector.broadcast %0 : vector<1x384xf32> to vector<10x384xf32>
    %84 = arith.addf %82, %83 : vector<10x384xf32>
    %85 = vector.extract_strided_slice %84 {offsets = [0, 0], sizes = [10, 96], strides = [1, 1]} : vector<10x384xf32> to vector<10x96xf32>
    %86 = vector.extract_strided_slice %84 {offsets = [0, 192], sizes = [10, 96], strides = [1, 1]} : vector<10x384xf32> to vector<10x96xf32>
    %87 = vector.extract_strided_slice %85 {offsets = [0, 0], sizes = [10, 32], strides = [1, 1]} : vector<10x96xf32> to vector<10x32xf32>
    %88 = vector.extract_strided_slice %86 {offsets = [0, 0], sizes = [10, 32], strides = [1, 1]} : vector<10x96xf32> to vector<10x32xf32>
    %89 = arith.addf %87, %88 : vector<10x32xf32>
    %90 = arith.negf %89 : vector<10x32xf32>
    %91 = math.exp %90 : vector<10x32xf32>
    %cst_25 = arith.constant 1.000000e+00 : f32
    %92 = vector.broadcast %cst_25 : f32 to vector<10x32xf32>
    %93 = arith.addf %92, %91 : vector<10x32xf32>
    %94 = arith.divf %92, %93 : vector<10x32xf32>
    %95 = vector.extract_strided_slice %85 {offsets = [0, 32], sizes = [10, 32], strides = [1, 1]} : vector<10x96xf32> to vector<10x32xf32>
    %96 = vector.extract_strided_slice %86 {offsets = [0, 32], sizes = [10, 32], strides = [1, 1]} : vector<10x96xf32> to vector<10x32xf32>
    %97 = arith.addf %95, %96 : vector<10x32xf32>
    %98 = arith.negf %97 : vector<10x32xf32>
    %99 = math.exp %98 : vector<10x32xf32>
    %cst_26 = arith.constant 1.000000e+00 : f32
    %100 = vector.broadcast %cst_26 : f32 to vector<10x32xf32>
    %101 = arith.addf %100, %99 : vector<10x32xf32>
    %102 = arith.divf %100, %101 : vector<10x32xf32>
    %103 = vector.extract_strided_slice %85 {offsets = [0, 64], sizes = [10, 32], strides = [1, 1]} : vector<10x96xf32> to vector<10x32xf32>
    %104 = vector.extract_strided_slice %86 {offsets = [0, 64], sizes = [10, 32], strides = [1, 1]} : vector<10x96xf32> to vector<10x32xf32>
    %105 = arith.mulf %94, %104 : vector<10x32xf32>
    %106 = arith.addf %103, %105 : vector<10x32xf32>
    %107 = math.tanh %106 : vector<10x32xf32>
    %cst_27 = arith.constant 1.000000e+00 : f32
    %108 = vector.broadcast %cst_27 : f32 to vector<10x32xf32>
    %109 = arith.subf %108, %102 : vector<10x32xf32>
    %110 = arith.mulf %109, %107 : vector<10x32xf32>
    %111 = arith.mulf %102, %43 : vector<10x32xf32>
    %112 = arith.addf %110, %111 : vector<10x32xf32>
    %113 = vector.extract_strided_slice %84 {offsets = [0, 96], sizes = [10, 96], strides = [1, 1]} : vector<10x384xf32> to vector<10x96xf32>
    %114 = vector.extract_strided_slice %84 {offsets = [0, 288], sizes = [10, 96], strides = [1, 1]} : vector<10x384xf32> to vector<10x96xf32>
    %115 = vector.extract_strided_slice %113 {offsets = [0, 0], sizes = [10, 32], strides = [1, 1]} : vector<10x96xf32> to vector<10x32xf32>
    %116 = vector.extract_strided_slice %114 {offsets = [0, 0], sizes = [10, 32], strides = [1, 1]} : vector<10x96xf32> to vector<10x32xf32>
    %117 = arith.addf %115, %116 : vector<10x32xf32>
    %118 = arith.negf %117 : vector<10x32xf32>
    %119 = math.exp %118 : vector<10x32xf32>
    %cst_28 = arith.constant 1.000000e+00 : f32
    %120 = vector.broadcast %cst_28 : f32 to vector<10x32xf32>
    %121 = arith.addf %120, %119 : vector<10x32xf32>
    %122 = arith.divf %120, %121 : vector<10x32xf32>
    %123 = vector.extract_strided_slice %113 {offsets = [0, 32], sizes = [10, 32], strides = [1, 1]} : vector<10x96xf32> to vector<10x32xf32>
    %124 = vector.extract_strided_slice %114 {offsets = [0, 32], sizes = [10, 32], strides = [1, 1]} : vector<10x96xf32> to vector<10x32xf32>
    %125 = arith.addf %123, %124 : vector<10x32xf32>
    %126 = arith.negf %125 : vector<10x32xf32>
    %127 = math.exp %126 : vector<10x32xf32>
    %cst_29 = arith.constant 1.000000e+00 : f32
    %128 = vector.broadcast %cst_29 : f32 to vector<10x32xf32>
    %129 = arith.addf %128, %127 : vector<10x32xf32>
    %130 = arith.divf %128, %129 : vector<10x32xf32>
    %131 = vector.extract_strided_slice %113 {offsets = [0, 64], sizes = [10, 32], strides = [1, 1]} : vector<10x96xf32> to vector<10x32xf32>
    %132 = vector.extract_strided_slice %114 {offsets = [0, 64], sizes = [10, 32], strides = [1, 1]} : vector<10x96xf32> to vector<10x32xf32>
    %133 = arith.mulf %122, %132 : vector<10x32xf32>
    %134 = arith.addf %131, %133 : vector<10x32xf32>
    %135 = math.tanh %134 : vector<10x32xf32>
    %cst_30 = arith.constant 1.000000e+00 : f32
    %136 = vector.broadcast %cst_30 : f32 to vector<10x32xf32>
    %137 = arith.subf %136, %130 : vector<10x32xf32>
    %138 = arith.mulf %137, %135 : vector<10x32xf32>
    %139 = arith.mulf %130, %71 : vector<10x32xf32>
    %140 = arith.addf %138, %139 : vector<10x32xf32>
    %c2 = arith.constant 2 : index
    %c0_31 = arith.constant 0 : index
    %c0_32 = arith.constant 0 : index
    %141 = vector.load %arg0[%c2, %c0_31, %c0_32] : memref<8x10x32xf32, #tpu.memory_space<vmem>>, vector<1x10x32xf32>
    %142 = vector.shape_cast %141 : vector<1x10x32xf32> to vector<10x32xf32>
    %143 = arith.truncf %142 : vector<10x32xf32> to vector<10x32xbf16>
    %c2_33 = arith.constant 2 : index
    %c0_34 = arith.constant 0 : index
    %c0_35 = arith.constant 0 : index
    %144 = vector.load %arg1[%c2_33, %c0_34, %c0_35] : memref<8x10x32xf32, #tpu.memory_space<vmem>>, vector<1x10x32xf32>
    %145 = vector.shape_cast %144 : vector<1x10x32xf32> to vector<10x32xf32>
    %146 = arith.truncf %145 : vector<10x32xf32> to vector<10x32xbf16>
    %147 = arith.truncf %112 : vector<10x32xf32> to vector<10x32xbf16>
    %148 = arith.truncf %140 : vector<10x32xf32> to vector<10x32xbf16>
    %149 = tpu.concatenate %143, %146, %147, %148 in 1 : vector<10x32xbf16>, vector<10x32xbf16>, vector<10x32xbf16>, vector<10x32xbf16> -> vector<10x128xbf16>
    %c0_36 = arith.constant 0 : index
    %c0_37 = arith.constant 0 : index
    %150 = vector.load %arg6[%c0_36, %c0_37] : memref<128x384xbf16, #tpu.memory_space<vmem>>, vector<128x384xbf16>
    %cst_38 = arith.constant dense<0.000000e+00> : vector<10x384xf32>
    %151 = tpu.matmul %149, %150, %cst_38 {dimension_numbers = #tpu.dot_dimension_numbers<[1], [0], [0], [1], [0, 0, 1, 1], [], []>} : vector<10x128xbf16>, vector<128x384xbf16>, vector<10x384xf32> -> vector<10x384xf32>
    %152 = vector.broadcast %0 : vector<1x384xf32> to vector<10x384xf32>
    %153 = arith.addf %151, %152 : vector<10x384xf32>
    %154 = vector.extract_strided_slice %153 {offsets = [0, 0], sizes = [10, 96], strides = [1, 1]} : vector<10x384xf32> to vector<10x96xf32>
    %155 = vector.extract_strided_slice %153 {offsets = [0, 192], sizes = [10, 96], strides = [1, 1]} : vector<10x384xf32> to vector<10x96xf32>
    %156 = vector.extract_strided_slice %154 {offsets = [0, 0], sizes = [10, 32], strides = [1, 1]} : vector<10x96xf32> to vector<10x32xf32>
    %157 = vector.extract_strided_slice %155 {offsets = [0, 0], sizes = [10, 32], strides = [1, 1]} : vector<10x96xf32> to vector<10x32xf32>
    %158 = arith.addf %156, %157 : vector<10x32xf32>
    %159 = arith.negf %158 : vector<10x32xf32>
    %160 = math.exp %159 : vector<10x32xf32>
    %cst_39 = arith.constant 1.000000e+00 : f32
    %161 = vector.broadcast %cst_39 : f32 to vector<10x32xf32>
    %162 = arith.addf %161, %160 : vector<10x32xf32>
    %163 = arith.divf %161, %162 : vector<10x32xf32>
    %164 = vector.extract_strided_slice %154 {offsets = [0, 32], sizes = [10, 32], strides = [1, 1]} : vector<10x96xf32> to vector<10x32xf32>
    %165 = vector.extract_strided_slice %155 {offsets = [0, 32], sizes = [10, 32], strides = [1, 1]} : vector<10x96xf32> to vector<10x32xf32>
    %166 = arith.addf %164, %165 : vector<10x32xf32>
    %167 = arith.negf %166 : vector<10x32xf32>
    %168 = math.exp %167 : vector<10x32xf32>
    %cst_40 = arith.constant 1.000000e+00 : f32
    %169 = vector.broadcast %cst_40 : f32 to vector<10x32xf32>
    %170 = arith.addf %169, %168 : vector<10x32xf32>
    %171 = arith.divf %169, %170 : vector<10x32xf32>
    %172 = vector.extract_strided_slice %154 {offsets = [0, 64], sizes = [10, 32], strides = [1, 1]} : vector<10x96xf32> to vector<10x32xf32>
    %173 = vector.extract_strided_slice %155 {offsets = [0, 64], sizes = [10, 32], strides = [1, 1]} : vector<10x96xf32> to vector<10x32xf32>
    %174 = arith.mulf %163, %173 : vector<10x32xf32>
    %175 = arith.addf %172, %174 : vector<10x32xf32>
    %176 = math.tanh %175 : vector<10x32xf32>
    %cst_41 = arith.constant 1.000000e+00 : f32
    %177 = vector.broadcast %cst_41 : f32 to vector<10x32xf32>
    %178 = arith.subf %177, %171 : vector<10x32xf32>
    %179 = arith.mulf %178, %176 : vector<10x32xf32>
    %180 = arith.mulf %171, %112 : vector<10x32xf32>
    %181 = arith.addf %179, %180 : vector<10x32xf32>
    %182 = vector.extract_strided_slice %153 {offsets = [0, 96], sizes = [10, 96], strides = [1, 1]} : vector<10x384xf32> to vector<10x96xf32>
    %183 = vector.extract_strided_slice %153 {offsets = [0, 288], sizes = [10, 96], strides = [1, 1]} : vector<10x384xf32> to vector<10x96xf32>
    %184 = vector.extract_strided_slice %182 {offsets = [0, 0], sizes = [10, 32], strides = [1, 1]} : vector<10x96xf32> to vector<10x32xf32>
    %185 = vector.extract_strided_slice %183 {offsets = [0, 0], sizes = [10, 32], strides = [1, 1]} : vector<10x96xf32> to vector<10x32xf32>
    %186 = arith.addf %184, %185 : vector<10x32xf32>
    %187 = arith.negf %186 : vector<10x32xf32>
    %188 = math.exp %187 : vector<10x32xf32>
    %cst_42 = arith.constant 1.000000e+00 : f32
    %189 = vector.broadcast %cst_42 : f32 to vector<10x32xf32>
    %190 = arith.addf %189, %188 : vector<10x32xf32>
    %191 = arith.divf %189, %190 : vector<10x32xf32>
    %192 = vector.extract_strided_slice %182 {offsets = [0, 32], sizes = [10, 32], strides = [1, 1]} : vector<10x96xf32> to vector<10x32xf32>
    %193 = vector.extract_strided_slice %183 {offsets = [0, 32], sizes = [10, 32], strides = [1, 1]} : vector<10x96xf32> to vector<10x32xf32>
    %194 = arith.addf %192, %193 : vector<10x32xf32>
    %195 = arith.negf %194 : vector<10x32xf32>
    %196 = math.exp %195 : vector<10x32xf32>
    %cst_43 = arith.constant 1.000000e+00 : f32
    %197 = vector.broadcast %cst_43 : f32 to vector<10x32xf32>
    %198 = arith.addf %197, %196 : vector<10x32xf32>
    %199 = arith.divf %197, %198 : vector<10x32xf32>
    %200 = vector.extract_strided_slice %182 {offsets = [0, 64], sizes = [10, 32], strides = [1, 1]} : vector<10x96xf32> to vector<10x32xf32>
    %201 = vector.extract_strided_slice %183 {offsets = [0, 64], sizes = [10, 32], strides = [1, 1]} : vector<10x96xf32> to vector<10x32xf32>
    %202 = arith.mulf %191, %201 : vector<10x32xf32>
    %203 = arith.addf %200, %202 : vector<10x32xf32>
    %204 = math.tanh %203 : vector<10x32xf32>
    %cst_44 = arith.constant 1.000000e+00 : f32
    %205 = vector.broadcast %cst_44 : f32 to vector<10x32xf32>
    %206 = arith.subf %205, %199 : vector<10x32xf32>
    %207 = arith.mulf %206, %204 : vector<10x32xf32>
    %208 = arith.mulf %199, %140 : vector<10x32xf32>
    %209 = arith.addf %207, %208 : vector<10x32xf32>
    %c3 = arith.constant 3 : index
    %c0_45 = arith.constant 0 : index
    %c0_46 = arith.constant 0 : index
    %210 = vector.load %arg0[%c3, %c0_45, %c0_46] : memref<8x10x32xf32, #tpu.memory_space<vmem>>, vector<1x10x32xf32>
    %211 = vector.shape_cast %210 : vector<1x10x32xf32> to vector<10x32xf32>
    %212 = arith.truncf %211 : vector<10x32xf32> to vector<10x32xbf16>
    %c3_47 = arith.constant 3 : index
    %c0_48 = arith.constant 0 : index
    %c0_49 = arith.constant 0 : index
    %213 = vector.load %arg1[%c3_47, %c0_48, %c0_49] : memref<8x10x32xf32, #tpu.memory_space<vmem>>, vector<1x10x32xf32>
    %214 = vector.shape_cast %213 : vector<1x10x32xf32> to vector<10x32xf32>
    %215 = arith.truncf %214 : vector<10x32xf32> to vector<10x32xbf16>
    %216 = arith.truncf %181 : vector<10x32xf32> to vector<10x32xbf16>
    %217 = arith.truncf %209 : vector<10x32xf32> to vector<10x32xbf16>
    %218 = tpu.concatenate %212, %215, %216, %217 in 1 : vector<10x32xbf16>, vector<10x32xbf16>, vector<10x32xbf16>, vector<10x32xbf16> -> vector<10x128xbf16>
    %c0_50 = arith.constant 0 : index
    %c0_51 = arith.constant 0 : index
    %219 = vector.load %arg6[%c0_50, %c0_51] : memref<128x384xbf16, #tpu.memory_space<vmem>>, vector<128x384xbf16>
    %cst_52 = arith.constant dense<0.000000e+00> : vector<10x384xf32>
    %220 = tpu.matmul %218, %219, %cst_52 {dimension_numbers = #tpu.dot_dimension_numbers<[1], [0], [0], [1], [0, 0, 1, 1], [], []>} : vector<10x128xbf16>, vector<128x384xbf16>, vector<10x384xf32> -> vector<10x384xf32>
    %221 = vector.broadcast %0 : vector<1x384xf32> to vector<10x384xf32>
    %222 = arith.addf %220, %221 : vector<10x384xf32>
    %223 = vector.extract_strided_slice %222 {offsets = [0, 0], sizes = [10, 96], strides = [1, 1]} : vector<10x384xf32> to vector<10x96xf32>
    %224 = vector.extract_strided_slice %222 {offsets = [0, 192], sizes = [10, 96], strides = [1, 1]} : vector<10x384xf32> to vector<10x96xf32>
    %225 = vector.extract_strided_slice %223 {offsets = [0, 0], sizes = [10, 32], strides = [1, 1]} : vector<10x96xf32> to vector<10x32xf32>
    %226 = vector.extract_strided_slice %224 {offsets = [0, 0], sizes = [10, 32], strides = [1, 1]} : vector<10x96xf32> to vector<10x32xf32>
    %227 = arith.addf %225, %226 : vector<10x32xf32>
    %228 = arith.negf %227 : vector<10x32xf32>
    %229 = math.exp %228 : vector<10x32xf32>
    %cst_53 = arith.constant 1.000000e+00 : f32
    %230 = vector.broadcast %cst_53 : f32 to vector<10x32xf32>
    %231 = arith.addf %230, %229 : vector<10x32xf32>
    %232 = arith.divf %230, %231 : vector<10x32xf32>
    %233 = vector.extract_strided_slice %223 {offsets = [0, 32], sizes = [10, 32], strides = [1, 1]} : vector<10x96xf32> to vector<10x32xf32>
    %234 = vector.extract_strided_slice %224 {offsets = [0, 32], sizes = [10, 32], strides = [1, 1]} : vector<10x96xf32> to vector<10x32xf32>
    %235 = arith.addf %233, %234 : vector<10x32xf32>
    %236 = arith.negf %235 : vector<10x32xf32>
    %237 = math.exp %236 : vector<10x32xf32>
    %cst_54 = arith.constant 1.000000e+00 : f32
    %238 = vector.broadcast %cst_54 : f32 to vector<10x32xf32>
    %239 = arith.addf %238, %237 : vector<10x32xf32>
    %240 = arith.divf %238, %239 : vector<10x32xf32>
    %241 = vector.extract_strided_slice %223 {offsets = [0, 64], sizes = [10, 32], strides = [1, 1]} : vector<10x96xf32> to vector<10x32xf32>
    %242 = vector.extract_strided_slice %224 {offsets = [0, 64], sizes = [10, 32], strides = [1, 1]} : vector<10x96xf32> to vector<10x32xf32>
    %243 = arith.mulf %232, %242 : vector<10x32xf32>
    %244 = arith.addf %241, %243 : vector<10x32xf32>
    %245 = math.tanh %244 : vector<10x32xf32>
    %cst_55 = arith.constant 1.000000e+00 : f32
    %246 = vector.broadcast %cst_55 : f32 to vector<10x32xf32>
    %247 = arith.subf %246, %240 : vector<10x32xf32>
    %248 = arith.mulf %247, %245 : vector<10x32xf32>
    %249 = arith.mulf %240, %181 : vector<10x32xf32>
    %250 = arith.addf %248, %249 : vector<10x32xf32>
    %251 = vector.extract_strided_slice %222 {offsets = [0, 96], sizes = [10, 96], strides = [1, 1]} : vector<10x384xf32> to vector<10x96xf32>
    %252 = vector.extract_strided_slice %222 {offsets = [0, 288], sizes = [10, 96], strides = [1, 1]} : vector<10x384xf32> to vector<10x96xf32>
    %253 = vector.extract_strided_slice %251 {offsets = [0, 0], sizes = [10, 32], strides = [1, 1]} : vector<10x96xf32> to vector<10x32xf32>
    %254 = vector.extract_strided_slice %252 {offsets = [0, 0], sizes = [10, 32], strides = [1, 1]} : vector<10x96xf32> to vector<10x32xf32>
    %255 = arith.addf %253, %254 : vector<10x32xf32>
    %256 = arith.negf %255 : vector<10x32xf32>
    %257 = math.exp %256 : vector<10x32xf32>
    %cst_56 = arith.constant 1.000000e+00 : f32
    %258 = vector.broadcast %cst_56 : f32 to vector<10x32xf32>
    %259 = arith.addf %258, %257 : vector<10x32xf32>
    %260 = arith.divf %258, %259 : vector<10x32xf32>
    %261 = vector.extract_strided_slice %251 {offsets = [0, 32], sizes = [10, 32], strides = [1, 1]} : vector<10x96xf32> to vector<10x32xf32>
    %262 = vector.extract_strided_slice %252 {offsets = [0, 32], sizes = [10, 32], strides = [1, 1]} : vector<10x96xf32> to vector<10x32xf32>
    %263 = arith.addf %261, %262 : vector<10x32xf32>
    %264 = arith.negf %263 : vector<10x32xf32>
    %265 = math.exp %264 : vector<10x32xf32>
    %cst_57 = arith.constant 1.000000e+00 : f32
    %266 = vector.broadcast %cst_57 : f32 to vector<10x32xf32>
    %267 = arith.addf %266, %265 : vector<10x32xf32>
    %268 = arith.divf %266, %267 : vector<10x32xf32>
    %269 = vector.extract_strided_slice %251 {offsets = [0, 64], sizes = [10, 32], strides = [1, 1]} : vector<10x96xf32> to vector<10x32xf32>
    %270 = vector.extract_strided_slice %252 {offsets = [0, 64], sizes = [10, 32], strides = [1, 1]} : vector<10x96xf32> to vector<10x32xf32>
    %271 = arith.mulf %260, %270 : vector<10x32xf32>
    %272 = arith.addf %269, %271 : vector<10x32xf32>
    %273 = math.tanh %272 : vector<10x32xf32>
    %cst_58 = arith.constant 1.000000e+00 : f32
    %274 = vector.broadcast %cst_58 : f32 to vector<10x32xf32>
    %275 = arith.subf %274, %268 : vector<10x32xf32>
    %276 = arith.mulf %275, %273 : vector<10x32xf32>
    %277 = arith.mulf %268, %209 : vector<10x32xf32>
    %278 = arith.addf %276, %277 : vector<10x32xf32>
    %c4 = arith.constant 4 : index
    %c0_59 = arith.constant 0 : index
    %c0_60 = arith.constant 0 : index
    %279 = vector.load %arg0[%c4, %c0_59, %c0_60] : memref<8x10x32xf32, #tpu.memory_space<vmem>>, vector<1x10x32xf32>
    %280 = vector.shape_cast %279 : vector<1x10x32xf32> to vector<10x32xf32>
    %281 = arith.truncf %280 : vector<10x32xf32> to vector<10x32xbf16>
    %c4_61 = arith.constant 4 : index
    %c0_62 = arith.constant 0 : index
    %c0_63 = arith.constant 0 : index
    %282 = vector.load %arg1[%c4_61, %c0_62, %c0_63] : memref<8x10x32xf32, #tpu.memory_space<vmem>>, vector<1x10x32xf32>
    %283 = vector.shape_cast %282 : vector<1x10x32xf32> to vector<10x32xf32>
    %284 = arith.truncf %283 : vector<10x32xf32> to vector<10x32xbf16>
    %285 = arith.truncf %250 : vector<10x32xf32> to vector<10x32xbf16>
    %286 = arith.truncf %278 : vector<10x32xf32> to vector<10x32xbf16>
    %287 = tpu.concatenate %281, %284, %285, %286 in 1 : vector<10x32xbf16>, vector<10x32xbf16>, vector<10x32xbf16>, vector<10x32xbf16> -> vector<10x128xbf16>
    %c0_64 = arith.constant 0 : index
    %c0_65 = arith.constant 0 : index
    %288 = vector.load %arg6[%c0_64, %c0_65] : memref<128x384xbf16, #tpu.memory_space<vmem>>, vector<128x384xbf16>
    %cst_66 = arith.constant dense<0.000000e+00> : vector<10x384xf32>
    %289 = tpu.matmul %287, %288, %cst_66 {dimension_numbers = #tpu.dot_dimension_numbers<[1], [0], [0], [1], [0, 0, 1, 1], [], []>} : vector<10x128xbf16>, vector<128x384xbf16>, vector<10x384xf32> -> vector<10x384xf32>
    %290 = vector.broadcast %0 : vector<1x384xf32> to vector<10x384xf32>
    %291 = arith.addf %289, %290 : vector<10x384xf32>
    %292 = vector.extract_strided_slice %291 {offsets = [0, 0], sizes = [10, 96], strides = [1, 1]} : vector<10x384xf32> to vector<10x96xf32>
    %293 = vector.extract_strided_slice %291 {offsets = [0, 192], sizes = [10, 96], strides = [1, 1]} : vector<10x384xf32> to vector<10x96xf32>
    %294 = vector.extract_strided_slice %292 {offsets = [0, 0], sizes = [10, 32], strides = [1, 1]} : vector<10x96xf32> to vector<10x32xf32>
    %295 = vector.extract_strided_slice %293 {offsets = [0, 0], sizes = [10, 32], strides = [1, 1]} : vector<10x96xf32> to vector<10x32xf32>
    %296 = arith.addf %294, %295 : vector<10x32xf32>
    %297 = arith.negf %296 : vector<10x32xf32>
    %298 = math.exp %297 : vector<10x32xf32>
    %cst_67 = arith.constant 1.000000e+00 : f32
    %299 = vector.broadcast %cst_67 : f32 to vector<10x32xf32>
    %300 = arith.addf %299, %298 : vector<10x32xf32>
    %301 = arith.divf %299, %300 : vector<10x32xf32>
    %302 = vector.extract_strided_slice %292 {offsets = [0, 32], sizes = [10, 32], strides = [1, 1]} : vector<10x96xf32> to vector<10x32xf32>
    %303 = vector.extract_strided_slice %293 {offsets = [0, 32], sizes = [10, 32], strides = [1, 1]} : vector<10x96xf32> to vector<10x32xf32>
    %304 = arith.addf %302, %303 : vector<10x32xf32>
    %305 = arith.negf %304 : vector<10x32xf32>
    %306 = math.exp %305 : vector<10x32xf32>
    %cst_68 = arith.constant 1.000000e+00 : f32
    %307 = vector.broadcast %cst_68 : f32 to vector<10x32xf32>
    %308 = arith.addf %307, %306 : vector<10x32xf32>
    %309 = arith.divf %307, %308 : vector<10x32xf32>
    %310 = vector.extract_strided_slice %292 {offsets = [0, 64], sizes = [10, 32], strides = [1, 1]} : vector<10x96xf32> to vector<10x32xf32>
    %311 = vector.extract_strided_slice %293 {offsets = [0, 64], sizes = [10, 32], strides = [1, 1]} : vector<10x96xf32> to vector<10x32xf32>
    %312 = arith.mulf %301, %311 : vector<10x32xf32>
    %313 = arith.addf %310, %312 : vector<10x32xf32>
    %314 = math.tanh %313 : vector<10x32xf32>
    %cst_69 = arith.constant 1.000000e+00 : f32
    %315 = vector.broadcast %cst_69 : f32 to vector<10x32xf32>
    %316 = arith.subf %315, %309 : vector<10x32xf32>
    %317 = arith.mulf %316, %314 : vector<10x32xf32>
    %318 = arith.mulf %309, %250 : vector<10x32xf32>
    %319 = arith.addf %317, %318 : vector<10x32xf32>
    %320 = vector.extract_strided_slice %291 {offsets = [0, 96], sizes = [10, 96], strides = [1, 1]} : vector<10x384xf32> to vector<10x96xf32>
    %321 = vector.extract_strided_slice %291 {offsets = [0, 288], sizes = [10, 96], strides = [1, 1]} : vector<10x384xf32> to vector<10x96xf32>
    %322 = vector.extract_strided_slice %320 {offsets = [0, 0], sizes = [10, 32], strides = [1, 1]} : vector<10x96xf32> to vector<10x32xf32>
    %323 = vector.extract_strided_slice %321 {offsets = [0, 0], sizes = [10, 32], strides = [1, 1]} : vector<10x96xf32> to vector<10x32xf32>
    %324 = arith.addf %322, %323 : vector<10x32xf32>
    %325 = arith.negf %324 : vector<10x32xf32>
    %326 = math.exp %325 : vector<10x32xf32>
    %cst_70 = arith.constant 1.000000e+00 : f32
    %327 = vector.broadcast %cst_70 : f32 to vector<10x32xf32>
    %328 = arith.addf %327, %326 : vector<10x32xf32>
    %329 = arith.divf %327, %328 : vector<10x32xf32>
    %330 = vector.extract_strided_slice %320 {offsets = [0, 32], sizes = [10, 32], strides = [1, 1]} : vector<10x96xf32> to vector<10x32xf32>
    %331 = vector.extract_strided_slice %321 {offsets = [0, 32], sizes = [10, 32], strides = [1, 1]} : vector<10x96xf32> to vector<10x32xf32>
    %332 = arith.addf %330, %331 : vector<10x32xf32>
    %333 = arith.negf %332 : vector<10x32xf32>
    %334 = math.exp %333 : vector<10x32xf32>
    %cst_71 = arith.constant 1.000000e+00 : f32
    %335 = vector.broadcast %cst_71 : f32 to vector<10x32xf32>
    %336 = arith.addf %335, %334 : vector<10x32xf32>
    %337 = arith.divf %335, %336 : vector<10x32xf32>
    %338 = vector.extract_strided_slice %320 {offsets = [0, 64], sizes = [10, 32], strides = [1, 1]} : vector<10x96xf32> to vector<10x32xf32>
    %339 = vector.extract_strided_slice %321 {offsets = [0, 64], sizes = [10, 32], strides = [1, 1]} : vector<10x96xf32> to vector<10x32xf32>
    %340 = arith.mulf %329, %339 : vector<10x32xf32>
    %341 = arith.addf %338, %340 : vector<10x32xf32>
    %342 = math.tanh %341 : vector<10x32xf32>
    %cst_72 = arith.constant 1.000000e+00 : f32
    %343 = vector.broadcast %cst_72 : f32 to vector<10x32xf32>
    %344 = arith.subf %343, %337 : vector<10x32xf32>
    %345 = arith.mulf %344, %342 : vector<10x32xf32>
    %346 = arith.mulf %337, %278 : vector<10x32xf32>
    %347 = arith.addf %345, %346 : vector<10x32xf32>
    %c5 = arith.constant 5 : index
    %c0_73 = arith.constant 0 : index
    %c0_74 = arith.constant 0 : index
    %348 = vector.load %arg0[%c5, %c0_73, %c0_74] : memref<8x10x32xf32, #tpu.memory_space<vmem>>, vector<1x10x32xf32>
    %349 = vector.shape_cast %348 : vector<1x10x32xf32> to vector<10x32xf32>
    %350 = arith.truncf %349 : vector<10x32xf32> to vector<10x32xbf16>
    %c5_75 = arith.constant 5 : index
    %c0_76 = arith.constant 0 : index
    %c0_77 = arith.constant 0 : index
    %351 = vector.load %arg1[%c5_75, %c0_76, %c0_77] : memref<8x10x32xf32, #tpu.memory_space<vmem>>, vector<1x10x32xf32>
    %352 = vector.shape_cast %351 : vector<1x10x32xf32> to vector<10x32xf32>
    %353 = arith.truncf %352 : vector<10x32xf32> to vector<10x32xbf16>
    %354 = arith.truncf %319 : vector<10x32xf32> to vector<10x32xbf16>
    %355 = arith.truncf %347 : vector<10x32xf32> to vector<10x32xbf16>
    %356 = tpu.concatenate %350, %353, %354, %355 in 1 : vector<10x32xbf16>, vector<10x32xbf16>, vector<10x32xbf16>, vector<10x32xbf16> -> vector<10x128xbf16>
    %c0_78 = arith.constant 0 : index
    %c0_79 = arith.constant 0 : index
    %357 = vector.load %arg6[%c0_78, %c0_79] : memref<128x384xbf16, #tpu.memory_space<vmem>>, vector<128x384xbf16>
    %cst_80 = arith.constant dense<0.000000e+00> : vector<10x384xf32>
    %358 = tpu.matmul %356, %357, %cst_80 {dimension_numbers = #tpu.dot_dimension_numbers<[1], [0], [0], [1], [0, 0, 1, 1], [], []>} : vector<10x128xbf16>, vector<128x384xbf16>, vector<10x384xf32> -> vector<10x384xf32>
    %359 = vector.broadcast %0 : vector<1x384xf32> to vector<10x384xf32>
    %360 = arith.addf %358, %359 : vector<10x384xf32>
    %361 = vector.extract_strided_slice %360 {offsets = [0, 0], sizes = [10, 96], strides = [1, 1]} : vector<10x384xf32> to vector<10x96xf32>
    %362 = vector.extract_strided_slice %360 {offsets = [0, 192], sizes = [10, 96], strides = [1, 1]} : vector<10x384xf32> to vector<10x96xf32>
    %363 = vector.extract_strided_slice %361 {offsets = [0, 0], sizes = [10, 32], strides = [1, 1]} : vector<10x96xf32> to vector<10x32xf32>
    %364 = vector.extract_strided_slice %362 {offsets = [0, 0], sizes = [10, 32], strides = [1, 1]} : vector<10x96xf32> to vector<10x32xf32>
    %365 = arith.addf %363, %364 : vector<10x32xf32>
    %366 = arith.negf %365 : vector<10x32xf32>
    %367 = math.exp %366 : vector<10x32xf32>
    %cst_81 = arith.constant 1.000000e+00 : f32
    %368 = vector.broadcast %cst_81 : f32 to vector<10x32xf32>
    %369 = arith.addf %368, %367 : vector<10x32xf32>
    %370 = arith.divf %368, %369 : vector<10x32xf32>
    %371 = vector.extract_strided_slice %361 {offsets = [0, 32], sizes = [10, 32], strides = [1, 1]} : vector<10x96xf32> to vector<10x32xf32>
    %372 = vector.extract_strided_slice %362 {offsets = [0, 32], sizes = [10, 32], strides = [1, 1]} : vector<10x96xf32> to vector<10x32xf32>
    %373 = arith.addf %371, %372 : vector<10x32xf32>
    %374 = arith.negf %373 : vector<10x32xf32>
    %375 = math.exp %374 : vector<10x32xf32>
    %cst_82 = arith.constant 1.000000e+00 : f32
    %376 = vector.broadcast %cst_82 : f32 to vector<10x32xf32>
    %377 = arith.addf %376, %375 : vector<10x32xf32>
    %378 = arith.divf %376, %377 : vector<10x32xf32>
    %379 = vector.extract_strided_slice %361 {offsets = [0, 64], sizes = [10, 32], strides = [1, 1]} : vector<10x96xf32> to vector<10x32xf32>
    %380 = vector.extract_strided_slice %362 {offsets = [0, 64], sizes = [10, 32], strides = [1, 1]} : vector<10x96xf32> to vector<10x32xf32>
    %381 = arith.mulf %370, %380 : vector<10x32xf32>
    %382 = arith.addf %379, %381 : vector<10x32xf32>
    %383 = math.tanh %382 : vector<10x32xf32>
    %cst_83 = arith.constant 1.000000e+00 : f32
    %384 = vector.broadcast %cst_83 : f32 to vector<10x32xf32>
    %385 = arith.subf %384, %378 : vector<10x32xf32>
    %386 = arith.mulf %385, %383 : vector<10x32xf32>
    %387 = arith.mulf %378, %319 : vector<10x32xf32>
    %388 = arith.addf %386, %387 : vector<10x32xf32>
    %389 = vector.extract_strided_slice %360 {offsets = [0, 96], sizes = [10, 96], strides = [1, 1]} : vector<10x384xf32> to vector<10x96xf32>
    %390 = vector.extract_strided_slice %360 {offsets = [0, 288], sizes = [10, 96], strides = [1, 1]} : vector<10x384xf32> to vector<10x96xf32>
    %391 = vector.extract_strided_slice %389 {offsets = [0, 0], sizes = [10, 32], strides = [1, 1]} : vector<10x96xf32> to vector<10x32xf32>
    %392 = vector.extract_strided_slice %390 {offsets = [0, 0], sizes = [10, 32], strides = [1, 1]} : vector<10x96xf32> to vector<10x32xf32>
    %393 = arith.addf %391, %392 : vector<10x32xf32>
    %394 = arith.negf %393 : vector<10x32xf32>
    %395 = math.exp %394 : vector<10x32xf32>
    %cst_84 = arith.constant 1.000000e+00 : f32
    %396 = vector.broadcast %cst_84 : f32 to vector<10x32xf32>
    %397 = arith.addf %396, %395 : vector<10x32xf32>
    %398 = arith.divf %396, %397 : vector<10x32xf32>
    %399 = vector.extract_strided_slice %389 {offsets = [0, 32], sizes = [10, 32], strides = [1, 1]} : vector<10x96xf32> to vector<10x32xf32>
    %400 = vector.extract_strided_slice %390 {offsets = [0, 32], sizes = [10, 32], strides = [1, 1]} : vector<10x96xf32> to vector<10x32xf32>
    %401 = arith.addf %399, %400 : vector<10x32xf32>
    %402 = arith.negf %401 : vector<10x32xf32>
    %403 = math.exp %402 : vector<10x32xf32>
    %cst_85 = arith.constant 1.000000e+00 : f32
    %404 = vector.broadcast %cst_85 : f32 to vector<10x32xf32>
    %405 = arith.addf %404, %403 : vector<10x32xf32>
    %406 = arith.divf %404, %405 : vector<10x32xf32>
    %407 = vector.extract_strided_slice %389 {offsets = [0, 64], sizes = [10, 32], strides = [1, 1]} : vector<10x96xf32> to vector<10x32xf32>
    %408 = vector.extract_strided_slice %390 {offsets = [0, 64], sizes = [10, 32], strides = [1, 1]} : vector<10x96xf32> to vector<10x32xf32>
    %409 = arith.mulf %398, %408 : vector<10x32xf32>
    %410 = arith.addf %407, %409 : vector<10x32xf32>
    %411 = math.tanh %410 : vector<10x32xf32>
    %cst_86 = arith.constant 1.000000e+00 : f32
    %412 = vector.broadcast %cst_86 : f32 to vector<10x32xf32>
    %413 = arith.subf %412, %406 : vector<10x32xf32>
    %414 = arith.mulf %413, %411 : vector<10x32xf32>
    %415 = arith.mulf %406, %347 : vector<10x32xf32>
    %416 = arith.addf %414, %415 : vector<10x32xf32>
    %c6 = arith.constant 6 : index
    %c0_87 = arith.constant 0 : index
    %c0_88 = arith.constant 0 : index
    %417 = vector.load %arg0[%c6, %c0_87, %c0_88] : memref<8x10x32xf32, #tpu.memory_space<vmem>>, vector<1x10x32xf32>
    %418 = vector.shape_cast %417 : vector<1x10x32xf32> to vector<10x32xf32>
    %419 = arith.truncf %418 : vector<10x32xf32> to vector<10x32xbf16>
    %c6_89 = arith.constant 6 : index
    %c0_90 = arith.constant 0 : index
    %c0_91 = arith.constant 0 : index
    %420 = vector.load %arg1[%c6_89, %c0_90, %c0_91] : memref<8x10x32xf32, #tpu.memory_space<vmem>>, vector<1x10x32xf32>
    %421 = vector.shape_cast %420 : vector<1x10x32xf32> to vector<10x32xf32>
    %422 = arith.truncf %421 : vector<10x32xf32> to vector<10x32xbf16>
    %423 = arith.truncf %388 : vector<10x32xf32> to vector<10x32xbf16>
    %424 = arith.truncf %416 : vector<10x32xf32> to vector<10x32xbf16>
    %425 = tpu.concatenate %419, %422, %423, %424 in 1 : vector<10x32xbf16>, vector<10x32xbf16>, vector<10x32xbf16>, vector<10x32xbf16> -> vector<10x128xbf16>
    %c0_92 = arith.constant 0 : index
    %c0_93 = arith.constant 0 : index
    %426 = vector.load %arg6[%c0_92, %c0_93] : memref<128x384xbf16, #tpu.memory_space<vmem>>, vector<128x384xbf16>
    %cst_94 = arith.constant dense<0.000000e+00> : vector<10x384xf32>
    %427 = tpu.matmul %425, %426, %cst_94 {dimension_numbers = #tpu.dot_dimension_numbers<[1], [0], [0], [1], [0, 0, 1, 1], [], []>} : vector<10x128xbf16>, vector<128x384xbf16>, vector<10x384xf32> -> vector<10x384xf32>
    %428 = vector.broadcast %0 : vector<1x384xf32> to vector<10x384xf32>
    %429 = arith.addf %427, %428 : vector<10x384xf32>
    %430 = vector.extract_strided_slice %429 {offsets = [0, 0], sizes = [10, 96], strides = [1, 1]} : vector<10x384xf32> to vector<10x96xf32>
    %431 = vector.extract_strided_slice %429 {offsets = [0, 192], sizes = [10, 96], strides = [1, 1]} : vector<10x384xf32> to vector<10x96xf32>
    %432 = vector.extract_strided_slice %430 {offsets = [0, 0], sizes = [10, 32], strides = [1, 1]} : vector<10x96xf32> to vector<10x32xf32>
    %433 = vector.extract_strided_slice %431 {offsets = [0, 0], sizes = [10, 32], strides = [1, 1]} : vector<10x96xf32> to vector<10x32xf32>
    %434 = arith.addf %432, %433 : vector<10x32xf32>
    %435 = arith.negf %434 : vector<10x32xf32>
    %436 = math.exp %435 : vector<10x32xf32>
    %cst_95 = arith.constant 1.000000e+00 : f32
    %437 = vector.broadcast %cst_95 : f32 to vector<10x32xf32>
    %438 = arith.addf %437, %436 : vector<10x32xf32>
    %439 = arith.divf %437, %438 : vector<10x32xf32>
    %440 = vector.extract_strided_slice %430 {offsets = [0, 32], sizes = [10, 32], strides = [1, 1]} : vector<10x96xf32> to vector<10x32xf32>
    %441 = vector.extract_strided_slice %431 {offsets = [0, 32], sizes = [10, 32], strides = [1, 1]} : vector<10x96xf32> to vector<10x32xf32>
    %442 = arith.addf %440, %441 : vector<10x32xf32>
    %443 = arith.negf %442 : vector<10x32xf32>
    %444 = math.exp %443 : vector<10x32xf32>
    %cst_96 = arith.constant 1.000000e+00 : f32
    %445 = vector.broadcast %cst_96 : f32 to vector<10x32xf32>
    %446 = arith.addf %445, %444 : vector<10x32xf32>
    %447 = arith.divf %445, %446 : vector<10x32xf32>
    %448 = vector.extract_strided_slice %430 {offsets = [0, 64], sizes = [10, 32], strides = [1, 1]} : vector<10x96xf32> to vector<10x32xf32>
    %449 = vector.extract_strided_slice %431 {offsets = [0, 64], sizes = [10, 32], strides = [1, 1]} : vector<10x96xf32> to vector<10x32xf32>
    %450 = arith.mulf %439, %449 : vector<10x32xf32>
    %451 = arith.addf %448, %450 : vector<10x32xf32>
    %452 = math.tanh %451 : vector<10x32xf32>
    %cst_97 = arith.constant 1.000000e+00 : f32
    %453 = vector.broadcast %cst_97 : f32 to vector<10x32xf32>
    %454 = arith.subf %453, %447 : vector<10x32xf32>
    %455 = arith.mulf %454, %452 : vector<10x32xf32>
    %456 = arith.mulf %447, %388 : vector<10x32xf32>
    %457 = arith.addf %455, %456 : vector<10x32xf32>
    %458 = vector.extract_strided_slice %429 {offsets = [0, 96], sizes = [10, 96], strides = [1, 1]} : vector<10x384xf32> to vector<10x96xf32>
    %459 = vector.extract_strided_slice %429 {offsets = [0, 288], sizes = [10, 96], strides = [1, 1]} : vector<10x384xf32> to vector<10x96xf32>
    %460 = vector.extract_strided_slice %458 {offsets = [0, 0], sizes = [10, 32], strides = [1, 1]} : vector<10x96xf32> to vector<10x32xf32>
    %461 = vector.extract_strided_slice %459 {offsets = [0, 0], sizes = [10, 32], strides = [1, 1]} : vector<10x96xf32> to vector<10x32xf32>
    %462 = arith.addf %460, %461 : vector<10x32xf32>
    %463 = arith.negf %462 : vector<10x32xf32>
    %464 = math.exp %463 : vector<10x32xf32>
    %cst_98 = arith.constant 1.000000e+00 : f32
    %465 = vector.broadcast %cst_98 : f32 to vector<10x32xf32>
    %466 = arith.addf %465, %464 : vector<10x32xf32>
    %467 = arith.divf %465, %466 : vector<10x32xf32>
    %468 = vector.extract_strided_slice %458 {offsets = [0, 32], sizes = [10, 32], strides = [1, 1]} : vector<10x96xf32> to vector<10x32xf32>
    %469 = vector.extract_strided_slice %459 {offsets = [0, 32], sizes = [10, 32], strides = [1, 1]} : vector<10x96xf32> to vector<10x32xf32>
    %470 = arith.addf %468, %469 : vector<10x32xf32>
    %471 = arith.negf %470 : vector<10x32xf32>
    %472 = math.exp %471 : vector<10x32xf32>
    %cst_99 = arith.constant 1.000000e+00 : f32
    %473 = vector.broadcast %cst_99 : f32 to vector<10x32xf32>
    %474 = arith.addf %473, %472 : vector<10x32xf32>
    %475 = arith.divf %473, %474 : vector<10x32xf32>
    %476 = vector.extract_strided_slice %458 {offsets = [0, 64], sizes = [10, 32], strides = [1, 1]} : vector<10x96xf32> to vector<10x32xf32>
    %477 = vector.extract_strided_slice %459 {offsets = [0, 64], sizes = [10, 32], strides = [1, 1]} : vector<10x96xf32> to vector<10x32xf32>
    %478 = arith.mulf %467, %477 : vector<10x32xf32>
    %479 = arith.addf %476, %478 : vector<10x32xf32>
    %480 = math.tanh %479 : vector<10x32xf32>
    %cst_100 = arith.constant 1.000000e+00 : f32
    %481 = vector.broadcast %cst_100 : f32 to vector<10x32xf32>
    %482 = arith.subf %481, %475 : vector<10x32xf32>
    %483 = arith.mulf %482, %480 : vector<10x32xf32>
    %484 = arith.mulf %475, %416 : vector<10x32xf32>
    %485 = arith.addf %483, %484 : vector<10x32xf32>
    %c7 = arith.constant 7 : index
    %c0_101 = arith.constant 0 : index
    %c0_102 = arith.constant 0 : index
    %486 = vector.load %arg0[%c7, %c0_101, %c0_102] : memref<8x10x32xf32, #tpu.memory_space<vmem>>, vector<1x10x32xf32>
    %487 = vector.shape_cast %486 : vector<1x10x32xf32> to vector<10x32xf32>
    %488 = arith.truncf %487 : vector<10x32xf32> to vector<10x32xbf16>
    %c7_103 = arith.constant 7 : index
    %c0_104 = arith.constant 0 : index
    %c0_105 = arith.constant 0 : index
    %489 = vector.load %arg1[%c7_103, %c0_104, %c0_105] : memref<8x10x32xf32, #tpu.memory_space<vmem>>, vector<1x10x32xf32>
    %490 = vector.shape_cast %489 : vector<1x10x32xf32> to vector<10x32xf32>
    %491 = arith.truncf %490 : vector<10x32xf32> to vector<10x32xbf16>
    %492 = arith.truncf %457 : vector<10x32xf32> to vector<10x32xbf16>
    %493 = arith.truncf %485 : vector<10x32xf32> to vector<10x32xbf16>
    %494 = tpu.concatenate %488, %491, %492, %493 in 1 : vector<10x32xbf16>, vector<10x32xbf16>, vector<10x32xbf16>, vector<10x32xbf16> -> vector<10x128xbf16>
    %c0_106 = arith.constant 0 : index
    %c0_107 = arith.constant 0 : index
    %495 = vector.load %arg6[%c0_106, %c0_107] : memref<128x384xbf16, #tpu.memory_space<vmem>>, vector<128x384xbf16>
    %cst_108 = arith.constant dense<0.000000e+00> : vector<10x384xf32>
    %496 = tpu.matmul %494, %495, %cst_108 {dimension_numbers = #tpu.dot_dimension_numbers<[1], [0], [0], [1], [0, 0, 1, 1], [], []>} : vector<10x128xbf16>, vector<128x384xbf16>, vector<10x384xf32> -> vector<10x384xf32>
    %497 = vector.broadcast %0 : vector<1x384xf32> to vector<10x384xf32>
    %498 = arith.addf %496, %497 : vector<10x384xf32>
    %499 = vector.extract_strided_slice %498 {offsets = [0, 0], sizes = [10, 96], strides = [1, 1]} : vector<10x384xf32> to vector<10x96xf32>
    %500 = vector.extract_strided_slice %498 {offsets = [0, 192], sizes = [10, 96], strides = [1, 1]} : vector<10x384xf32> to vector<10x96xf32>
    %501 = vector.extract_strided_slice %499 {offsets = [0, 0], sizes = [10, 32], strides = [1, 1]} : vector<10x96xf32> to vector<10x32xf32>
    %502 = vector.extract_strided_slice %500 {offsets = [0, 0], sizes = [10, 32], strides = [1, 1]} : vector<10x96xf32> to vector<10x32xf32>
    %503 = arith.addf %501, %502 : vector<10x32xf32>
    %504 = arith.negf %503 : vector<10x32xf32>
    %505 = math.exp %504 : vector<10x32xf32>
    %cst_109 = arith.constant 1.000000e+00 : f32
    %506 = vector.broadcast %cst_109 : f32 to vector<10x32xf32>
    %507 = arith.addf %506, %505 : vector<10x32xf32>
    %508 = arith.divf %506, %507 : vector<10x32xf32>
    %509 = vector.extract_strided_slice %499 {offsets = [0, 32], sizes = [10, 32], strides = [1, 1]} : vector<10x96xf32> to vector<10x32xf32>
    %510 = vector.extract_strided_slice %500 {offsets = [0, 32], sizes = [10, 32], strides = [1, 1]} : vector<10x96xf32> to vector<10x32xf32>
    %511 = arith.addf %509, %510 : vector<10x32xf32>
    %512 = arith.negf %511 : vector<10x32xf32>
    %513 = math.exp %512 : vector<10x32xf32>
    %cst_110 = arith.constant 1.000000e+00 : f32
    %514 = vector.broadcast %cst_110 : f32 to vector<10x32xf32>
    %515 = arith.addf %514, %513 : vector<10x32xf32>
    %516 = arith.divf %514, %515 : vector<10x32xf32>
    %517 = vector.extract_strided_slice %499 {offsets = [0, 64], sizes = [10, 32], strides = [1, 1]} : vector<10x96xf32> to vector<10x32xf32>
    %518 = vector.extract_strided_slice %500 {offsets = [0, 64], sizes = [10, 32], strides = [1, 1]} : vector<10x96xf32> to vector<10x32xf32>
    %519 = arith.mulf %508, %518 : vector<10x32xf32>
    %520 = arith.addf %517, %519 : vector<10x32xf32>
    %521 = math.tanh %520 : vector<10x32xf32>
    %cst_111 = arith.constant 1.000000e+00 : f32
    %522 = vector.broadcast %cst_111 : f32 to vector<10x32xf32>
    %523 = arith.subf %522, %516 : vector<10x32xf32>
    %524 = arith.mulf %523, %521 : vector<10x32xf32>
    %525 = arith.mulf %516, %457 : vector<10x32xf32>
    %526 = arith.addf %524, %525 : vector<10x32xf32>
    %527 = vector.extract_strided_slice %498 {offsets = [0, 96], sizes = [10, 96], strides = [1, 1]} : vector<10x384xf32> to vector<10x96xf32>
    %528 = vector.extract_strided_slice %498 {offsets = [0, 288], sizes = [10, 96], strides = [1, 1]} : vector<10x384xf32> to vector<10x96xf32>
    %529 = vector.extract_strided_slice %527 {offsets = [0, 0], sizes = [10, 32], strides = [1, 1]} : vector<10x96xf32> to vector<10x32xf32>
    %530 = vector.extract_strided_slice %528 {offsets = [0, 0], sizes = [10, 32], strides = [1, 1]} : vector<10x96xf32> to vector<10x32xf32>
    %531 = arith.addf %529, %530 : vector<10x32xf32>
    %532 = arith.negf %531 : vector<10x32xf32>
    %533 = math.exp %532 : vector<10x32xf32>
    %cst_112 = arith.constant 1.000000e+00 : f32
    %534 = vector.broadcast %cst_112 : f32 to vector<10x32xf32>
    %535 = arith.addf %534, %533 : vector<10x32xf32>
    %536 = arith.divf %534, %535 : vector<10x32xf32>
    %537 = vector.extract_strided_slice %527 {offsets = [0, 32], sizes = [10, 32], strides = [1, 1]} : vector<10x96xf32> to vector<10x32xf32>
    %538 = vector.extract_strided_slice %528 {offsets = [0, 32], sizes = [10, 32], strides = [1, 1]} : vector<10x96xf32> to vector<10x32xf32>
    %539 = arith.addf %537, %538 : vector<10x32xf32>
    %540 = arith.negf %539 : vector<10x32xf32>
    %541 = math.exp %540 : vector<10x32xf32>
    %cst_113 = arith.constant 1.000000e+00 : f32
    %542 = vector.broadcast %cst_113 : f32 to vector<10x32xf32>
    %543 = arith.addf %542, %541 : vector<10x32xf32>
    %544 = arith.divf %542, %543 : vector<10x32xf32>
    %545 = vector.extract_strided_slice %527 {offsets = [0, 64], sizes = [10, 32], strides = [1, 1]} : vector<10x96xf32> to vector<10x32xf32>
    %546 = vector.extract_strided_slice %528 {offsets = [0, 64], sizes = [10, 32], strides = [1, 1]} : vector<10x96xf32> to vector<10x32xf32>
    %547 = arith.mulf %536, %546 : vector<10x32xf32>
    %548 = arith.addf %545, %547 : vector<10x32xf32>
    %549 = math.tanh %548 : vector<10x32xf32>
    %cst_114 = arith.constant 1.000000e+00 : f32
    %550 = vector.broadcast %cst_114 : f32 to vector<10x32xf32>
    %551 = arith.subf %550, %544 : vector<10x32xf32>
    %552 = arith.mulf %551, %549 : vector<10x32xf32>
    %553 = arith.mulf %544, %485 : vector<10x32xf32>
    %554 = arith.addf %552, %553 : vector<10x32xf32>
    %c0_115 = arith.constant 0 : index
    %c0_116 = arith.constant 0 : index
    %555 = vector.load %arg9[%c0_115, %c0_116] : memref<1x384xf32, #tpu.memory_space<vmem>>, vector<1x384xf32>
    %cst_117 = arith.constant 0.000000e+00 : f32
    %556 = vector.broadcast %cst_117 : f32 to vector<2x32xf32>
    %cst_118 = arith.constant 0.000000e+00 : f32
    %557 = vector.broadcast %cst_118 : f32 to vector<2x32xf32>
    %c0_119 = arith.constant 0 : index
    %c0_120 = arith.constant 0 : index
    %c0_121 = arith.constant 0 : index
    %558 = vector.load %arg2[%c0_119, %c0_120, %c0_121] : memref<10x2x32xf32, #tpu.memory_space<vmem>>, vector<1x2x32xf32>
    %559 = vector.shape_cast %558 : vector<1x2x32xf32> to vector<2x32xf32>
    %560 = arith.truncf %559 : vector<2x32xf32> to vector<2x32xbf16>
    %c0_122 = arith.constant 0 : index
    %c0_123 = arith.constant 0 : index
    %c0_124 = arith.constant 0 : index
    %561 = vector.load %arg3[%c0_122, %c0_123, %c0_124] : memref<10x2x32xf32, #tpu.memory_space<vmem>>, vector<1x2x32xf32>
    %562 = vector.shape_cast %561 : vector<1x2x32xf32> to vector<2x32xf32>
    %563 = arith.truncf %562 : vector<2x32xf32> to vector<2x32xbf16>
    %564 = arith.truncf %556 : vector<2x32xf32> to vector<2x32xbf16>
    %565 = arith.truncf %557 : vector<2x32xf32> to vector<2x32xbf16>
    %566 = tpu.concatenate %560, %563, %564, %565 in 1 : vector<2x32xbf16>, vector<2x32xbf16>, vector<2x32xbf16>, vector<2x32xbf16> -> vector<2x128xbf16>
    %c0_125 = arith.constant 0 : index
    %c0_126 = arith.constant 0 : index
    %567 = vector.load %arg8[%c0_125, %c0_126] : memref<128x384xbf16, #tpu.memory_space<vmem>>, vector<128x384xbf16>
    %cst_127 = arith.constant dense<0.000000e+00> : vector<2x384xf32>
    %568 = tpu.matmul %566, %567, %cst_127 {dimension_numbers = #tpu.dot_dimension_numbers<[1], [0], [0], [1], [0, 0, 1, 1], [], []>} : vector<2x128xbf16>, vector<128x384xbf16>, vector<2x384xf32> -> vector<2x384xf32>
    %569 = vector.broadcast %555 : vector<1x384xf32> to vector<2x384xf32>
    %570 = arith.addf %568, %569 : vector<2x384xf32>
    %571 = vector.extract_strided_slice %570 {offsets = [0, 0], sizes = [2, 96], strides = [1, 1]} : vector<2x384xf32> to vector<2x96xf32>
    %572 = vector.extract_strided_slice %570 {offsets = [0, 192], sizes = [2, 96], strides = [1, 1]} : vector<2x384xf32> to vector<2x96xf32>
    %573 = vector.extract_strided_slice %571 {offsets = [0, 0], sizes = [2, 32], strides = [1, 1]} : vector<2x96xf32> to vector<2x32xf32>
    %574 = vector.extract_strided_slice %572 {offsets = [0, 0], sizes = [2, 32], strides = [1, 1]} : vector<2x96xf32> to vector<2x32xf32>
    %575 = arith.addf %573, %574 : vector<2x32xf32>
    %576 = arith.negf %575 : vector<2x32xf32>
    %577 = math.exp %576 : vector<2x32xf32>
    %cst_128 = arith.constant 1.000000e+00 : f32
    %578 = vector.broadcast %cst_128 : f32 to vector<2x32xf32>
    %579 = arith.addf %578, %577 : vector<2x32xf32>
    %580 = arith.divf %578, %579 : vector<2x32xf32>
    %581 = vector.extract_strided_slice %571 {offsets = [0, 32], sizes = [2, 32], strides = [1, 1]} : vector<2x96xf32> to vector<2x32xf32>
    %582 = vector.extract_strided_slice %572 {offsets = [0, 32], sizes = [2, 32], strides = [1, 1]} : vector<2x96xf32> to vector<2x32xf32>
    %583 = arith.addf %581, %582 : vector<2x32xf32>
    %584 = arith.negf %583 : vector<2x32xf32>
    %585 = math.exp %584 : vector<2x32xf32>
    %cst_129 = arith.constant 1.000000e+00 : f32
    %586 = vector.broadcast %cst_129 : f32 to vector<2x32xf32>
    %587 = arith.addf %586, %585 : vector<2x32xf32>
    %588 = arith.divf %586, %587 : vector<2x32xf32>
    %589 = vector.extract_strided_slice %571 {offsets = [0, 64], sizes = [2, 32], strides = [1, 1]} : vector<2x96xf32> to vector<2x32xf32>
    %590 = vector.extract_strided_slice %572 {offsets = [0, 64], sizes = [2, 32], strides = [1, 1]} : vector<2x96xf32> to vector<2x32xf32>
    %591 = arith.mulf %580, %590 : vector<2x32xf32>
    %592 = arith.addf %589, %591 : vector<2x32xf32>
    %593 = math.tanh %592 : vector<2x32xf32>
    %cst_130 = arith.constant 1.000000e+00 : f32
    %594 = vector.broadcast %cst_130 : f32 to vector<2x32xf32>
    %595 = arith.subf %594, %588 : vector<2x32xf32>
    %596 = arith.mulf %595, %593 : vector<2x32xf32>
    %597 = arith.mulf %588, %556 : vector<2x32xf32>
    %598 = arith.addf %596, %597 : vector<2x32xf32>
    %599 = vector.extract_strided_slice %570 {offsets = [0, 96], sizes = [2, 96], strides = [1, 1]} : vector<2x384xf32> to vector<2x96xf32>
    %600 = vector.extract_strided_slice %570 {offsets = [0, 288], sizes = [2, 96], strides = [1, 1]} : vector<2x384xf32> to vector<2x96xf32>
    %601 = vector.extract_strided_slice %599 {offsets = [0, 0], sizes = [2, 32], strides = [1, 1]} : vector<2x96xf32> to vector<2x32xf32>
    %602 = vector.extract_strided_slice %600 {offsets = [0, 0], sizes = [2, 32], strides = [1, 1]} : vector<2x96xf32> to vector<2x32xf32>
    %603 = arith.addf %601, %602 : vector<2x32xf32>
    %604 = arith.negf %603 : vector<2x32xf32>
    %605 = math.exp %604 : vector<2x32xf32>
    %cst_131 = arith.constant 1.000000e+00 : f32
    %606 = vector.broadcast %cst_131 : f32 to vector<2x32xf32>
    %607 = arith.addf %606, %605 : vector<2x32xf32>
    %608 = arith.divf %606, %607 : vector<2x32xf32>
    %609 = vector.extract_strided_slice %599 {offsets = [0, 32], sizes = [2, 32], strides = [1, 1]} : vector<2x96xf32> to vector<2x32xf32>
    %610 = vector.extract_strided_slice %600 {offsets = [0, 32], sizes = [2, 32], strides = [1, 1]} : vector<2x96xf32> to vector<2x32xf32>
    %611 = arith.addf %609, %610 : vector<2x32xf32>
    %612 = arith.negf %611 : vector<2x32xf32>
    %613 = math.exp %612 : vector<2x32xf32>
    %cst_132 = arith.constant 1.000000e+00 : f32
    %614 = vector.broadcast %cst_132 : f32 to vector<2x32xf32>
    %615 = arith.addf %614, %613 : vector<2x32xf32>
    %616 = arith.divf %614, %615 : vector<2x32xf32>
    %617 = vector.extract_strided_slice %599 {offsets = [0, 64], sizes = [2, 32], strides = [1, 1]} : vector<2x96xf32> to vector<2x32xf32>
    %618 = vector.extract_strided_slice %600 {offsets = [0, 64], sizes = [2, 32], strides = [1, 1]} : vector<2x96xf32> to vector<2x32xf32>
    %619 = arith.mulf %608, %618 : vector<2x32xf32>
    %620 = arith.addf %617, %619 : vector<2x32xf32>
    %621 = math.tanh %620 : vector<2x32xf32>
    %cst_133 = arith.constant 1.000000e+00 : f32
    %622 = vector.broadcast %cst_133 : f32 to vector<2x32xf32>
    %623 = arith.subf %622, %616 : vector<2x32xf32>
    %624 = arith.mulf %623, %621 : vector<2x32xf32>
    %625 = arith.mulf %616, %557 : vector<2x32xf32>
    %626 = arith.addf %624, %625 : vector<2x32xf32>
    %c1_134 = arith.constant 1 : index
    %c0_135 = arith.constant 0 : index
    %c0_136 = arith.constant 0 : index
    %627 = vector.load %arg2[%c1_134, %c0_135, %c0_136] : memref<10x2x32xf32, #tpu.memory_space<vmem>>, vector<1x2x32xf32>
    %628 = vector.shape_cast %627 : vector<1x2x32xf32> to vector<2x32xf32>
    %629 = arith.truncf %628 : vector<2x32xf32> to vector<2x32xbf16>
    %c1_137 = arith.constant 1 : index
    %c0_138 = arith.constant 0 : index
    %c0_139 = arith.constant 0 : index
    %630 = vector.load %arg3[%c1_137, %c0_138, %c0_139] : memref<10x2x32xf32, #tpu.memory_space<vmem>>, vector<1x2x32xf32>
    %631 = vector.shape_cast %630 : vector<1x2x32xf32> to vector<2x32xf32>
    %632 = arith.truncf %631 : vector<2x32xf32> to vector<2x32xbf16>
    %633 = arith.truncf %598 : vector<2x32xf32> to vector<2x32xbf16>
    %634 = arith.truncf %626 : vector<2x32xf32> to vector<2x32xbf16>
    %635 = tpu.concatenate %629, %632, %633, %634 in 1 : vector<2x32xbf16>, vector<2x32xbf16>, vector<2x32xbf16>, vector<2x32xbf16> -> vector<2x128xbf16>
    %c0_140 = arith.constant 0 : index
    %c0_141 = arith.constant 0 : index
    %636 = vector.load %arg8[%c0_140, %c0_141] : memref<128x384xbf16, #tpu.memory_space<vmem>>, vector<128x384xbf16>
    %cst_142 = arith.constant dense<0.000000e+00> : vector<2x384xf32>
    %637 = tpu.matmul %635, %636, %cst_142 {dimension_numbers = #tpu.dot_dimension_numbers<[1], [0], [0], [1], [0, 0, 1, 1], [], []>} : vector<2x128xbf16>, vector<128x384xbf16>, vector<2x384xf32> -> vector<2x384xf32>
    %638 = vector.broadcast %555 : vector<1x384xf32> to vector<2x384xf32>
    %639 = arith.addf %637, %638 : vector<2x384xf32>
    %640 = vector.extract_strided_slice %639 {offsets = [0, 0], sizes = [2, 96], strides = [1, 1]} : vector<2x384xf32> to vector<2x96xf32>
    %641 = vector.extract_strided_slice %639 {offsets = [0, 192], sizes = [2, 96], strides = [1, 1]} : vector<2x384xf32> to vector<2x96xf32>
    %642 = vector.extract_strided_slice %640 {offsets = [0, 0], sizes = [2, 32], strides = [1, 1]} : vector<2x96xf32> to vector<2x32xf32>
    %643 = vector.extract_strided_slice %641 {offsets = [0, 0], sizes = [2, 32], strides = [1, 1]} : vector<2x96xf32> to vector<2x32xf32>
    %644 = arith.addf %642, %643 : vector<2x32xf32>
    %645 = arith.negf %644 : vector<2x32xf32>
    %646 = math.exp %645 : vector<2x32xf32>
    %cst_143 = arith.constant 1.000000e+00 : f32
    %647 = vector.broadcast %cst_143 : f32 to vector<2x32xf32>
    %648 = arith.addf %647, %646 : vector<2x32xf32>
    %649 = arith.divf %647, %648 : vector<2x32xf32>
    %650 = vector.extract_strided_slice %640 {offsets = [0, 32], sizes = [2, 32], strides = [1, 1]} : vector<2x96xf32> to vector<2x32xf32>
    %651 = vector.extract_strided_slice %641 {offsets = [0, 32], sizes = [2, 32], strides = [1, 1]} : vector<2x96xf32> to vector<2x32xf32>
    %652 = arith.addf %650, %651 : vector<2x32xf32>
    %653 = arith.negf %652 : vector<2x32xf32>
    %654 = math.exp %653 : vector<2x32xf32>
    %cst_144 = arith.constant 1.000000e+00 : f32
    %655 = vector.broadcast %cst_144 : f32 to vector<2x32xf32>
    %656 = arith.addf %655, %654 : vector<2x32xf32>
    %657 = arith.divf %655, %656 : vector<2x32xf32>
    %658 = vector.extract_strided_slice %640 {offsets = [0, 64], sizes = [2, 32], strides = [1, 1]} : vector<2x96xf32> to vector<2x32xf32>
    %659 = vector.extract_strided_slice %641 {offsets = [0, 64], sizes = [2, 32], strides = [1, 1]} : vector<2x96xf32> to vector<2x32xf32>
    %660 = arith.mulf %649, %659 : vector<2x32xf32>
    %661 = arith.addf %658, %660 : vector<2x32xf32>
    %662 = math.tanh %661 : vector<2x32xf32>
    %cst_145 = arith.constant 1.000000e+00 : f32
    %663 = vector.broadcast %cst_145 : f32 to vector<2x32xf32>
    %664 = arith.subf %663, %657 : vector<2x32xf32>
    %665 = arith.mulf %664, %662 : vector<2x32xf32>
    %666 = arith.mulf %657, %598 : vector<2x32xf32>
    %667 = arith.addf %665, %666 : vector<2x32xf32>
    %668 = vector.extract_strided_slice %639 {offsets = [0, 96], sizes = [2, 96], strides = [1, 1]} : vector<2x384xf32> to vector<2x96xf32>
    %669 = vector.extract_strided_slice %639 {offsets = [0, 288], sizes = [2, 96], strides = [1, 1]} : vector<2x384xf32> to vector<2x96xf32>
    %670 = vector.extract_strided_slice %668 {offsets = [0, 0], sizes = [2, 32], strides = [1, 1]} : vector<2x96xf32> to vector<2x32xf32>
    %671 = vector.extract_strided_slice %669 {offsets = [0, 0], sizes = [2, 32], strides = [1, 1]} : vector<2x96xf32> to vector<2x32xf32>
    %672 = arith.addf %670, %671 : vector<2x32xf32>
    %673 = arith.negf %672 : vector<2x32xf32>
    %674 = math.exp %673 : vector<2x32xf32>
    %cst_146 = arith.constant 1.000000e+00 : f32
    %675 = vector.broadcast %cst_146 : f32 to vector<2x32xf32>
    %676 = arith.addf %675, %674 : vector<2x32xf32>
    %677 = arith.divf %675, %676 : vector<2x32xf32>
    %678 = vector.extract_strided_slice %668 {offsets = [0, 32], sizes = [2, 32], strides = [1, 1]} : vector<2x96xf32> to vector<2x32xf32>
    %679 = vector.extract_strided_slice %669 {offsets = [0, 32], sizes = [2, 32], strides = [1, 1]} : vector<2x96xf32> to vector<2x32xf32>
    %680 = arith.addf %678, %679 : vector<2x32xf32>
    %681 = arith.negf %680 : vector<2x32xf32>
    %682 = math.exp %681 : vector<2x32xf32>
    %cst_147 = arith.constant 1.000000e+00 : f32
    %683 = vector.broadcast %cst_147 : f32 to vector<2x32xf32>
    %684 = arith.addf %683, %682 : vector<2x32xf32>
    %685 = arith.divf %683, %684 : vector<2x32xf32>
    %686 = vector.extract_strided_slice %668 {offsets = [0, 64], sizes = [2, 32], strides = [1, 1]} : vector<2x96xf32> to vector<2x32xf32>
    %687 = vector.extract_strided_slice %669 {offsets = [0, 64], sizes = [2, 32], strides = [1, 1]} : vector<2x96xf32> to vector<2x32xf32>
    %688 = arith.mulf %677, %687 : vector<2x32xf32>
    %689 = arith.addf %686, %688 : vector<2x32xf32>
    %690 = math.tanh %689 : vector<2x32xf32>
    %cst_148 = arith.constant 1.000000e+00 : f32
    %691 = vector.broadcast %cst_148 : f32 to vector<2x32xf32>
    %692 = arith.subf %691, %685 : vector<2x32xf32>
    %693 = arith.mulf %692, %690 : vector<2x32xf32>
    %694 = arith.mulf %685, %626 : vector<2x32xf32>
    %695 = arith.addf %693, %694 : vector<2x32xf32>
    %c2_149 = arith.constant 2 : index
    %c0_150 = arith.constant 0 : index
    %c0_151 = arith.constant 0 : index
    %696 = vector.load %arg2[%c2_149, %c0_150, %c0_151] : memref<10x2x32xf32, #tpu.memory_space<vmem>>, vector<1x2x32xf32>
    %697 = vector.shape_cast %696 : vector<1x2x32xf32> to vector<2x32xf32>
    %698 = arith.truncf %697 : vector<2x32xf32> to vector<2x32xbf16>
    %c2_152 = arith.constant 2 : index
    %c0_153 = arith.constant 0 : index
    %c0_154 = arith.constant 0 : index
    %699 = vector.load %arg3[%c2_152, %c0_153, %c0_154] : memref<10x2x32xf32, #tpu.memory_space<vmem>>, vector<1x2x32xf32>
    %700 = vector.shape_cast %699 : vector<1x2x32xf32> to vector<2x32xf32>
    %701 = arith.truncf %700 : vector<2x32xf32> to vector<2x32xbf16>
    %702 = arith.truncf %667 : vector<2x32xf32> to vector<2x32xbf16>
    %703 = arith.truncf %695 : vector<2x32xf32> to vector<2x32xbf16>
    %704 = tpu.concatenate %698, %701, %702, %703 in 1 : vector<2x32xbf16>, vector<2x32xbf16>, vector<2x32xbf16>, vector<2x32xbf16> -> vector<2x128xbf16>
    %c0_155 = arith.constant 0 : index
    %c0_156 = arith.constant 0 : index
    %705 = vector.load %arg8[%c0_155, %c0_156] : memref<128x384xbf16, #tpu.memory_space<vmem>>, vector<128x384xbf16>
    %cst_157 = arith.constant dense<0.000000e+00> : vector<2x384xf32>
    %706 = tpu.matmul %704, %705, %cst_157 {dimension_numbers = #tpu.dot_dimension_numbers<[1], [0], [0], [1], [0, 0, 1, 1], [], []>} : vector<2x128xbf16>, vector<128x384xbf16>, vector<2x384xf32> -> vector<2x384xf32>
    %707 = vector.broadcast %555 : vector<1x384xf32> to vector<2x384xf32>
    %708 = arith.addf %706, %707 : vector<2x384xf32>
    %709 = vector.extract_strided_slice %708 {offsets = [0, 0], sizes = [2, 96], strides = [1, 1]} : vector<2x384xf32> to vector<2x96xf32>
    %710 = vector.extract_strided_slice %708 {offsets = [0, 192], sizes = [2, 96], strides = [1, 1]} : vector<2x384xf32> to vector<2x96xf32>
    %711 = vector.extract_strided_slice %709 {offsets = [0, 0], sizes = [2, 32], strides = [1, 1]} : vector<2x96xf32> to vector<2x32xf32>
    %712 = vector.extract_strided_slice %710 {offsets = [0, 0], sizes = [2, 32], strides = [1, 1]} : vector<2x96xf32> to vector<2x32xf32>
    %713 = arith.addf %711, %712 : vector<2x32xf32>
    %714 = arith.negf %713 : vector<2x32xf32>
    %715 = math.exp %714 : vector<2x32xf32>
    %cst_158 = arith.constant 1.000000e+00 : f32
    %716 = vector.broadcast %cst_158 : f32 to vector<2x32xf32>
    %717 = arith.addf %716, %715 : vector<2x32xf32>
    %718 = arith.divf %716, %717 : vector<2x32xf32>
    %719 = vector.extract_strided_slice %709 {offsets = [0, 32], sizes = [2, 32], strides = [1, 1]} : vector<2x96xf32> to vector<2x32xf32>
    %720 = vector.extract_strided_slice %710 {offsets = [0, 32], sizes = [2, 32], strides = [1, 1]} : vector<2x96xf32> to vector<2x32xf32>
    %721 = arith.addf %719, %720 : vector<2x32xf32>
    %722 = arith.negf %721 : vector<2x32xf32>
    %723 = math.exp %722 : vector<2x32xf32>
    %cst_159 = arith.constant 1.000000e+00 : f32
    %724 = vector.broadcast %cst_159 : f32 to vector<2x32xf32>
    %725 = arith.addf %724, %723 : vector<2x32xf32>
    %726 = arith.divf %724, %725 : vector<2x32xf32>
    %727 = vector.extract_strided_slice %709 {offsets = [0, 64], sizes = [2, 32], strides = [1, 1]} : vector<2x96xf32> to vector<2x32xf32>
    %728 = vector.extract_strided_slice %710 {offsets = [0, 64], sizes = [2, 32], strides = [1, 1]} : vector<2x96xf32> to vector<2x32xf32>
    %729 = arith.mulf %718, %728 : vector<2x32xf32>
    %730 = arith.addf %727, %729 : vector<2x32xf32>
    %731 = math.tanh %730 : vector<2x32xf32>
    %cst_160 = arith.constant 1.000000e+00 : f32
    %732 = vector.broadcast %cst_160 : f32 to vector<2x32xf32>
    %733 = arith.subf %732, %726 : vector<2x32xf32>
    %734 = arith.mulf %733, %731 : vector<2x32xf32>
    %735 = arith.mulf %726, %667 : vector<2x32xf32>
    %736 = arith.addf %734, %735 : vector<2x32xf32>
    %737 = vector.extract_strided_slice %708 {offsets = [0, 96], sizes = [2, 96], strides = [1, 1]} : vector<2x384xf32> to vector<2x96xf32>
    %738 = vector.extract_strided_slice %708 {offsets = [0, 288], sizes = [2, 96], strides = [1, 1]} : vector<2x384xf32> to vector<2x96xf32>
    %739 = vector.extract_strided_slice %737 {offsets = [0, 0], sizes = [2, 32], strides = [1, 1]} : vector<2x96xf32> to vector<2x32xf32>
    %740 = vector.extract_strided_slice %738 {offsets = [0, 0], sizes = [2, 32], strides = [1, 1]} : vector<2x96xf32> to vector<2x32xf32>
    %741 = arith.addf %739, %740 : vector<2x32xf32>
    %742 = arith.negf %741 : vector<2x32xf32>
    %743 = math.exp %742 : vector<2x32xf32>
    %cst_161 = arith.constant 1.000000e+00 : f32
    %744 = vector.broadcast %cst_161 : f32 to vector<2x32xf32>
    %745 = arith.addf %744, %743 : vector<2x32xf32>
    %746 = arith.divf %744, %745 : vector<2x32xf32>
    %747 = vector.extract_strided_slice %737 {offsets = [0, 32], sizes = [2, 32], strides = [1, 1]} : vector<2x96xf32> to vector<2x32xf32>
    %748 = vector.extract_strided_slice %738 {offsets = [0, 32], sizes = [2, 32], strides = [1, 1]} : vector<2x96xf32> to vector<2x32xf32>
    %749 = arith.addf %747, %748 : vector<2x32xf32>
    %750 = arith.negf %749 : vector<2x32xf32>
    %751 = math.exp %750 : vector<2x32xf32>
    %cst_162 = arith.constant 1.000000e+00 : f32
    %752 = vector.broadcast %cst_162 : f32 to vector<2x32xf32>
    %753 = arith.addf %752, %751 : vector<2x32xf32>
    %754 = arith.divf %752, %753 : vector<2x32xf32>
    %755 = vector.extract_strided_slice %737 {offsets = [0, 64], sizes = [2, 32], strides = [1, 1]} : vector<2x96xf32> to vector<2x32xf32>
    %756 = vector.extract_strided_slice %738 {offsets = [0, 64], sizes = [2, 32], strides = [1, 1]} : vector<2x96xf32> to vector<2x32xf32>
    %757 = arith.mulf %746, %756 : vector<2x32xf32>
    %758 = arith.addf %755, %757 : vector<2x32xf32>
    %759 = math.tanh %758 : vector<2x32xf32>
    %cst_163 = arith.constant 1.000000e+00 : f32
    %760 = vector.broadcast %cst_163 : f32 to vector<2x32xf32>
    %761 = arith.subf %760, %754 : vector<2x32xf32>
    %762 = arith.mulf %761, %759 : vector<2x32xf32>
    %763 = arith.mulf %754, %695 : vector<2x32xf32>
    %764 = arith.addf %762, %763 : vector<2x32xf32>
    %c3_164 = arith.constant 3 : index
    %c0_165 = arith.constant 0 : index
    %c0_166 = arith.constant 0 : index
    %765 = vector.load %arg2[%c3_164, %c0_165, %c0_166] : memref<10x2x32xf32, #tpu.memory_space<vmem>>, vector<1x2x32xf32>
    %766 = vector.shape_cast %765 : vector<1x2x32xf32> to vector<2x32xf32>
    %767 = arith.truncf %766 : vector<2x32xf32> to vector<2x32xbf16>
    %c3_167 = arith.constant 3 : index
    %c0_168 = arith.constant 0 : index
    %c0_169 = arith.constant 0 : index
    %768 = vector.load %arg3[%c3_167, %c0_168, %c0_169] : memref<10x2x32xf32, #tpu.memory_space<vmem>>, vector<1x2x32xf32>
    %769 = vector.shape_cast %768 : vector<1x2x32xf32> to vector<2x32xf32>
    %770 = arith.truncf %769 : vector<2x32xf32> to vector<2x32xbf16>
    %771 = arith.truncf %736 : vector<2x32xf32> to vector<2x32xbf16>
    %772 = arith.truncf %764 : vector<2x32xf32> to vector<2x32xbf16>
    %773 = tpu.concatenate %767, %770, %771, %772 in 1 : vector<2x32xbf16>, vector<2x32xbf16>, vector<2x32xbf16>, vector<2x32xbf16> -> vector<2x128xbf16>
    %c0_170 = arith.constant 0 : index
    %c0_171 = arith.constant 0 : index
    %774 = vector.load %arg8[%c0_170, %c0_171] : memref<128x384xbf16, #tpu.memory_space<vmem>>, vector<128x384xbf16>
    %cst_172 = arith.constant dense<0.000000e+00> : vector<2x384xf32>
    %775 = tpu.matmul %773, %774, %cst_172 {dimension_numbers = #tpu.dot_dimension_numbers<[1], [0], [0], [1], [0, 0, 1, 1], [], []>} : vector<2x128xbf16>, vector<128x384xbf16>, vector<2x384xf32> -> vector<2x384xf32>
    %776 = vector.broadcast %555 : vector<1x384xf32> to vector<2x384xf32>
    %777 = arith.addf %775, %776 : vector<2x384xf32>
    %778 = vector.extract_strided_slice %777 {offsets = [0, 0], sizes = [2, 96], strides = [1, 1]} : vector<2x384xf32> to vector<2x96xf32>
    %779 = vector.extract_strided_slice %777 {offsets = [0, 192], sizes = [2, 96], strides = [1, 1]} : vector<2x384xf32> to vector<2x96xf32>
    %780 = vector.extract_strided_slice %778 {offsets = [0, 0], sizes = [2, 32], strides = [1, 1]} : vector<2x96xf32> to vector<2x32xf32>
    %781 = vector.extract_strided_slice %779 {offsets = [0, 0], sizes = [2, 32], strides = [1, 1]} : vector<2x96xf32> to vector<2x32xf32>
    %782 = arith.addf %780, %781 : vector<2x32xf32>
    %783 = arith.negf %782 : vector<2x32xf32>
    %784 = math.exp %783 : vector<2x32xf32>
    %cst_173 = arith.constant 1.000000e+00 : f32
    %785 = vector.broadcast %cst_173 : f32 to vector<2x32xf32>
    %786 = arith.addf %785, %784 : vector<2x32xf32>
    %787 = arith.divf %785, %786 : vector<2x32xf32>
    %788 = vector.extract_strided_slice %778 {offsets = [0, 32], sizes = [2, 32], strides = [1, 1]} : vector<2x96xf32> to vector<2x32xf32>
    %789 = vector.extract_strided_slice %779 {offsets = [0, 32], sizes = [2, 32], strides = [1, 1]} : vector<2x96xf32> to vector<2x32xf32>
    %790 = arith.addf %788, %789 : vector<2x32xf32>
    %791 = arith.negf %790 : vector<2x32xf32>
    %792 = math.exp %791 : vector<2x32xf32>
    %cst_174 = arith.constant 1.000000e+00 : f32
    %793 = vector.broadcast %cst_174 : f32 to vector<2x32xf32>
    %794 = arith.addf %793, %792 : vector<2x32xf32>
    %795 = arith.divf %793, %794 : vector<2x32xf32>
    %796 = vector.extract_strided_slice %778 {offsets = [0, 64], sizes = [2, 32], strides = [1, 1]} : vector<2x96xf32> to vector<2x32xf32>
    %797 = vector.extract_strided_slice %779 {offsets = [0, 64], sizes = [2, 32], strides = [1, 1]} : vector<2x96xf32> to vector<2x32xf32>
    %798 = arith.mulf %787, %797 : vector<2x32xf32>
    %799 = arith.addf %796, %798 : vector<2x32xf32>
    %800 = math.tanh %799 : vector<2x32xf32>
    %cst_175 = arith.constant 1.000000e+00 : f32
    %801 = vector.broadcast %cst_175 : f32 to vector<2x32xf32>
    %802 = arith.subf %801, %795 : vector<2x32xf32>
    %803 = arith.mulf %802, %800 : vector<2x32xf32>
    %804 = arith.mulf %795, %736 : vector<2x32xf32>
    %805 = arith.addf %803, %804 : vector<2x32xf32>
    %806 = vector.extract_strided_slice %777 {offsets = [0, 96], sizes = [2, 96], strides = [1, 1]} : vector<2x384xf32> to vector<2x96xf32>
    %807 = vector.extract_strided_slice %777 {offsets = [0, 288], sizes = [2, 96], strides = [1, 1]} : vector<2x384xf32> to vector<2x96xf32>
    %808 = vector.extract_strided_slice %806 {offsets = [0, 0], sizes = [2, 32], strides = [1, 1]} : vector<2x96xf32> to vector<2x32xf32>
    %809 = vector.extract_strided_slice %807 {offsets = [0, 0], sizes = [2, 32], strides = [1, 1]} : vector<2x96xf32> to vector<2x32xf32>
    %810 = arith.addf %808, %809 : vector<2x32xf32>
    %811 = arith.negf %810 : vector<2x32xf32>
    %812 = math.exp %811 : vector<2x32xf32>
    %cst_176 = arith.constant 1.000000e+00 : f32
    %813 = vector.broadcast %cst_176 : f32 to vector<2x32xf32>
    %814 = arith.addf %813, %812 : vector<2x32xf32>
    %815 = arith.divf %813, %814 : vector<2x32xf32>
    %816 = vector.extract_strided_slice %806 {offsets = [0, 32], sizes = [2, 32], strides = [1, 1]} : vector<2x96xf32> to vector<2x32xf32>
    %817 = vector.extract_strided_slice %807 {offsets = [0, 32], sizes = [2, 32], strides = [1, 1]} : vector<2x96xf32> to vector<2x32xf32>
    %818 = arith.addf %816, %817 : vector<2x32xf32>
    %819 = arith.negf %818 : vector<2x32xf32>
    %820 = math.exp %819 : vector<2x32xf32>
    %cst_177 = arith.constant 1.000000e+00 : f32
    %821 = vector.broadcast %cst_177 : f32 to vector<2x32xf32>
    %822 = arith.addf %821, %820 : vector<2x32xf32>
    %823 = arith.divf %821, %822 : vector<2x32xf32>
    %824 = vector.extract_strided_slice %806 {offsets = [0, 64], sizes = [2, 32], strides = [1, 1]} : vector<2x96xf32> to vector<2x32xf32>
    %825 = vector.extract_strided_slice %807 {offsets = [0, 64], sizes = [2, 32], strides = [1, 1]} : vector<2x96xf32> to vector<2x32xf32>
    %826 = arith.mulf %815, %825 : vector<2x32xf32>
    %827 = arith.addf %824, %826 : vector<2x32xf32>
    %828 = math.tanh %827 : vector<2x32xf32>
    %cst_178 = arith.constant 1.000000e+00 : f32
    %829 = vector.broadcast %cst_178 : f32 to vector<2x32xf32>
    %830 = arith.subf %829, %823 : vector<2x32xf32>
    %831 = arith.mulf %830, %828 : vector<2x32xf32>
    %832 = arith.mulf %823, %764 : vector<2x32xf32>
    %833 = arith.addf %831, %832 : vector<2x32xf32>
    %c4_179 = arith.constant 4 : index
    %c0_180 = arith.constant 0 : index
    %c0_181 = arith.constant 0 : index
    %834 = vector.load %arg2[%c4_179, %c0_180, %c0_181] : memref<10x2x32xf32, #tpu.memory_space<vmem>>, vector<1x2x32xf32>
    %835 = vector.shape_cast %834 : vector<1x2x32xf32> to vector<2x32xf32>
    %836 = arith.truncf %835 : vector<2x32xf32> to vector<2x32xbf16>
    %c4_182 = arith.constant 4 : index
    %c0_183 = arith.constant 0 : index
    %c0_184 = arith.constant 0 : index
    %837 = vector.load %arg3[%c4_182, %c0_183, %c0_184] : memref<10x2x32xf32, #tpu.memory_space<vmem>>, vector<1x2x32xf32>
    %838 = vector.shape_cast %837 : vector<1x2x32xf32> to vector<2x32xf32>
    %839 = arith.truncf %838 : vector<2x32xf32> to vector<2x32xbf16>
    %840 = arith.truncf %805 : vector<2x32xf32> to vector<2x32xbf16>
    %841 = arith.truncf %833 : vector<2x32xf32> to vector<2x32xbf16>
    %842 = tpu.concatenate %836, %839, %840, %841 in 1 : vector<2x32xbf16>, vector<2x32xbf16>, vector<2x32xbf16>, vector<2x32xbf16> -> vector<2x128xbf16>
    %c0_185 = arith.constant 0 : index
    %c0_186 = arith.constant 0 : index
    %843 = vector.load %arg8[%c0_185, %c0_186] : memref<128x384xbf16, #tpu.memory_space<vmem>>, vector<128x384xbf16>
    %cst_187 = arith.constant dense<0.000000e+00> : vector<2x384xf32>
    %844 = tpu.matmul %842, %843, %cst_187 {dimension_numbers = #tpu.dot_dimension_numbers<[1], [0], [0], [1], [0, 0, 1, 1], [], []>} : vector<2x128xbf16>, vector<128x384xbf16>, vector<2x384xf32> -> vector<2x384xf32>
    %845 = vector.broadcast %555 : vector<1x384xf32> to vector<2x384xf32>
    %846 = arith.addf %844, %845 : vector<2x384xf32>
    %847 = vector.extract_strided_slice %846 {offsets = [0, 0], sizes = [2, 96], strides = [1, 1]} : vector<2x384xf32> to vector<2x96xf32>
    %848 = vector.extract_strided_slice %846 {offsets = [0, 192], sizes = [2, 96], strides = [1, 1]} : vector<2x384xf32> to vector<2x96xf32>
    %849 = vector.extract_strided_slice %847 {offsets = [0, 0], sizes = [2, 32], strides = [1, 1]} : vector<2x96xf32> to vector<2x32xf32>
    %850 = vector.extract_strided_slice %848 {offsets = [0, 0], sizes = [2, 32], strides = [1, 1]} : vector<2x96xf32> to vector<2x32xf32>
    %851 = arith.addf %849, %850 : vector<2x32xf32>
    %852 = arith.negf %851 : vector<2x32xf32>
    %853 = math.exp %852 : vector<2x32xf32>
    %cst_188 = arith.constant 1.000000e+00 : f32
    %854 = vector.broadcast %cst_188 : f32 to vector<2x32xf32>
    %855 = arith.addf %854, %853 : vector<2x32xf32>
    %856 = arith.divf %854, %855 : vector<2x32xf32>
    %857 = vector.extract_strided_slice %847 {offsets = [0, 32], sizes = [2, 32], strides = [1, 1]} : vector<2x96xf32> to vector<2x32xf32>
    %858 = vector.extract_strided_slice %848 {offsets = [0, 32], sizes = [2, 32], strides = [1, 1]} : vector<2x96xf32> to vector<2x32xf32>
    %859 = arith.addf %857, %858 : vector<2x32xf32>
    %860 = arith.negf %859 : vector<2x32xf32>
    %861 = math.exp %860 : vector<2x32xf32>
    %cst_189 = arith.constant 1.000000e+00 : f32
    %862 = vector.broadcast %cst_189 : f32 to vector<2x32xf32>
    %863 = arith.addf %862, %861 : vector<2x32xf32>
    %864 = arith.divf %862, %863 : vector<2x32xf32>
    %865 = vector.extract_strided_slice %847 {offsets = [0, 64], sizes = [2, 32], strides = [1, 1]} : vector<2x96xf32> to vector<2x32xf32>
    %866 = vector.extract_strided_slice %848 {offsets = [0, 64], sizes = [2, 32], strides = [1, 1]} : vector<2x96xf32> to vector<2x32xf32>
    %867 = arith.mulf %856, %866 : vector<2x32xf32>
    %868 = arith.addf %865, %867 : vector<2x32xf32>
    %869 = math.tanh %868 : vector<2x32xf32>
    %cst_190 = arith.constant 1.000000e+00 : f32
    %870 = vector.broadcast %cst_190 : f32 to vector<2x32xf32>
    %871 = arith.subf %870, %864 : vector<2x32xf32>
    %872 = arith.mulf %871, %869 : vector<2x32xf32>
    %873 = arith.mulf %864, %805 : vector<2x32xf32>
    %874 = arith.addf %872, %873 : vector<2x32xf32>
    %875 = vector.extract_strided_slice %846 {offsets = [0, 96], sizes = [2, 96], strides = [1, 1]} : vector<2x384xf32> to vector<2x96xf32>
    %876 = vector.extract_strided_slice %846 {offsets = [0, 288], sizes = [2, 96], strides = [1, 1]} : vector<2x384xf32> to vector<2x96xf32>
    %877 = vector.extract_strided_slice %875 {offsets = [0, 0], sizes = [2, 32], strides = [1, 1]} : vector<2x96xf32> to vector<2x32xf32>
    %878 = vector.extract_strided_slice %876 {offsets = [0, 0], sizes = [2, 32], strides = [1, 1]} : vector<2x96xf32> to vector<2x32xf32>
    %879 = arith.addf %877, %878 : vector<2x32xf32>
    %880 = arith.negf %879 : vector<2x32xf32>
    %881 = math.exp %880 : vector<2x32xf32>
    %cst_191 = arith.constant 1.000000e+00 : f32
    %882 = vector.broadcast %cst_191 : f32 to vector<2x32xf32>
    %883 = arith.addf %882, %881 : vector<2x32xf32>
    %884 = arith.divf %882, %883 : vector<2x32xf32>
    %885 = vector.extract_strided_slice %875 {offsets = [0, 32], sizes = [2, 32], strides = [1, 1]} : vector<2x96xf32> to vector<2x32xf32>
    %886 = vector.extract_strided_slice %876 {offsets = [0, 32], sizes = [2, 32], strides = [1, 1]} : vector<2x96xf32> to vector<2x32xf32>
    %887 = arith.addf %885, %886 : vector<2x32xf32>
    %888 = arith.negf %887 : vector<2x32xf32>
    %889 = math.exp %888 : vector<2x32xf32>
    %cst_192 = arith.constant 1.000000e+00 : f32
    %890 = vector.broadcast %cst_192 : f32 to vector<2x32xf32>
    %891 = arith.addf %890, %889 : vector<2x32xf32>
    %892 = arith.divf %890, %891 : vector<2x32xf32>
    %893 = vector.extract_strided_slice %875 {offsets = [0, 64], sizes = [2, 32], strides = [1, 1]} : vector<2x96xf32> to vector<2x32xf32>
    %894 = vector.extract_strided_slice %876 {offsets = [0, 64], sizes = [2, 32], strides = [1, 1]} : vector<2x96xf32> to vector<2x32xf32>
    %895 = arith.mulf %884, %894 : vector<2x32xf32>
    %896 = arith.addf %893, %895 : vector<2x32xf32>
    %897 = math.tanh %896 : vector<2x32xf32>
    %cst_193 = arith.constant 1.000000e+00 : f32
    %898 = vector.broadcast %cst_193 : f32 to vector<2x32xf32>
    %899 = arith.subf %898, %892 : vector<2x32xf32>
    %900 = arith.mulf %899, %897 : vector<2x32xf32>
    %901 = arith.mulf %892, %833 : vector<2x32xf32>
    %902 = arith.addf %900, %901 : vector<2x32xf32>
    %c5_194 = arith.constant 5 : index
    %c0_195 = arith.constant 0 : index
    %c0_196 = arith.constant 0 : index
    %903 = vector.load %arg2[%c5_194, %c0_195, %c0_196] : memref<10x2x32xf32, #tpu.memory_space<vmem>>, vector<1x2x32xf32>
    %904 = vector.shape_cast %903 : vector<1x2x32xf32> to vector<2x32xf32>
    %905 = arith.truncf %904 : vector<2x32xf32> to vector<2x32xbf16>
    %c5_197 = arith.constant 5 : index
    %c0_198 = arith.constant 0 : index
    %c0_199 = arith.constant 0 : index
    %906 = vector.load %arg3[%c5_197, %c0_198, %c0_199] : memref<10x2x32xf32, #tpu.memory_space<vmem>>, vector<1x2x32xf32>
    %907 = vector.shape_cast %906 : vector<1x2x32xf32> to vector<2x32xf32>
    %908 = arith.truncf %907 : vector<2x32xf32> to vector<2x32xbf16>
    %909 = arith.truncf %874 : vector<2x32xf32> to vector<2x32xbf16>
    %910 = arith.truncf %902 : vector<2x32xf32> to vector<2x32xbf16>
    %911 = tpu.concatenate %905, %908, %909, %910 in 1 : vector<2x32xbf16>, vector<2x32xbf16>, vector<2x32xbf16>, vector<2x32xbf16> -> vector<2x128xbf16>
    %c0_200 = arith.constant 0 : index
    %c0_201 = arith.constant 0 : index
    %912 = vector.load %arg8[%c0_200, %c0_201] : memref<128x384xbf16, #tpu.memory_space<vmem>>, vector<128x384xbf16>
    %cst_202 = arith.constant dense<0.000000e+00> : vector<2x384xf32>
    %913 = tpu.matmul %911, %912, %cst_202 {dimension_numbers = #tpu.dot_dimension_numbers<[1], [0], [0], [1], [0, 0, 1, 1], [], []>} : vector<2x128xbf16>, vector<128x384xbf16>, vector<2x384xf32> -> vector<2x384xf32>
    %914 = vector.broadcast %555 : vector<1x384xf32> to vector<2x384xf32>
    %915 = arith.addf %913, %914 : vector<2x384xf32>
    %916 = vector.extract_strided_slice %915 {offsets = [0, 0], sizes = [2, 96], strides = [1, 1]} : vector<2x384xf32> to vector<2x96xf32>
    %917 = vector.extract_strided_slice %915 {offsets = [0, 192], sizes = [2, 96], strides = [1, 1]} : vector<2x384xf32> to vector<2x96xf32>
    %918 = vector.extract_strided_slice %916 {offsets = [0, 0], sizes = [2, 32], strides = [1, 1]} : vector<2x96xf32> to vector<2x32xf32>
    %919 = vector.extract_strided_slice %917 {offsets = [0, 0], sizes = [2, 32], strides = [1, 1]} : vector<2x96xf32> to vector<2x32xf32>
    %920 = arith.addf %918, %919 : vector<2x32xf32>
    %921 = arith.negf %920 : vector<2x32xf32>
    %922 = math.exp %921 : vector<2x32xf32>
    %cst_203 = arith.constant 1.000000e+00 : f32
    %923 = vector.broadcast %cst_203 : f32 to vector<2x32xf32>
    %924 = arith.addf %923, %922 : vector<2x32xf32>
    %925 = arith.divf %923, %924 : vector<2x32xf32>
    %926 = vector.extract_strided_slice %916 {offsets = [0, 32], sizes = [2, 32], strides = [1, 1]} : vector<2x96xf32> to vector<2x32xf32>
    %927 = vector.extract_strided_slice %917 {offsets = [0, 32], sizes = [2, 32], strides = [1, 1]} : vector<2x96xf32> to vector<2x32xf32>
    %928 = arith.addf %926, %927 : vector<2x32xf32>
    %929 = arith.negf %928 : vector<2x32xf32>
    %930 = math.exp %929 : vector<2x32xf32>
    %cst_204 = arith.constant 1.000000e+00 : f32
    %931 = vector.broadcast %cst_204 : f32 to vector<2x32xf32>
    %932 = arith.addf %931, %930 : vector<2x32xf32>
    %933 = arith.divf %931, %932 : vector<2x32xf32>
    %934 = vector.extract_strided_slice %916 {offsets = [0, 64], sizes = [2, 32], strides = [1, 1]} : vector<2x96xf32> to vector<2x32xf32>
    %935 = vector.extract_strided_slice %917 {offsets = [0, 64], sizes = [2, 32], strides = [1, 1]} : vector<2x96xf32> to vector<2x32xf32>
    %936 = arith.mulf %925, %935 : vector<2x32xf32>
    %937 = arith.addf %934, %936 : vector<2x32xf32>
    %938 = math.tanh %937 : vector<2x32xf32>
    %cst_205 = arith.constant 1.000000e+00 : f32
    %939 = vector.broadcast %cst_205 : f32 to vector<2x32xf32>
    %940 = arith.subf %939, %933 : vector<2x32xf32>
    %941 = arith.mulf %940, %938 : vector<2x32xf32>
    %942 = arith.mulf %933, %874 : vector<2x32xf32>
    %943 = arith.addf %941, %942 : vector<2x32xf32>
    %944 = vector.extract_strided_slice %915 {offsets = [0, 96], sizes = [2, 96], strides = [1, 1]} : vector<2x384xf32> to vector<2x96xf32>
    %945 = vector.extract_strided_slice %915 {offsets = [0, 288], sizes = [2, 96], strides = [1, 1]} : vector<2x384xf32> to vector<2x96xf32>
    %946 = vector.extract_strided_slice %944 {offsets = [0, 0], sizes = [2, 32], strides = [1, 1]} : vector<2x96xf32> to vector<2x32xf32>
    %947 = vector.extract_strided_slice %945 {offsets = [0, 0], sizes = [2, 32], strides = [1, 1]} : vector<2x96xf32> to vector<2x32xf32>
    %948 = arith.addf %946, %947 : vector<2x32xf32>
    %949 = arith.negf %948 : vector<2x32xf32>
    %950 = math.exp %949 : vector<2x32xf32>
    %cst_206 = arith.constant 1.000000e+00 : f32
    %951 = vector.broadcast %cst_206 : f32 to vector<2x32xf32>
    %952 = arith.addf %951, %950 : vector<2x32xf32>
    %953 = arith.divf %951, %952 : vector<2x32xf32>
    %954 = vector.extract_strided_slice %944 {offsets = [0, 32], sizes = [2, 32], strides = [1, 1]} : vector<2x96xf32> to vector<2x32xf32>
    %955 = vector.extract_strided_slice %945 {offsets = [0, 32], sizes = [2, 32], strides = [1, 1]} : vector<2x96xf32> to vector<2x32xf32>
    %956 = arith.addf %954, %955 : vector<2x32xf32>
    %957 = arith.negf %956 : vector<2x32xf32>
    %958 = math.exp %957 : vector<2x32xf32>
    %cst_207 = arith.constant 1.000000e+00 : f32
    %959 = vector.broadcast %cst_207 : f32 to vector<2x32xf32>
    %960 = arith.addf %959, %958 : vector<2x32xf32>
    %961 = arith.divf %959, %960 : vector<2x32xf32>
    %962 = vector.extract_strided_slice %944 {offsets = [0, 64], sizes = [2, 32], strides = [1, 1]} : vector<2x96xf32> to vector<2x32xf32>
    %963 = vector.extract_strided_slice %945 {offsets = [0, 64], sizes = [2, 32], strides = [1, 1]} : vector<2x96xf32> to vector<2x32xf32>
    %964 = arith.mulf %953, %963 : vector<2x32xf32>
    %965 = arith.addf %962, %964 : vector<2x32xf32>
    %966 = math.tanh %965 : vector<2x32xf32>
    %cst_208 = arith.constant 1.000000e+00 : f32
    %967 = vector.broadcast %cst_208 : f32 to vector<2x32xf32>
    %968 = arith.subf %967, %961 : vector<2x32xf32>
    %969 = arith.mulf %968, %966 : vector<2x32xf32>
    %970 = arith.mulf %961, %902 : vector<2x32xf32>
    %971 = arith.addf %969, %970 : vector<2x32xf32>
    %c6_209 = arith.constant 6 : index
    %c0_210 = arith.constant 0 : index
    %c0_211 = arith.constant 0 : index
    %972 = vector.load %arg2[%c6_209, %c0_210, %c0_211] : memref<10x2x32xf32, #tpu.memory_space<vmem>>, vector<1x2x32xf32>
    %973 = vector.shape_cast %972 : vector<1x2x32xf32> to vector<2x32xf32>
    %974 = arith.truncf %973 : vector<2x32xf32> to vector<2x32xbf16>
    %c6_212 = arith.constant 6 : index
    %c0_213 = arith.constant 0 : index
    %c0_214 = arith.constant 0 : index
    %975 = vector.load %arg3[%c6_212, %c0_213, %c0_214] : memref<10x2x32xf32, #tpu.memory_space<vmem>>, vector<1x2x32xf32>
    %976 = vector.shape_cast %975 : vector<1x2x32xf32> to vector<2x32xf32>
    %977 = arith.truncf %976 : vector<2x32xf32> to vector<2x32xbf16>
    %978 = arith.truncf %943 : vector<2x32xf32> to vector<2x32xbf16>
    %979 = arith.truncf %971 : vector<2x32xf32> to vector<2x32xbf16>
    %980 = tpu.concatenate %974, %977, %978, %979 in 1 : vector<2x32xbf16>, vector<2x32xbf16>, vector<2x32xbf16>, vector<2x32xbf16> -> vector<2x128xbf16>
    %c0_215 = arith.constant 0 : index
    %c0_216 = arith.constant 0 : index
    %981 = vector.load %arg8[%c0_215, %c0_216] : memref<128x384xbf16, #tpu.memory_space<vmem>>, vector<128x384xbf16>
    %cst_217 = arith.constant dense<0.000000e+00> : vector<2x384xf32>
    %982 = tpu.matmul %980, %981, %cst_217 {dimension_numbers = #tpu.dot_dimension_numbers<[1], [0], [0], [1], [0, 0, 1, 1], [], []>} : vector<2x128xbf16>, vector<128x384xbf16>, vector<2x384xf32> -> vector<2x384xf32>
    %983 = vector.broadcast %555 : vector<1x384xf32> to vector<2x384xf32>
    %984 = arith.addf %982, %983 : vector<2x384xf32>
    %985 = vector.extract_strided_slice %984 {offsets = [0, 0], sizes = [2, 96], strides = [1, 1]} : vector<2x384xf32> to vector<2x96xf32>
    %986 = vector.extract_strided_slice %984 {offsets = [0, 192], sizes = [2, 96], strides = [1, 1]} : vector<2x384xf32> to vector<2x96xf32>
    %987 = vector.extract_strided_slice %985 {offsets = [0, 0], sizes = [2, 32], strides = [1, 1]} : vector<2x96xf32> to vector<2x32xf32>
    %988 = vector.extract_strided_slice %986 {offsets = [0, 0], sizes = [2, 32], strides = [1, 1]} : vector<2x96xf32> to vector<2x32xf32>
    %989 = arith.addf %987, %988 : vector<2x32xf32>
    %990 = arith.negf %989 : vector<2x32xf32>
    %991 = math.exp %990 : vector<2x32xf32>
    %cst_218 = arith.constant 1.000000e+00 : f32
    %992 = vector.broadcast %cst_218 : f32 to vector<2x32xf32>
    %993 = arith.addf %992, %991 : vector<2x32xf32>
    %994 = arith.divf %992, %993 : vector<2x32xf32>
    %995 = vector.extract_strided_slice %985 {offsets = [0, 32], sizes = [2, 32], strides = [1, 1]} : vector<2x96xf32> to vector<2x32xf32>
    %996 = vector.extract_strided_slice %986 {offsets = [0, 32], sizes = [2, 32], strides = [1, 1]} : vector<2x96xf32> to vector<2x32xf32>
    %997 = arith.addf %995, %996 : vector<2x32xf32>
    %998 = arith.negf %997 : vector<2x32xf32>
    %999 = math.exp %998 : vector<2x32xf32>
    %cst_219 = arith.constant 1.000000e+00 : f32
    %1000 = vector.broadcast %cst_219 : f32 to vector<2x32xf32>
    %1001 = arith.addf %1000, %999 : vector<2x32xf32>
    %1002 = arith.divf %1000, %1001 : vector<2x32xf32>
    %1003 = vector.extract_strided_slice %985 {offsets = [0, 64], sizes = [2, 32], strides = [1, 1]} : vector<2x96xf32> to vector<2x32xf32>
    %1004 = vector.extract_strided_slice %986 {offsets = [0, 64], sizes = [2, 32], strides = [1, 1]} : vector<2x96xf32> to vector<2x32xf32>
    %1005 = arith.mulf %994, %1004 : vector<2x32xf32>
    %1006 = arith.addf %1003, %1005 : vector<2x32xf32>
    %1007 = math.tanh %1006 : vector<2x32xf32>
    %cst_220 = arith.constant 1.000000e+00 : f32
    %1008 = vector.broadcast %cst_220 : f32 to vector<2x32xf32>
    %1009 = arith.subf %1008, %1002 : vector<2x32xf32>
    %1010 = arith.mulf %1009, %1007 : vector<2x32xf32>
    %1011 = arith.mulf %1002, %943 : vector<2x32xf32>
    %1012 = arith.addf %1010, %1011 : vector<2x32xf32>
    %1013 = vector.extract_strided_slice %984 {offsets = [0, 96], sizes = [2, 96], strides = [1, 1]} : vector<2x384xf32> to vector<2x96xf32>
    %1014 = vector.extract_strided_slice %984 {offsets = [0, 288], sizes = [2, 96], strides = [1, 1]} : vector<2x384xf32> to vector<2x96xf32>
    %1015 = vector.extract_strided_slice %1013 {offsets = [0, 0], sizes = [2, 32], strides = [1, 1]} : vector<2x96xf32> to vector<2x32xf32>
    %1016 = vector.extract_strided_slice %1014 {offsets = [0, 0], sizes = [2, 32], strides = [1, 1]} : vector<2x96xf32> to vector<2x32xf32>
    %1017 = arith.addf %1015, %1016 : vector<2x32xf32>
    %1018 = arith.negf %1017 : vector<2x32xf32>
    %1019 = math.exp %1018 : vector<2x32xf32>
    %cst_221 = arith.constant 1.000000e+00 : f32
    %1020 = vector.broadcast %cst_221 : f32 to vector<2x32xf32>
    %1021 = arith.addf %1020, %1019 : vector<2x32xf32>
    %1022 = arith.divf %1020, %1021 : vector<2x32xf32>
    %1023 = vector.extract_strided_slice %1013 {offsets = [0, 32], sizes = [2, 32], strides = [1, 1]} : vector<2x96xf32> to vector<2x32xf32>
    %1024 = vector.extract_strided_slice %1014 {offsets = [0, 32], sizes = [2, 32], strides = [1, 1]} : vector<2x96xf32> to vector<2x32xf32>
    %1025 = arith.addf %1023, %1024 : vector<2x32xf32>
    %1026 = arith.negf %1025 : vector<2x32xf32>
    %1027 = math.exp %1026 : vector<2x32xf32>
    %cst_222 = arith.constant 1.000000e+00 : f32
    %1028 = vector.broadcast %cst_222 : f32 to vector<2x32xf32>
    %1029 = arith.addf %1028, %1027 : vector<2x32xf32>
    %1030 = arith.divf %1028, %1029 : vector<2x32xf32>
    %1031 = vector.extract_strided_slice %1013 {offsets = [0, 64], sizes = [2, 32], strides = [1, 1]} : vector<2x96xf32> to vector<2x32xf32>
    %1032 = vector.extract_strided_slice %1014 {offsets = [0, 64], sizes = [2, 32], strides = [1, 1]} : vector<2x96xf32> to vector<2x32xf32>
    %1033 = arith.mulf %1022, %1032 : vector<2x32xf32>
    %1034 = arith.addf %1031, %1033 : vector<2x32xf32>
    %1035 = math.tanh %1034 : vector<2x32xf32>
    %cst_223 = arith.constant 1.000000e+00 : f32
    %1036 = vector.broadcast %cst_223 : f32 to vector<2x32xf32>
    %1037 = arith.subf %1036, %1030 : vector<2x32xf32>
    %1038 = arith.mulf %1037, %1035 : vector<2x32xf32>
    %1039 = arith.mulf %1030, %971 : vector<2x32xf32>
    %1040 = arith.addf %1038, %1039 : vector<2x32xf32>
    %c7_224 = arith.constant 7 : index
    %c0_225 = arith.constant 0 : index
    %c0_226 = arith.constant 0 : index
    %1041 = vector.load %arg2[%c7_224, %c0_225, %c0_226] : memref<10x2x32xf32, #tpu.memory_space<vmem>>, vector<1x2x32xf32>
    %1042 = vector.shape_cast %1041 : vector<1x2x32xf32> to vector<2x32xf32>
    %1043 = arith.truncf %1042 : vector<2x32xf32> to vector<2x32xbf16>
    %c7_227 = arith.constant 7 : index
    %c0_228 = arith.constant 0 : index
    %c0_229 = arith.constant 0 : index
    %1044 = vector.load %arg3[%c7_227, %c0_228, %c0_229] : memref<10x2x32xf32, #tpu.memory_space<vmem>>, vector<1x2x32xf32>
    %1045 = vector.shape_cast %1044 : vector<1x2x32xf32> to vector<2x32xf32>
    %1046 = arith.truncf %1045 : vector<2x32xf32> to vector<2x32xbf16>
    %1047 = arith.truncf %1012 : vector<2x32xf32> to vector<2x32xbf16>
    %1048 = arith.truncf %1040 : vector<2x32xf32> to vector<2x32xbf16>
    %1049 = tpu.concatenate %1043, %1046, %1047, %1048 in 1 : vector<2x32xbf16>, vector<2x32xbf16>, vector<2x32xbf16>, vector<2x32xbf16> -> vector<2x128xbf16>
    %c0_230 = arith.constant 0 : index
    %c0_231 = arith.constant 0 : index
    %1050 = vector.load %arg8[%c0_230, %c0_231] : memref<128x384xbf16, #tpu.memory_space<vmem>>, vector<128x384xbf16>
    %cst_232 = arith.constant dense<0.000000e+00> : vector<2x384xf32>
    %1051 = tpu.matmul %1049, %1050, %cst_232 {dimension_numbers = #tpu.dot_dimension_numbers<[1], [0], [0], [1], [0, 0, 1, 1], [], []>} : vector<2x128xbf16>, vector<128x384xbf16>, vector<2x384xf32> -> vector<2x384xf32>
    %1052 = vector.broadcast %555 : vector<1x384xf32> to vector<2x384xf32>
    %1053 = arith.addf %1051, %1052 : vector<2x384xf32>
    %1054 = vector.extract_strided_slice %1053 {offsets = [0, 0], sizes = [2, 96], strides = [1, 1]} : vector<2x384xf32> to vector<2x96xf32>
    %1055 = vector.extract_strided_slice %1053 {offsets = [0, 192], sizes = [2, 96], strides = [1, 1]} : vector<2x384xf32> to vector<2x96xf32>
    %1056 = vector.extract_strided_slice %1054 {offsets = [0, 0], sizes = [2, 32], strides = [1, 1]} : vector<2x96xf32> to vector<2x32xf32>
    %1057 = vector.extract_strided_slice %1055 {offsets = [0, 0], sizes = [2, 32], strides = [1, 1]} : vector<2x96xf32> to vector<2x32xf32>
    %1058 = arith.addf %1056, %1057 : vector<2x32xf32>
    %1059 = arith.negf %1058 : vector<2x32xf32>
    %1060 = math.exp %1059 : vector<2x32xf32>
    %cst_233 = arith.constant 1.000000e+00 : f32
    %1061 = vector.broadcast %cst_233 : f32 to vector<2x32xf32>
    %1062 = arith.addf %1061, %1060 : vector<2x32xf32>
    %1063 = arith.divf %1061, %1062 : vector<2x32xf32>
    %1064 = vector.extract_strided_slice %1054 {offsets = [0, 32], sizes = [2, 32], strides = [1, 1]} : vector<2x96xf32> to vector<2x32xf32>
    %1065 = vector.extract_strided_slice %1055 {offsets = [0, 32], sizes = [2, 32], strides = [1, 1]} : vector<2x96xf32> to vector<2x32xf32>
    %1066 = arith.addf %1064, %1065 : vector<2x32xf32>
    %1067 = arith.negf %1066 : vector<2x32xf32>
    %1068 = math.exp %1067 : vector<2x32xf32>
    %cst_234 = arith.constant 1.000000e+00 : f32
    %1069 = vector.broadcast %cst_234 : f32 to vector<2x32xf32>
    %1070 = arith.addf %1069, %1068 : vector<2x32xf32>
    %1071 = arith.divf %1069, %1070 : vector<2x32xf32>
    %1072 = vector.extract_strided_slice %1054 {offsets = [0, 64], sizes = [2, 32], strides = [1, 1]} : vector<2x96xf32> to vector<2x32xf32>
    %1073 = vector.extract_strided_slice %1055 {offsets = [0, 64], sizes = [2, 32], strides = [1, 1]} : vector<2x96xf32> to vector<2x32xf32>
    %1074 = arith.mulf %1063, %1073 : vector<2x32xf32>
    %1075 = arith.addf %1072, %1074 : vector<2x32xf32>
    %1076 = math.tanh %1075 : vector<2x32xf32>
    %cst_235 = arith.constant 1.000000e+00 : f32
    %1077 = vector.broadcast %cst_235 : f32 to vector<2x32xf32>
    %1078 = arith.subf %1077, %1071 : vector<2x32xf32>
    %1079 = arith.mulf %1078, %1076 : vector<2x32xf32>
    %1080 = arith.mulf %1071, %1012 : vector<2x32xf32>
    %1081 = arith.addf %1079, %1080 : vector<2x32xf32>
    %1082 = vector.extract_strided_slice %1053 {offsets = [0, 96], sizes = [2, 96], strides = [1, 1]} : vector<2x384xf32> to vector<2x96xf32>
    %1083 = vector.extract_strided_slice %1053 {offsets = [0, 288], sizes = [2, 96], strides = [1, 1]} : vector<2x384xf32> to vector<2x96xf32>
    %1084 = vector.extract_strided_slice %1082 {offsets = [0, 0], sizes = [2, 32], strides = [1, 1]} : vector<2x96xf32> to vector<2x32xf32>
    %1085 = vector.extract_strided_slice %1083 {offsets = [0, 0], sizes = [2, 32], strides = [1, 1]} : vector<2x96xf32> to vector<2x32xf32>
    %1086 = arith.addf %1084, %1085 : vector<2x32xf32>
    %1087 = arith.negf %1086 : vector<2x32xf32>
    %1088 = math.exp %1087 : vector<2x32xf32>
    %cst_236 = arith.constant 1.000000e+00 : f32
    %1089 = vector.broadcast %cst_236 : f32 to vector<2x32xf32>
    %1090 = arith.addf %1089, %1088 : vector<2x32xf32>
    %1091 = arith.divf %1089, %1090 : vector<2x32xf32>
    %1092 = vector.extract_strided_slice %1082 {offsets = [0, 32], sizes = [2, 32], strides = [1, 1]} : vector<2x96xf32> to vector<2x32xf32>
    %1093 = vector.extract_strided_slice %1083 {offsets = [0, 32], sizes = [2, 32], strides = [1, 1]} : vector<2x96xf32> to vector<2x32xf32>
    %1094 = arith.addf %1092, %1093 : vector<2x32xf32>
    %1095 = arith.negf %1094 : vector<2x32xf32>
    %1096 = math.exp %1095 : vector<2x32xf32>
    %cst_237 = arith.constant 1.000000e+00 : f32
    %1097 = vector.broadcast %cst_237 : f32 to vector<2x32xf32>
    %1098 = arith.addf %1097, %1096 : vector<2x32xf32>
    %1099 = arith.divf %1097, %1098 : vector<2x32xf32>
    %1100 = vector.extract_strided_slice %1082 {offsets = [0, 64], sizes = [2, 32], strides = [1, 1]} : vector<2x96xf32> to vector<2x32xf32>
    %1101 = vector.extract_strided_slice %1083 {offsets = [0, 64], sizes = [2, 32], strides = [1, 1]} : vector<2x96xf32> to vector<2x32xf32>
    %1102 = arith.mulf %1091, %1101 : vector<2x32xf32>
    %1103 = arith.addf %1100, %1102 : vector<2x32xf32>
    %1104 = math.tanh %1103 : vector<2x32xf32>
    %cst_238 = arith.constant 1.000000e+00 : f32
    %1105 = vector.broadcast %cst_238 : f32 to vector<2x32xf32>
    %1106 = arith.subf %1105, %1099 : vector<2x32xf32>
    %1107 = arith.mulf %1106, %1104 : vector<2x32xf32>
    %1108 = arith.mulf %1099, %1040 : vector<2x32xf32>
    %1109 = arith.addf %1107, %1108 : vector<2x32xf32>
    %c8 = arith.constant 8 : index
    %c0_239 = arith.constant 0 : index
    %c0_240 = arith.constant 0 : index
    %1110 = vector.load %arg2[%c8, %c0_239, %c0_240] : memref<10x2x32xf32, #tpu.memory_space<vmem>>, vector<1x2x32xf32>
    %1111 = vector.shape_cast %1110 : vector<1x2x32xf32> to vector<2x32xf32>
    %1112 = arith.truncf %1111 : vector<2x32xf32> to vector<2x32xbf16>
    %c8_241 = arith.constant 8 : index
    %c0_242 = arith.constant 0 : index
    %c0_243 = arith.constant 0 : index
    %1113 = vector.load %arg3[%c8_241, %c0_242, %c0_243] : memref<10x2x32xf32, #tpu.memory_space<vmem>>, vector<1x2x32xf32>
    %1114 = vector.shape_cast %1113 : vector<1x2x32xf32> to vector<2x32xf32>
    %1115 = arith.truncf %1114 : vector<2x32xf32> to vector<2x32xbf16>
    %1116 = arith.truncf %1081 : vector<2x32xf32> to vector<2x32xbf16>
    %1117 = arith.truncf %1109 : vector<2x32xf32> to vector<2x32xbf16>
    %1118 = tpu.concatenate %1112, %1115, %1116, %1117 in 1 : vector<2x32xbf16>, vector<2x32xbf16>, vector<2x32xbf16>, vector<2x32xbf16> -> vector<2x128xbf16>
    %c0_244 = arith.constant 0 : index
    %c0_245 = arith.constant 0 : index
    %1119 = vector.load %arg8[%c0_244, %c0_245] : memref<128x384xbf16, #tpu.memory_space<vmem>>, vector<128x384xbf16>
    %cst_246 = arith.constant dense<0.000000e+00> : vector<2x384xf32>
    %1120 = tpu.matmul %1118, %1119, %cst_246 {dimension_numbers = #tpu.dot_dimension_numbers<[1], [0], [0], [1], [0, 0, 1, 1], [], []>} : vector<2x128xbf16>, vector<128x384xbf16>, vector<2x384xf32> -> vector<2x384xf32>
    %1121 = vector.broadcast %555 : vector<1x384xf32> to vector<2x384xf32>
    %1122 = arith.addf %1120, %1121 : vector<2x384xf32>
    %1123 = vector.extract_strided_slice %1122 {offsets = [0, 0], sizes = [2, 96], strides = [1, 1]} : vector<2x384xf32> to vector<2x96xf32>
    %1124 = vector.extract_strided_slice %1122 {offsets = [0, 192], sizes = [2, 96], strides = [1, 1]} : vector<2x384xf32> to vector<2x96xf32>
    %1125 = vector.extract_strided_slice %1123 {offsets = [0, 0], sizes = [2, 32], strides = [1, 1]} : vector<2x96xf32> to vector<2x32xf32>
    %1126 = vector.extract_strided_slice %1124 {offsets = [0, 0], sizes = [2, 32], strides = [1, 1]} : vector<2x96xf32> to vector<2x32xf32>
    %1127 = arith.addf %1125, %1126 : vector<2x32xf32>
    %1128 = arith.negf %1127 : vector<2x32xf32>
    %1129 = math.exp %1128 : vector<2x32xf32>
    %cst_247 = arith.constant 1.000000e+00 : f32
    %1130 = vector.broadcast %cst_247 : f32 to vector<2x32xf32>
    %1131 = arith.addf %1130, %1129 : vector<2x32xf32>
    %1132 = arith.divf %1130, %1131 : vector<2x32xf32>
    %1133 = vector.extract_strided_slice %1123 {offsets = [0, 32], sizes = [2, 32], strides = [1, 1]} : vector<2x96xf32> to vector<2x32xf32>
    %1134 = vector.extract_strided_slice %1124 {offsets = [0, 32], sizes = [2, 32], strides = [1, 1]} : vector<2x96xf32> to vector<2x32xf32>
    %1135 = arith.addf %1133, %1134 : vector<2x32xf32>
    %1136 = arith.negf %1135 : vector<2x32xf32>
    %1137 = math.exp %1136 : vector<2x32xf32>
    %cst_248 = arith.constant 1.000000e+00 : f32
    %1138 = vector.broadcast %cst_248 : f32 to vector<2x32xf32>
    %1139 = arith.addf %1138, %1137 : vector<2x32xf32>
    %1140 = arith.divf %1138, %1139 : vector<2x32xf32>
    %1141 = vector.extract_strided_slice %1123 {offsets = [0, 64], sizes = [2, 32], strides = [1, 1]} : vector<2x96xf32> to vector<2x32xf32>
    %1142 = vector.extract_strided_slice %1124 {offsets = [0, 64], sizes = [2, 32], strides = [1, 1]} : vector<2x96xf32> to vector<2x32xf32>
    %1143 = arith.mulf %1132, %1142 : vector<2x32xf32>
    %1144 = arith.addf %1141, %1143 : vector<2x32xf32>
    %1145 = math.tanh %1144 : vector<2x32xf32>
    %cst_249 = arith.constant 1.000000e+00 : f32
    %1146 = vector.broadcast %cst_249 : f32 to vector<2x32xf32>
    %1147 = arith.subf %1146, %1140 : vector<2x32xf32>
    %1148 = arith.mulf %1147, %1145 : vector<2x32xf32>
    %1149 = arith.mulf %1140, %1081 : vector<2x32xf32>
    %1150 = arith.addf %1148, %1149 : vector<2x32xf32>
    %1151 = vector.extract_strided_slice %1122 {offsets = [0, 96], sizes = [2, 96], strides = [1, 1]} : vector<2x384xf32> to vector<2x96xf32>
    %1152 = vector.extract_strided_slice %1122 {offsets = [0, 288], sizes = [2, 96], strides = [1, 1]} : vector<2x384xf32> to vector<2x96xf32>
    %1153 = vector.extract_strided_slice %1151 {offsets = [0, 0], sizes = [2, 32], strides = [1, 1]} : vector<2x96xf32> to vector<2x32xf32>
    %1154 = vector.extract_strided_slice %1152 {offsets = [0, 0], sizes = [2, 32], strides = [1, 1]} : vector<2x96xf32> to vector<2x32xf32>
    %1155 = arith.addf %1153, %1154 : vector<2x32xf32>
    %1156 = arith.negf %1155 : vector<2x32xf32>
    %1157 = math.exp %1156 : vector<2x32xf32>
    %cst_250 = arith.constant 1.000000e+00 : f32
    %1158 = vector.broadcast %cst_250 : f32 to vector<2x32xf32>
    %1159 = arith.addf %1158, %1157 : vector<2x32xf32>
    %1160 = arith.divf %1158, %1159 : vector<2x32xf32>
    %1161 = vector.extract_strided_slice %1151 {offsets = [0, 32], sizes = [2, 32], strides = [1, 1]} : vector<2x96xf32> to vector<2x32xf32>
    %1162 = vector.extract_strided_slice %1152 {offsets = [0, 32], sizes = [2, 32], strides = [1, 1]} : vector<2x96xf32> to vector<2x32xf32>
    %1163 = arith.addf %1161, %1162 : vector<2x32xf32>
    %1164 = arith.negf %1163 : vector<2x32xf32>
    %1165 = math.exp %1164 : vector<2x32xf32>
    %cst_251 = arith.constant 1.000000e+00 : f32
    %1166 = vector.broadcast %cst_251 : f32 to vector<2x32xf32>
    %1167 = arith.addf %1166, %1165 : vector<2x32xf32>
    %1168 = arith.divf %1166, %1167 : vector<2x32xf32>
    %1169 = vector.extract_strided_slice %1151 {offsets = [0, 64], sizes = [2, 32], strides = [1, 1]} : vector<2x96xf32> to vector<2x32xf32>
    %1170 = vector.extract_strided_slice %1152 {offsets = [0, 64], sizes = [2, 32], strides = [1, 1]} : vector<2x96xf32> to vector<2x32xf32>
    %1171 = arith.mulf %1160, %1170 : vector<2x32xf32>
    %1172 = arith.addf %1169, %1171 : vector<2x32xf32>
    %1173 = math.tanh %1172 : vector<2x32xf32>
    %cst_252 = arith.constant 1.000000e+00 : f32
    %1174 = vector.broadcast %cst_252 : f32 to vector<2x32xf32>
    %1175 = arith.subf %1174, %1168 : vector<2x32xf32>
    %1176 = arith.mulf %1175, %1173 : vector<2x32xf32>
    %1177 = arith.mulf %1168, %1109 : vector<2x32xf32>
    %1178 = arith.addf %1176, %1177 : vector<2x32xf32>
    %c9 = arith.constant 9 : index
    %c0_253 = arith.constant 0 : index
    %c0_254 = arith.constant 0 : index
    %1179 = vector.load %arg2[%c9, %c0_253, %c0_254] : memref<10x2x32xf32, #tpu.memory_space<vmem>>, vector<1x2x32xf32>
    %1180 = vector.shape_cast %1179 : vector<1x2x32xf32> to vector<2x32xf32>
    %1181 = arith.truncf %1180 : vector<2x32xf32> to vector<2x32xbf16>
    %c9_255 = arith.constant 9 : index
    %c0_256 = arith.constant 0 : index
    %c0_257 = arith.constant 0 : index
    %1182 = vector.load %arg3[%c9_255, %c0_256, %c0_257] : memref<10x2x32xf32, #tpu.memory_space<vmem>>, vector<1x2x32xf32>
    %1183 = vector.shape_cast %1182 : vector<1x2x32xf32> to vector<2x32xf32>
    %1184 = arith.truncf %1183 : vector<2x32xf32> to vector<2x32xbf16>
    %1185 = arith.truncf %1150 : vector<2x32xf32> to vector<2x32xbf16>
    %1186 = arith.truncf %1178 : vector<2x32xf32> to vector<2x32xbf16>
    %1187 = tpu.concatenate %1181, %1184, %1185, %1186 in 1 : vector<2x32xbf16>, vector<2x32xbf16>, vector<2x32xbf16>, vector<2x32xbf16> -> vector<2x128xbf16>
    %c0_258 = arith.constant 0 : index
    %c0_259 = arith.constant 0 : index
    %1188 = vector.load %arg8[%c0_258, %c0_259] : memref<128x384xbf16, #tpu.memory_space<vmem>>, vector<128x384xbf16>
    %cst_260 = arith.constant dense<0.000000e+00> : vector<2x384xf32>
    %1189 = tpu.matmul %1187, %1188, %cst_260 {dimension_numbers = #tpu.dot_dimension_numbers<[1], [0], [0], [1], [0, 0, 1, 1], [], []>} : vector<2x128xbf16>, vector<128x384xbf16>, vector<2x384xf32> -> vector<2x384xf32>
    %1190 = vector.broadcast %555 : vector<1x384xf32> to vector<2x384xf32>
    %1191 = arith.addf %1189, %1190 : vector<2x384xf32>
    %1192 = vector.extract_strided_slice %1191 {offsets = [0, 0], sizes = [2, 96], strides = [1, 1]} : vector<2x384xf32> to vector<2x96xf32>
    %1193 = vector.extract_strided_slice %1191 {offsets = [0, 192], sizes = [2, 96], strides = [1, 1]} : vector<2x384xf32> to vector<2x96xf32>
    %1194 = vector.extract_strided_slice %1192 {offsets = [0, 0], sizes = [2, 32], strides = [1, 1]} : vector<2x96xf32> to vector<2x32xf32>
    %1195 = vector.extract_strided_slice %1193 {offsets = [0, 0], sizes = [2, 32], strides = [1, 1]} : vector<2x96xf32> to vector<2x32xf32>
    %1196 = arith.addf %1194, %1195 : vector<2x32xf32>
    %1197 = arith.negf %1196 : vector<2x32xf32>
    %1198 = math.exp %1197 : vector<2x32xf32>
    %cst_261 = arith.constant 1.000000e+00 : f32
    %1199 = vector.broadcast %cst_261 : f32 to vector<2x32xf32>
    %1200 = arith.addf %1199, %1198 : vector<2x32xf32>
    %1201 = arith.divf %1199, %1200 : vector<2x32xf32>
    %1202 = vector.extract_strided_slice %1192 {offsets = [0, 32], sizes = [2, 32], strides = [1, 1]} : vector<2x96xf32> to vector<2x32xf32>
    %1203 = vector.extract_strided_slice %1193 {offsets = [0, 32], sizes = [2, 32], strides = [1, 1]} : vector<2x96xf32> to vector<2x32xf32>
    %1204 = arith.addf %1202, %1203 : vector<2x32xf32>
    %1205 = arith.negf %1204 : vector<2x32xf32>
    %1206 = math.exp %1205 : vector<2x32xf32>
    %cst_262 = arith.constant 1.000000e+00 : f32
    %1207 = vector.broadcast %cst_262 : f32 to vector<2x32xf32>
    %1208 = arith.addf %1207, %1206 : vector<2x32xf32>
    %1209 = arith.divf %1207, %1208 : vector<2x32xf32>
    %1210 = vector.extract_strided_slice %1192 {offsets = [0, 64], sizes = [2, 32], strides = [1, 1]} : vector<2x96xf32> to vector<2x32xf32>
    %1211 = vector.extract_strided_slice %1193 {offsets = [0, 64], sizes = [2, 32], strides = [1, 1]} : vector<2x96xf32> to vector<2x32xf32>
    %1212 = arith.mulf %1201, %1211 : vector<2x32xf32>
    %1213 = arith.addf %1210, %1212 : vector<2x32xf32>
    %1214 = math.tanh %1213 : vector<2x32xf32>
    %cst_263 = arith.constant 1.000000e+00 : f32
    %1215 = vector.broadcast %cst_263 : f32 to vector<2x32xf32>
    %1216 = arith.subf %1215, %1209 : vector<2x32xf32>
    %1217 = arith.mulf %1216, %1214 : vector<2x32xf32>
    %1218 = arith.mulf %1209, %1150 : vector<2x32xf32>
    %1219 = arith.addf %1217, %1218 : vector<2x32xf32>
    %1220 = vector.extract_strided_slice %1191 {offsets = [0, 96], sizes = [2, 96], strides = [1, 1]} : vector<2x384xf32> to vector<2x96xf32>
    %1221 = vector.extract_strided_slice %1191 {offsets = [0, 288], sizes = [2, 96], strides = [1, 1]} : vector<2x384xf32> to vector<2x96xf32>
    %1222 = vector.extract_strided_slice %1220 {offsets = [0, 0], sizes = [2, 32], strides = [1, 1]} : vector<2x96xf32> to vector<2x32xf32>
    %1223 = vector.extract_strided_slice %1221 {offsets = [0, 0], sizes = [2, 32], strides = [1, 1]} : vector<2x96xf32> to vector<2x32xf32>
    %1224 = arith.addf %1222, %1223 : vector<2x32xf32>
    %1225 = arith.negf %1224 : vector<2x32xf32>
    %1226 = math.exp %1225 : vector<2x32xf32>
    %cst_264 = arith.constant 1.000000e+00 : f32
    %1227 = vector.broadcast %cst_264 : f32 to vector<2x32xf32>
    %1228 = arith.addf %1227, %1226 : vector<2x32xf32>
    %1229 = arith.divf %1227, %1228 : vector<2x32xf32>
    %1230 = vector.extract_strided_slice %1220 {offsets = [0, 32], sizes = [2, 32], strides = [1, 1]} : vector<2x96xf32> to vector<2x32xf32>
    %1231 = vector.extract_strided_slice %1221 {offsets = [0, 32], sizes = [2, 32], strides = [1, 1]} : vector<2x96xf32> to vector<2x32xf32>
    %1232 = arith.addf %1230, %1231 : vector<2x32xf32>
    %1233 = arith.negf %1232 : vector<2x32xf32>
    %1234 = math.exp %1233 : vector<2x32xf32>
    %cst_265 = arith.constant 1.000000e+00 : f32
    %1235 = vector.broadcast %cst_265 : f32 to vector<2x32xf32>
    %1236 = arith.addf %1235, %1234 : vector<2x32xf32>
    %1237 = arith.divf %1235, %1236 : vector<2x32xf32>
    %1238 = vector.extract_strided_slice %1220 {offsets = [0, 64], sizes = [2, 32], strides = [1, 1]} : vector<2x96xf32> to vector<2x32xf32>
    %1239 = vector.extract_strided_slice %1221 {offsets = [0, 64], sizes = [2, 32], strides = [1, 1]} : vector<2x96xf32> to vector<2x32xf32>
    %1240 = arith.mulf %1229, %1239 : vector<2x32xf32>
    %1241 = arith.addf %1238, %1240 : vector<2x32xf32>
    %1242 = math.tanh %1241 : vector<2x32xf32>
    %cst_266 = arith.constant 1.000000e+00 : f32
    %1243 = vector.broadcast %cst_266 : f32 to vector<2x32xf32>
    %1244 = arith.subf %1243, %1237 : vector<2x32xf32>
    %1245 = arith.mulf %1244, %1242 : vector<2x32xf32>
    %1246 = arith.mulf %1237, %1178 : vector<2x32xf32>
    %1247 = arith.addf %1245, %1246 : vector<2x32xf32>
    %1248 = vector.extract_strided_slice %43 {offsets = [2, 0], sizes = [8, 32], strides = [1, 1]} : vector<10x32xf32> to vector<8x32xf32>
    %1249 = vector.extract_strided_slice %416 {offsets = [2, 0], sizes = [8, 32], strides = [1, 1]} : vector<10x32xf32> to vector<8x32xf32>
    %1250 = tpu.concatenate %1248, %1249 in 1 : vector<8x32xf32>, vector<8x32xf32> -> vector<8x64xf32>
    %1251 = vector.extract_strided_slice %112 {offsets = [2, 0], sizes = [8, 32], strides = [1, 1]} : vector<10x32xf32> to vector<8x32xf32>
    %1252 = vector.extract_strided_slice %347 {offsets = [2, 0], sizes = [8, 32], strides = [1, 1]} : vector<10x32xf32> to vector<8x32xf32>
    %1253 = tpu.concatenate %1251, %1252 in 1 : vector<8x32xf32>, vector<8x32xf32> -> vector<8x64xf32>
    %1254 = vector.extract_strided_slice %181 {offsets = [2, 0], sizes = [8, 32], strides = [1, 1]} : vector<10x32xf32> to vector<8x32xf32>
    %1255 = vector.extract_strided_slice %278 {offsets = [2, 0], sizes = [8, 32], strides = [1, 1]} : vector<10x32xf32> to vector<8x32xf32>
    %1256 = tpu.concatenate %1254, %1255 in 1 : vector<8x32xf32>, vector<8x32xf32> -> vector<8x64xf32>
    %1257 = vector.extract_strided_slice %250 {offsets = [2, 0], sizes = [8, 32], strides = [1, 1]} : vector<10x32xf32> to vector<8x32xf32>
    %1258 = vector.extract_strided_slice %209 {offsets = [2, 0], sizes = [8, 32], strides = [1, 1]} : vector<10x32xf32> to vector<8x32xf32>
    %1259 = tpu.concatenate %1257, %1258 in 1 : vector<8x32xf32>, vector<8x32xf32> -> vector<8x64xf32>
    %1260 = vector.extract_strided_slice %319 {offsets = [2, 0], sizes = [8, 32], strides = [1, 1]} : vector<10x32xf32> to vector<8x32xf32>
    %1261 = vector.extract_strided_slice %140 {offsets = [2, 0], sizes = [8, 32], strides = [1, 1]} : vector<10x32xf32> to vector<8x32xf32>
    %1262 = tpu.concatenate %1260, %1261 in 1 : vector<8x32xf32>, vector<8x32xf32> -> vector<8x64xf32>
    %1263 = vector.extract_strided_slice %388 {offsets = [2, 0], sizes = [8, 32], strides = [1, 1]} : vector<10x32xf32> to vector<8x32xf32>
    %1264 = vector.extract_strided_slice %71 {offsets = [2, 0], sizes = [8, 32], strides = [1, 1]} : vector<10x32xf32> to vector<8x32xf32>
    %1265 = tpu.concatenate %1263, %1264 in 1 : vector<8x32xf32>, vector<8x32xf32> -> vector<8x64xf32>
    %1266 = tpu.concatenate %1250, %1253, %1256, %1259, %1262, %1265 in 0 : vector<8x64xf32>, vector<8x64xf32>, vector<8x64xf32>, vector<8x64xf32>, vector<8x64xf32>, vector<8x64xf32> -> vector<48x64xf32>
    %1267 = arith.truncf %1266 : vector<48x64xf32> to vector<48x64xbf16>
    %c0_267 = arith.constant 0 : index
    %c0_268 = arith.constant 0 : index
    %1268 = vector.load %arg10[%c0_267, %c0_268] : memref<64x32xbf16, #tpu.memory_space<vmem>>, vector<64x32xbf16>
    %cst_269 = arith.constant dense<0.000000e+00> : vector<48x32xf32>
    %1269 = tpu.matmul %1267, %1268, %cst_269 {dimension_numbers = #tpu.dot_dimension_numbers<[1], [0], [0], [1], [0, 0, 1, 1], [], []>} : vector<48x64xbf16>, vector<64x32xbf16>, vector<48x32xf32> -> vector<48x32xf32>
    %c0_270 = arith.constant 0 : index
    %c0_271 = arith.constant 0 : index
    %1270 = vector.load %arg11[%c0_270, %c0_271] : memref<1x32xf32, #tpu.memory_space<vmem>>, vector<1x32xf32>
    %1271 = vector.broadcast %1270 : vector<1x32xf32> to vector<48x32xf32>
    %1272 = arith.addf %1269, %1271 : vector<48x32xf32>
    %cst_272 = arith.constant 0.000000e+00 : f32
    %1273 = vector.broadcast %cst_272 : f32 to vector<48x32xf32>
    %1274 = arith.maximumf %1272, %1273 : vector<48x32xf32>
    %c0_273 = arith.constant 0 : index
    %c0_274 = arith.constant 0 : index
    %1275 = vector.load %arg12[%c0_273, %c0_274] : memref<1x32xf32, #tpu.memory_space<vmem>>, vector<1x32xf32>
    %1276 = vector.broadcast %1275 : vector<1x32xf32> to vector<48x32xf32>
    %1277 = arith.mulf %1274, %1276 : vector<48x32xf32>
    %cst_275 = arith.constant dense<0.000000e+00> : vector<48xf32>
    %1278 = vector.multi_reduction <add>, %1277, %cst_275 [1] : vector<48x32xf32> to vector<48xf32>
    %1279 = vector.shape_cast %1278 : vector<48xf32> to vector<48x1xf32>
    %c0_276 = arith.constant 0 : index
    %c0_277 = arith.constant 0 : index
    %1280 = vector.load %arg13[%c0_276, %c0_277] : memref<1x1xf32, #tpu.memory_space<vmem>>, vector<1x1xf32>
    %1281 = vector.broadcast %1280 : vector<1x1xf32> to vector<48x1xf32>
    %1282 = arith.addf %1279, %1281 : vector<48x1xf32>
    %1283 = vector.extract_strided_slice %1282 {offsets = [0, 0], sizes = [8, 1], strides = [1, 1]} : vector<48x1xf32> to vector<8x1xf32>
    %1284 = vector.extract_strided_slice %1282 {offsets = [8, 0], sizes = [8, 1], strides = [1, 1]} : vector<48x1xf32> to vector<8x1xf32>
    %1285 = vector.extract_strided_slice %1282 {offsets = [16, 0], sizes = [8, 1], strides = [1, 1]} : vector<48x1xf32> to vector<8x1xf32>
    %1286 = vector.extract_strided_slice %1282 {offsets = [24, 0], sizes = [8, 1], strides = [1, 1]} : vector<48x1xf32> to vector<8x1xf32>
    %1287 = vector.extract_strided_slice %1282 {offsets = [32, 0], sizes = [8, 1], strides = [1, 1]} : vector<48x1xf32> to vector<8x1xf32>
    %1288 = vector.extract_strided_slice %1282 {offsets = [40, 0], sizes = [8, 1], strides = [1, 1]} : vector<48x1xf32> to vector<8x1xf32>
    %1289 = tpu.concatenate %1283, %1284, %1285, %1286, %1287, %1288 in 1 : vector<8x1xf32>, vector<8x1xf32>, vector<8x1xf32>, vector<8x1xf32>, vector<8x1xf32>, vector<8x1xf32> -> vector<8x6xf32>
    %c0_278 = arith.constant 0 : index
    %c0_279 = arith.constant 0 : index
    %1290 = vector.load %arg4[%c0_278, %c0_279] : memref<8x6xf32, #tpu.memory_space<vmem>>, vector<8x6xf32>
    %cst_280 = arith.constant 5.000000e-01 : f32
    %1291 = vector.broadcast %cst_280 : f32 to vector<8x6xf32>
    %1292 = arith.cmpf ogt, %1290, %1291 : vector<8x6xf32>
    %cst_281 = arith.constant -1.000000e+09 : f32
    %1293 = vector.broadcast %cst_281 : f32 to vector<8x6xf32>
    %1294 = arith.select %1292, %1293, %1289 : vector<8x6xi1>, vector<8x6xf32>
    %cst_282 = arith.constant dense<0xFF800000> : vector<8xf32>
    %1295 = vector.multi_reduction <maximumf>, %1294, %cst_282 [1] : vector<8x6xf32> to vector<8xf32>
    %1296 = vector.shape_cast %1295 : vector<8xf32> to vector<8x1xf32>
    %1297 = vector.broadcast %1296 : vector<8x1xf32> to vector<8x6xf32>
    %1298 = arith.subf %1294, %1297 : vector<8x6xf32>
    %1299 = math.exp %1298 : vector<8x6xf32>
    %cst_283 = arith.constant dense<0.000000e+00> : vector<8xf32>
    %1300 = vector.multi_reduction <add>, %1299, %cst_283 [1] : vector<8x6xf32> to vector<8xf32>
    %1301 = vector.shape_cast %1300 : vector<8xf32> to vector<8x1xf32>
    %1302 = vector.broadcast %1301 : vector<8x1xf32> to vector<8x6xf32>
    %1303 = arith.divf %1299, %1302 : vector<8x6xf32>
    %cst_284 = arith.constant 0.000000e+00 : f32
    %1304 = vector.broadcast %cst_284 : f32 to vector<8x64xf32>
    %1305 = vector.extract_strided_slice %1303 {offsets = [0, 0], sizes = [8, 1], strides = [1, 1]} : vector<8x6xf32> to vector<8x1xf32>
    %1306 = vector.broadcast %1305 : vector<8x1xf32> to vector<8x64xf32>
    %1307 = arith.mulf %1306, %1250 : vector<8x64xf32>
    %1308 = arith.addf %1304, %1307 : vector<8x64xf32>
    %1309 = vector.extract_strided_slice %1303 {offsets = [0, 1], sizes = [8, 1], strides = [1, 1]} : vector<8x6xf32> to vector<8x1xf32>
    %1310 = vector.broadcast %1309 : vector<8x1xf32> to vector<8x64xf32>
    %1311 = arith.mulf %1310, %1253 : vector<8x64xf32>
    %1312 = arith.addf %1308, %1311 : vector<8x64xf32>
    %1313 = vector.extract_strided_slice %1303 {offsets = [0, 2], sizes = [8, 1], strides = [1, 1]} : vector<8x6xf32> to vector<8x1xf32>
    %1314 = vector.broadcast %1313 : vector<8x1xf32> to vector<8x64xf32>
    %1315 = arith.mulf %1314, %1256 : vector<8x64xf32>
    %1316 = arith.addf %1312, %1315 : vector<8x64xf32>
    %1317 = vector.extract_strided_slice %1303 {offsets = [0, 3], sizes = [8, 1], strides = [1, 1]} : vector<8x6xf32> to vector<8x1xf32>
    %1318 = vector.broadcast %1317 : vector<8x1xf32> to vector<8x64xf32>
    %1319 = arith.mulf %1318, %1259 : vector<8x64xf32>
    %1320 = arith.addf %1316, %1319 : vector<8x64xf32>
    %1321 = vector.extract_strided_slice %1303 {offsets = [0, 4], sizes = [8, 1], strides = [1, 1]} : vector<8x6xf32> to vector<8x1xf32>
    %1322 = vector.broadcast %1321 : vector<8x1xf32> to vector<8x64xf32>
    %1323 = arith.mulf %1322, %1262 : vector<8x64xf32>
    %1324 = arith.addf %1320, %1323 : vector<8x64xf32>
    %1325 = vector.extract_strided_slice %1303 {offsets = [0, 5], sizes = [8, 1], strides = [1, 1]} : vector<8x6xf32> to vector<8x1xf32>
    %1326 = vector.broadcast %1325 : vector<8x1xf32> to vector<8x64xf32>
    %1327 = arith.mulf %1326, %1265 : vector<8x64xf32>
    %1328 = arith.addf %1324, %1327 : vector<8x64xf32>
    %1329 = arith.truncf %1328 : vector<8x64xf32> to vector<8x64xbf16>
    %c0_285 = arith.constant 0 : index
    %c0_286 = arith.constant 0 : index
    %1330 = vector.load %arg14[%c0_285, %c0_286] : memref<64x32xbf16, #tpu.memory_space<vmem>>, vector<64x32xbf16>
    %cst_287 = arith.constant dense<0.000000e+00> : vector<8x32xf32>
    %1331 = tpu.matmul %1329, %1330, %cst_287 {dimension_numbers = #tpu.dot_dimension_numbers<[1], [0], [0], [1], [0, 0, 1, 1], [], []>} : vector<8x64xbf16>, vector<64x32xbf16>, vector<8x32xf32> -> vector<8x32xf32>
    %c0_288 = arith.constant 0 : index
    %c0_289 = arith.constant 0 : index
    %1332 = vector.load %arg15[%c0_288, %c0_289] : memref<1x32xf32, #tpu.memory_space<vmem>>, vector<1x32xf32>
    %1333 = vector.broadcast %1332 : vector<1x32xf32> to vector<8x32xf32>
    %1334 = arith.addf %1331, %1333 : vector<8x32xf32>
    %cst_290 = arith.constant 0.000000e+00 : f32
    %1335 = vector.broadcast %cst_290 : f32 to vector<2x32xf32>
    %1336 = vector.extract_strided_slice %43 {offsets = [0, 0], sizes = [2, 32], strides = [1, 1]} : vector<10x32xf32> to vector<2x32xf32>
    %1337 = vector.extract_strided_slice %554 {offsets = [0, 0], sizes = [2, 32], strides = [1, 1]} : vector<10x32xf32> to vector<2x32xf32>
    %1338 = tpu.concatenate %1336, %1337 in 1 : vector<2x32xf32>, vector<2x32xf32> -> vector<2x64xf32>
    %1339 = arith.truncf %1338 : vector<2x64xf32> to vector<2x64xbf16>
    %c0_291 = arith.constant 0 : index
    %c0_292 = arith.constant 0 : index
    %1340 = vector.load %arg18[%c0_291, %c0_292] : memref<64x32xbf16, #tpu.memory_space<vmem>>, vector<64x32xbf16>
    %cst_293 = arith.constant dense<0.000000e+00> : vector<2x32xf32>
    %1341 = tpu.matmul %1339, %1340, %cst_293 {dimension_numbers = #tpu.dot_dimension_numbers<[1], [0], [0], [1], [0, 0, 1, 1], [], []>} : vector<2x64xbf16>, vector<64x32xbf16>, vector<2x32xf32> -> vector<2x32xf32>
    %c0_294 = arith.constant 0 : index
    %c0_295 = arith.constant 0 : index
    %1342 = vector.load %arg19[%c0_294, %c0_295] : memref<1x32xf32, #tpu.memory_space<vmem>>, vector<1x32xf32>
    %1343 = vector.broadcast %1342 : vector<1x32xf32> to vector<2x32xf32>
    %1344 = arith.addf %1341, %1343 : vector<2x32xf32>
    %cst_296 = arith.constant 0.000000e+00 : f32
    %1345 = vector.broadcast %cst_296 : f32 to vector<2x32xf32>
    %1346 = arith.maximumf %1344, %1345 : vector<2x32xf32>
    %1347 = arith.addf %1335, %1346 : vector<2x32xf32>
    %1348 = vector.extract_strided_slice %112 {offsets = [0, 0], sizes = [2, 32], strides = [1, 1]} : vector<10x32xf32> to vector<2x32xf32>
    %1349 = vector.extract_strided_slice %485 {offsets = [0, 0], sizes = [2, 32], strides = [1, 1]} : vector<10x32xf32> to vector<2x32xf32>
    %1350 = tpu.concatenate %1348, %1349 in 1 : vector<2x32xf32>, vector<2x32xf32> -> vector<2x64xf32>
    %1351 = arith.truncf %1350 : vector<2x64xf32> to vector<2x64xbf16>
    %c0_297 = arith.constant 0 : index
    %c0_298 = arith.constant 0 : index
    %1352 = vector.load %arg18[%c0_297, %c0_298] : memref<64x32xbf16, #tpu.memory_space<vmem>>, vector<64x32xbf16>
    %cst_299 = arith.constant dense<0.000000e+00> : vector<2x32xf32>
    %1353 = tpu.matmul %1351, %1352, %cst_299 {dimension_numbers = #tpu.dot_dimension_numbers<[1], [0], [0], [1], [0, 0, 1, 1], [], []>} : vector<2x64xbf16>, vector<64x32xbf16>, vector<2x32xf32> -> vector<2x32xf32>
    %c0_300 = arith.constant 0 : index
    %c0_301 = arith.constant 0 : index
    %1354 = vector.load %arg19[%c0_300, %c0_301] : memref<1x32xf32, #tpu.memory_space<vmem>>, vector<1x32xf32>
    %1355 = vector.broadcast %1354 : vector<1x32xf32> to vector<2x32xf32>
    %1356 = arith.addf %1353, %1355 : vector<2x32xf32>
    %cst_302 = arith.constant 0.000000e+00 : f32
    %1357 = vector.broadcast %cst_302 : f32 to vector<2x32xf32>
    %1358 = arith.maximumf %1356, %1357 : vector<2x32xf32>
    %1359 = arith.addf %1347, %1358 : vector<2x32xf32>
    %1360 = vector.extract_strided_slice %181 {offsets = [0, 0], sizes = [2, 32], strides = [1, 1]} : vector<10x32xf32> to vector<2x32xf32>
    %1361 = vector.extract_strided_slice %416 {offsets = [0, 0], sizes = [2, 32], strides = [1, 1]} : vector<10x32xf32> to vector<2x32xf32>
    %1362 = tpu.concatenate %1360, %1361 in 1 : vector<2x32xf32>, vector<2x32xf32> -> vector<2x64xf32>
    %1363 = arith.truncf %1362 : vector<2x64xf32> to vector<2x64xbf16>
    %c0_303 = arith.constant 0 : index
    %c0_304 = arith.constant 0 : index
    %1364 = vector.load %arg18[%c0_303, %c0_304] : memref<64x32xbf16, #tpu.memory_space<vmem>>, vector<64x32xbf16>
    %cst_305 = arith.constant dense<0.000000e+00> : vector<2x32xf32>
    %1365 = tpu.matmul %1363, %1364, %cst_305 {dimension_numbers = #tpu.dot_dimension_numbers<[1], [0], [0], [1], [0, 0, 1, 1], [], []>} : vector<2x64xbf16>, vector<64x32xbf16>, vector<2x32xf32> -> vector<2x32xf32>
    %c0_306 = arith.constant 0 : index
    %c0_307 = arith.constant 0 : index
    %1366 = vector.load %arg19[%c0_306, %c0_307] : memref<1x32xf32, #tpu.memory_space<vmem>>, vector<1x32xf32>
    %1367 = vector.broadcast %1366 : vector<1x32xf32> to vector<2x32xf32>
    %1368 = arith.addf %1365, %1367 : vector<2x32xf32>
    %cst_308 = arith.constant 0.000000e+00 : f32
    %1369 = vector.broadcast %cst_308 : f32 to vector<2x32xf32>
    %1370 = arith.maximumf %1368, %1369 : vector<2x32xf32>
    %1371 = arith.addf %1359, %1370 : vector<2x32xf32>
    %1372 = vector.extract_strided_slice %250 {offsets = [0, 0], sizes = [2, 32], strides = [1, 1]} : vector<10x32xf32> to vector<2x32xf32>
    %1373 = vector.extract_strided_slice %347 {offsets = [0, 0], sizes = [2, 32], strides = [1, 1]} : vector<10x32xf32> to vector<2x32xf32>
    %1374 = tpu.concatenate %1372, %1373 in 1 : vector<2x32xf32>, vector<2x32xf32> -> vector<2x64xf32>
    %1375 = arith.truncf %1374 : vector<2x64xf32> to vector<2x64xbf16>
    %c0_309 = arith.constant 0 : index
    %c0_310 = arith.constant 0 : index
    %1376 = vector.load %arg18[%c0_309, %c0_310] : memref<64x32xbf16, #tpu.memory_space<vmem>>, vector<64x32xbf16>
    %cst_311 = arith.constant dense<0.000000e+00> : vector<2x32xf32>
    %1377 = tpu.matmul %1375, %1376, %cst_311 {dimension_numbers = #tpu.dot_dimension_numbers<[1], [0], [0], [1], [0, 0, 1, 1], [], []>} : vector<2x64xbf16>, vector<64x32xbf16>, vector<2x32xf32> -> vector<2x32xf32>
    %c0_312 = arith.constant 0 : index
    %c0_313 = arith.constant 0 : index
    %1378 = vector.load %arg19[%c0_312, %c0_313] : memref<1x32xf32, #tpu.memory_space<vmem>>, vector<1x32xf32>
    %1379 = vector.broadcast %1378 : vector<1x32xf32> to vector<2x32xf32>
    %1380 = arith.addf %1377, %1379 : vector<2x32xf32>
    %cst_314 = arith.constant 0.000000e+00 : f32
    %1381 = vector.broadcast %cst_314 : f32 to vector<2x32xf32>
    %1382 = arith.maximumf %1380, %1381 : vector<2x32xf32>
    %1383 = arith.addf %1371, %1382 : vector<2x32xf32>
    %1384 = vector.extract_strided_slice %319 {offsets = [0, 0], sizes = [2, 32], strides = [1, 1]} : vector<10x32xf32> to vector<2x32xf32>
    %1385 = vector.extract_strided_slice %278 {offsets = [0, 0], sizes = [2, 32], strides = [1, 1]} : vector<10x32xf32> to vector<2x32xf32>
    %1386 = tpu.concatenate %1384, %1385 in 1 : vector<2x32xf32>, vector<2x32xf32> -> vector<2x64xf32>
    %1387 = arith.truncf %1386 : vector<2x64xf32> to vector<2x64xbf16>
    %c0_315 = arith.constant 0 : index
    %c0_316 = arith.constant 0 : index
    %1388 = vector.load %arg18[%c0_315, %c0_316] : memref<64x32xbf16, #tpu.memory_space<vmem>>, vector<64x32xbf16>
    %cst_317 = arith.constant dense<0.000000e+00> : vector<2x32xf32>
    %1389 = tpu.matmul %1387, %1388, %cst_317 {dimension_numbers = #tpu.dot_dimension_numbers<[1], [0], [0], [1], [0, 0, 1, 1], [], []>} : vector<2x64xbf16>, vector<64x32xbf16>, vector<2x32xf32> -> vector<2x32xf32>
    %c0_318 = arith.constant 0 : index
    %c0_319 = arith.constant 0 : index
    %1390 = vector.load %arg19[%c0_318, %c0_319] : memref<1x32xf32, #tpu.memory_space<vmem>>, vector<1x32xf32>
    %1391 = vector.broadcast %1390 : vector<1x32xf32> to vector<2x32xf32>
    %1392 = arith.addf %1389, %1391 : vector<2x32xf32>
    %cst_320 = arith.constant 0.000000e+00 : f32
    %1393 = vector.broadcast %cst_320 : f32 to vector<2x32xf32>
    %1394 = arith.maximumf %1392, %1393 : vector<2x32xf32>
    %1395 = arith.addf %1383, %1394 : vector<2x32xf32>
    %1396 = vector.extract_strided_slice %388 {offsets = [0, 0], sizes = [2, 32], strides = [1, 1]} : vector<10x32xf32> to vector<2x32xf32>
    %1397 = vector.extract_strided_slice %209 {offsets = [0, 0], sizes = [2, 32], strides = [1, 1]} : vector<10x32xf32> to vector<2x32xf32>
    %1398 = tpu.concatenate %1396, %1397 in 1 : vector<2x32xf32>, vector<2x32xf32> -> vector<2x64xf32>
    %1399 = arith.truncf %1398 : vector<2x64xf32> to vector<2x64xbf16>
    %c0_321 = arith.constant 0 : index
    %c0_322 = arith.constant 0 : index
    %1400 = vector.load %arg18[%c0_321, %c0_322] : memref<64x32xbf16, #tpu.memory_space<vmem>>, vector<64x32xbf16>
    %cst_323 = arith.constant dense<0.000000e+00> : vector<2x32xf32>
    %1401 = tpu.matmul %1399, %1400, %cst_323 {dimension_numbers = #tpu.dot_dimension_numbers<[1], [0], [0], [1], [0, 0, 1, 1], [], []>} : vector<2x64xbf16>, vector<64x32xbf16>, vector<2x32xf32> -> vector<2x32xf32>
    %c0_324 = arith.constant 0 : index
    %c0_325 = arith.constant 0 : index
    %1402 = vector.load %arg19[%c0_324, %c0_325] : memref<1x32xf32, #tpu.memory_space<vmem>>, vector<1x32xf32>
    %1403 = vector.broadcast %1402 : vector<1x32xf32> to vector<2x32xf32>
    %1404 = arith.addf %1401, %1403 : vector<2x32xf32>
    %cst_326 = arith.constant 0.000000e+00 : f32
    %1405 = vector.broadcast %cst_326 : f32 to vector<2x32xf32>
    %1406 = arith.maximumf %1404, %1405 : vector<2x32xf32>
    %1407 = arith.addf %1395, %1406 : vector<2x32xf32>
    %1408 = vector.extract_strided_slice %457 {offsets = [0, 0], sizes = [2, 32], strides = [1, 1]} : vector<10x32xf32> to vector<2x32xf32>
    %1409 = vector.extract_strided_slice %140 {offsets = [0, 0], sizes = [2, 32], strides = [1, 1]} : vector<10x32xf32> to vector<2x32xf32>
    %1410 = tpu.concatenate %1408, %1409 in 1 : vector<2x32xf32>, vector<2x32xf32> -> vector<2x64xf32>
    %1411 = arith.truncf %1410 : vector<2x64xf32> to vector<2x64xbf16>
    %c0_327 = arith.constant 0 : index
    %c0_328 = arith.constant 0 : index
    %1412 = vector.load %arg18[%c0_327, %c0_328] : memref<64x32xbf16, #tpu.memory_space<vmem>>, vector<64x32xbf16>
    %cst_329 = arith.constant dense<0.000000e+00> : vector<2x32xf32>
    %1413 = tpu.matmul %1411, %1412, %cst_329 {dimension_numbers = #tpu.dot_dimension_numbers<[1], [0], [0], [1], [0, 0, 1, 1], [], []>} : vector<2x64xbf16>, vector<64x32xbf16>, vector<2x32xf32> -> vector<2x32xf32>
    %c0_330 = arith.constant 0 : index
    %c0_331 = arith.constant 0 : index
    %1414 = vector.load %arg19[%c0_330, %c0_331] : memref<1x32xf32, #tpu.memory_space<vmem>>, vector<1x32xf32>
    %1415 = vector.broadcast %1414 : vector<1x32xf32> to vector<2x32xf32>
    %1416 = arith.addf %1413, %1415 : vector<2x32xf32>
    %cst_332 = arith.constant 0.000000e+00 : f32
    %1417 = vector.broadcast %cst_332 : f32 to vector<2x32xf32>
    %1418 = arith.maximumf %1416, %1417 : vector<2x32xf32>
    %1419 = arith.addf %1407, %1418 : vector<2x32xf32>
    %1420 = vector.extract_strided_slice %526 {offsets = [0, 0], sizes = [2, 32], strides = [1, 1]} : vector<10x32xf32> to vector<2x32xf32>
    %1421 = vector.extract_strided_slice %71 {offsets = [0, 0], sizes = [2, 32], strides = [1, 1]} : vector<10x32xf32> to vector<2x32xf32>
    %1422 = tpu.concatenate %1420, %1421 in 1 : vector<2x32xf32>, vector<2x32xf32> -> vector<2x64xf32>
    %1423 = arith.truncf %1422 : vector<2x64xf32> to vector<2x64xbf16>
    %c0_333 = arith.constant 0 : index
    %c0_334 = arith.constant 0 : index
    %1424 = vector.load %arg18[%c0_333, %c0_334] : memref<64x32xbf16, #tpu.memory_space<vmem>>, vector<64x32xbf16>
    %cst_335 = arith.constant dense<0.000000e+00> : vector<2x32xf32>
    %1425 = tpu.matmul %1423, %1424, %cst_335 {dimension_numbers = #tpu.dot_dimension_numbers<[1], [0], [0], [1], [0, 0, 1, 1], [], []>} : vector<2x64xbf16>, vector<64x32xbf16>, vector<2x32xf32> -> vector<2x32xf32>
    %c0_336 = arith.constant 0 : index
    %c0_337 = arith.constant 0 : index
    %1426 = vector.load %arg19[%c0_336, %c0_337] : memref<1x32xf32, #tpu.memory_space<vmem>>, vector<1x32xf32>
    %1427 = vector.broadcast %1426 : vector<1x32xf32> to vector<2x32xf32>
    %1428 = arith.addf %1425, %1427 : vector<2x32xf32>
    %cst_338 = arith.constant 0.000000e+00 : f32
    %1429 = vector.broadcast %cst_338 : f32 to vector<2x32xf32>
    %1430 = arith.maximumf %1428, %1429 : vector<2x32xf32>
    %1431 = arith.addf %1419, %1430 : vector<2x32xf32>
    %cst_339 = arith.constant 0.000000e+00 : f32
    %1432 = vector.broadcast %cst_339 : f32 to vector<2x64xf32>
    %1433 = tpu.concatenate %598, %1247 in 1 : vector<2x32xf32>, vector<2x32xf32> -> vector<2x64xf32>
    %1434 = arith.addf %1432, %1433 : vector<2x64xf32>
    %1435 = tpu.concatenate %667, %1178 in 1 : vector<2x32xf32>, vector<2x32xf32> -> vector<2x64xf32>
    %1436 = arith.addf %1434, %1435 : vector<2x64xf32>
    %1437 = tpu.concatenate %736, %1109 in 1 : vector<2x32xf32>, vector<2x32xf32> -> vector<2x64xf32>
    %1438 = arith.addf %1436, %1437 : vector<2x64xf32>
    %1439 = tpu.concatenate %805, %1040 in 1 : vector<2x32xf32>, vector<2x32xf32> -> vector<2x64xf32>
    %1440 = arith.addf %1438, %1439 : vector<2x64xf32>
    %1441 = tpu.concatenate %874, %971 in 1 : vector<2x32xf32>, vector<2x32xf32> -> vector<2x64xf32>
    %1442 = arith.addf %1440, %1441 : vector<2x64xf32>
    %1443 = tpu.concatenate %943, %902 in 1 : vector<2x32xf32>, vector<2x32xf32> -> vector<2x64xf32>
    %1444 = arith.addf %1442, %1443 : vector<2x64xf32>
    %1445 = tpu.concatenate %1012, %833 in 1 : vector<2x32xf32>, vector<2x32xf32> -> vector<2x64xf32>
    %1446 = arith.addf %1444, %1445 : vector<2x64xf32>
    %1447 = tpu.concatenate %1081, %764 in 1 : vector<2x32xf32>, vector<2x32xf32> -> vector<2x64xf32>
    %1448 = arith.addf %1446, %1447 : vector<2x64xf32>
    %1449 = tpu.concatenate %1150, %695 in 1 : vector<2x32xf32>, vector<2x32xf32> -> vector<2x64xf32>
    %1450 = arith.addf %1448, %1449 : vector<2x64xf32>
    %1451 = tpu.concatenate %1219, %626 in 1 : vector<2x32xf32>, vector<2x32xf32> -> vector<2x64xf32>
    %1452 = arith.addf %1450, %1451 : vector<2x64xf32>
    %cst_340 = arith.constant 1.000000e-01 : f32
    %1453 = vector.broadcast %cst_340 : f32 to vector<2x64xf32>
    %1454 = arith.mulf %1452, %1453 : vector<2x64xf32>
    %1455 = arith.truncf %1454 : vector<2x64xf32> to vector<2x64xbf16>
    %c0_341 = arith.constant 0 : index
    %c0_342 = arith.constant 0 : index
    %1456 = vector.load %arg22[%c0_341, %c0_342] : memref<64x32xbf16, #tpu.memory_space<vmem>>, vector<64x32xbf16>
    %cst_343 = arith.constant dense<0.000000e+00> : vector<2x32xf32>
    %1457 = tpu.matmul %1455, %1456, %cst_343 {dimension_numbers = #tpu.dot_dimension_numbers<[1], [0], [0], [1], [0, 0, 1, 1], [], []>} : vector<2x64xbf16>, vector<64x32xbf16>, vector<2x32xf32> -> vector<2x32xf32>
    %c0_344 = arith.constant 0 : index
    %c0_345 = arith.constant 0 : index
    %1458 = vector.load %arg23[%c0_344, %c0_345] : memref<1x32xf32, #tpu.memory_space<vmem>>, vector<1x32xf32>
    %1459 = vector.broadcast %1458 : vector<1x32xf32> to vector<2x32xf32>
    %1460 = arith.addf %1457, %1459 : vector<2x32xf32>
    %c0_346 = arith.constant 0 : index
    %c0_347 = arith.constant 0 : index
    %1461 = vector.load %arg5[%c0_346, %c0_347] : memref<2x768xf32, #tpu.memory_space<vmem>>, vector<2x768xf32>
    %1462 = arith.truncf %1461 : vector<2x768xf32> to vector<2x768xbf16>
    %c0_348 = arith.constant 0 : index
    %c0_349 = arith.constant 0 : index
    %1463 = vector.load %arg16[%c0_348, %c0_349] : memref<768x32xbf16, #tpu.memory_space<vmem>>, vector<768x32xbf16>
    %cst_350 = arith.constant dense<0.000000e+00> : vector<2x32xf32>
    %1464 = tpu.matmul %1462, %1463, %cst_350 {dimension_numbers = #tpu.dot_dimension_numbers<[1], [0], [0], [1], [0, 0, 1, 1], [], []>} : vector<2x768xbf16>, vector<768x32xbf16>, vector<2x32xf32> -> vector<2x32xf32>
    %c0_351 = arith.constant 0 : index
    %c0_352 = arith.constant 0 : index
    %1465 = vector.load %arg17[%c0_351, %c0_352] : memref<1x32xf32, #tpu.memory_space<vmem>>, vector<1x32xf32>
    %1466 = vector.broadcast %1465 : vector<1x32xf32> to vector<2x32xf32>
    %1467 = arith.addf %1464, %1466 : vector<2x32xf32>
    %cst_353 = arith.constant 0.000000e+00 : f32
    %1468 = vector.broadcast %cst_353 : f32 to vector<2x32xf32>
    %1469 = arith.maximumf %1467, %1468 : vector<2x32xf32>
    %1470 = arith.truncf %1469 : vector<2x32xf32> to vector<2x32xbf16>
    %c0_354 = arith.constant 0 : index
    %c0_355 = arith.constant 0 : index
    %1471 = vector.load %arg20[%c0_354, %c0_355] : memref<32x32xbf16, #tpu.memory_space<vmem>>, vector<32x32xbf16>
    %cst_356 = arith.constant dense<0.000000e+00> : vector<2x32xf32>
    %1472 = tpu.matmul %1470, %1471, %cst_356 {dimension_numbers = #tpu.dot_dimension_numbers<[1], [0], [0], [1], [0, 0, 1, 1], [], []>} : vector<2x32xbf16>, vector<32x32xbf16>, vector<2x32xf32> -> vector<2x32xf32>
    %c0_357 = arith.constant 0 : index
    %c0_358 = arith.constant 0 : index
    %1473 = vector.load %arg21[%c0_357, %c0_358] : memref<1x32xf32, #tpu.memory_space<vmem>>, vector<1x32xf32>
    %1474 = vector.broadcast %1473 : vector<1x32xf32> to vector<2x32xf32>
    %1475 = arith.addf %1472, %1474 : vector<2x32xf32>
    %1476 = arith.negf %1475 : vector<2x32xf32>
    %1477 = math.exp %1476 : vector<2x32xf32>
    %cst_359 = arith.constant 1.000000e+00 : f32
    %1478 = vector.broadcast %cst_359 : f32 to vector<2x32xf32>
    %1479 = arith.addf %1478, %1477 : vector<2x32xf32>
    %1480 = arith.divf %1478, %1479 : vector<2x32xf32>
    %1481 = arith.negf %1460 : vector<2x32xf32>
    %1482 = math.exp %1481 : vector<2x32xf32>
    %cst_360 = arith.constant 1.000000e+00 : f32
    %1483 = vector.broadcast %cst_360 : f32 to vector<2x32xf32>
    %1484 = arith.addf %1483, %1482 : vector<2x32xf32>
    %1485 = arith.divf %1483, %1484 : vector<2x32xf32>
    %1486 = arith.addf %1480, %1485 : vector<2x32xf32>
    %1487 = arith.mulf %1431, %1486 : vector<2x32xf32>
    %1488 = arith.truncf %1487 : vector<2x32xf32> to vector<2x32xbf16>
    %c0_361 = arith.constant 0 : index
    %c0_362 = arith.constant 0 : index
    %1489 = vector.load %arg24[%c0_361, %c0_362] : memref<32x32xbf16, #tpu.memory_space<vmem>>, vector<32x32xbf16>
    %cst_363 = arith.constant dense<0.000000e+00> : vector<2x32xf32>
    %1490 = tpu.matmul %1488, %1489, %cst_363 {dimension_numbers = #tpu.dot_dimension_numbers<[1], [0], [0], [1], [0, 0, 1, 1], [], []>} : vector<2x32xbf16>, vector<32x32xbf16>, vector<2x32xf32> -> vector<2x32xf32>
    %c0_364 = arith.constant 0 : index
    %c0_365 = arith.constant 0 : index
    %1491 = vector.load %arg25[%c0_364, %c0_365] : memref<1x32xf32, #tpu.memory_space<vmem>>, vector<1x32xf32>
    %1492 = vector.broadcast %1491 : vector<1x32xf32> to vector<2x32xf32>
    %1493 = arith.addf %1490, %1492 : vector<2x32xf32>
    %cst_366 = arith.constant 0.000000e+00 : f32
    %1494 = vector.broadcast %cst_366 : f32 to vector<2x32xf32>
    %1495 = arith.maximumf %1493, %1494 : vector<2x32xf32>
    %1496 = vector.extract_strided_slice %1495 {offsets = [0, 0], sizes = [1, 32], strides = [1, 1]} : vector<2x32xf32> to vector<1x32xf32>
    %1497 = vector.extract_strided_slice %1495 {offsets = [0, 0], sizes = [1, 32], strides = [1, 1]} : vector<2x32xf32> to vector<1x32xf32>
    %1498 = vector.extract_strided_slice %1495 {offsets = [0, 0], sizes = [1, 32], strides = [1, 1]} : vector<2x32xf32> to vector<1x32xf32>
    %1499 = vector.extract_strided_slice %1495 {offsets = [0, 0], sizes = [1, 32], strides = [1, 1]} : vector<2x32xf32> to vector<1x32xf32>
    %1500 = vector.extract_strided_slice %1495 {offsets = [1, 0], sizes = [1, 32], strides = [1, 1]} : vector<2x32xf32> to vector<1x32xf32>
    %1501 = vector.extract_strided_slice %1495 {offsets = [1, 0], sizes = [1, 32], strides = [1, 1]} : vector<2x32xf32> to vector<1x32xf32>
    %1502 = vector.extract_strided_slice %1495 {offsets = [1, 0], sizes = [1, 32], strides = [1, 1]} : vector<2x32xf32> to vector<1x32xf32>
    %1503 = vector.extract_strided_slice %1495 {offsets = [1, 0], sizes = [1, 32], strides = [1, 1]} : vector<2x32xf32> to vector<1x32xf32>
    %1504 = tpu.concatenate %1496, %1497, %1498, %1499, %1500, %1501, %1502, %1503 in 0 : vector<1x32xf32>, vector<1x32xf32>, vector<1x32xf32>, vector<1x32xf32>, vector<1x32xf32>, vector<1x32xf32>, vector<1x32xf32>, vector<1x32xf32> -> vector<8x32xf32>
    %1505 = arith.mulf %1334, %1504 : vector<8x32xf32>
    %cst_367 = arith.constant dense<0.000000e+00> : vector<8xf32>
    %1506 = vector.multi_reduction <add>, %1505, %cst_367 [1] : vector<8x32xf32> to vector<8xf32>
    %1507 = vector.shape_cast %1506 : vector<8xf32> to vector<8x1xf32>
    %1508 = arith.mulf %1334, %1334 : vector<8x32xf32>
    %cst_368 = arith.constant dense<0.000000e+00> : vector<8xf32>
    %1509 = vector.multi_reduction <add>, %1508, %cst_368 [1] : vector<8x32xf32> to vector<8xf32>
    %1510 = vector.shape_cast %1509 : vector<8xf32> to vector<8x1xf32>
    %1511 = math.sqrt %1510 : vector<8x1xf32>
    %1512 = arith.mulf %1504, %1504 : vector<8x32xf32>
    %cst_369 = arith.constant dense<0.000000e+00> : vector<8xf32>
    %1513 = vector.multi_reduction <add>, %1512, %cst_369 [1] : vector<8x32xf32> to vector<8xf32>
    %1514 = vector.shape_cast %1513 : vector<8xf32> to vector<8x1xf32>
    %1515 = math.sqrt %1514 : vector<8x1xf32>
    %cst_370 = arith.constant 9.99999993E-9 : f32
    %1516 = vector.broadcast %cst_370 : f32 to vector<8x1xf32>
    %1517 = arith.maximumf %1511, %1516 : vector<8x1xf32>
    %cst_371 = arith.constant 9.99999993E-9 : f32
    %1518 = vector.broadcast %cst_371 : f32 to vector<8x1xf32>
    %1519 = arith.maximumf %1515, %1518 : vector<8x1xf32>
    %1520 = arith.mulf %1517, %1519 : vector<8x1xf32>
    %1521 = arith.divf %1507, %1520 : vector<8x1xf32>
    %c0_372 = arith.constant 0 : index
    %c0_373 = arith.constant 0 : index
    %1522 = vector.load %arg26[%c0_372, %c0_373] : memref<8x1xf32, #tpu.memory_space<vmem>>, vector<8x1xf32>
    tpu.vector_store %arg26[%c0_372, %c0_373], %1521 {strides = array<i32>} : memref<8x1xf32, #tpu.memory_space<vmem>>, vector<8x1xf32>,
    return
  }
}

</mosaic_0001>

<llo_original>
// kernel: net_forward.1
$region0: #{net_forward.1}
  #allocation0 [shape = 'u32[]', space=smem, size = 0x4, offset = 0x4, fixed_abs, tag = 'smem constant byte address 0x4 - core index']
  #allocation1 [shape = 'u32[144,128]{1,0:T(1,128)}', space=vmem, size = 0x12000, scoped, tag = 'internal scratch']
  #allocation2 [shape = 'f32[1,1]{1,0:T(1,128)S(1)}', space=vmem, size = 0x200, scoped, tag = 'scoped memory for net_forward.1']
  %s0 = inlined_call_operand.vmem [shape: f32[8,10,32], index: 0, kind: input, shape index: {}]
  %s1 = inlined_call_operand.vmem [shape: f32[8,10,32], index: 1, kind: input, shape index: {}]
  %s2 = inlined_call_operand.vmem [shape: f32[10,2,32], index: 2, kind: input, shape index: {}]
  %s3 = inlined_call_operand.vmem [shape: f32[10,2,32], index: 3, kind: input, shape index: {}]
  %s4 = inlined_call_operand.vmem [shape: f32[8,6], index: 4, kind: input, shape index: {}]
  %s5 = inlined_call_operand.vmem [shape: f32[2,768], index: 5, kind: input, shape index: {}]
  %s6 = inlined_call_operand.vmem [shape: bf16[128,384], index: 6, kind: input, shape index: {}]
  %s7 = inlined_call_operand.vmem [shape: f32[1,384], index: 7, kind: input, shape index: {}]
  %s8 = inlined_call_operand.vmem [shape: bf16[128,384], index: 8, kind: input, shape index: {}]
  %s9 = inlined_call_operand.vmem [shape: f32[1,384], index: 9, kind: input, shape index: {}]
  %s10 = inlined_call_operand.vmem [shape: bf16[64,32], index: 10, kind: input, shape index: {}]
  %s11 = inlined_call_operand.vmem [shape: f32[1,32], index: 11, kind: input, shape index: {}]
  %s12 = inlined_call_operand.vmem [shape: f32[1,32], index: 12, kind: input, shape index: {}]
  %s13 = inlined_call_operand.<no memory space> [shape: f32[1,1], index: 13, kind: input, shape index: {}]
  %s14 = inlined_call_operand.vmem [shape: bf16[64,32], index: 14, kind: input, shape index: {}]
  %s15 = inlined_call_operand.vmem [shape: f32[1,32], index: 15, kind: input, shape index: {}]
  %s16 = inlined_call_operand.vmem [shape: bf16[768,32], index: 16, kind: input, shape index: {}]
  %s17 = inlined_call_operand.vmem [shape: f32[1,32], index: 17, kind: input, shape index: {}]
  %s18 = inlined_call_operand.vmem [shape: bf16[64,32], index: 18, kind: input, shape index: {}]
  %s19 = inlined_call_operand.vmem [shape: f32[1,32], index: 19, kind: input, shape index: {}]
  %s20 = inlined_call_operand.vmem [shape: bf16[32,32], index: 20, kind: input, shape index: {}]
  %s21 = inlined_call_operand.vmem [shape: f32[1,32], index: 21, kind: input, shape index: {}]
  %s22 = inlined_call_operand.vmem [shape: bf16[64,32], index: 22, kind: input, shape index: {}]
  %s23 = inlined_call_operand.vmem [shape: f32[1,32], index: 23, kind: input, shape index: {}]
  %s24 = inlined_call_operand.vmem [shape: bf16[32,32], index: 24, kind: input, shape index: {}]
  %s25 = inlined_call_operand.vmem [shape: f32[1,32], index: 25, kind: input, shape index: {}]
  %s26 = inlined_call_operand.vmem [shape: f32[8,1], index: 26, kind: output, shape index: {}]
  %s27 = sld [smem:[#allocation0]]
  $region114: #{net_forward.1} parent=0
    _
  %s29 = ssub.s32 1, %s27
  %s30 = scalar_select 0, %s29, %s27
  %v31 = vstv %s13
  %32 = vst [vmem:[#allocation2] sm:$0x1] %v31
  // Predicated region
  $region2: #{net_forward.1} parent=0 // pred_check
    _
  $region3: #{net_forward.1} parent=0 // pred_check_branch
    %34 = sbr.rel (0) target = $region5
  $region4: #{net_forward.1} parent=0 // pred_region
    _
  $region5: #{net_forward.1} parent=0 // pred_fallthru
    _
  // Predicated region
  $region6: #{net_forward.1} parent=0 // pred_check
    _
  $region7: #{net_forward.1} parent=0 // pred_check_branch
    %36 = sbr.rel (0) target = $region9
  $region8: #{net_forward.1} parent=0 // pred_region
    _
  $region9: #{net_forward.1} parent=0 // pred_fallthru
    _
  // Predicated region
  $region10: #{net_forward.1} parent=0 // pred_check
    _
  $region11: #{net_forward.1} parent=0 // pred_check_branch
    %38 = sbr.rel (0) target = $region13
  $region12: #{net_forward.1} parent=0 // pred_region
    _
  $region13: #{net_forward.1} parent=0 // pred_fallthru
    _
  // Predicated region
  $region14: #{net_forward.1} parent=0 // pred_check
    _
  $region15: #{net_forward.1} parent=0 // pred_check_branch
    %40 = sbr.rel (0) target = $region17
  $region16: #{net_forward.1} parent=0 // pred_region
    _
  $region17: #{net_forward.1} parent=0 // pred_fallthru
    _
  // Predicated region
  $region18: #{net_forward.1} parent=0 // pred_check
    _
  $region19: #{net_forward.1} parent=0 // pred_check_branch
    %42 = sbr.rel (0) target = $region21
  $region20: #{net_forward.1} parent=0 // pred_region
    _
  $region21: #{net_forward.1} parent=0 // pred_fallthru
    _
  // Predicated region
  $region22: #{net_forward.1} parent=0 // pred_check
    _
  $region23: #{net_forward.1} parent=0 // pred_check_branch
    %44 = sbr.rel (0) target = $region25
  $region24: #{net_forward.1} parent=0 // pred_region
    _
  $region25: #{net_forward.1} parent=0 // pred_fallthru
    _
  // Predicated region
  $region26: #{net_forward.1} parent=0 // pred_check
    _
  $region27: #{net_forward.1} parent=0 // pred_check_branch
    %46 = sbr.rel (0) target = $region29
  $region28: #{net_forward.1} parent=0 // pred_region
    _
  $region29: #{net_forward.1} parent=0 // pred_fallthru
    _
  // Predicated region
  $region30: #{net_forward.1} parent=0 // pred_check
    _
  $region31: #{net_forward.1} parent=0 // pred_check_branch
    %48 = sbr.rel (0) target = $region33
  $region32: #{net_forward.1} parent=0 // pred_region
    _
  $region33: #{net_forward.1} parent=0 // pred_fallthru
    _
  // Predicated region
  $region34: #{net_forward.1} parent=0 // pred_check
    _
  $region35: #{net_forward.1} parent=0 // pred_check_branch
    %50 = sbr.rel (0) target = $region37
  $region36: #{net_forward.1} parent=0 // pred_region
    _
  $region37: #{net_forward.1} parent=0 // pred_fallthru
    _
  // Predicated region
  $region38: #{net_forward.1} parent=0 // pred_check
    _
  $region39: #{net_forward.1} parent=0 // pred_check_branch
    %52 = sbr.rel (0) target = $region41
  $region40: #{net_forward.1} parent=0 // pred_region
    _
  $region41: #{net_forward.1} parent=0 // pred_fallthru
    _
  // Predicated region
  $region42: #{net_forward.1} parent=0 // pred_check
    _
  $region43: #{net_forward.1} parent=0 // pred_check_branch
    %54 = sbr.rel (0) target = $region45
  $region44: #{net_forward.1} parent=0 // pred_region
    _
  $region45: #{net_forward.1} parent=0 // pred_fallthru
    _
  // Predicated region
  $region46: #{net_forward.1} parent=0 // pred_check
    _
  $region47: #{net_forward.1} parent=0 // pred_check_branch
    %56 = sbr.rel (0) target = $region49
  $region48: #{net_forward.1} parent=0 // pred_region
    _
  $region49: #{net_forward.1} parent=0 // pred_fallthru
    _
  // Predicated region
  $region50: #{net_forward.1} parent=0 // pred_check
    _
  $region51: #{net_forward.1} parent=0 // pred_check_branch
    %58 = sbr.rel (0) target = $region53
  $region52: #{net_forward.1} parent=0 // pred_region
    _
  $region53: #{net_forward.1} parent=0 // pred_fallthru
    _
  // Predicated region
  $region54: #{net_forward.1} parent=0 // pred_check
    _
  $region55: #{net_forward.1} parent=0 // pred_check_branch
    %60 = sbr.rel (0) target = $region57
  $region56: #{net_forward.1} parent=0 // pred_region
    _
  $region57: #{net_forward.1} parent=0 // pred_fallthru
    _
  // Predicated region
  $region58: #{net_forward.1} parent=0 // pred_check
    _
  $region59: #{net_forward.1} parent=0 // pred_check_branch
    %62 = sbr.rel (0) target = $region61
  $region60: #{net_forward.1} parent=0 // pred_region
    _
  $region61: #{net_forward.1} parent=0 // pred_fallthru
    _
  // Predicated region
  $region62: #{net_forward.1} parent=0 // pred_check
    _
  $region63: #{net_forward.1} parent=0 // pred_check_branch
    %64 = sbr.rel (0) target = $region65
  $region64: #{net_forward.1} parent=0 // pred_region
    _
  $region65: #{net_forward.1} parent=0 // pred_fallthru
    _
  // Predicated region
  $region66: #{net_forward.1} parent=0 // pred_check
    _
  $region67: #{net_forward.1} parent=0 // pred_check_branch
    %66 = sbr.rel (0) target = $region69
  $region68: #{net_forward.1} parent=0 // pred_region
    _
  $region69: #{net_forward.1} parent=0 // pred_fallthru
    _
  // Predicated region
  $region70: #{net_forward.1} parent=0 // pred_check
    _
  $region71: #{net_forward.1} parent=0 // pred_check_branch
    %68 = sbr.rel (0) target = $region73
  $region72: #{net_forward.1} parent=0 // pred_region
    _
  $region73: #{net_forward.1} parent=0 // pred_fallthru
    _
  // Predicated region
  $region74: #{net_forward.1} parent=0 // pred_check
    _
  $region75: #{net_forward.1} parent=0 // pred_check_branch
    %70 = sbr.rel (0) target = $region77
  $region76: #{net_forward.1} parent=0 // pred_region
    _
  $region77: #{net_forward.1} parent=0 // pred_fallthru
    _
  // Predicated region
  $region78: #{net_forward.1} parent=0 // pred_check
    _
  $region79: #{net_forward.1} parent=0 // pred_check_branch
    %72 = sbr.rel (0) target = $region81
  $region80: #{net_forward.1} parent=0 // pred_region
    _
  $region81: #{net_forward.1} parent=0 // pred_fallthru
    _
  // Predicated region
  $region82: #{net_forward.1} parent=0 // pred_check
    _
  $region83: #{net_forward.1} parent=0 // pred_check_branch
    %74 = sbr.rel (0) target = $region85
  $region84: #{net_forward.1} parent=0 // pred_region
    _
  $region85: #{net_forward.1} parent=0 // pred_fallthru
    _
  // Predicated region
  $region86: #{net_forward.1} parent=0 // pred_check
    _
  $region87: #{net_forward.1} parent=0 // pred_check_branch
    %76 = sbr.rel (0) target = $region89
  $region88: #{net_forward.1} parent=0 // pred_region
    _
  $region89: #{net_forward.1} parent=0 // pred_fallthru
    _
  // Predicated region
  $region90: #{net_forward.1} parent=0 // pred_check
    _
  $region91: #{net_forward.1} parent=0 // pred_check_branch
    %78 = sbr.rel (0) target = $region93
  $region92: #{net_forward.1} parent=0 // pred_region
    _
  $region93: #{net_forward.1} parent=0 // pred_fallthru
    _
  // Predicated region
  $region94: #{net_forward.1} parent=0 // pred_check
    _
  $region95: #{net_forward.1} parent=0 // pred_check_branch
    %80 = sbr.rel (0) target = $region97
  $region96: #{net_forward.1} parent=0 // pred_region
    _
  $region97: #{net_forward.1} parent=0 // pred_fallthru
    _
  // Predicated region
  $region98: #{net_forward.1} parent=0 // pred_check
    _
  $region99: #{net_forward.1} parent=0 // pred_check_branch
    %82 = sbr.rel (0) target = $region101
  $region100: #{net_forward.1} parent=0 // pred_region
    _
  $region101: #{net_forward.1} parent=0 // pred_fallthru
    _
  // Predicated region
  $region102: #{net_forward.1} parent=0 // pred_check
    _
  $region103: #{net_forward.1} parent=0 // pred_check_branch
    %84 = sbr.rel (0) target = $region105
  $region104: #{net_forward.1} parent=0 // pred_region
    _
  $region105: #{net_forward.1} parent=0 // pred_fallthru
    _
  %v86 = vld [vmem:[%s7] sm:$0x7]
  %v87 = vld [vmem:[%s0] sm:$0xff]
  %v88 = vld [vmem:[%s0 + $0x8] sm:$0x3]
  %v89 = vpack.c.bf16 %v88, %v87
  %v90 = vld [vmem:[%s1] sm:$0xff]
  %v91 = vld [vmem:[%s1 + $0x8] sm:$0x3]
  %v92 = vpack.c.bf16 %v91, %v90
  %94 = vrot.lane.b32.xlu0 %v92, 32
  %v95 = vpop.permute.xlu0 %94
  %vm96 = vcmask 261120
  %v99 = vsel %vm96, %v89, %v95
  %vm100 = vcmask 523264
  %v102 = vsel %vm100, %v99, 0
  %vm103 = vcmask 785408
  %v104 = vsel %vm103, %v102, 0
  %v106 = vld [vmem:[%s6] sm:$0xff]
  %v107 = vld [vmem:[%s6 + $0x8] sm:$0xf]
  %v108 = vld [vmem:[%s6 + $0xc] sm:$0xff]
  %v109 = vld [vmem:[%s6 + $0x14] sm:$0xf]
  %v110 = vld [vmem:[%s6 + $0x18] sm:$0xff]
  %v111 = vld [vmem:[%s6 + $0x20] sm:$0xf]
  %v112 = vld [vmem:[%s6 + $0x24] sm:$0xff]
  %v113 = vld [vmem:[%s6 + $0x2c] sm:$0xf]
  %v114 = vld [vmem:[%s6 + $0x30] sm:$0xff]
  %v115 = vld [vmem:[%s6 + $0x38] sm:$0xf]
  %v116 = vld [vmem:[%s6 + $0x3c] sm:$0xff]
  %v117 = vld [vmem:[%s6 + $0x44] sm:$0xf]
  %v118 = vld [vmem:[%s6 + $0x48] sm:$0xff]
  %v119 = vld [vmem:[%s6 + $0x50] sm:$0xf]
  %v120 = vld [vmem:[%s6 + $0x54] sm:$0xff]
  %v121 = vld [vmem:[%s6 + $0x5c] sm:$0xf]
  %v122 = vld [vmem:[%s6 + $0x60] sm:$0xff]
  %v123 = vld [vmem:[%s6 + $0x68] sm:$0xf]
  %v124 = vld [vmem:[%s6 + $0x6c] sm:$0xff]
  %v125 = vld [vmem:[%s6 + $0x74] sm:$0xf]
  %v126 = vld [vmem:[%s6 + $0x78] sm:$0xff]
  %v127 = vld [vmem:[%s6 + $0x80] sm:$0xf]
  %v128 = vld [vmem:[%s6 + $0x84] sm:$0xff]
  %v129 = vld [vmem:[%s6 + $0x8c] sm:$0xf]
  %v130 = vld [vmem:[%s6 + $0x90] sm:$0xff]
  %v131 = vld [vmem:[%s6 + $0x98] sm:$0xf]
  %v132 = vld [vmem:[%s6 + $0x9c] sm:$0xff]
  %v133 = vld [vmem:[%s6 + $0xa4] sm:$0xf]
  %v134 = vld [vmem:[%s6 + $0xa8] sm:$0xff]
  %v135 = vld [vmem:[%s6 + $0xb0] sm:$0xf]
  %v136 = vld [vmem:[%s6 + $0xb4] sm:$0xff]
  %v137 = vld [vmem:[%s6 + $0xbc] sm:$0xf]
  %v139 = vlaneseq
  %v140 = vshrl.u32 %v139, 7
  %v141 = vsub.s32 0, %v140
  %v142 = vrot.slane %v86, %v141
  %v143 = vlaneseq
  %v144 = vshrl.u32 %v143, 7
  %v145 = vsub.s32 1, %v144
  %v146 = vrot.slane %v86, %v145
  %v147 = vlaneseq
  %v148 = vshrl.u32 %v147, 7
  %v149 = vsub.s32 2, %v148
  %v150 = vrot.slane %v86, %v149
  %v186 = vunpack.c.l.b16 %v106
  %v187 = vunpack.c.h.b16 %v106
  %v188 = vunpack.c.l.b16 %v107
  %v189 = vunpack.c.l.b16 %v108
  %v190 = vunpack.c.h.b16 %v108
  %v191 = vunpack.c.l.b16 %v109
  %v192 = vunpack.c.l.b16 %v110
  %v193 = vunpack.c.h.b16 %v110
  %v194 = vunpack.c.l.b16 %v111
  %v195 = vunpack.c.l.b16 %v112
  %v196 = vunpack.c.h.b16 %v112
  %v197 = vunpack.c.l.b16 %v113
  %v198 = vunpack.c.l.b16 %v114
  %v199 = vunpack.c.h.b16 %v114
  %v200 = vunpack.c.l.b16 %v115
  %v201 = vunpack.c.l.b16 %v116
  %v202 = vunpack.c.h.b16 %v116
  %v203 = vunpack.c.l.b16 %v117
  %v204 = vunpack.c.l.b16 %v118
  %v205 = vunpack.c.h.b16 %v118
  %v206 = vunpack.c.l.b16 %v119
  %v207 = vunpack.c.l.b16 %v120
  %v208 = vunpack.c.h.b16 %v120
  %v209 = vunpack.c.l.b16 %v121
  %v210 = vunpack.c.l.b16 %v122
  %v211 = vunpack.c.h.b16 %v122
  %v212 = vunpack.c.l.b16 %v123
  %v213 = vunpack.c.l.b16 %v124
  %v214 = vunpack.c.h.b16 %v124
  %v215 = vunpack.c.l.b16 %v125
  %v216 = vunpack.c.l.b16 %v126
  %v217 = vunpack.c.h.b16 %v126
  %v218 = vunpack.c.l.b16 %v127
  %v219 = vunpack.c.l.b16 %v128
  %v220 = vunpack.c.h.b16 %v128
  %v221 = vunpack.c.l.b16 %v129
  %v222 = vunpack.c.l.b16 %v130
  %v223 = vunpack.c.h.b16 %v130
  %v224 = vunpack.c.l.b16 %v131
  %v225 = vunpack.c.l.b16 %v132
  %v226 = vunpack.c.h.b16 %v132
  %v227 = vunpack.c.l.b16 %v133
  %v228 = vunpack.c.l.b16 %v134
  %v229 = vunpack.c.h.b16 %v134
  %v230 = vunpack.c.l.b16 %v135
  %v231 = vunpack.c.l.b16 %v136
  %v232 = vunpack.c.h.b16 %v136
  %v233 = vunpack.c.l.b16 %v137
  %v234 = vpack.c.b16 %v189, %v186
  %v235 = vpack.c.b16 %v190, %v187
  %v236 = vpack.c.b16 %v191, %v188
  %v237 = vpack.c.b16 %v195, %v192
  %v238 = vpack.c.b16 %v196, %v193
  %v239 = vpack.c.b16 %v197, %v194
  %v240 = vpack.c.b16 %v201, %v198
  %v241 = vpack.c.b16 %v202, %v199
  %v242 = vpack.c.b16 %v203, %v200
  %v243 = vpack.c.b16 %v207, %v204
  %v244 = vpack.c.b16 %v208, %v205
  %v245 = vpack.c.b16 %v209, %v206
  %v246 = vpack.c.b16 %v213, %v210
  %v247 = vpack.c.b16 %v214, %v211
  %v248 = vpack.c.b16 %v215, %v212
  %v249 = vpack.c.b16 %v219, %v216
  %v250 = vpack.c.b16 %v220, %v217
  %v251 = vpack.c.b16 %v221, %v218
  %v252 = vpack.c.b16 %v225, %v222
  %v253 = vpack.c.b16 %v226, %v223
  %v254 = vpack.c.b16 %v227, %v224
  %v255 = vpack.c.b16 %v231, %v228
  %v256 = vpack.c.b16 %v232, %v229
  %v257 = vpack.c.b16 %v233, %v230
  %282 = vmatprep.subr.bf16.mxu0 %v256
  %283 = vmatpush1.bf16.msra.mxu0 %v255
  %284 = vmatprep.subr.bf16.mxu0 %v253
  %285 = vmatpush1.bf16.msra.mxu0 %v252
  %286 = vmatprep.subr.bf16.mxu0 %v250
  %287 = vmatpush1.bf16.msra.mxu0 %v249
  %288 = vmatprep.subr.bf16.mxu0 %v247
  %289 = vmatpush1.bf16.msra.mxu0 %v246
  %290 = vmatprep.subr.bf16.mxu0 %v244
  %291 = vmatpush1.bf16.msra.mxu0 %v243
  %292 = vmatprep.subr.bf16.mxu0 %v241
  %293 = vmatpush1.bf16.msra.mxu0 %v240
  %294 = vmatprep.subr.bf16.mxu0 %v238
  %295 = vmatpush1.bf16.msra.mxu0 %v237
  %296 = vmatprep.subr.bf16.mxu0 %v235
  %297 = vmatpush1.bf16.msra.mxu0 %v234
  %298 = vmatprep.subr.bf16.mxu0 0
  %299 = vmatpush2.bf16.msra.mxu0 0
  %300 = vmatprep.subr.bf16.mxu0 0
  %301 = vmatpush2.bf16.msra.mxu0 0
  %302 = vmatprep.subr.bf16.mxu0 0
  %303 = vmatpush2.bf16.msra.mxu0 0
  %304 = vmatprep.subr.bf16.mxu0 0
  %305 = vmatpush2.bf16.msra.mxu0 0
  %306 = vmatprep.subr.bf16.mxu0 0
  %307 = vmatpush2.bf16.msra.mxu0 0
  %308 = vmatprep.subr.bf16.mxu0 0
  %309 = vmatpush2.bf16.msra.mxu0 0
  %310 = vmatprep.subr.bf16.mxu0 0
  %311 = vmatpush2.bf16.msra.mxu0 0
  %312 = vmatprep.subr.bf16.mxu0 0
  %313 = vmatpush2.bf16.msra.mxu0 0
  %314 = vmatprep.mubr.bf16.mxu0 0
  %315 = vmatmul.mubr.bf16.gmra.mxu0 %v104
  %v316 = vpop.f32.mrf.mxu0
  %v317 = vadd.f32 %v142, %v316
  %v318 = vpop.f32.mrf.mxu0
  %v319 = vadd.f32 %v146, %v318
  %v320 = vpop.f32.mrf.mxu0
  %v321 = vadd.f32 %v142, %v320
  %v322 = vpop.f32.mrf.mxu0
  %v323 = vadd.f32 %v146, %v322
  %324 = vdwg.mxu0
  %325 = vmatprep.subr.bf16.mxu0 0
  %326 = vmatpush1.bf16.msra.mxu0 %v257
  %327 = vmatprep.subr.bf16.mxu0 0
  %328 = vmatpush1.bf16.msra.mxu0 %v254
  %329 = vmatprep.subr.bf16.mxu0 0
  %330 = vmatpush1.bf16.msra.mxu0 %v251
  %331 = vmatprep.subr.bf16.mxu0 0
  %332 = vmatpush1.bf16.msra.mxu0 %v248
  %333 = vmatprep.subr.bf16.mxu0 0
  %334 = vmatpush1.bf16.msra.mxu0 %v245
  %335 = vmatprep.subr.bf16.mxu0 0
  %336 = vmatpush1.bf16.msra.mxu0 %v242
  %337 = vmatprep.subr.bf16.mxu0 0
  %338 = vmatpush1.bf16.msra.mxu0 %v239
  %339 = vmatprep.subr.bf16.mxu0 0
  %340 = vmatpush1.bf16.msra.mxu0 %v236
  %341 = vmatprep.subr.bf16.mxu0 0
  %342 = vmatpush2.bf16.msra.mxu0 0
  %343 = vmatprep.subr.bf16.mxu0 0
  %344 = vmatpush2.bf16.msra.mxu0 0
  %345 = vmatprep.subr.bf16.mxu0 0
  %346 = vmatpush2.bf16.msra.mxu0 0
  %347 = vmatprep.subr.bf16.mxu0 0
  %348 = vmatpush2.bf16.msra.mxu0 0
  %349 = vmatprep.subr.bf16.mxu0 0
  %350 = vmatpush2.bf16.msra.mxu0 0
  %351 = vmatprep.subr.bf16.mxu0 0
  %352 = vmatpush2.bf16.msra.mxu0 0
  %353 = vmatprep.subr.bf16.mxu0 0
  %354 = vmatpush2.bf16.msra.mxu0 0
  %355 = vmatprep.subr.bf16.mxu0 0
  %356 = vmatpush2.bf16.msra.mxu0 0
  %357 = vmatprep.mubr.bf16.mxu0 0
  %358 = vmatmul.mubr.bf16.gmra.mxu0 %v104
  %v359 = vpop.f32.mrf.mxu0
  %v360 = vadd.f32 %v150, %v359
  %v361 = vpop.f32.mrf.mxu0
  %v362 = vpop.f32.mrf.mxu0
  %v363 = vadd.f32 %v150, %v362
  %v364 = vpop.f32.mrf.mxu0
  %365 = vdwg.mxu0
  %368 = vrot.lane.b32.xlu0 %v319, 64
  %v369 = vpop.permute.xlu0 %368
  %370 = vrot.lane.b32.xlu0 %v323, 64
  %v371 = vpop.permute.xlu0 %370
  %v374 = vadd.f32 %v317, %v369
  %v375 = vadd.f32 %v321, %v371
  %v376 = vxor.u32 %v374, 2147483648
  %v377 = vxor.u32 %v375, 2147483648
  %v378 = vmul.f32 %v376, 1.442695
  %v379 = vpow.pop %v378
  %v380 = vmul.f32 %v377, 1.442695
  %v381 = vpow.pop %v380
  %v382 = vadd.f32 %v379, 1.0
  %v383 = vadd.f32 %v381, 1.0
  %v384 = vrcp.pop %v382
  %v385 = vmul.f32 1.0, %v384
  %v386 = vrcp.pop %v383
  %v387 = vmul.f32 1.0, %v386
  %v388 = vmul.f32 %v385, %v360
  %v389 = vmul.f32 %v387, %v363
  %392 = vrot.lane.b32.xlu0 %v388, 64
  %v393 = vpop.permute.xlu0 %392
  %394 = vrot.lane.b32.xlu0 %v389, 64
  %v395 = vpop.permute.xlu0 %394
  %v398 = vadd.f32 %v317, %v393
  %v399 = vadd.f32 %v321, %v395
  %v400 = vtanh.pop %v398
  %v401 = vtanh.pop %v399
  %v402 = vsub.f32 1.0, %v385
  %v403 = vsub.f32 1.0, %v387
  %406 = vrot.lane.b32.xlu0 %v400, 96
  %v407 = vpop.permute.xlu0 %406
  %408 = vrot.lane.b32.xlu0 %v401, 96
  %v409 = vpop.permute.xlu0 %408
  %v412 = vmul.f32 %v402, %v407
  %v413 = vmul.f32 %v403, %v409
  %v414 = vmul.f32 %v385, 0.0
  %v415 = vmul.f32 %v387, 0.0
  %v416 = vadd.f32 %v412, %v414
  %v417 = vadd.f32 %v413, %v415
  %420 = vrot.lane.b32.xlu0 %v360, 64
  %v421 = vpop.permute.xlu0 %420
  %422 = vrot.lane.b32.xlu0 %v363, 64
  %v423 = vpop.permute.xlu0 %422
  %v426 = vadd.f32 %v317, %v421
  %v427 = vadd.f32 %v321, %v423
  %v428 = vxor.u32 %v426, 2147483648
  %v429 = vxor.u32 %v427, 2147483648
  %v430 = vmul.f32 %v428, 1.442695
  %v431 = vpow.pop %v430
  %v432 = vmul.f32 %v429, 1.442695
  %v433 = vpow.pop %v432
  %v434 = vadd.f32 %v431, 1.0
  %v435 = vadd.f32 %v433, 1.0
  %v436 = vrcp.pop %v434
  %v437 = vmul.f32 1.0, %v436
  %v438 = vrcp.pop %v435
  %v439 = vmul.f32 1.0, %v438
  %v440 = vadd.f32 %v319, %v421
  %v441 = vadd.f32 %v323, %v423
  %v442 = vxor.u32 %v440, 2147483648
  %v443 = vxor.u32 %v441, 2147483648
  %v444 = vmul.f32 %v442, 1.442695
  %v445 = vpow.pop %v444
  %v446 = vmul.f32 %v443, 1.442695
  %v447 = vpow.pop %v446
  %v448 = vadd.f32 %v445, 1.0
  %v449 = vadd.f32 %v447, 1.0
  %v450 = vrcp.pop %v448
  %v451 = vmul.f32 1.0, %v450
  %v452 = vrcp.pop %v449
  %v453 = vmul.f32 1.0, %v452
  %v454 = vmul.f32 %v437, %v360
  %v455 = vmul.f32 %v439, %v363
  %458 = vrot.lane.b32.xlu0 %v454, 64
  %v459 = vpop.permute.xlu0 %458
  %460 = vrot.lane.b32.xlu0 %v455, 64
  %v461 = vpop.permute.xlu0 %460
  %v464 = vadd.f32 %v319, %v459
  %v465 = vadd.f32 %v323, %v461
  %v466 = vtanh.pop %v464
  %v467 = vtanh.pop %v465
  %v468 = vsub.f32 1.0, %v451
  %v469 = vsub.f32 1.0, %v453
  %472 = vrot.lane.b32.xlu0 %v466, 96
  %v473 = vpop.permute.xlu0 %472
  %474 = vrot.lane.b32.xlu0 %v467, 96
  %v475 = vpop.permute.xlu0 %474
  %v478 = vmul.f32 %v468, %v473
  %v479 = vmul.f32 %v469, %v475
  %v480 = vmul.f32 %v451, 0.0
  %v481 = vmul.f32 %v453, 0.0
  %v482 = vadd.f32 %v478, %v480
  %v483 = vadd.f32 %v479, %v481
  %s484 = scalar_lea.vmem %s0, 16
  %v485 = vld [vmem:[%s484] sm:$0xff]
  %v486 = vld [vmem:[%s484 + $0x8] sm:$0x3]
  %v487 = vpack.c.bf16 %v486, %v485
  %s488 = scalar_lea.vmem %s1, 16
  %v489 = vld [vmem:[%s488] sm:$0xff]
  %v490 = vld [vmem:[%s488 + $0x8] sm:$0x3]
  %v491 = vpack.c.bf16 %v490, %v489
  %v492 = vpack.c.bf16 %v417, %v416
  %v493 = vpack.c.bf16 %v483, %v482
  %495 = vrot.lane.b32.xlu0 %v491, 32
  %v496 = vpop.permute.xlu0 %495
  %498 = vrot.lane.b32.xlu0 %v492, 32
  %v499 = vpop.permute.xlu0 %498
  %501 = vrot.lane.b32.xlu0 %v493, 96
  %v502 = vpop.permute.xlu0 %501
  %v505 = vsel %vm96, %v487, %v496
  %v507 = vsel %vm100, %v505, %v499
  %v509 = vsel %vm103, %v507, %v502
  %511 = vmatprep.subr.bf16.mxu0 %v256
  %512 = vmatpush1.bf16.msra.mxu0 %v255
  %513 = vmatprep.subr.bf16.mxu0 %v253
  %514 = vmatpush1.bf16.msra.mxu0 %v252
  %515 = vmatprep.subr.bf16.mxu0 %v250
  %516 = vmatpush1.bf16.msra.mxu0 %v249
  %517 = vmatprep.subr.bf16.mxu0 %v247
  %518 = vmatpush1.bf16.msra.mxu0 %v246
  %519 = vmatprep.subr.bf16.mxu0 %v244
  %520 = vmatpush1.bf16.msra.mxu0 %v243
  %521 = vmatprep.subr.bf16.mxu0 %v241
  %522 = vmatpush1.bf16.msra.mxu0 %v240
  %523 = vmatprep.subr.bf16.mxu0 %v238
  %524 = vmatpush1.bf16.msra.mxu0 %v237
  %525 = vmatprep.subr.bf16.mxu0 %v235
  %526 = vmatpush1.bf16.msra.mxu0 %v234
  %527 = vmatprep.subr.bf16.mxu0 0
  %528 = vmatpush2.bf16.msra.mxu0 0
  %529 = vmatprep.subr.bf16.mxu0 0
  %530 = vmatpush2.bf16.msra.mxu0 0
  %531 = vmatprep.subr.bf16.mxu0 0
  %532 = vmatpush2.bf16.msra.mxu0 0
  %533 = vmatprep.subr.bf16.mxu0 0
  %534 = vmatpush2.bf16.msra.mxu0 0
  %535 = vmatprep.subr.bf16.mxu0 0
  %536 = vmatpush2.bf16.msra.mxu0 0
  %537 = vmatprep.subr.bf16.mxu0 0
  %538 = vmatpush2.bf16.msra.mxu0 0
  %539 = vmatprep.subr.bf16.mxu0 0
  %540 = vmatpush2.bf16.msra.mxu0 0
  %541 = vmatprep.subr.bf16.mxu0 0
  %542 = vmatpush2.bf16.msra.mxu0 0
  %543 = vmatprep.mubr.bf16.mxu0 0
  %544 = vmatmul.mubr.bf16.gmra.mxu0 %v509
  %v545 = vpop.f32.mrf.mxu0
  %v546 = vadd.f32 %v142, %v545
  %v547 = vpop.f32.mrf.mxu0
  %v548 = vadd.f32 %v146, %v547
  %v549 = vpop.f32.mrf.mxu0
  %v550 = vadd.f32 %v142, %v549
  %v551 = vpop.f32.mrf.mxu0
  %v552 = vadd.f32 %v146, %v551
  %553 = vdwg.mxu0
  %554 = vmatprep.subr.bf16.mxu0 0
  %555 = vmatpush1.bf16.msra.mxu0 %v257
  %556 = vmatprep.subr.bf16.mxu0 0
  %557 = vmatpush1.bf16.msra.mxu0 %v254
  %558 = vmatprep.subr.bf16.mxu0 0
  %559 = vmatpush1.bf16.msra.mxu0 %v251
  %560 = vmatprep.subr.bf16.mxu0 0
  %561 = vmatpush1.bf16.msra.mxu0 %v248
  %562 = vmatprep.subr.bf16.mxu0 0
  %563 = vmatpush1.bf16.msra.mxu0 %v245
  %564 = vmatprep.subr.bf16.mxu0 0
  %565 = vmatpush1.bf16.msra.mxu0 %v242
  %566 = vmatprep.subr.bf16.mxu0 0
  %567 = vmatpush1.bf16.msra.mxu0 %v239
  %568 = vmatprep.subr.bf16.mxu0 0
  %569 = vmatpush1.bf16.msra.mxu0 %v236
  %570 = vmatprep.subr.bf16.mxu0 0
  %571 = vmatpush2.bf16.msra.mxu0 0
  %572 = vmatprep.subr.bf16.mxu0 0
  %573 = vmatpush2.bf16.msra.mxu0 0
  %574 = vmatprep.subr.bf16.mxu0 0
  %575 = vmatpush2.bf16.msra.mxu0 0
  %576 = vmatprep.subr.bf16.mxu0 0
  %577 = vmatpush2.bf16.msra.mxu0 0
  %578 = vmatprep.subr.bf16.mxu0 0
  %579 = vmatpush2.bf16.msra.mxu0 0
  %580 = vmatprep.subr.bf16.mxu0 0
  %581 = vmatpush2.bf16.msra.mxu0 0
  %582 = vmatprep.subr.bf16.mxu0 0
  %583 = vmatpush2.bf16.msra.mxu0 0
  %584 = vmatprep.subr.bf16.mxu0 0
  %585 = vmatpush2.bf16.msra.mxu0 0
  %586 = vmatprep.mubr.bf16.mxu0 0
  %587 = vmatmul.mubr.bf16.gmra.mxu0 %v509
  %v588 = vpop.f32.mrf.mxu0
  %v589 = vadd.f32 %v150, %v588
  %v590 = vpop.f32.mrf.mxu0
  %v591 = vpop.f32.mrf.mxu0
  %v592 = vadd.f32 %v150, %v591
  %v593 = vpop.f32.mrf.mxu0
  %594 = vdwg.mxu0
  %597 = vrot.lane.b32.xlu0 %v548, 64
  %v598 = vpop.permute.xlu0 %597
  %599 = vrot.lane.b32.xlu0 %v552, 64
  %v600 = vpop.permute.xlu0 %599
  %v603 = vadd.f32 %v546, %v598
  %v604 = vadd.f32 %v550, %v600
  %v605 = vxor.u32 %v603, 2147483648
  %v606 = vxor.u32 %v604, 2147483648
  %v607 = vmul.f32 %v605, 1.442695
  %v608 = vpow.pop %v607
  %v609 = vmul.f32 %v606, 1.442695
  %v610 = vpow.pop %v609
  %v611 = vadd.f32 %v608, 1.0
  %v612 = vadd.f32 %v610, 1.0
  %v613 = vrcp.pop %v611
  %v614 = vmul.f32 1.0, %v613
  %v615 = vrcp.pop %v612
  %v616 = vmul.f32 1.0, %v615
  %v617 = vmul.f32 %v614, %v589
  %v618 = vmul.f32 %v616, %v592
  %621 = vrot.lane.b32.xlu0 %v617, 64
  %v622 = vpop.permute.xlu0 %621
  %623 = vrot.lane.b32.xlu0 %v618, 64
  %v624 = vpop.permute.xlu0 %623
  %v627 = vadd.f32 %v546, %v622
  %v628 = vadd.f32 %v550, %v624
  %v629 = vtanh.pop %v627
  %v630 = vtanh.pop %v628
  %v631 = vsub.f32 1.0, %v614
  %v632 = vsub.f32 1.0, %v616
  %635 = vrot.lane.b32.xlu0 %v629, 96
  %v636 = vpop.permute.xlu0 %635
  %637 = vrot.lane.b32.xlu0 %v630, 96
  %v638 = vpop.permute.xlu0 %637
  %v641 = vmul.f32 %v631, %v636
  %v642 = vmul.f32 %v632, %v638
  %v643 = vmul.f32 %v614, %v416
  %v644 = vmul.f32 %v616, %v417
  %v645 = vadd.f32 %v641, %v643
  %v646 = vadd.f32 %v642, %v644
  %649 = vrot.lane.b32.xlu0 %v589, 64
  %v650 = vpop.permute.xlu0 %649
  %651 = vrot.lane.b32.xlu0 %v592, 64
  %v652 = vpop.permute.xlu0 %651
  %v655 = vadd.f32 %v546, %v650
  %v656 = vadd.f32 %v550, %v652
  %v657 = vxor.u32 %v655, 2147483648
  %v658 = vxor.u32 %v656, 2147483648
  %v659 = vmul.f32 %v657, 1.442695
  %v660 = vpow.pop %v659
  %v661 = vmul.f32 %v658, 1.442695
  %v662 = vpow.pop %v661
  %v663 = vadd.f32 %v660, 1.0
  %v664 = vadd.f32 %v662, 1.0
  %v665 = vrcp.pop %v663
  %v666 = vmul.f32 1.0, %v665
  %v667 = vrcp.pop %v664
  %v668 = vmul.f32 1.0, %v667
  %v669 = vadd.f32 %v548, %v650
  %v670 = vadd.f32 %v552, %v652
  %v671 = vxor.u32 %v669, 2147483648
  %v672 = vxor.u32 %v670, 2147483648
  %v673 = vmul.f32 %v671, 1.442695
  %v674 = vpow.pop %v673
  %v675 = vmul.f32 %v672, 1.442695
  %v676 = vpow.pop %v675
  %v677 = vadd.f32 %v674, 1.0
  %v678 = vadd.f32 %v676, 1.0
  %v679 = vrcp.pop %v677
  %v680 = vmul.f32 1.0, %v679
  %v681 = vrcp.pop %v678
  %v682 = vmul.f32 1.0, %v681
  %v683 = vmul.f32 %v666, %v589
  %v684 = vmul.f32 %v668, %v592
  %687 = vrot.lane.b32.xlu0 %v683, 64
  %v688 = vpop.permute.xlu0 %687
  %689 = vrot.lane.b32.xlu0 %v684, 64
  %v690 = vpop.permute.xlu0 %689
  %v693 = vadd.f32 %v548, %v688
  %v694 = vadd.f32 %v552, %v690
  %v695 = vtanh.pop %v693
  %v696 = vtanh.pop %v694
  %v697 = vsub.f32 1.0, %v680
  %v698 = vsub.f32 1.0, %v682
  %701 = vrot.lane.b32.xlu0 %v695, 96
  %v702 = vpop.permute.xlu0 %701
  %703 = vrot.lane.b32.xlu0 %v696, 96
  %v704 = vpop.permute.xlu0 %703
  %v707 = vmul.f32 %v697, %v702
  %v708 = vmul.f32 %v698, %v704
  %v709 = vmul.f32 %v680, %v482
  %v710 = vmul.f32 %v682, %v483
  %v711 = vadd.f32 %v707, %v709
  %v712 = vadd.f32 %v708, %v710
  %s713 = scalar_lea.vmem %s0, 32
  %v714 = vld [vmem:[%s713] sm:$0xff]
  %v715 = vld [vmem:[%s713 + $0x8] sm:$0x3]
  %v716 = vpack.c.bf16 %v715, %v714
  %s717 = scalar_lea.vmem %s1, 32
  %v718 = vld [vmem:[%s717] sm:$0xff]
  %v719 = vld [vmem:[%s717 + $0x8] sm:$0x3]
  %v720 = vpack.c.bf16 %v719, %v718
  %v721 = vpack.c.bf16 %v646, %v645
  %v722 = vpack.c.bf16 %v712, %v711
  %724 = vrot.lane.b32.xlu0 %v720, 32
  %v725 = vpop.permute.xlu0 %724
  %727 = vrot.lane.b32.xlu0 %v721, 32
  %v728 = vpop.permute.xlu0 %727
  %730 = vrot.lane.b32.xlu0 %v722, 96
  %v731 = vpop.permute.xlu0 %730
  %v734 = vsel %vm96, %v716, %v725
  %v736 = vsel %vm100, %v734, %v728
  %v738 = vsel %vm103, %v736, %v731
  %740 = vmatprep.subr.bf16.mxu0 %v256
  %741 = vmatpush1.bf16.msra.mxu0 %v255
  %742 = vmatprep.subr.bf16.mxu0 %v253
  %743 = vmatpush1.bf16.msra.mxu0 %v252
  %744 = vmatprep.subr.bf16.mxu0 %v250
  %745 = vmatpush1.bf16.msra.mxu0 %v249
  %746 = vmatprep.subr.bf16.mxu0 %v247
  %747 = vmatpush1.bf16.msra.mxu0 %v246
  %748 = vmatprep.subr.bf16.mxu0 %v244
  %749 = vmatpush1.bf16.msra.mxu0 %v243
  %750 = vmatprep.subr.bf16.mxu0 %v241
  %751 = vmatpush1.bf16.msra.mxu0 %v240
  %752 = vmatprep.subr.bf16.mxu0 %v238
  %753 = vmatpush1.bf16.msra.mxu0 %v237
  %754 = vmatprep.subr.bf16.mxu0 %v235
  %755 = vmatpush1.bf16.msra.mxu0 %v234
  %756 = vmatprep.subr.bf16.mxu0 0
  %757 = vmatpush2.bf16.msra.mxu0 0
  %758 = vmatprep.subr.bf16.mxu0 0
  %759 = vmatpush2.bf16.msra.mxu0 0
  %760 = vmatprep.subr.bf16.mxu0 0
  %761 = vmatpush2.bf16.msra.mxu0 0
  %762 = vmatprep.subr.bf16.mxu0 0
  %763 = vmatpush2.bf16.msra.mxu0 0
  %764 = vmatprep.subr.bf16.mxu0 0
  %765 = vmatpush2.bf16.msra.mxu0 0
  %766 = vmatprep.subr.bf16.mxu0 0
  %767 = vmatpush2.bf16.msra.mxu0 0
  %768 = vmatprep.subr.bf16.mxu0 0
  %769 = vmatpush2.bf16.msra.mxu0 0
  %770 = vmatprep.subr.bf16.mxu0 0
  %771 = vmatpush2.bf16.msra.mxu0 0
  %772 = vmatprep.mubr.bf16.mxu0 0
  %773 = vmatmul.mubr.bf16.gmra.mxu0 %v738
  %v774 = vpop.f32.mrf.mxu0
  %v775 = vadd.f32 %v142, %v774
  %v776 = vpop.f32.mrf.mxu0
  %v777 = vadd.f32 %v146, %v776
  %v778 = vpop.f32.mrf.mxu0
  %v779 = vadd.f32 %v142, %v778
  %v780 = vpop.f32.mrf.mxu0
  %v781 = vadd.f32 %v146, %v780
  %782 = vdwg.mxu0
  %783 = vmatprep.subr.bf16.mxu0 0
  %784 = vmatpush1.bf16.msra.mxu0 %v257
  %785 = vmatprep.subr.bf16.mxu0 0
  %786 = vmatpush1.bf16.msra.mxu0 %v254
  %787 = vmatprep.subr.bf16.mxu0 0
  %788 = vmatpush1.bf16.msra.mxu0 %v251
  %789 = vmatprep.subr.bf16.mxu0 0
  %790 = vmatpush1.bf16.msra.mxu0 %v248
  %791 = vmatprep.subr.bf16.mxu0 0
  %792 = vmatpush1.bf16.msra.mxu0 %v245
  %793 = vmatprep.subr.bf16.mxu0 0
  %794 = vmatpush1.bf16.msra.mxu0 %v242
  %795 = vmatprep.subr.bf16.mxu0 0
  %796 = vmatpush1.bf16.msra.mxu0 %v239
  %797 = vmatprep.subr.bf16.mxu0 0
  %798 = vmatpush1.bf16.msra.mxu0 %v236
  %799 = vmatprep.subr.bf16.mxu0 0
  %800 = vmatpush2.bf16.msra.mxu0 0
  %801 = vmatprep.subr.bf16.mxu0 0
  %802 = vmatpush2.bf16.msra.mxu0 0
  %803 = vmatprep.subr.bf16.mxu0 0
  %804 = vmatpush2.bf16.msra.mxu0 0
  %805 = vmatprep.subr.bf16.mxu0 0
  %806 = vmatpush2.bf16.msra.mxu0 0
  %807 = vmatprep.subr.bf16.mxu0 0
  %808 = vmatpush2.bf16.msra.mxu0 0
  %809 = vmatprep.subr.bf16.mxu0 0
  %810 = vmatpush2.bf16.msra.mxu0 0
  %811 = vmatprep.subr.bf16.mxu0 0
  %812 = vmatpush2.bf16.msra.mxu0 0
  %813 = vmatprep.subr.bf16.mxu0 0
  %814 = vmatpush2.bf16.msra.mxu0 0
  %815 = vmatprep.mubr.bf16.mxu0 0
  %816 = vmatmul.mubr.bf16.gmra.mxu0 %v738
  %v817 = vpop.f32.mrf.mxu0
  %v818 = vadd.f32 %v150, %v817
  %v819 = vpop.f32.mrf.mxu0
  %v820 = vpop.f32.mrf.mxu0
  %v821 = vadd.f32 %v150, %v820
  %v822 = vpop.f32.mrf.mxu0
  %823 = vdwg.mxu0
  %826 = vrot.lane.b32.xlu0 %v777, 64
  %v827 = vpop.permute.xlu0 %826
  %828 = vrot.lane.b32.xlu0 %v781, 64
  %v829 = vpop.permute.xlu0 %828
  %v832 = vadd.f32 %v775, %v827
  %v833 = vadd.f32 %v779, %v829
  %v834 = vxor.u32 %v832, 2147483648
  %v835 = vxor.u32 %v833, 2147483648
  %v836 = vmul.f32 %v834, 1.442695
  %v837 = vpow.pop %v836
  %v838 = vmul.f32 %v835, 1.442695
  %v839 = vpow.pop %v838
  %v840 = vadd.f32 %v837, 1.0
  %v841 = vadd.f32 %v839, 1.0
  %v842 = vrcp.pop %v840
  %v843 = vmul.f32 1.0, %v842
  %v844 = vrcp.pop %v841
  %v845 = vmul.f32 1.0, %v844
  %v846 = vmul.f32 %v843, %v818
  %v847 = vmul.f32 %v845, %v821
  %850 = vrot.lane.b32.xlu0 %v846, 64
  %v851 = vpop.permute.xlu0 %850
  %852 = vrot.lane.b32.xlu0 %v847, 64
  %v853 = vpop.permute.xlu0 %852
  %v856 = vadd.f32 %v775, %v851
  %v857 = vadd.f32 %v779, %v853
  %v858 = vtanh.pop %v856
  %v859 = vtanh.pop %v857
  %v860 = vsub.f32 1.0, %v843
  %v861 = vsub.f32 1.0, %v845
  %864 = vrot.lane.b32.xlu0 %v858, 96
  %v865 = vpop.permute.xlu0 %864
  %866 = vrot.lane.b32.xlu0 %v859, 96
  %v867 = vpop.permute.xlu0 %866
  %v870 = vmul.f32 %v860, %v865
  %v871 = vmul.f32 %v861, %v867
  %v872 = vmul.f32 %v843, %v645
  %v873 = vmul.f32 %v845, %v646
  %v874 = vadd.f32 %v870, %v872
  %v875 = vadd.f32 %v871, %v873
  %878 = vrot.lane.b32.xlu0 %v818, 64
  %v879 = vpop.permute.xlu0 %878
  %880 = vrot.lane.b32.xlu0 %v821, 64
  %v881 = vpop.permute.xlu0 %880
  %v884 = vadd.f32 %v775, %v879
  %v885 = vadd.f32 %v779, %v881
  %v886 = vxor.u32 %v884, 2147483648
  %v887 = vxor.u32 %v885, 2147483648
  %v888 = vmul.f32 %v886, 1.442695
  %v889 = vpow.pop %v888
  %v890 = vmul.f32 %v887, 1.442695
  %v891 = vpow.pop %v890
  %v892 = vadd.f32 %v889, 1.0
  %v893 = vadd.f32 %v891, 1.0
  %v894 = vrcp.pop %v892
  %v895 = vmul.f32 1.0, %v894
  %v896 = vrcp.pop %v893
  %v897 = vmul.f32 1.0, %v896
  %v898 = vadd.f32 %v777, %v879
  %v899 = vadd.f32 %v781, %v881
  %v900 = vxor.u32 %v898, 2147483648
  %v901 = vxor.u32 %v899, 2147483648
  %v902 = vmul.f32 %v900, 1.442695
  %v903 = vpow.pop %v902
  %v904 = vmul.f32 %v901, 1.442695
  %v905 = vpow.pop %v904
  %v906 = vadd.f32 %v903, 1.0
  %v907 = vadd.f32 %v905, 1.0
  %v908 = vrcp.pop %v906
  %v909 = vmul.f32 1.0, %v908
  %v910 = vrcp.pop %v907
  %v911 = vmul.f32 1.0, %v910
  %v912 = vmul.f32 %v895, %v818
  %v913 = vmul.f32 %v897, %v821
  %916 = vrot.lane.b32.xlu0 %v912, 64
  %v917 = vpop.permute.xlu0 %916
  %918 = vrot.lane.b32.xlu0 %v913, 64
  %v919 = vpop.permute.xlu0 %918
  %v922 = vadd.f32 %v777, %v917
  %v923 = vadd.f32 %v781, %v919
  %v924 = vtanh.pop %v922
  %v925 = vtanh.pop %v923
  %v926 = vsub.f32 1.0, %v909
  %v927 = vsub.f32 1.0, %v911
  %930 = vrot.lane.b32.xlu0 %v924, 96
  %v931 = vpop.permute.xlu0 %930
  %932 = vrot.lane.b32.xlu0 %v925, 96
  %v933 = vpop.permute.xlu0 %932
  %v936 = vmul.f32 %v926, %v931
  %v937 = vmul.f32 %v927, %v933
  %v938 = vmul.f32 %v909, %v711
  %v939 = vmul.f32 %v911, %v712
  %v940 = vadd.f32 %v936, %v938
  %v941 = vadd.f32 %v937, %v939
  %s942 = scalar_lea.vmem %s0, 48
  %v943 = vld [vmem:[%s942] sm:$0xff]
  %v944 = vld [vmem:[%s942 + $0x8] sm:$0x3]
  %v945 = vpack.c.bf16 %v944, %v943
  %s946 = scalar_lea.vmem %s1, 48
  %v947 = vld [vmem:[%s946] sm:$0xff]
  %v948 = vld [vmem:[%s946 + $0x8] sm:$0x3]
  %v949 = vpack.c.bf16 %v948, %v947
  %v950 = vpack.c.bf16 %v875, %v874
  %v951 = vpack.c.bf16 %v941, %v940
  %953 = vrot.lane.b32.xlu0 %v949, 32
  %v954 = vpop.permute.xlu0 %953
  %956 = vrot.lane.b32.xlu0 %v950, 32
  %v957 = vpop.permute.xlu0 %956
  %959 = vrot.lane.b32.xlu0 %v951, 96
  %v960 = vpop.permute.xlu0 %959
  %v963 = vsel %vm96, %v945, %v954
  %v965 = vsel %vm100, %v963, %v957
  %v967 = vsel %vm103, %v965, %v960
  %969 = vmatprep.subr.bf16.mxu0 %v256
  %970 = vmatpush1.bf16.msra.mxu0 %v255
  %971 = vmatprep.subr.bf16.mxu0 %v253
  %972 = vmatpush1.bf16.msra.mxu0 %v252
  %973 = vmatprep.subr.bf16.mxu0 %v250
  %974 = vmatpush1.bf16.msra.mxu0 %v249
  %975 = vmatprep.subr.bf16.mxu0 %v247
  %976 = vmatpush1.bf16.msra.mxu0 %v246
  %977 = vmatprep.subr.bf16.mxu0 %v244
  %978 = vmatpush1.bf16.msra.mxu0 %v243
  %979 = vmatprep.subr.bf16.mxu0 %v241
  %980 = vmatpush1.bf16.msra.mxu0 %v240
  %981 = vmatprep.subr.bf16.mxu0 %v238
  %982 = vmatpush1.bf16.msra.mxu0 %v237
  %983 = vmatprep.subr.bf16.mxu0 %v235
  %984 = vmatpush1.bf16.msra.mxu0 %v234
  %985 = vmatprep.subr.bf16.mxu0 0
  %986 = vmatpush2.bf16.msra.mxu0 0
  %987 = vmatprep.subr.bf16.mxu0 0
  %988 = vmatpush2.bf16.msra.mxu0 0
  %989 = vmatprep.subr.bf16.mxu0 0
  %990 = vmatpush2.bf16.msra.mxu0 0
  %991 = vmatprep.subr.bf16.mxu0 0
  %992 = vmatpush2.bf16.msra.mxu0 0
  %993 = vmatprep.subr.bf16.mxu0 0
  %994 = vmatpush2.bf16.msra.mxu0 0
  %995 = vmatprep.subr.bf16.mxu0 0
  %996 = vmatpush2.bf16.msra.mxu0 0
  %997 = vmatprep.subr.bf16.mxu0 0
  %998 = vmatpush2.bf16.msra.mxu0 0
  %999 = vmatprep.subr.bf16.mxu0 0
  %1000 = vmatpush2.bf16.msra.mxu0 0
  %1001 = vmatprep.mubr.bf16.mxu0 0
  %1002 = vmatmul.mubr.bf16.gmra.mxu0 %v967
  %v1003 = vpop.f32.mrf.mxu0
  %v1004 = vadd.f32 %v142, %v1003
  %v1005 = vpop.f32.mrf.mxu0
  %v1006 = vadd.f32 %v146, %v1005
  %v1007 = vpop.f32.mrf.mxu0
  %v1008 = vadd.f32 %v142, %v1007
  %v1009 = vpop.f32.mrf.mxu0
  %v1010 = vadd.f32 %v146, %v1009
  %1011 = vdwg.mxu0
  %1012 = vmatprep.subr.bf16.mxu0 0
  %1013 = vmatpush1.bf16.msra.mxu0 %v257
  %1014 = vmatprep.subr.bf16.mxu0 0
  %1015 = vmatpush1.bf16.msra.mxu0 %v254
  %1016 = vmatprep.subr.bf16.mxu0 0
  %1017 = vmatpush1.bf16.msra.mxu0 %v251
  %1018 = vmatprep.subr.bf16.mxu0 0
  %1019 = vmatpush1.bf16.msra.mxu0 %v248
  %1020 = vmatprep.subr.bf16.mxu0 0
  %1021 = vmatpush1.bf16.msra.mxu0 %v245
  %1022 = vmatprep.subr.bf16.mxu0 0
  %1023 = vmatpush1.bf16.msra.mxu0 %v242
  %1024 = vmatprep.subr.bf16.mxu0 0
  %1025 = vmatpush1.bf16.msra.mxu0 %v239
  %1026 = vmatprep.subr.bf16.mxu0 0
  %1027 = vmatpush1.bf16.msra.mxu0 %v236
  %1028 = vmatprep.subr.bf16.mxu0 0
  %1029 = vmatpush2.bf16.msra.mxu0 0
  %1030 = vmatprep.subr.bf16.mxu0 0
  %1031 = vmatpush2.bf16.msra.mxu0 0
  %1032 = vmatprep.subr.bf16.mxu0 0
  %1033 = vmatpush2.bf16.msra.mxu0 0
  %1034 = vmatprep.subr.bf16.mxu0 0
  %1035 = vmatpush2.bf16.msra.mxu0 0
  %1036 = vmatprep.subr.bf16.mxu0 0
  %1037 = vmatpush2.bf16.msra.mxu0 0
  %1038 = vmatprep.subr.bf16.mxu0 0
  %1039 = vmatpush2.bf16.msra.mxu0 0
  %1040 = vmatprep.subr.bf16.mxu0 0
  %1041 = vmatpush2.bf16.msra.mxu0 0
  %1042 = vmatprep.subr.bf16.mxu0 0
  %1043 = vmatpush2.bf16.msra.mxu0 0
  %1044 = vmatprep.mubr.bf16.mxu0 0
  %1045 = vmatmul.mubr.bf16.gmra.mxu0 %v967
  %v1046 = vpop.f32.mrf.mxu0
  %v1047 = vadd.f32 %v150, %v1046
  %v1048 = vpop.f32.mrf.mxu0
  %v1049 = vpop.f32.mrf.mxu0
  %v1050 = vadd.f32 %v150, %v1049
  %v1051 = vpop.f32.mrf.mxu0
  %1052 = vdwg.mxu0
  %1055 = vrot.lane.b32.xlu0 %v1006, 64
  %v1056 = vpop.permute.xlu0 %1055
  %1057 = vrot.lane.b32.xlu0 %v1010, 64
  %v1058 = vpop.permute.xlu0 %1057
  %v1061 = vadd.f32 %v1004, %v1056
  %v1062 = vadd.f32 %v1008, %v1058
  %v1063 = vxor.u32 %v1061, 2147483648
  %v1064 = vxor.u32 %v1062, 2147483648
  %v1065 = vmul.f32 %v1063, 1.442695
  %v1066 = vpow.pop %v1065
  %v1067 = vmul.f32 %v1064, 1.442695
  %v1068 = vpow.pop %v1067
  %v1069 = vadd.f32 %v1066, 1.0
  %v1070 = vadd.f32 %v1068, 1.0
  %v1071 = vrcp.pop %v1069
  %v1072 = vmul.f32 1.0, %v1071
  %v1073 = vrcp.pop %v1070
  %v1074 = vmul.f32 1.0, %v1073
  %v1075 = vmul.f32 %v1072, %v1047
  %v1076 = vmul.f32 %v1074, %v1050
  %1079 = vrot.lane.b32.xlu0 %v1075, 64
  %v1080 = vpop.permute.xlu0 %1079
  %1081 = vrot.lane.b32.xlu0 %v1076, 64
  %v1082 = vpop.permute.xlu0 %1081
  %v1085 = vadd.f32 %v1004, %v1080
  %v1086 = vadd.f32 %v1008, %v1082
  %v1087 = vtanh.pop %v1085
  %v1088 = vtanh.pop %v1086
  %v1089 = vsub.f32 1.0, %v1072
  %v1090 = vsub.f32 1.0, %v1074
  %1093 = vrot.lane.b32.xlu0 %v1087, 96
  %v1094 = vpop.permute.xlu0 %1093
  %1095 = vrot.lane.b32.xlu0 %v1088, 96
  %v1096 = vpop.permute.xlu0 %1095
  %v1099 = vmul.f32 %v1089, %v1094
  %v1100 = vmul.f32 %v1090, %v1096
  %v1101 = vmul.f32 %v1072, %v874
  %v1102 = vmul.f32 %v1074, %v875
  %v1103 = vadd.f32 %v1099, %v1101
  %v1104 = vadd.f32 %v1100, %v1102
  %1107 = vrot.lane.b32.xlu0 %v1047, 64
  %v1108 = vpop.permute.xlu0 %1107
  %1109 = vrot.lane.b32.xlu0 %v1050, 64
  %v1110 = vpop.permute.xlu0 %1109
  %v1113 = vadd.f32 %v1004, %v1108
  %v1114 = vadd.f32 %v1008, %v1110
  %v1115 = vxor.u32 %v1113, 2147483648
  %v1116 = vxor.u32 %v1114, 2147483648
  %v1117 = vmul.f32 %v1115, 1.442695
  %v1118 = vpow.pop %v1117
  %v1119 = vmul.f32 %v1116, 1.442695
  %v1120 = vpow.pop %v1119
  %v1121 = vadd.f32 %v1118, 1.0
  %v1122 = vadd.f32 %v1120, 1.0
  %v1123 = vrcp.pop %v1121
  %v1124 = vmul.f32 1.0, %v1123
  %v1125 = vrcp.pop %v1122
  %v1126 = vmul.f32 1.0, %v1125
  %v1127 = vadd.f32 %v1006, %v1108
  %v1128 = vadd.f32 %v1010, %v1110
  %v1129 = vxor.u32 %v1127, 2147483648
  %v1130 = vxor.u32 %v1128, 2147483648
  %v1131 = vmul.f32 %v1129, 1.442695
  %v1132 = vpow.pop %v1131
  %v1133 = vmul.f32 %v1130, 1.442695
  %v1134 = vpow.pop %v1133
  %v1135 = vadd.f32 %v1132, 1.0
  %v1136 = vadd.f32 %v1134, 1.0
  %v1137 = vrcp.pop %v1135
  %v1138 = vmul.f32 1.0, %v1137
  %v1139 = vrcp.pop %v1136
  %v1140 = vmul.f32 1.0, %v1139
  %v1141 = vmul.f32 %v1124, %v1047
  %v1142 = vmul.f32 %v1126, %v1050
  %1145 = vrot.lane.b32.xlu0 %v1141, 64
  %v1146 = vpop.permute.xlu0 %1145
  %1147 = vrot.lane.b32.xlu0 %v1142, 64
  %v1148 = vpop.permute.xlu0 %1147
  %v1151 = vadd.f32 %v1006, %v1146
  %v1152 = vadd.f32 %v1010, %v1148
  %v1153 = vtanh.pop %v1151
  %v1154 = vtanh.pop %v1152
  %v1155 = vsub.f32 1.0, %v1138
  %v1156 = vsub.f32 1.0, %v1140
  %1159 = vrot.lane.b32.xlu0 %v1153, 96
  %v1160 = vpop.permute.xlu0 %1159
  %1161 = vrot.lane.b32.xlu0 %v1154, 96
  %v1162 = vpop.permute.xlu0 %1161
  %v1165 = vmul.f32 %v1155, %v1160
  %v1166 = vmul.f32 %v1156, %v1162
  %v1167 = vmul.f32 %v1138, %v940
  %v1168 = vmul.f32 %v1140, %v941
  %v1169 = vadd.f32 %v1165, %v1167
  %v1170 = vadd.f32 %v1166, %v1168
  %s1171 = scalar_lea.vmem %s0, 64
  %v1172 = vld [vmem:[%s1171] sm:$0xff]
  %v1173 = vld [vmem:[%s1171 + $0x8] sm:$0x3]
  %v1174 = vpack.c.bf16 %v1173, %v1172
  %s1175 = scalar_lea.vmem %s1, 64
  %v1176 = vld [vmem:[%s1175] sm:$0xff]
  %v1177 = vld [vmem:[%s1175 + $0x8] sm:$0x3]
  %v1178 = vpack.c.bf16 %v1177, %v1176
  %v1179 = vpack.c.bf16 %v1104, %v1103
  %v1180 = vpack.c.bf16 %v1170, %v1169
  %1182 = vrot.lane.b32.xlu0 %v1178, 32
  %v1183 = vpop.permute.xlu0 %1182
  %1185 = vrot.lane.b32.xlu0 %v1179, 32
  %v1186 = vpop.permute.xlu0 %1185
  %1188 = vrot.lane.b32.xlu0 %v1180, 96
  %v1189 = vpop.permute.xlu0 %1188
  %v1192 = vsel %vm96, %v1174, %v1183
  %v1194 = vsel %vm100, %v1192, %v1186
  %v1196 = vsel %vm103, %v1194, %v1189
  %1198 = vmatprep.subr.bf16.mxu0 %v256
  %1199 = vmatpush1.bf16.msra.mxu0 %v255
  %1200 = vmatprep.subr.bf16.mxu0 %v253
  %1201 = vmatpush1.bf16.msra.mxu0 %v252
  %1202 = vmatprep.subr.bf16.mxu0 %v250
  %1203 = vmatpush1.bf16.msra.mxu0 %v249
  %1204 = vmatprep.subr.bf16.mxu0 %v247
  %1205 = vmatpush1.bf16.msra.mxu0 %v246
  %1206 = vmatprep.subr.bf16.mxu0 %v244
  %1207 = vmatpush1.bf16.msra.mxu0 %v243
  %1208 = vmatprep.subr.bf16.mxu0 %v241
  %1209 = vmatpush1.bf16.msra.mxu0 %v240
  %1210 = vmatprep.subr.bf16.mxu0 %v238
  %1211 = vmatpush1.bf16.msra.mxu0 %v237
  %1212 = vmatprep.subr.bf16.mxu0 %v235
  %1213 = vmatpush1.bf16.msra.mxu0 %v234
  %1214 = vmatprep.subr.bf16.mxu0 0
  %1215 = vmatpush2.bf16.msra.mxu0 0
  %1216 = vmatprep.subr.bf16.mxu0 0
  %1217 = vmatpush2.bf16.msra.mxu0 0
  %1218 = vmatprep.subr.bf16.mxu0 0
  %1219 = vmatpush2.bf16.msra.mxu0 0
  %1220 = vmatprep.subr.bf16.mxu0 0
  %1221 = vmatpush2.bf16.msra.mxu0 0
  %1222 = vmatprep.subr.bf16.mxu0 0
  %1223 = vmatpush2.bf16.msra.mxu0 0
  %1224 = vmatprep.subr.bf16.mxu0 0
  %1225 = vmatpush2.bf16.msra.mxu0 0
  %1226 = vmatprep.subr.bf16.mxu0 0
  %1227 = vmatpush2.bf16.msra.mxu0 0
  %1228 = vmatprep.subr.bf16.mxu0 0
  %1229 = vmatpush2.bf16.msra.mxu0 0
  %1230 = vmatprep.mubr.bf16.mxu0 0
  %1231 = vmatmul.mubr.bf16.gmra.mxu0 %v1196
  %v1232 = vpop.f32.mrf.mxu0
  %v1233 = vadd.f32 %v142, %v1232
  %v1234 = vpop.f32.mrf.mxu0
  %v1235 = vadd.f32 %v146, %v1234
  %v1236 = vpop.f32.mrf.mxu0
  %v1237 = vadd.f32 %v142, %v1236
  %v1238 = vpop.f32.mrf.mxu0
  %v1239 = vadd.f32 %v146, %v1238
  %1240 = vdwg.mxu0
  %1241 = vmatprep.subr.bf16.mxu0 0
  %1242 = vmatpush1.bf16.msra.mxu0 %v257
  %1243 = vmatprep.subr.bf16.mxu0 0
  %1244 = vmatpush1.bf16.msra.mxu0 %v254
  %1245 = vmatprep.subr.bf16.mxu0 0
  %1246 = vmatpush1.bf16.msra.mxu0 %v251
  %1247 = vmatprep.subr.bf16.mxu0 0
  %1248 = vmatpush1.bf16.msra.mxu0 %v248
  %1249 = vmatprep.subr.bf16.mxu0 0
  %1250 = vmatpush1.bf16.msra.mxu0 %v245
  %1251 = vmatprep.subr.bf16.mxu0 0
  %1252 = vmatpush1.bf16.msra.mxu0 %v242
  %1253 = vmatprep.subr.bf16.mxu0 0
  %1254 = vmatpush1.bf16.msra.mxu0 %v239
  %1255 = vmatprep.subr.bf16.mxu0 0
  %1256 = vmatpush1.bf16.msra.mxu0 %v236
  %1257 = vmatprep.subr.bf16.mxu0 0
  %1258 = vmatpush2.bf16.msra.mxu0 0
  %1259 = vmatprep.subr.bf16.mxu0 0
  %1260 = vmatpush2.bf16.msra.mxu0 0
  %1261 = vmatprep.subr.bf16.mxu0 0
  %1262 = vmatpush2.bf16.msra.mxu0 0
  %1263 = vmatprep.subr.bf16.mxu0 0
  %1264 = vmatpush2.bf16.msra.mxu0 0
  %1265 = vmatprep.subr.bf16.mxu0 0
  %1266 = vmatpush2.bf16.msra.mxu0 0
  %1267 = vmatprep.subr.bf16.mxu0 0
  %1268 = vmatpush2.bf16.msra.mxu0 0
  %1269 = vmatprep.subr.bf16.mxu0 0
  %1270 = vmatpush2.bf16.msra.mxu0 0
  %1271 = vmatprep.subr.bf16.mxu0 0
  %1272 = vmatpush2.bf16.msra.mxu0 0
  %1273 = vmatprep.mubr.bf16.mxu0 0
  %1274 = vmatmul.mubr.bf16.gmra.mxu0 %v1196
  %v1275 = vpop.f32.mrf.mxu0
  %v1276 = vadd.f32 %v150, %v1275
  %v1277 = vpop.f32.mrf.mxu0
  %v1278 = vpop.f32.mrf.mxu0
  %v1279 = vadd.f32 %v150, %v1278
  %v1280 = vpop.f32.mrf.mxu0
  %1281 = vdwg.mxu0
  %1284 = vrot.lane.b32.xlu0 %v1235, 64
  %v1285 = vpop.permute.xlu0 %1284
  %1286 = vrot.lane.b32.xlu0 %v1239, 64
  %v1287 = vpop.permute.xlu0 %1286
  %v1290 = vadd.f32 %v1233, %v1285
  %v1291 = vadd.f32 %v1237, %v1287
  %v1292 = vxor.u32 %v1290, 2147483648
  %v1293 = vxor.u32 %v1291, 2147483648
  %v1294 = vmul.f32 %v1292, 1.442695
  %v1295 = vpow.pop %v1294
  %v1296 = vmul.f32 %v1293, 1.442695
  %v1297 = vpow.pop %v1296
  %v1298 = vadd.f32 %v1295, 1.0
  %v1299 = vadd.f32 %v1297, 1.0
  %v1300 = vrcp.pop %v1298
  %v1301 = vmul.f32 1.0, %v1300
  %v1302 = vrcp.pop %v1299
  %v1303 = vmul.f32 1.0, %v1302
  %v1304 = vmul.f32 %v1301, %v1276
  %v1305 = vmul.f32 %v1303, %v1279
  %1308 = vrot.lane.b32.xlu0 %v1304, 64
  %v1309 = vpop.permute.xlu0 %1308
  %1310 = vrot.lane.b32.xlu0 %v1305, 64
  %v1311 = vpop.permute.xlu0 %1310
  %v1314 = vadd.f32 %v1233, %v1309
  %v1315 = vadd.f32 %v1237, %v1311
  %v1316 = vtanh.pop %v1314
  %v1317 = vtanh.pop %v1315
  %v1318 = vsub.f32 1.0, %v1301
  %v1319 = vsub.f32 1.0, %v1303
  %1322 = vrot.lane.b32.xlu0 %v1316, 96
  %v1323 = vpop.permute.xlu0 %1322
  %1324 = vrot.lane.b32.xlu0 %v1317, 96
  %v1325 = vpop.permute.xlu0 %1324
  %v1328 = vmul.f32 %v1318, %v1323
  %v1329 = vmul.f32 %v1319, %v1325
  %v1330 = vmul.f32 %v1301, %v1103
  %v1331 = vmul.f32 %v1303, %v1104
  %v1332 = vadd.f32 %v1328, %v1330
  %v1333 = vadd.f32 %v1329, %v1331
  %1336 = vrot.lane.b32.xlu0 %v1276, 64
  %v1337 = vpop.permute.xlu0 %1336
  %1338 = vrot.lane.b32.xlu0 %v1279, 64
  %v1339 = vpop.permute.xlu0 %1338
  %v1342 = vadd.f32 %v1233, %v1337
  %v1343 = vadd.f32 %v1237, %v1339
  %v1344 = vxor.u32 %v1342, 2147483648
  %v1345 = vxor.u32 %v1343, 2147483648
  %v1346 = vmul.f32 %v1344, 1.442695
  %v1347 = vpow.pop %v1346
  %v1348 = vmul.f32 %v1345, 1.442695
  %v1349 = vpow.pop %v1348
  %v1350 = vadd.f32 %v1347, 1.0
  %v1351 = vadd.f32 %v1349, 1.0
  %v1352 = vrcp.pop %v1350
  %v1353 = vmul.f32 1.0, %v1352
  %v1354 = vrcp.pop %v1351
  %v1355 = vmul.f32 1.0, %v1354
  %v1356 = vadd.f32 %v1235, %v1337
  %v1357 = vadd.f32 %v1239, %v1339
  %v1358 = vxor.u32 %v1356, 2147483648
  %v1359 = vxor.u32 %v1357, 2147483648
  %v1360 = vmul.f32 %v1358, 1.442695
  %v1361 = vpow.pop %v1360
  %v1362 = vmul.f32 %v1359, 1.442695
  %v1363 = vpow.pop %v1362
  %v1364 = vadd.f32 %v1361, 1.0
  %v1365 = vadd.f32 %v1363, 1.0
  %v1366 = vrcp.pop %v1364
  %v1367 = vmul.f32 1.0, %v1366
  %v1368 = vrcp.pop %v1365
  %v1369 = vmul.f32 1.0, %v1368
  %v1370 = vmul.f32 %v1353, %v1276
  %v1371 = vmul.f32 %v1355, %v1279
  %1374 = vrot.lane.b32.xlu0 %v1370, 64
  %v1375 = vpop.permute.xlu0 %1374
  %1376 = vrot.lane.b32.xlu0 %v1371, 64
  %v1377 = vpop.permute.xlu0 %1376
  %v1380 = vadd.f32 %v1235, %v1375
  %v1381 = vadd.f32 %v1239, %v1377
  %v1382 = vtanh.pop %v1380
  %v1383 = vtanh.pop %v1381
  %v1384 = vsub.f32 1.0, %v1367
  %v1385 = vsub.f32 1.0, %v1369
  %1388 = vrot.lane.b32.xlu0 %v1382, 96
  %v1389 = vpop.permute.xlu0 %1388
  %1390 = vrot.lane.b32.xlu0 %v1383, 96
  %v1391 = vpop.permute.xlu0 %1390
  %v1394 = vmul.f32 %v1384, %v1389
  %v1395 = vmul.f32 %v1385, %v1391
  %v1396 = vmul.f32 %v1367, %v1169
  %v1397 = vmul.f32 %v1369, %v1170
  %v1398 = vadd.f32 %v1394, %v1396
  %v1399 = vadd.f32 %v1395, %v1397
  %s1400 = scalar_lea.vmem %s0, 80
  %v1401 = vld [vmem:[%s1400] sm:$0xff]
  %v1402 = vld [vmem:[%s1400 + $0x8] sm:$0x3]
  %v1403 = vpack.c.bf16 %v1402, %v1401
  %s1404 = scalar_lea.vmem %s1, 80
  %v1405 = vld [vmem:[%s1404] sm:$0xff]
  %v1406 = vld [vmem:[%s1404 + $0x8] sm:$0x3]
  %v1407 = vpack.c.bf16 %v1406, %v1405
  %v1408 = vpack.c.bf16 %v1333, %v1332
  %v1409 = vpack.c.bf16 %v1399, %v1398
  %1411 = vrot.lane.b32.xlu0 %v1407, 32
  %v1412 = vpop.permute.xlu0 %1411
  %1414 = vrot.lane.b32.xlu0 %v1408, 32
  %v1415 = vpop.permute.xlu0 %1414
  %1417 = vrot.lane.b32.xlu0 %v1409, 96
  %v1418 = vpop.permute.xlu0 %1417
  %v1421 = vsel %vm96, %v1403, %v1412
  %v1423 = vsel %vm100, %v1421, %v1415
  %v1425 = vsel %vm103, %v1423, %v1418
  %1427 = vmatprep.subr.bf16.mxu0 %v256
  %1428 = vmatpush1.bf16.msra.mxu0 %v255
  %1429 = vmatprep.subr.bf16.mxu0 %v253
  %1430 = vmatpush1.bf16.msra.mxu0 %v252
  %1431 = vmatprep.subr.bf16.mxu0 %v250
  %1432 = vmatpush1.bf16.msra.mxu0 %v249
  %1433 = vmatprep.subr.bf16.mxu0 %v247
  %1434 = vmatpush1.bf16.msra.mxu0 %v246
  %1435 = vmatprep.subr.bf16.mxu0 %v244
  %1436 = vmatpush1.bf16.msra.mxu0 %v243
  %1437 = vmatprep.subr.bf16.mxu0 %v241
  %1438 = vmatpush1.bf16.msra.mxu0 %v240
  %1439 = vmatprep.subr.bf16.mxu0 %v238
  %1440 = vmatpush1.bf16.msra.mxu0 %v237
  %1441 = vmatprep.subr.bf16.mxu0 %v235
  %1442 = vmatpush1.bf16.msra.mxu0 %v234
  %1443 = vmatprep.subr.bf16.mxu0 0
  %1444 = vmatpush2.bf16.msra.mxu0 0
  %1445 = vmatprep.subr.bf16.mxu0 0
  %1446 = vmatpush2.bf16.msra.mxu0 0
  %1447 = vmatprep.subr.bf16.mxu0 0
  %1448 = vmatpush2.bf16.msra.mxu0 0
  %1449 = vmatprep.subr.bf16.mxu0 0
  %1450 = vmatpush2.bf16.msra.mxu0 0
  %1451 = vmatprep.subr.bf16.mxu0 0
  %1452 = vmatpush2.bf16.msra.mxu0 0
  %1453 = vmatprep.subr.bf16.mxu0 0
  %1454 = vmatpush2.bf16.msra.mxu0 0
  %1455 = vmatprep.subr.bf16.mxu0 0
  %1456 = vmatpush2.bf16.msra.mxu0 0
  %1457 = vmatprep.subr.bf16.mxu0 0
  %1458 = vmatpush2.bf16.msra.mxu0 0
  %1459 = vmatprep.mubr.bf16.mxu0 0
  %1460 = vmatmul.mubr.bf16.gmra.mxu0 %v1425
  %v1461 = vpop.f32.mrf.mxu0
  %v1462 = vadd.f32 %v142, %v1461
  %v1463 = vpop.f32.mrf.mxu0
  %v1464 = vadd.f32 %v146, %v1463
  %v1465 = vpop.f32.mrf.mxu0
  %v1466 = vadd.f32 %v142, %v1465
  %v1467 = vpop.f32.mrf.mxu0
  %v1468 = vadd.f32 %v146, %v1467
  %1469 = vdwg.mxu0
  %1470 = vmatprep.subr.bf16.mxu0 0
  %1471 = vmatpush1.bf16.msra.mxu0 %v257
  %1472 = vmatprep.subr.bf16.mxu0 0
  %1473 = vmatpush1.bf16.msra.mxu0 %v254
  %1474 = vmatprep.subr.bf16.mxu0 0
  %1475 = vmatpush1.bf16.msra.mxu0 %v251
  %1476 = vmatprep.subr.bf16.mxu0 0
  %1477 = vmatpush1.bf16.msra.mxu0 %v248
  %1478 = vmatprep.subr.bf16.mxu0 0
  %1479 = vmatpush1.bf16.msra.mxu0 %v245
  %1480 = vmatprep.subr.bf16.mxu0 0
  %1481 = vmatpush1.bf16.msra.mxu0 %v242
  %1482 = vmatprep.subr.bf16.mxu0 0
  %1483 = vmatpush1.bf16.msra.mxu0 %v239
  %1484 = vmatprep.subr.bf16.mxu0 0
  %1485 = vmatpush1.bf16.msra.mxu0 %v236
  %1486 = vmatprep.subr.bf16.mxu0 0
  %1487 = vmatpush2.bf16.msra.mxu0 0
  %1488 = vmatprep.subr.bf16.mxu0 0
  %1489 = vmatpush2.bf16.msra.mxu0 0
  %1490 = vmatprep.subr.bf16.mxu0 0
  %1491 = vmatpush2.bf16.msra.mxu0 0
  %1492 = vmatprep.subr.bf16.mxu0 0
  %1493 = vmatpush2.bf16.msra.mxu0 0
  %1494 = vmatprep.subr.bf16.mxu0 0
  %1495 = vmatpush2.bf16.msra.mxu0 0
  %1496 = vmatprep.subr.bf16.mxu0 0
  %1497 = vmatpush2.bf16.msra.mxu0 0
  %1498 = vmatprep.subr.bf16.mxu0 0
  %1499 = vmatpush2.bf16.msra.mxu0 0
  %1500 = vmatprep.subr.bf16.mxu0 0
  %1501 = vmatpush2.bf16.msra.mxu0 0
  %1502 = vmatprep.mubr.bf16.mxu0 0
  %1503 = vmatmul.mubr.bf16.gmra.mxu0 %v1425
  %v1504 = vpop.f32.mrf.mxu0
  %v1505 = vadd.f32 %v150, %v1504
  %v1506 = vpop.f32.mrf.mxu0
  %v1507 = vpop.f32.mrf.mxu0
  %v1508 = vadd.f32 %v150, %v1507
  %v1509 = vpop.f32.mrf.mxu0
  %1510 = vdwg.mxu0
  %1513 = vrot.lane.b32.xlu0 %v1464, 64
  %v1514 = vpop.permute.xlu0 %1513
  %1515 = vrot.lane.b32.xlu0 %v1468, 64
  %v1516 = vpop.permute.xlu0 %1515
  %v1519 = vadd.f32 %v1462, %v1514
  %v1520 = vadd.f32 %v1466, %v1516
  %v1521 = vxor.u32 %v1519, 2147483648
  %v1522 = vxor.u32 %v1520, 2147483648
  %v1523 = vmul.f32 %v1521, 1.442695
  %v1524 = vpow.pop %v1523
  %v1525 = vmul.f32 %v1522, 1.442695
  %v1526 = vpow.pop %v1525
  %v1527 = vadd.f32 %v1524, 1.0
  %v1528 = vadd.f32 %v1526, 1.0
  %v1529 = vrcp.pop %v1527
  %v1530 = vmul.f32 1.0, %v1529
  %v1531 = vrcp.pop %v1528
  %v1532 = vmul.f32 1.0, %v1531
  %v1533 = vmul.f32 %v1530, %v1505
  %v1534 = vmul.f32 %v1532, %v1508
  %1537 = vrot.lane.b32.xlu0 %v1533, 64
  %v1538 = vpop.permute.xlu0 %1537
  %1539 = vrot.lane.b32.xlu0 %v1534, 64
  %v1540 = vpop.permute.xlu0 %1539
  %v1543 = vadd.f32 %v1462, %v1538
  %v1544 = vadd.f32 %v1466, %v1540
  %v1545 = vtanh.pop %v1543
  %v1546 = vtanh.pop %v1544
  %v1547 = vsub.f32 1.0, %v1530
  %v1548 = vsub.f32 1.0, %v1532
  %1551 = vrot.lane.b32.xlu0 %v1545, 96
  %v1552 = vpop.permute.xlu0 %1551
  %1553 = vrot.lane.b32.xlu0 %v1546, 96
  %v1554 = vpop.permute.xlu0 %1553
  %v1557 = vmul.f32 %v1547, %v1552
  %v1558 = vmul.f32 %v1548, %v1554
  %v1559 = vmul.f32 %v1530, %v1332
  %v1560 = vmul.f32 %v1532, %v1333
  %v1561 = vadd.f32 %v1557, %v1559
  %v1562 = vadd.f32 %v1558, %v1560
  %1565 = vrot.lane.b32.xlu0 %v1505, 64
  %v1566 = vpop.permute.xlu0 %1565
  %1567 = vrot.lane.b32.xlu0 %v1508, 64
  %v1568 = vpop.permute.xlu0 %1567
  %v1571 = vadd.f32 %v1462, %v1566
  %v1572 = vadd.f32 %v1466, %v1568
  %v1573 = vxor.u32 %v1571, 2147483648
  %v1574 = vxor.u32 %v1572, 2147483648
  %v1575 = vmul.f32 %v1573, 1.442695
  %v1576 = vpow.pop %v1575
  %v1577 = vmul.f32 %v1574, 1.442695
  %v1578 = vpow.pop %v1577
  %v1579 = vadd.f32 %v1576, 1.0
  %v1580 = vadd.f32 %v1578, 1.0
  %v1581 = vrcp.pop %v1579
  %v1582 = vmul.f32 1.0, %v1581
  %v1583 = vrcp.pop %v1580
  %v1584 = vmul.f32 1.0, %v1583
  %v1585 = vadd.f32 %v1464, %v1566
  %v1586 = vadd.f32 %v1468, %v1568
  %v1587 = vxor.u32 %v1585, 2147483648
  %v1588 = vxor.u32 %v1586, 2147483648
  %v1589 = vmul.f32 %v1587, 1.442695
  %v1590 = vpow.pop %v1589
  %v1591 = vmul.f32 %v1588, 1.442695
  %v1592 = vpow.pop %v1591
  %v1593 = vadd.f32 %v1590, 1.0
  %v1594 = vadd.f32 %v1592, 1.0
  %v1595 = vrcp.pop %v1593
  %v1596 = vmul.f32 1.0, %v1595
  %v1597 = vrcp.pop %v1594
  %v1598 = vmul.f32 1.0, %v1597
  %v1599 = vmul.f32 %v1582, %v1505
  %v1600 = vmul.f32 %v1584, %v1508
  %1603 = vrot.lane.b32.xlu0 %v1599, 64
  %v1604 = vpop.permute.xlu0 %1603
  %1605 = vrot.lane.b32.xlu0 %v1600, 64
  %v1606 = vpop.permute.xlu0 %1605
  %v1609 = vadd.f32 %v1464, %v1604
  %v1610 = vadd.f32 %v1468, %v1606
  %v1611 = vtanh.pop %v1609
  %v1612 = vtanh.pop %v1610
  %v1613 = vsub.f32 1.0, %v1596
  %v1614 = vsub.f32 1.0, %v1598
  %1617 = vrot.lane.b32.xlu0 %v1611, 96
  %v1618 = vpop.permute.xlu0 %1617
  %1619 = vrot.lane.b32.xlu0 %v1612, 96
  %v1620 = vpop.permute.xlu0 %1619
  %v1623 = vmul.f32 %v1613, %v1618
  %v1624 = vmul.f32 %v1614, %v1620
  %v1625 = vmul.f32 %v1596, %v1398
  %v1626 = vmul.f32 %v1598, %v1399
  %v1627 = vadd.f32 %v1623, %v1625
  %v1628 = vadd.f32 %v1624, %v1626
  %s1629 = scalar_lea.vmem %s0, 96
  %v1630 = vld [vmem:[%s1629] sm:$0xff]
  %v1631 = vld [vmem:[%s1629 + $0x8] sm:$0x3]
  %v1632 = vpack.c.bf16 %v1631, %v1630
  %s1633 = scalar_lea.vmem %s1, 96
  %v1634 = vld [vmem:[%s1633] sm:$0xff]
  %v1635 = vld [vmem:[%s1633 + $0x8] sm:$0x3]
  %v1636 = vpack.c.bf16 %v1635, %v1634
  %v1637 = vpack.c.bf16 %v1562, %v1561
  %v1638 = vpack.c.bf16 %v1628, %v1627
  %1640 = vrot.lane.b32.xlu0 %v1636, 32
  %v1641 = vpop.permute.xlu0 %1640
  %1643 = vrot.lane.b32.xlu0 %v1637, 32
  %v1644 = vpop.permute.xlu0 %1643
  %1646 = vrot.lane.b32.xlu0 %v1638, 96
  %v1647 = vpop.permute.xlu0 %1646
  %v1650 = vsel %vm96, %v1632, %v1641
  %v1652 = vsel %vm100, %v1650, %v1644
  %v1654 = vsel %vm103, %v1652, %v1647
  %1656 = vmatprep.subr.bf16.mxu0 %v256
  %1657 = vmatpush1.bf16.msra.mxu0 %v255
  %1658 = vmatprep.subr.bf16.mxu0 %v253
  %1659 = vmatpush1.bf16.msra.mxu0 %v252
  %1660 = vmatprep.subr.bf16.mxu0 %v250
  %1661 = vmatpush1.bf16.msra.mxu0 %v249
  %1662 = vmatprep.subr.bf16.mxu0 %v247
  %1663 = vmatpush1.bf16.msra.mxu0 %v246
  %1664 = vmatprep.subr.bf16.mxu0 %v244
  %1665 = vmatpush1.bf16.msra.mxu0 %v243
  %1666 = vmatprep.subr.bf16.mxu0 %v241
  %1667 = vmatpush1.bf16.msra.mxu0 %v240
  %1668 = vmatprep.subr.bf16.mxu0 %v238
  %1669 = vmatpush1.bf16.msra.mxu0 %v237
  %1670 = vmatprep.subr.bf16.mxu0 %v235
  %1671 = vmatpush1.bf16.msra.mxu0 %v234
  %1672 = vmatprep.subr.bf16.mxu0 0
  %1673 = vmatpush2.bf16.msra.mxu0 0
  %1674 = vmatprep.subr.bf16.mxu0 0
  %1675 = vmatpush2.bf16.msra.mxu0 0
  %1676 = vmatprep.subr.bf16.mxu0 0
  %1677 = vmatpush2.bf16.msra.mxu0 0
  %1678 = vmatprep.subr.bf16.mxu0 0
  %1679 = vmatpush2.bf16.msra.mxu0 0
  %1680 = vmatprep.subr.bf16.mxu0 0
  %1681 = vmatpush2.bf16.msra.mxu0 0
  %1682 = vmatprep.subr.bf16.mxu0 0
  %1683 = vmatpush2.bf16.msra.mxu0 0
  %1684 = vmatprep.subr.bf16.mxu0 0
  %1685 = vmatpush2.bf16.msra.mxu0 0
  %1686 = vmatprep.subr.bf16.mxu0 0
  %1687 = vmatpush2.bf16.msra.mxu0 0
  %1688 = vmatprep.mubr.bf16.mxu0 0
  %1689 = vmatmul.mubr.bf16.gmra.mxu0 %v1654
  %v1690 = vpop.f32.mrf.mxu0
  %v1691 = vadd.f32 %v142, %v1690
  %v1692 = vpop.f32.mrf.mxu0
  %v1693 = vadd.f32 %v146, %v1692
  %v1694 = vpop.f32.mrf.mxu0
  %v1695 = vadd.f32 %v142, %v1694
  %v1696 = vpop.f32.mrf.mxu0
  %v1697 = vadd.f32 %v146, %v1696
  %1698 = vdwg.mxu0
  %1699 = vmatprep.subr.bf16.mxu0 0
  %1700 = vmatpush1.bf16.msra.mxu0 %v257
  %1701 = vmatprep.subr.bf16.mxu0 0
  %1702 = vmatpush1.bf16.msra.mxu0 %v254
  %1703 = vmatprep.subr.bf16.mxu0 0
  %1704 = vmatpush1.bf16.msra.mxu0 %v251
  %1705 = vmatprep.subr.bf16.mxu0 0
  %1706 = vmatpush1.bf16.msra.mxu0 %v248
  %1707 = vmatprep.subr.bf16.mxu0 0
  %1708 = vmatpush1.bf16.msra.mxu0 %v245
  %1709 = vmatprep.subr.bf16.mxu0 0
  %1710 = vmatpush1.bf16.msra.mxu0 %v242
  %1711 = vmatprep.subr.bf16.mxu0 0
  %1712 = vmatpush1.bf16.msra.mxu0 %v239
  %1713 = vmatprep.subr.bf16.mxu0 0
  %1714 = vmatpush1.bf16.msra.mxu0 %v236
  %1715 = vmatprep.subr.bf16.mxu0 0
  %1716 = vmatpush2.bf16.msra.mxu0 0
  %1717 = vmatprep.subr.bf16.mxu0 0
  %1718 = vmatpush2.bf16.msra.mxu0 0
  %1719 = vmatprep.subr.bf16.mxu0 0
  %1720 = vmatpush2.bf16.msra.mxu0 0
  %1721 = vmatprep.subr.bf16.mxu0 0
  %1722 = vmatpush2.bf16.msra.mxu0 0
  %1723 = vmatprep.subr.bf16.mxu0 0
  %1724 = vmatpush2.bf16.msra.mxu0 0
  %1725 = vmatprep.subr.bf16.mxu0 0
  %1726 = vmatpush2.bf16.msra.mxu0 0
  %1727 = vmatprep.subr.bf16.mxu0 0
  %1728 = vmatpush2.bf16.msra.mxu0 0
  %1729 = vmatprep.subr.bf16.mxu0 0
  %1730 = vmatpush2.bf16.msra.mxu0 0
  %1731 = vmatprep.mubr.bf16.mxu0 0
  %1732 = vmatmul.mubr.bf16.gmra.mxu0 %v1654
  %v1733 = vpop.f32.mrf.mxu0
  %v1734 = vadd.f32 %v150, %v1733
  %v1735 = vpop.f32.mrf.mxu0
  %v1736 = vpop.f32.mrf.mxu0
  %v1737 = vadd.f32 %v150, %v1736
  %v1738 = vpop.f32.mrf.mxu0
  %1739 = vdwg.mxu0
  %1742 = vrot.lane.b32.xlu0 %v1693, 64
  %v1743 = vpop.permute.xlu0 %1742
  %1744 = vrot.lane.b32.xlu0 %v1697, 64
  %v1745 = vpop.permute.xlu0 %1744
  %v1748 = vadd.f32 %v1691, %v1743
  %v1749 = vadd.f32 %v1695, %v1745
  %v1750 = vxor.u32 %v1748, 2147483648
  %v1751 = vxor.u32 %v1749, 2147483648
  %v1752 = vmul.f32 %v1750, 1.442695
  %v1753 = vpow.pop %v1752
  %v1754 = vmul.f32 %v1751, 1.442695
  %v1755 = vpow.pop %v1754
  %v1756 = vadd.f32 %v1753, 1.0
  %v1757 = vadd.f32 %v1755, 1.0
  %v1758 = vrcp.pop %v1756
  %v1759 = vmul.f32 1.0, %v1758
  %v1760 = vrcp.pop %v1757
  %v1761 = vmul.f32 1.0, %v1760
  %v1762 = vmul.f32 %v1759, %v1734
  %v1763 = vmul.f32 %v1761, %v1737
  %1766 = vrot.lane.b32.xlu0 %v1762, 64
  %v1767 = vpop.permute.xlu0 %1766
  %1768 = vrot.lane.b32.xlu0 %v1763, 64
  %v1769 = vpop.permute.xlu0 %1768
  %v1772 = vadd.f32 %v1691, %v1767
  %v1773 = vadd.f32 %v1695, %v1769
  %v1774 = vtanh.pop %v1772
  %v1775 = vtanh.pop %v1773
  %v1776 = vsub.f32 1.0, %v1759
  %v1777 = vsub.f32 1.0, %v1761
  %1780 = vrot.lane.b32.xlu0 %v1774, 96
  %v1781 = vpop.permute.xlu0 %1780
  %1782 = vrot.lane.b32.xlu0 %v1775, 96
  %v1783 = vpop.permute.xlu0 %1782
  %v1786 = vmul.f32 %v1776, %v1781
  %v1787 = vmul.f32 %v1777, %v1783
  %v1788 = vmul.f32 %v1759, %v1561
  %v1789 = vmul.f32 %v1761, %v1562
  %v1790 = vadd.f32 %v1786, %v1788
  %v1791 = vadd.f32 %v1787, %v1789
  %1794 = vrot.lane.b32.xlu0 %v1734, 64
  %v1795 = vpop.permute.xlu0 %1794
  %1796 = vrot.lane.b32.xlu0 %v1737, 64
  %v1797 = vpop.permute.xlu0 %1796
  %v1800 = vadd.f32 %v1691, %v1795
  %v1801 = vadd.f32 %v1695, %v1797
  %v1802 = vxor.u32 %v1800, 2147483648
  %v1803 = vxor.u32 %v1801, 2147483648
  %v1804 = vmul.f32 %v1802, 1.442695
  %v1805 = vpow.pop %v1804
  %v1806 = vmul.f32 %v1803, 1.442695
  %v1807 = vpow.pop %v1806
  %v1808 = vadd.f32 %v1805, 1.0
  %v1809 = vadd.f32 %v1807, 1.0
  %v1810 = vrcp.pop %v1808
  %v1811 = vmul.f32 1.0, %v1810
  %v1812 = vrcp.pop %v1809
  %v1813 = vmul.f32 1.0, %v1812
  %v1814 = vadd.f32 %v1693, %v1795
  %v1815 = vadd.f32 %v1697, %v1797
  %v1816 = vxor.u32 %v1814, 2147483648
  %v1817 = vxor.u32 %v1815, 2147483648
  %v1818 = vmul.f32 %v1816, 1.442695
  %v1819 = vpow.pop %v1818
  %v1820 = vmul.f32 %v1817, 1.442695
  %v1821 = vpow.pop %v1820
  %v1822 = vadd.f32 %v1819, 1.0
  %v1823 = vadd.f32 %v1821, 1.0
  %v1824 = vrcp.pop %v1822
  %v1825 = vmul.f32 1.0, %v1824
  %v1826 = vrcp.pop %v1823
  %v1827 = vmul.f32 1.0, %v1826
  %v1828 = vmul.f32 %v1811, %v1734
  %v1829 = vmul.f32 %v1813, %v1737
  %1832 = vrot.lane.b32.xlu0 %v1828, 64
  %v1833 = vpop.permute.xlu0 %1832
  %1834 = vrot.lane.b32.xlu0 %v1829, 64
  %v1835 = vpop.permute.xlu0 %1834
  %v1838 = vadd.f32 %v1693, %v1833
  %v1839 = vadd.f32 %v1697, %v1835
  %v1840 = vtanh.pop %v1838
  %v1841 = vtanh.pop %v1839
  %v1842 = vsub.f32 1.0, %v1825
  %v1843 = vsub.f32 1.0, %v1827
  %1846 = vrot.lane.b32.xlu0 %v1840, 96
  %v1847 = vpop.permute.xlu0 %1846
  %1848 = vrot.lane.b32.xlu0 %v1841, 96
  %v1849 = vpop.permute.xlu0 %1848
  %v1852 = vmul.f32 %v1842, %v1847
  %v1853 = vmul.f32 %v1843, %v1849
  %v1854 = vmul.f32 %v1825, %v1627
  %v1855 = vmul.f32 %v1827, %v1628
  %v1856 = vadd.f32 %v1852, %v1854
  %v1857 = vadd.f32 %v1853, %v1855
  %s1858 = scalar_lea.vmem %s0, 112
  %v1859 = vld [vmem:[%s1858] sm:$0xff]
  %v1860 = vld [vmem:[%s1858 + $0x8] sm:$0x3]
  %v1861 = vpack.c.bf16 %v1860, %v1859
  %s1862 = scalar_lea.vmem %s1, 112
  %v1863 = vld [vmem:[%s1862] sm:$0xff]
  %v1864 = vld [vmem:[%s1862 + $0x8] sm:$0x3]
  %v1865 = vpack.c.bf16 %v1864, %v1863
  %v1866 = vpack.c.bf16 %v1791, %v1790
  %v1867 = vpack.c.bf16 %v1857, %v1856
  %1869 = vrot.lane.b32.xlu0 %v1865, 32
  %v1870 = vpop.permute.xlu0 %1869
  %1872 = vrot.lane.b32.xlu0 %v1866, 32
  %v1873 = vpop.permute.xlu0 %1872
  %1875 = vrot.lane.b32.xlu0 %v1867, 96
  %v1876 = vpop.permute.xlu0 %1875
  %v1879 = vsel %vm96, %v1861, %v1870
  %v1881 = vsel %vm100, %v1879, %v1873
  %v1883 = vsel %vm103, %v1881, %v1876
  %1885 = vmatprep.subr.bf16.mxu0 %v256
  %1886 = vmatpush1.bf16.msra.mxu0 %v255
  %1887 = vmatprep.subr.bf16.mxu0 %v253
  %1888 = vmatpush1.bf16.msra.mxu0 %v252
  %1889 = vmatprep.subr.bf16.mxu0 %v250
  %1890 = vmatpush1.bf16.msra.mxu0 %v249
  %1891 = vmatprep.subr.bf16.mxu0 %v247
  %1892 = vmatpush1.bf16.msra.mxu0 %v246
  %1893 = vmatprep.subr.bf16.mxu0 %v244
  %1894 = vmatpush1.bf16.msra.mxu0 %v243
  %1895 = vmatprep.subr.bf16.mxu0 %v241
  %1896 = vmatpush1.bf16.msra.mxu0 %v240
  %1897 = vmatprep.subr.bf16.mxu0 %v238
  %1898 = vmatpush1.bf16.msra.mxu0 %v237
  %1899 = vmatprep.subr.bf16.mxu0 %v235
  %1900 = vmatpush1.bf16.msra.mxu0 %v234
  %1901 = vmatprep.subr.bf16.mxu0 0
  %1902 = vmatpush2.bf16.msra.mxu0 0
  %1903 = vmatprep.subr.bf16.mxu0 0
  %1904 = vmatpush2.bf16.msra.mxu0 0
  %1905 = vmatprep.subr.bf16.mxu0 0
  %1906 = vmatpush2.bf16.msra.mxu0 0
  %1907 = vmatprep.subr.bf16.mxu0 0
  %1908 = vmatpush2.bf16.msra.mxu0 0
  %1909 = vmatprep.subr.bf16.mxu0 0
  %1910 = vmatpush2.bf16.msra.mxu0 0
  %1911 = vmatprep.subr.bf16.mxu0 0
  %1912 = vmatpush2.bf16.msra.mxu0 0
  %1913 = vmatprep.subr.bf16.mxu0 0
  %1914 = vmatpush2.bf16.msra.mxu0 0
  %1915 = vmatprep.subr.bf16.mxu0 0
  %1916 = vmatpush2.bf16.msra.mxu0 0
  %1917 = vmatprep.mubr.bf16.mxu0 0
  %1918 = vmatmul.mubr.bf16.gmra.mxu0 %v1883
  %v1919 = vpop.f32.mrf.mxu0
  %v1920 = vadd.f32 %v142, %v1919
  %v1921 = vpop.f32.mrf.mxu0
  %v1922 = vadd.f32 %v146, %v1921
  %v1923 = vpop.f32.mrf.mxu0
  %v1924 = vpop.f32.mrf.mxu0
  %1925 = vdwg.mxu0
  %1926 = vmatprep.subr.bf16.mxu0 0
  %1927 = vmatpush1.bf16.msra.mxu0 %v257
  %1928 = vmatprep.subr.bf16.mxu0 0
  %1929 = vmatpush1.bf16.msra.mxu0 %v254
  %1930 = vmatprep.subr.bf16.mxu0 0
  %1931 = vmatpush1.bf16.msra.mxu0 %v251
  %1932 = vmatprep.subr.bf16.mxu0 0
  %1933 = vmatpush1.bf16.msra.mxu0 %v248
  %1934 = vmatprep.subr.bf16.mxu0 0
  %1935 = vmatpush1.bf16.msra.mxu0 %v245
  %1936 = vmatprep.subr.bf16.mxu0 0
  %1937 = vmatpush1.bf16.msra.mxu0 %v242
  %1938 = vmatprep.subr.bf16.mxu0 0
  %1939 = vmatpush1.bf16.msra.mxu0 %v239
  %1940 = vmatprep.subr.bf16.mxu0 0
  %1941 = vmatpush1.bf16.msra.mxu0 %v236
  %1942 = vmatprep.subr.bf16.mxu0 0
  %1943 = vmatpush2.bf16.msra.mxu0 0
  %1944 = vmatprep.subr.bf16.mxu0 0
  %1945 = vmatpush2.bf16.msra.mxu0 0
  %1946 = vmatprep.subr.bf16.mxu0 0
  %1947 = vmatpush2.bf16.msra.mxu0 0
  %1948 = vmatprep.subr.bf16.mxu0 0
  %1949 = vmatpush2.bf16.msra.mxu0 0
  %1950 = vmatprep.subr.bf16.mxu0 0
  %1951 = vmatpush2.bf16.msra.mxu0 0
  %1952 = vmatprep.subr.bf16.mxu0 0
  %1953 = vmatpush2.bf16.msra.mxu0 0
  %1954 = vmatprep.subr.bf16.mxu0 0
  %1955 = vmatpush2.bf16.msra.mxu0 0
  %1956 = vmatprep.subr.bf16.mxu0 0
  %1957 = vmatpush2.bf16.msra.mxu0 0
  %1958 = vmatprep.mubr.bf16.mxu0 0
  %1959 = vmatmul.mubr.bf16.gmra.mxu0 %v1883
  %v1960 = vpop.f32.mrf.mxu0
  %v1961 = vadd.f32 %v150, %v1960
  %v1962 = vpop.f32.mrf.mxu0
  %v1963 = vpop.f32.mrf.mxu0
  %v1964 = vpop.f32.mrf.mxu0
  %1965 = vdwg.mxu0
  %1967 = vrot.lane.b32.xlu0 %v1922, 64
  %v1968 = vpop.permute.xlu0 %1967
  %v1970 = vadd.f32 %v1920, %v1968
  %v1971 = vxor.u32 %v1970, 2147483648
  %v1972 = vmul.f32 %v1971, 1.442695
  %v1973 = vpow.pop %v1972
  %v1974 = vadd.f32 %v1973, 1.0
  %v1975 = vrcp.pop %v1974
  %v1976 = vmul.f32 1.0, %v1975
  %v1977 = vmul.f32 %v1976, %v1961
  %1979 = vrot.lane.b32.xlu0 %v1977, 64
  %v1980 = vpop.permute.xlu0 %1979
  %v1982 = vadd.f32 %v1920, %v1980
  %v1983 = vtanh.pop %v1982
  %v1984 = vsub.f32 1.0, %v1976
  %1986 = vrot.lane.b32.xlu0 %v1983, 96
  %v1987 = vpop.permute.xlu0 %1986
  %v1989 = vmul.f32 %v1984, %v1987
  %v1990 = vmul.f32 %v1976, %v1790
  %v1991 = vadd.f32 %v1989, %v1990
  %1993 = vrot.lane.b32.xlu0 %v1961, 64
  %v1994 = vpop.permute.xlu0 %1993
  %v1996 = vadd.f32 %v1920, %v1994
  %v1997 = vxor.u32 %v1996, 2147483648
  %v1998 = vmul.f32 %v1997, 1.442695
  %v1999 = vpow.pop %v1998
  %v2000 = vadd.f32 %v1999, 1.0
  %v2001 = vrcp.pop %v2000
  %v2002 = vmul.f32 1.0, %v2001
  %v2003 = vadd.f32 %v1922, %v1994
  %v2004 = vxor.u32 %v2003, 2147483648
  %v2005 = vmul.f32 %v2004, 1.442695
  %v2006 = vpow.pop %v2005
  %v2007 = vadd.f32 %v2006, 1.0
  %v2008 = vrcp.pop %v2007
  %v2009 = vmul.f32 1.0, %v2008
  %v2010 = vmul.f32 %v2002, %v1961
  %2012 = vrot.lane.b32.xlu0 %v2010, 64
  %v2013 = vpop.permute.xlu0 %2012
  %v2015 = vadd.f32 %v1922, %v2013
  %v2016 = vtanh.pop %v2015
  %v2017 = vsub.f32 1.0, %v2009
  %2019 = vrot.lane.b32.xlu0 %v2016, 96
  %v2020 = vpop.permute.xlu0 %2019
  %v2022 = vmul.f32 %v2017, %v2020
  %v2023 = vmul.f32 %v2009, %v1856
  %v2024 = vadd.f32 %v2022, %v2023
  %v2025 = vld [vmem:[%s9] sm:$0x7]
  %v2026 = vld [vmem:[%s2] sm:$0x3]
  %v2027 = vpack.c.bf16 %v2026, %v2026
  %v2028 = vld [vmem:[%s3] sm:$0x3]
  %v2029 = vpack.c.bf16 %v2028, %v2028
  %2031 = vrot.lane.b32.xlu0 %v2029, 32
  %v2032 = vpop.permute.xlu0 %2031
  %v2035 = vsel %vm96, %v2027, %v2032
  %v2036 = vsel %vm100, %v2035, 0
  %v2037 = vsel %vm103, %v2036, 0
  %v2039 = vld [vmem:[%s8] sm:$0xff]
  %v2040 = vld [vmem:[%s8 + $0x8] sm:$0xf]
  %v2041 = vld [vmem:[%s8 + $0xc] sm:$0xff]
  %v2042 = vld [vmem:[%s8 + $0x14] sm:$0xf]
  %v2043 = vld [vmem:[%s8 + $0x18] sm:$0xff]
  %v2044 = vld [vmem:[%s8 + $0x20] sm:$0xf]
  %v2045 = vld [vmem:[%s8 + $0x24] sm:$0xff]
  %v2046 = vld [vmem:[%s8 + $0x2c] sm:$0xf]
  %v2047 = vld [vmem:[%s8 + $0x30] sm:$0xff]
  %v2048 = vld [vmem:[%s8 + $0x38] sm:$0xf]
  %v2049 = vld [vmem:[%s8 + $0x3c] sm:$0xff]
  %v2050 = vld [vmem:[%s8 + $0x44] sm:$0xf]
  %v2051 = vld [vmem:[%s8 + $0x48] sm:$0xff]
  %v2052 = vld [vmem:[%s8 + $0x50] sm:$0xf]
  %v2053 = vld [vmem:[%s8 + $0x54] sm:$0xff]
  %v2054 = vld [vmem:[%s8 + $0x5c] sm:$0xf]
  %v2055 = vld [vmem:[%s8 + $0x60] sm:$0xff]
  %v2056 = vld [vmem:[%s8 + $0x68] sm:$0xf]
  %v2057 = vld [vmem:[%s8 + $0x6c] sm:$0xff]
  %v2058 = vld [vmem:[%s8 + $0x74] sm:$0xf]
  %v2059 = vld [vmem:[%s8 + $0x78] sm:$0xff]
  %v2060 = vld [vmem:[%s8 + $0x80] sm:$0xf]
  %v2061 = vld [vmem:[%s8 + $0x84] sm:$0xff]
  %v2062 = vld [vmem:[%s8 + $0x8c] sm:$0xf]
  %v2063 = vld [vmem:[%s8 + $0x90] sm:$0xff]
  %v2064 = vld [vmem:[%s8 + $0x98] sm:$0xf]
  %v2065 = vld [vmem:[%s8 + $0x9c] sm:$0xff]
  %v2066 = vld [vmem:[%s8 + $0xa4] sm:$0xf]
  %v2067 = vld [vmem:[%s8 + $0xa8] sm:$0xff]
  %v2068 = vld [vmem:[%s8 + $0xb0] sm:$0xf]
  %v2069 = vld [vmem:[%s8 + $0xb4] sm:$0xff]
  %v2070 = vld [vmem:[%s8 + $0xbc] sm:$0xf]
  %v2072 = vlaneseq
  %v2073 = vshrl.u32 %v2072, 7
  %v2074 = vsub.s32 0, %v2073
  %v2075 = vrot.slane %v2025, %v2074
  %v2076 = vlaneseq
  %v2077 = vshrl.u32 %v2076, 7
  %v2078 = vsub.s32 1, %v2077
  %v2079 = vrot.slane %v2025, %v2078
  %v2080 = vlaneseq
  %v2081 = vshrl.u32 %v2080, 7
  %v2082 = vsub.s32 2, %v2081
  %v2083 = vrot.slane %v2025, %v2082
  %v2119 = vunpack.c.l.b16 %v2039
  %v2120 = vunpack.c.h.b16 %v2039
  %v2121 = vunpack.c.l.b16 %v2040
  %v2122 = vunpack.c.l.b16 %v2041
  %v2123 = vunpack.c.h.b16 %v2041
  %v2124 = vunpack.c.l.b16 %v2042
  %v2125 = vunpack.c.l.b16 %v2043
  %v2126 = vunpack.c.h.b16 %v2043
  %v2127 = vunpack.c.l.b16 %v2044
  %v2128 = vunpack.c.l.b16 %v2045
  %v2129 = vunpack.c.h.b16 %v2045
  %v2130 = vunpack.c.l.b16 %v2046
  %v2131 = vunpack.c.l.b16 %v2047
  %v2132 = vunpack.c.h.b16 %v2047
  %v2133 = vunpack.c.l.b16 %v2048
  %v2134 = vunpack.c.l.b16 %v2049
  %v2135 = vunpack.c.h.b16 %v2049
  %v2136 = vunpack.c.l.b16 %v2050
  %v2137 = vunpack.c.l.b16 %v2051
  %v2138 = vunpack.c.h.b16 %v2051
  %v2139 = vunpack.c.l.b16 %v2052
  %v2140 = vunpack.c.l.b16 %v2053
  %v2141 = vunpack.c.h.b16 %v2053
  %v2142 = vunpack.c.l.b16 %v2054
  %v2143 = vunpack.c.l.b16 %v2055
  %v2144 = vunpack.c.h.b16 %v2055
  %v2145 = vunpack.c.l.b16 %v2056
  %v2146 = vunpack.c.l.b16 %v2057
  %v2147 = vunpack.c.h.b16 %v2057
  %v2148 = vunpack.c.l.b16 %v2058
  %v2149 = vunpack.c.l.b16 %v2059
  %v2150 = vunpack.c.h.b16 %v2059
  %v2151 = vunpack.c.l.b16 %v2060
  %v2152 = vunpack.c.l.b16 %v2061
  %v2153 = vunpack.c.h.b16 %v2061
  %v2154 = vunpack.c.l.b16 %v2062
  %v2155 = vunpack.c.l.b16 %v2063
  %v2156 = vunpack.c.h.b16 %v2063
  %v2157 = vunpack.c.l.b16 %v2064
  %v2158 = vunpack.c.l.b16 %v2065
  %v2159 = vunpack.c.h.b16 %v2065
  %v2160 = vunpack.c.l.b16 %v2066
  %v2161 = vunpack.c.l.b16 %v2067
  %v2162 = vunpack.c.h.b16 %v2067
  %v2163 = vunpack.c.l.b16 %v2068
  %v2164 = vunpack.c.l.b16 %v2069
  %v2165 = vunpack.c.h.b16 %v2069
  %v2166 = vunpack.c.l.b16 %v2070
  %v2167 = vpack.c.b16 %v2122, %v2119
  %v2168 = vpack.c.b16 %v2123, %v2120
  %v2169 = vpack.c.b16 %v2124, %v2121
  %v2170 = vpack.c.b16 %v2128, %v2125
  %v2171 = vpack.c.b16 %v2129, %v2126
  %v2172 = vpack.c.b16 %v2130, %v2127
  %v2173 = vpack.c.b16 %v2134, %v2131
  %v2174 = vpack.c.b16 %v2135, %v2132
  %v2175 = vpack.c.b16 %v2136, %v2133
  %v2176 = vpack.c.b16 %v2140, %v2137
  %v2177 = vpack.c.b16 %v2141, %v2138
  %v2178 = vpack.c.b16 %v2142, %v2139
  %v2179 = vpack.c.b16 %v2146, %v2143
  %v2180 = vpack.c.b16 %v2147, %v2144
  %v2181 = vpack.c.b16 %v2148, %v2145
  %v2182 = vpack.c.b16 %v2152, %v2149
  %v2183 = vpack.c.b16 %v2153, %v2150
  %v2184 = vpack.c.b16 %v2154, %v2151
  %v2185 = vpack.c.b16 %v2158, %v2155
  %v2186 = vpack.c.b16 %v2159, %v2156
  %v2187 = vpack.c.b16 %v2160, %v2157
  %v2188 = vpack.c.b16 %v2164, %v2161
  %v2189 = vpack.c.b16 %v2165, %v2162
  %v2190 = vpack.c.b16 %v2166, %v2163
  %2215 = vmatprep.subr.bf16.mxu0 %v2189
  %2216 = vmatpush1.bf16.msra.mxu0 %v2188
  %2217 = vmatprep.subr.bf16.mxu0 %v2186
  %2218 = vmatpush1.bf16.msra.mxu0 %v2185
  %2219 = vmatprep.subr.bf16.mxu0 %v2183
  %2220 = vmatpush1.bf16.msra.mxu0 %v2182
  %2221 = vmatprep.subr.bf16.mxu0 %v2180
  %2222 = vmatpush1.bf16.msra.mxu0 %v2179
  %2223 = vmatprep.subr.bf16.mxu0 %v2177
  %2224 = vmatpush1.bf16.msra.mxu0 %v2176
  %2225 = vmatprep.subr.bf16.mxu0 %v2174
  %2226 = vmatpush1.bf16.msra.mxu0 %v2173
  %2227 = vmatprep.subr.bf16.mxu0 %v2171
  %2228 = vmatpush1.bf16.msra.mxu0 %v2170
  %2229 = vmatprep.subr.bf16.mxu0 %v2168
  %2230 = vmatpush1.bf16.msra.mxu0 %v2167
  %2231 = vmatprep.subr.bf16.mxu0 0
  %2232 = vmatpush2.bf16.msra.mxu0 0
  %2233 = vmatprep.subr.bf16.mxu0 0
  %2234 = vmatpush2.bf16.msra.mxu0 0
  %2235 = vmatprep.subr.bf16.mxu0 0
  %2236 = vmatpush2.bf16.msra.mxu0 0
  %2237 = vmatprep.subr.bf16.mxu0 0
  %2238 = vmatpush2.bf16.msra.mxu0 0
  %2239 = vmatprep.subr.bf16.mxu0 0
  %2240 = vmatpush2.bf16.msra.mxu0 0
  %2241 = vmatprep.subr.bf16.mxu0 0
  %2242 = vmatpush2.bf16.msra.mxu0 0
  %2243 = vmatprep.subr.bf16.mxu0 0
  %2244 = vmatpush2.bf16.msra.mxu0 0
  %2245 = vmatprep.subr.bf16.mxu0 0
  %2246 = vmatpush2.bf16.msra.mxu0 0
  %2247 = vmatprep.mubr.bf16.mxu0 0
  %2248 = vmatmul.mubr.bf16.gmra.mxu0 %v2037
  %v2249 = vpop.f32.mrf.mxu0
  %v2250 = vadd.f32 %v2075, %v2249
  %v2251 = vpop.f32.mrf.mxu0
  %v2252 = vadd.f32 %v2079, %v2251
  %v2253 = vpop.f32.mrf.mxu0
  %v2254 = vpop.f32.mrf.mxu0
  %2255 = vdwg.mxu0
  %2256 = vmatprep.subr.bf16.mxu0 0
  %2257 = vmatpush1.bf16.msra.mxu0 %v2190
  %2258 = vmatprep.subr.bf16.mxu0 0
  %2259 = vmatpush1.bf16.msra.mxu0 %v2187
  %2260 = vmatprep.subr.bf16.mxu0 0
  %2261 = vmatpush1.bf16.msra.mxu0 %v2184
  %2262 = vmatprep.subr.bf16.mxu0 0
  %2263 = vmatpush1.bf16.msra.mxu0 %v2181
  %2264 = vmatprep.subr.bf16.mxu0 0
  %2265 = vmatpush1.bf16.msra.mxu0 %v2178
  %2266 = vmatprep.subr.bf16.mxu0 0
  %2267 = vmatpush1.bf16.msra.mxu0 %v2175
  %2268 = vmatprep.subr.bf16.mxu0 0
  %2269 = vmatpush1.bf16.msra.mxu0 %v2172
  %2270 = vmatprep.subr.bf16.mxu0 0
  %2271 = vmatpush1.bf16.msra.mxu0 %v2169
  %2272 = vmatprep.subr.bf16.mxu0 0
  %2273 = vmatpush2.bf16.msra.mxu0 0
  %2274 = vmatprep.subr.bf16.mxu0 0
  %2275 = vmatpush2.bf16.msra.mxu0 0
  %2276 = vmatprep.subr.bf16.mxu0 0
  %2277 = vmatpush2.bf16.msra.mxu0 0
  %2278 = vmatprep.subr.bf16.mxu0 0
  %2279 = vmatpush2.bf16.msra.mxu0 0
  %2280 = vmatprep.subr.bf16.mxu0 0
  %2281 = vmatpush2.bf16.msra.mxu0 0
  %2282 = vmatprep.subr.bf16.mxu0 0
  %2283 = vmatpush2.bf16.msra.mxu0 0
  %2284 = vmatprep.subr.bf16.mxu0 0
  %2285 = vmatpush2.bf16.msra.mxu0 0
  %2286 = vmatprep.subr.bf16.mxu0 0
  %2287 = vmatpush2.bf16.msra.mxu0 0
  %2288 = vmatprep.mubr.bf16.mxu0 0
  %2289 = vmatmul.mubr.bf16.gmra.mxu0 %v2037
  %v2290 = vpop.f32.mrf.mxu0
  %v2291 = vadd.f32 %v2083, %v2290
  %v2292 = vpop.f32.mrf.mxu0
  %v2293 = vpop.f32.mrf.mxu0
  %v2294 = vpop.f32.mrf.mxu0
  %2295 = vdwg.mxu0
  %2297 = vrot.lane.b32.xlu0 %v2252, 64
  %v2298 = vpop.permute.xlu0 %2297
  %v2300 = vadd.f32 %v2250, %v2298
  %v2301 = vxor.u32 %v2300, 2147483648
  %v2302 = vmul.f32 %v2301, 1.442695
  %v2303 = vpow.pop %v2302
  %v2304 = vadd.f32 %v2303, 1.0
  %v2305 = vrcp.pop %v2304
  %v2306 = vmul.f32 1.0, %v2305
  %v2307 = vmul.f32 %v2306, %v2291
  %2309 = vrot.lane.b32.xlu0 %v2307, 64
  %v2310 = vpop.permute.xlu0 %2309
  %v2312 = vadd.f32 %v2250, %v2310
  %v2313 = vtanh.pop %v2312
  %v2314 = vsub.f32 1.0, %v2306
  %2316 = vrot.lane.b32.xlu0 %v2313, 96
  %v2317 = vpop.permute.xlu0 %2316
  %v2319 = vmul.f32 %v2314, %v2317
  %v2320 = vmul.f32 %v2306, 0.0
  %v2321 = vadd.f32 %v2319, %v2320
  %2323 = vrot.lane.b32.xlu0 %v2291, 64
  %v2324 = vpop.permute.xlu0 %2323
  %v2326 = vadd.f32 %v2250, %v2324
  %v2327 = vxor.u32 %v2326, 2147483648
  %v2328 = vmul.f32 %v2327, 1.442695
  %v2329 = vpow.pop %v2328
  %v2330 = vadd.f32 %v2329, 1.0
  %v2331 = vrcp.pop %v2330
  %v2332 = vmul.f32 1.0, %v2331
  %v2333 = vadd.f32 %v2252, %v2324
  %v2334 = vxor.u32 %v2333, 2147483648
  %v2335 = vmul.f32 %v2334, 1.442695
  %v2336 = vpow.pop %v2335
  %v2337 = vadd.f32 %v2336, 1.0
  %v2338 = vrcp.pop %v2337
  %v2339 = vmul.f32 1.0, %v2338
  %v2340 = vmul.f32 %v2332, %v2291
  %2342 = vrot.lane.b32.xlu0 %v2340, 64
  %v2343 = vpop.permute.xlu0 %2342
  %v2345 = vadd.f32 %v2252, %v2343
  %v2346 = vtanh.pop %v2345
  %v2347 = vsub.f32 1.0, %v2339
  %2349 = vrot.lane.b32.xlu0 %v2346, 96
  %v2350 = vpop.permute.xlu0 %2349
  %v2352 = vmul.f32 %v2347, %v2350
  %v2353 = vmul.f32 %v2339, 0.0
  %v2354 = vadd.f32 %v2352, %v2353
  %s2355 = scalar_lea.vmem %s2, 2
  %v2356 = vld [vmem:[%s2355] sm:$0x3]
  %v2357 = vpack.c.bf16 %v2356, %v2356
  %s2358 = scalar_lea.vmem %s3, 2
  %v2359 = vld [vmem:[%s2358] sm:$0x3]
  %v2360 = vpack.c.bf16 %v2359, %v2359
  %v2361 = vpack.c.bf16 %v2321, %v2321
  %v2362 = vpack.c.bf16 %v2354, %v2354
  %2364 = vrot.lane.b32.xlu0 %v2360, 32
  %v2365 = vpop.permute.xlu0 %2364
  %2367 = vrot.lane.b32.xlu0 %v2361, 32
  %v2368 = vpop.permute.xlu0 %2367
  %2370 = vrot.lane.b32.xlu0 %v2362, 96
  %v2371 = vpop.permute.xlu0 %2370
  %v2374 = vsel %vm96, %v2357, %v2365
  %v2376 = vsel %vm100, %v2374, %v2368
  %v2378 = vsel %vm103, %v2376, %v2371
  %2380 = vmatprep.subr.bf16.mxu0 %v2189
  %2381 = vmatpush1.bf16.msra.mxu0 %v2188
  %2382 = vmatprep.subr.bf16.mxu0 %v2186
  %2383 = vmatpush1.bf16.msra.mxu0 %v2185
  %2384 = vmatprep.subr.bf16.mxu0 %v2183
  %2385 = vmatpush1.bf16.msra.mxu0 %v2182
  %2386 = vmatprep.subr.bf16.mxu0 %v2180
  %2387 = vmatpush1.bf16.msra.mxu0 %v2179
  %2388 = vmatprep.subr.bf16.mxu0 %v2177
  %2389 = vmatpush1.bf16.msra.mxu0 %v2176
  %2390 = vmatprep.subr.bf16.mxu0 %v2174
  %2391 = vmatpush1.bf16.msra.mxu0 %v2173
  %2392 = vmatprep.subr.bf16.mxu0 %v2171
  %2393 = vmatpush1.bf16.msra.mxu0 %v2170
  %2394 = vmatprep.subr.bf16.mxu0 %v2168
  %2395 = vmatpush1.bf16.msra.mxu0 %v2167
  %2396 = vmatprep.subr.bf16.mxu0 0
  %2397 = vmatpush2.bf16.msra.mxu0 0
  %2398 = vmatprep.subr.bf16.mxu0 0
  %2399 = vmatpush2.bf16.msra.mxu0 0
  %2400 = vmatprep.subr.bf16.mxu0 0
  %2401 = vmatpush2.bf16.msra.mxu0 0
  %2402 = vmatprep.subr.bf16.mxu0 0
  %2403 = vmatpush2.bf16.msra.mxu0 0
  %2404 = vmatprep.subr.bf16.mxu0 0
  %2405 = vmatpush2.bf16.msra.mxu0 0
  %2406 = vmatprep.subr.bf16.mxu0 0
  %2407 = vmatpush2.bf16.msra.mxu0 0
  %2408 = vmatprep.subr.bf16.mxu0 0
  %2409 = vmatpush2.bf16.msra.mxu0 0
  %2410 = vmatprep.subr.bf16.mxu0 0
  %2411 = vmatpush2.bf16.msra.mxu0 0
  %2412 = vmatprep.mubr.bf16.mxu0 0
  %2413 = vmatmul.mubr.bf16.gmra.mxu0 %v2378
  %v2414 = vpop.f32.mrf.mxu0
  %v2415 = vadd.f32 %v2075, %v2414
  %v2416 = vpop.f32.mrf.mxu0
  %v2417 = vadd.f32 %v2079, %v2416
  %v2418 = vpop.f32.mrf.mxu0
  %v2419 = vpop.f32.mrf.mxu0
  %2420 = vdwg.mxu0
  %2421 = vmatprep.subr.bf16.mxu0 0
  %2422 = vmatpush1.bf16.msra.mxu0 %v2190
  %2423 = vmatprep.subr.bf16.mxu0 0
  %2424 = vmatpush1.bf16.msra.mxu0 %v2187
  %2425 = vmatprep.subr.bf16.mxu0 0
  %2426 = vmatpush1.bf16.msra.mxu0 %v2184
  %2427 = vmatprep.subr.bf16.mxu0 0
  %2428 = vmatpush1.bf16.msra.mxu0 %v2181
  %2429 = vmatprep.subr.bf16.mxu0 0
  %2430 = vmatpush1.bf16.msra.mxu0 %v2178
  %2431 = vmatprep.subr.bf16.mxu0 0
  %2432 = vmatpush1.bf16.msra.mxu0 %v2175
  %2433 = vmatprep.subr.bf16.mxu0 0
  %2434 = vmatpush1.bf16.msra.mxu0 %v2172
  %2435 = vmatprep.subr.bf16.mxu0 0
  %2436 = vmatpush1.bf16.msra.mxu0 %v2169
  %2437 = vmatprep.subr.bf16.mxu0 0
  %2438 = vmatpush2.bf16.msra.mxu0 0
  %2439 = vmatprep.subr.bf16.mxu0 0
  %2440 = vmatpush2.bf16.msra.mxu0 0
  %2441 = vmatprep.subr.bf16.mxu0 0
  %2442 = vmatpush2.bf16.msra.mxu0 0
  %2443 = vmatprep.subr.bf16.mxu0 0
  %2444 = vmatpush2.bf16.msra.mxu0 0
  %2445 = vmatprep.subr.bf16.mxu0 0
  %2446 = vmatpush2.bf16.msra.mxu0 0
  %2447 = vmatprep.subr.bf16.mxu0 0
  %2448 = vmatpush2.bf16.msra.mxu0 0
  %2449 = vmatprep.subr.bf16.mxu0 0
  %2450 = vmatpush2.bf16.msra.mxu0 0
  %2451 = vmatprep.subr.bf16.mxu0 0
  %2452 = vmatpush2.bf16.msra.mxu0 0
  %2453 = vmatprep.mubr.bf16.mxu0 0
  %2454 = vmatmul.mubr.bf16.gmra.mxu0 %v2378
  %v2455 = vpop.f32.mrf.mxu0
  %v2456 = vadd.f32 %v2083, %v2455
  %v2457 = vpop.f32.mrf.mxu0
  %v2458 = vpop.f32.mrf.mxu0
  %v2459 = vpop.f32.mrf.mxu0
  %2460 = vdwg.mxu0
  %2462 = vrot.lane.b32.xlu0 %v2417, 64
  %v2463 = vpop.permute.xlu0 %2462
  %v2465 = vadd.f32 %v2415, %v2463
  %v2466 = vxor.u32 %v2465, 2147483648
  %v2467 = vmul.f32 %v2466, 1.442695
  %v2468 = vpow.pop %v2467
  %v2469 = vadd.f32 %v2468, 1.0
  %v2470 = vrcp.pop %v2469
  %v2471 = vmul.f32 1.0, %v2470
  %v2472 = vmul.f32 %v2471, %v2456
  %2474 = vrot.lane.b32.xlu0 %v2472, 64
  %v2475 = vpop.permute.xlu0 %2474
  %v2477 = vadd.f32 %v2415, %v2475
  %v2478 = vtanh.pop %v2477
  %v2479 = vsub.f32 1.0, %v2471
  %2481 = vrot.lane.b32.xlu0 %v2478, 96
  %v2482 = vpop.permute.xlu0 %2481
  %v2484 = vmul.f32 %v2479, %v2482
  %v2485 = vmul.f32 %v2471, %v2321
  %v2486 = vadd.f32 %v2484, %v2485
  %2488 = vrot.lane.b32.xlu0 %v2456, 64
  %v2489 = vpop.permute.xlu0 %2488
  %v2491 = vadd.f32 %v2415, %v2489
  %v2492 = vxor.u32 %v2491, 2147483648
  %v2493 = vmul.f32 %v2492, 1.442695
  %v2494 = vpow.pop %v2493
  %v2495 = vadd.f32 %v2494, 1.0
  %v2496 = vrcp.pop %v2495
  %v2497 = vmul.f32 1.0, %v2496
  %v2498 = vadd.f32 %v2417, %v2489
  %v2499 = vxor.u32 %v2498, 2147483648
  %v2500 = vmul.f32 %v2499, 1.442695
  %v2501 = vpow.pop %v2500
  %v2502 = vadd.f32 %v2501, 1.0
  %v2503 = vrcp.pop %v2502
  %v2504 = vmul.f32 1.0, %v2503
  %v2505 = vmul.f32 %v2497, %v2456
  %2507 = vrot.lane.b32.xlu0 %v2505, 64
  %v2508 = vpop.permute.xlu0 %2507
  %v2510 = vadd.f32 %v2417, %v2508
  %v2511 = vtanh.pop %v2510
  %v2512 = vsub.f32 1.0, %v2504
  %2514 = vrot.lane.b32.xlu0 %v2511, 96
  %v2515 = vpop.permute.xlu0 %2514
  %v2517 = vmul.f32 %v2512, %v2515
  %v2518 = vmul.f32 %v2504, %v2354
  %v2519 = vadd.f32 %v2517, %v2518
  %s2520 = scalar_lea.vmem %s2, 4
  %v2521 = vld [vmem:[%s2520] sm:$0x3]
  %v2522 = vpack.c.bf16 %v2521, %v2521
  %s2523 = scalar_lea.vmem %s3, 4
  %v2524 = vld [vmem:[%s2523] sm:$0x3]
  %v2525 = vpack.c.bf16 %v2524, %v2524
  %v2526 = vpack.c.bf16 %v2486, %v2486
  %v2527 = vpack.c.bf16 %v2519, %v2519
  %2529 = vrot.lane.b32.xlu0 %v2525, 32
  %v2530 = vpop.permute.xlu0 %2529
  %2532 = vrot.lane.b32.xlu0 %v2526, 32
  %v2533 = vpop.permute.xlu0 %2532
  %2535 = vrot.lane.b32.xlu0 %v2527, 96
  %v2536 = vpop.permute.xlu0 %2535
  %v2539 = vsel %vm96, %v2522, %v2530
  %v2541 = vsel %vm100, %v2539, %v2533
  %v2543 = vsel %vm103, %v2541, %v2536
  %2545 = vmatprep.subr.bf16.mxu0 %v2189
  %2546 = vmatpush1.bf16.msra.mxu0 %v2188
  %2547 = vmatprep.subr.bf16.mxu0 %v2186
  %2548 = vmatpush1.bf16.msra.mxu0 %v2185
  %2549 = vmatprep.subr.bf16.mxu0 %v2183
  %2550 = vmatpush1.bf16.msra.mxu0 %v2182
  %2551 = vmatprep.subr.bf16.mxu0 %v2180
  %2552 = vmatpush1.bf16.msra.mxu0 %v2179
  %2553 = vmatprep.subr.bf16.mxu0 %v2177
  %2554 = vmatpush1.bf16.msra.mxu0 %v2176
  %2555 = vmatprep.subr.bf16.mxu0 %v2174
  %2556 = vmatpush1.bf16.msra.mxu0 %v2173
  %2557 = vmatprep.subr.bf16.mxu0 %v2171
  %2558 = vmatpush1.bf16.msra.mxu0 %v2170
  %2559 = vmatprep.subr.bf16.mxu0 %v2168
  %2560 = vmatpush1.bf16.msra.mxu0 %v2167
  %2561 = vmatprep.subr.bf16.mxu0 0
  %2562 = vmatpush2.bf16.msra.mxu0 0
  %2563 = vmatprep.subr.bf16.mxu0 0
  %2564 = vmatpush2.bf16.msra.mxu0 0
  %2565 = vmatprep.subr.bf16.mxu0 0
  %2566 = vmatpush2.bf16.msra.mxu0 0
  %2567 = vmatprep.subr.bf16.mxu0 0
  %2568 = vmatpush2.bf16.msra.mxu0 0
  %2569 = vmatprep.subr.bf16.mxu0 0
  %2570 = vmatpush2.bf16.msra.mxu0 0
  %2571 = vmatprep.subr.bf16.mxu0 0
  %2572 = vmatpush2.bf16.msra.mxu0 0
  %2573 = vmatprep.subr.bf16.mxu0 0
  %2574 = vmatpush2.bf16.msra.mxu0 0
  %2575 = vmatprep.subr.bf16.mxu0 0
  %2576 = vmatpush2.bf16.msra.mxu0 0
  %2577 = vmatprep.mubr.bf16.mxu0 0
  %2578 = vmatmul.mubr.bf16.gmra.mxu0 %v2543
  %v2579 = vpop.f32.mrf.mxu0
  %v2580 = vadd.f32 %v2075, %v2579
  %v2581 = vpop.f32.mrf.mxu0
  %v2582 = vadd.f32 %v2079, %v2581
  %v2583 = vpop.f32.mrf.mxu0
  %v2584 = vpop.f32.mrf.mxu0
  %2585 = vdwg.mxu0
  %2586 = vmatprep.subr.bf16.mxu0 0
  %2587 = vmatpush1.bf16.msra.mxu0 %v2190
  %2588 = vmatprep.subr.bf16.mxu0 0
  %2589 = vmatpush1.bf16.msra.mxu0 %v2187
  %2590 = vmatprep.subr.bf16.mxu0 0
  %2591 = vmatpush1.bf16.msra.mxu0 %v2184
  %2592 = vmatprep.subr.bf16.mxu0 0
  %2593 = vmatpush1.bf16.msra.mxu0 %v2181
  %2594 = vmatprep.subr.bf16.mxu0 0
  %2595 = vmatpush1.bf16.msra.mxu0 %v2178
  %2596 = vmatprep.subr.bf16.mxu0 0
  %2597 = vmatpush1.bf16.msra.mxu0 %v2175
  %2598 = vmatprep.subr.bf16.mxu0 0
  %2599 = vmatpush1.bf16.msra.mxu0 %v2172
  %2600 = vmatprep.subr.bf16.mxu0 0
  %2601 = vmatpush1.bf16.msra.mxu0 %v2169
  %2602 = vmatprep.subr.bf16.mxu0 0
  %2603 = vmatpush2.bf16.msra.mxu0 0
  %2604 = vmatprep.subr.bf16.mxu0 0
  %2605 = vmatpush2.bf16.msra.mxu0 0
  %2606 = vmatprep.subr.bf16.mxu0 0
  %2607 = vmatpush2.bf16.msra.mxu0 0
  %2608 = vmatprep.subr.bf16.mxu0 0
  %2609 = vmatpush2.bf16.msra.mxu0 0
  %2610 = vmatprep.subr.bf16.mxu0 0
  %2611 = vmatpush2.bf16.msra.mxu0 0
  %2612 = vmatprep.subr.bf16.mxu0 0
  %2613 = vmatpush2.bf16.msra.mxu0 0
  %2614 = vmatprep.subr.bf16.mxu0 0
  %2615 = vmatpush2.bf16.msra.mxu0 0
  %2616 = vmatprep.subr.bf16.mxu0 0
  %2617 = vmatpush2.bf16.msra.mxu0 0
  %2618 = vmatprep.mubr.bf16.mxu0 0
  %2619 = vmatmul.mubr.bf16.gmra.mxu0 %v2543
  %v2620 = vpop.f32.mrf.mxu0
  %v2621 = vadd.f32 %v2083, %v2620
  %v2622 = vpop.f32.mrf.mxu0
  %v2623 = vpop.f32.mrf.mxu0
  %v2624 = vpop.f32.mrf.mxu0
  %2625 = vdwg.mxu0
  %2627 = vrot.lane.b32.xlu0 %v2582, 64
  %v2628 = vpop.permute.xlu0 %2627
  %v2630 = vadd.f32 %v2580, %v2628
  %v2631 = vxor.u32 %v2630, 2147483648
  %v2632 = vmul.f32 %v2631, 1.442695
  %v2633 = vpow.pop %v2632
  %v2634 = vadd.f32 %v2633, 1.0
  %v2635 = vrcp.pop %v2634
  %v2636 = vmul.f32 1.0, %v2635
  %v2637 = vmul.f32 %v2636, %v2621
  %2639 = vrot.lane.b32.xlu0 %v2637, 64
  %v2640 = vpop.permute.xlu0 %2639
  %v2642 = vadd.f32 %v2580, %v2640
  %v2643 = vtanh.pop %v2642
  %v2644 = vsub.f32 1.0, %v2636
  %2646 = vrot.lane.b32.xlu0 %v2643, 96
  %v2647 = vpop.permute.xlu0 %2646
  %v2649 = vmul.f32 %v2644, %v2647
  %v2650 = vmul.f32 %v2636, %v2486
  %v2651 = vadd.f32 %v2649, %v2650
  %2653 = vrot.lane.b32.xlu0 %v2621, 64
  %v2654 = vpop.permute.xlu0 %2653
  %v2656 = vadd.f32 %v2580, %v2654
  %v2657 = vxor.u32 %v2656, 2147483648
  %v2658 = vmul.f32 %v2657, 1.442695
  %v2659 = vpow.pop %v2658
  %v2660 = vadd.f32 %v2659, 1.0
  %v2661 = vrcp.pop %v2660
  %v2662 = vmul.f32 1.0, %v2661
  %v2663 = vadd.f32 %v2582, %v2654
  %v2664 = vxor.u32 %v2663, 2147483648
  %v2665 = vmul.f32 %v2664, 1.442695
  %v2666 = vpow.pop %v2665
  %v2667 = vadd.f32 %v2666, 1.0
  %v2668 = vrcp.pop %v2667
  %v2669 = vmul.f32 1.0, %v2668
  %v2670 = vmul.f32 %v2662, %v2621
  %2672 = vrot.lane.b32.xlu0 %v2670, 64
  %v2673 = vpop.permute.xlu0 %2672
  %v2675 = vadd.f32 %v2582, %v2673
  %v2676 = vtanh.pop %v2675
  %v2677 = vsub.f32 1.0, %v2669
  %2679 = vrot.lane.b32.xlu0 %v2676, 96
  %v2680 = vpop.permute.xlu0 %2679
  %v2682 = vmul.f32 %v2677, %v2680
  %v2683 = vmul.f32 %v2669, %v2519
  %v2684 = vadd.f32 %v2682, %v2683
  %s2685 = scalar_lea.vmem %s2, 6
  %v2686 = vld [vmem:[%s2685] sm:$0x3]
  %v2687 = vpack.c.bf16 %v2686, %v2686
  %s2688 = scalar_lea.vmem %s3, 6
  %v2689 = vld [vmem:[%s2688] sm:$0x3]
  %v2690 = vpack.c.bf16 %v2689, %v2689
  %v2691 = vpack.c.bf16 %v2651, %v2651
  %v2692 = vpack.c.bf16 %v2684, %v2684
  %2694 = vrot.lane.b32.xlu0 %v2690, 32
  %v2695 = vpop.permute.xlu0 %2694
  %2697 = vrot.lane.b32.xlu0 %v2691, 32
  %v2698 = vpop.permute.xlu0 %2697
  %2700 = vrot.lane.b32.xlu0 %v2692, 96
  %v2701 = vpop.permute.xlu0 %2700
  %v2704 = vsel %vm96, %v2687, %v2695
  %v2706 = vsel %vm100, %v2704, %v2698
  %v2708 = vsel %vm103, %v2706, %v2701
  %2710 = vmatprep.subr.bf16.mxu0 %v2189
  %2711 = vmatpush1.bf16.msra.mxu0 %v2188
  %2712 = vmatprep.subr.bf16.mxu0 %v2186
  %2713 = vmatpush1.bf16.msra.mxu0 %v2185
  %2714 = vmatprep.subr.bf16.mxu0 %v2183
  %2715 = vmatpush1.bf16.msra.mxu0 %v2182
  %2716 = vmatprep.subr.bf16.mxu0 %v2180
  %2717 = vmatpush1.bf16.msra.mxu0 %v2179
  %2718 = vmatprep.subr.bf16.mxu0 %v2177
  %2719 = vmatpush1.bf16.msra.mxu0 %v2176
  %2720 = vmatprep.subr.bf16.mxu0 %v2174
  %2721 = vmatpush1.bf16.msra.mxu0 %v2173
  %2722 = vmatprep.subr.bf16.mxu0 %v2171
  %2723 = vmatpush1.bf16.msra.mxu0 %v2170
  %2724 = vmatprep.subr.bf16.mxu0 %v2168
  %2725 = vmatpush1.bf16.msra.mxu0 %v2167
  %2726 = vmatprep.subr.bf16.mxu0 0
  %2727 = vmatpush2.bf16.msra.mxu0 0
  %2728 = vmatprep.subr.bf16.mxu0 0
  %2729 = vmatpush2.bf16.msra.mxu0 0
  %2730 = vmatprep.subr.bf16.mxu0 0
  %2731 = vmatpush2.bf16.msra.mxu0 0
  %2732 = vmatprep.subr.bf16.mxu0 0
  %2733 = vmatpush2.bf16.msra.mxu0 0
  %2734 = vmatprep.subr.bf16.mxu0 0
  %2735 = vmatpush2.bf16.msra.mxu0 0
  %2736 = vmatprep.subr.bf16.mxu0 0
  %2737 = vmatpush2.bf16.msra.mxu0 0
  %2738 = vmatprep.subr.bf16.mxu0 0
  %2739 = vmatpush2.bf16.msra.mxu0 0
  %2740 = vmatprep.subr.bf16.mxu0 0
  %2741 = vmatpush2.bf16.msra.mxu0 0
  %2742 = vmatprep.mubr.bf16.mxu0 0
  %2743 = vmatmul.mubr.bf16.gmra.mxu0 %v2708
  %v2744 = vpop.f32.mrf.mxu0
  %v2745 = vadd.f32 %v2075, %v2744
  %v2746 = vpop.f32.mrf.mxu0
  %v2747 = vadd.f32 %v2079, %v2746
  %v2748 = vpop.f32.mrf.mxu0
  %v2749 = vpop.f32.mrf.mxu0
  %2750 = vdwg.mxu0
  %2751 = vmatprep.subr.bf16.mxu0 0
  %2752 = vmatpush1.bf16.msra.mxu0 %v2190
  %2753 = vmatprep.subr.bf16.mxu0 0
  %2754 = vmatpush1.bf16.msra.mxu0 %v2187
  %2755 = vmatprep.subr.bf16.mxu0 0
  %2756 = vmatpush1.bf16.msra.mxu0 %v2184
  %2757 = vmatprep.subr.bf16.mxu0 0
  %2758 = vmatpush1.bf16.msra.mxu0 %v2181
  %2759 = vmatprep.subr.bf16.mxu0 0
  %2760 = vmatpush1.bf16.msra.mxu0 %v2178
  %2761 = vmatprep.subr.bf16.mxu0 0
  %2762 = vmatpush1.bf16.msra.mxu0 %v2175
  %2763 = vmatprep.subr.bf16.mxu0 0
  %2764 = vmatpush1.bf16.msra.mxu0 %v2172
  %2765 = vmatprep.subr.bf16.mxu0 0
  %2766 = vmatpush1.bf16.msra.mxu0 %v2169
  %2767 = vmatprep.subr.bf16.mxu0 0
  %2768 = vmatpush2.bf16.msra.mxu0 0
  %2769 = vmatprep.subr.bf16.mxu0 0
  %2770 = vmatpush2.bf16.msra.mxu0 0
  %2771 = vmatprep.subr.bf16.mxu0 0
  %2772 = vmatpush2.bf16.msra.mxu0 0
  %2773 = vmatprep.subr.bf16.mxu0 0
  %2774 = vmatpush2.bf16.msra.mxu0 0
  %2775 = vmatprep.subr.bf16.mxu0 0
  %2776 = vmatpush2.bf16.msra.mxu0 0
  %2777 = vmatprep.subr.bf16.mxu0 0
  %2778 = vmatpush2.bf16.msra.mxu0 0
  %2779 = vmatprep.subr.bf16.mxu0 0
  %2780 = vmatpush2.bf16.msra.mxu0 0
  %2781 = vmatprep.subr.bf16.mxu0 0
  %2782 = vmatpush2.bf16.msra.mxu0 0
  %2783 = vmatprep.mubr.bf16.mxu0 0
  %2784 = vmatmul.mubr.bf16.gmra.mxu0 %v2708
  %v2785 = vpop.f32.mrf.mxu0
  %v2786 = vadd.f32 %v2083, %v2785
  %v2787 = vpop.f32.mrf.mxu0
  %v2788 = vpop.f32.mrf.mxu0
  %v2789 = vpop.f32.mrf.mxu0
  %2790 = vdwg.mxu0
  %2792 = vrot.lane.b32.xlu0 %v2747, 64
  %v2793 = vpop.permute.xlu0 %2792
  %v2795 = vadd.f32 %v2745, %v2793
  %v2796 = vxor.u32 %v2795, 2147483648
  %v2797 = vmul.f32 %v2796, 1.442695
  %v2798 = vpow.pop %v2797
  %v2799 = vadd.f32 %v2798, 1.0
  %v2800 = vrcp.pop %v2799
  %v2801 = vmul.f32 1.0, %v2800
  %v2802 = vmul.f32 %v2801, %v2786
  %2804 = vrot.lane.b32.xlu0 %v2802, 64
  %v2805 = vpop.permute.xlu0 %2804
  %v2807 = vadd.f32 %v2745, %v2805
  %v2808 = vtanh.pop %v2807
  %v2809 = vsub.f32 1.0, %v2801
  %2811 = vrot.lane.b32.xlu0 %v2808, 96
  %v2812 = vpop.permute.xlu0 %2811
  %v2814 = vmul.f32 %v2809, %v2812
  %v2815 = vmul.f32 %v2801, %v2651
  %v2816 = vadd.f32 %v2814, %v2815
  %2818 = vrot.lane.b32.xlu0 %v2786, 64
  %v2819 = vpop.permute.xlu0 %2818
  %v2821 = vadd.f32 %v2745, %v2819
  %v2822 = vxor.u32 %v2821, 2147483648
  %v2823 = vmul.f32 %v2822, 1.442695
  %v2824 = vpow.pop %v2823
  %v2825 = vadd.f32 %v2824, 1.0
  %v2826 = vrcp.pop %v2825
  %v2827 = vmul.f32 1.0, %v2826
  %v2828 = vadd.f32 %v2747, %v2819
  %v2829 = vxor.u32 %v2828, 2147483648
  %v2830 = vmul.f32 %v2829, 1.442695
  %v2831 = vpow.pop %v2830
  %v2832 = vadd.f32 %v2831, 1.0
  %v2833 = vrcp.pop %v2832
  %v2834 = vmul.f32 1.0, %v2833
  %v2835 = vmul.f32 %v2827, %v2786
  %2837 = vrot.lane.b32.xlu0 %v2835, 64
  %v2838 = vpop.permute.xlu0 %2837
  %v2840 = vadd.f32 %v2747, %v2838
  %v2841 = vtanh.pop %v2840
  %v2842 = vsub.f32 1.0, %v2834
  %2844 = vrot.lane.b32.xlu0 %v2841, 96
  %v2845 = vpop.permute.xlu0 %2844
  %v2847 = vmul.f32 %v2842, %v2845
  %v2848 = vmul.f32 %v2834, %v2684
  %v2849 = vadd.f32 %v2847, %v2848
  %s2850 = scalar_lea.vmem %s2, 8
  %v2851 = vld [vmem:[%s2850] sm:$0x3]
  %v2852 = vpack.c.bf16 %v2851, %v2851
  %s2853 = scalar_lea.vmem %s3, 8
  %v2854 = vld [vmem:[%s2853] sm:$0x3]
  %v2855 = vpack.c.bf16 %v2854, %v2854
  %v2856 = vpack.c.bf16 %v2816, %v2816
  %v2857 = vpack.c.bf16 %v2849, %v2849
  %2859 = vrot.lane.b32.xlu0 %v2855, 32
  %v2860 = vpop.permute.xlu0 %2859
  %2862 = vrot.lane.b32.xlu0 %v2856, 32
  %v2863 = vpop.permute.xlu0 %2862
  %2865 = vrot.lane.b32.xlu0 %v2857, 96
  %v2866 = vpop.permute.xlu0 %2865
  %v2869 = vsel %vm96, %v2852, %v2860
  %v2871 = vsel %vm100, %v2869, %v2863
  %v2873 = vsel %vm103, %v2871, %v2866
  %2875 = vmatprep.subr.bf16.mxu0 %v2189
  %2876 = vmatpush1.bf16.msra.mxu0 %v2188
  %2877 = vmatprep.subr.bf16.mxu0 %v2186
  %2878 = vmatpush1.bf16.msra.mxu0 %v2185
  %2879 = vmatprep.subr.bf16.mxu0 %v2183
  %2880 = vmatpush1.bf16.msra.mxu0 %v2182
  %2881 = vmatprep.subr.bf16.mxu0 %v2180
  %2882 = vmatpush1.bf16.msra.mxu0 %v2179
  %2883 = vmatprep.subr.bf16.mxu0 %v2177
  %2884 = vmatpush1.bf16.msra.mxu0 %v2176
  %2885 = vmatprep.subr.bf16.mxu0 %v2174
  %2886 = vmatpush1.bf16.msra.mxu0 %v2173
  %2887 = vmatprep.subr.bf16.mxu0 %v2171
  %2888 = vmatpush1.bf16.msra.mxu0 %v2170
  %2889 = vmatprep.subr.bf16.mxu0 %v2168
  %2890 = vmatpush1.bf16.msra.mxu0 %v2167
  %2891 = vmatprep.subr.bf16.mxu0 0
  %2892 = vmatpush2.bf16.msra.mxu0 0
  %2893 = vmatprep.subr.bf16.mxu0 0
  %2894 = vmatpush2.bf16.msra.mxu0 0
  %2895 = vmatprep.subr.bf16.mxu0 0
  %2896 = vmatpush2.bf16.msra.mxu0 0
  %2897 = vmatprep.subr.bf16.mxu0 0
  %2898 = vmatpush2.bf16.msra.mxu0 0
  %2899 = vmatprep.subr.bf16.mxu0 0
  %2900 = vmatpush2.bf16.msra.mxu0 0
  %2901 = vmatprep.subr.bf16.mxu0 0
  %2902 = vmatpush2.bf16.msra.mxu0 0
  %2903 = vmatprep.subr.bf16.mxu0 0
  %2904 = vmatpush2.bf16.msra.mxu0 0
  %2905 = vmatprep.subr.bf16.mxu0 0
  %2906 = vmatpush2.bf16.msra.mxu0 0
  %2907 = vmatprep.mubr.bf16.mxu0 0
  %2908 = vmatmul.mubr.bf16.gmra.mxu0 %v2873
  %v2909 = vpop.f32.mrf.mxu0
  %v2910 = vadd.f32 %v2075, %v2909
  %v2911 = vpop.f32.mrf.mxu0
  %v2912 = vadd.f32 %v2079, %v2911
  %v2913 = vpop.f32.mrf.mxu0
  %v2914 = vpop.f32.mrf.mxu0
  %2915 = vdwg.mxu0
  %2916 = vmatprep.subr.bf16.mxu0 0
  %2917 = vmatpush1.bf16.msra.mxu0 %v2190
  %2918 = vmatprep.subr.bf16.mxu0 0
  %2919 = vmatpush1.bf16.msra.mxu0 %v2187
  %2920 = vmatprep.subr.bf16.mxu0 0
  %2921 = vmatpush1.bf16.msra.mxu0 %v2184
  %2922 = vmatprep.subr.bf16.mxu0 0
  %2923 = vmatpush1.bf16.msra.mxu0 %v2181
  %2924 = vmatprep.subr.bf16.mxu0 0
  %2925 = vmatpush1.bf16.msra.mxu0 %v2178
  %2926 = vmatprep.subr.bf16.mxu0 0
  %2927 = vmatpush1.bf16.msra.mxu0 %v2175
  %2928 = vmatprep.subr.bf16.mxu0 0
  %2929 = vmatpush1.bf16.msra.mxu0 %v2172
  %2930 = vmatprep.subr.bf16.mxu0 0
  %2931 = vmatpush1.bf16.msra.mxu0 %v2169
  %2932 = vmatprep.subr.bf16.mxu0 0
  %2933 = vmatpush2.bf16.msra.mxu0 0
  %2934 = vmatprep.subr.bf16.mxu0 0
  %2935 = vmatpush2.bf16.msra.mxu0 0
  %2936 = vmatprep.subr.bf16.mxu0 0
  %2937 = vmatpush2.bf16.msra.mxu0 0
  %2938 = vmatprep.subr.bf16.mxu0 0
  %2939 = vmatpush2.bf16.msra.mxu0 0
  %2940 = vmatprep.subr.bf16.mxu0 0
  %2941 = vmatpush2.bf16.msra.mxu0 0
  %2942 = vmatprep.subr.bf16.mxu0 0
  %2943 = vmatpush2.bf16.msra.mxu0 0
  %2944 = vmatprep.subr.bf16.mxu0 0
  %2945 = vmatpush2.bf16.msra.mxu0 0
  %2946 = vmatprep.subr.bf16.mxu0 0
  %2947 = vmatpush2.bf16.msra.mxu0 0
  %2948 = vmatprep.mubr.bf16.mxu0 0
  %2949 = vmatmul.mubr.bf16.gmra.mxu0 %v2873
  %v2950 = vpop.f32.mrf.mxu0
  %v2951 = vadd.f32 %v2083, %v2950
  %v2952 = vpop.f32.mrf.mxu0
  %v2953 = vpop.f32.mrf.mxu0
  %v2954 = vpop.f32.mrf.mxu0
  %2955 = vdwg.mxu0
  %2957 = vrot.lane.b32.xlu0 %v2912, 64
  %v2958 = vpop.permute.xlu0 %2957
  %v2960 = vadd.f32 %v2910, %v2958
  %v2961 = vxor.u32 %v2960, 2147483648
  %v2962 = vmul.f32 %v2961, 1.442695
  %v2963 = vpow.pop %v2962
  %v2964 = vadd.f32 %v2963, 1.0
  %v2965 = vrcp.pop %v2964
  %v2966 = vmul.f32 1.0, %v2965
  %v2967 = vmul.f32 %v2966, %v2951
  %2969 = vrot.lane.b32.xlu0 %v2967, 64
  %v2970 = vpop.permute.xlu0 %2969
  %v2972 = vadd.f32 %v2910, %v2970
  %v2973 = vtanh.pop %v2972
  %v2974 = vsub.f32 1.0, %v2966
  %2976 = vrot.lane.b32.xlu0 %v2973, 96
  %v2977 = vpop.permute.xlu0 %2976
  %v2979 = vmul.f32 %v2974, %v2977
  %v2980 = vmul.f32 %v2966, %v2816
  %v2981 = vadd.f32 %v2979, %v2980
  %2983 = vrot.lane.b32.xlu0 %v2951, 64
  %v2984 = vpop.permute.xlu0 %2983
  %v2986 = vadd.f32 %v2910, %v2984
  %v2987 = vxor.u32 %v2986, 2147483648
  %v2988 = vmul.f32 %v2987, 1.442695
  %v2989 = vpow.pop %v2988
  %v2990 = vadd.f32 %v2989, 1.0
  %v2991 = vrcp.pop %v2990
  %v2992 = vmul.f32 1.0, %v2991
  %v2993 = vadd.f32 %v2912, %v2984
  %v2994 = vxor.u32 %v2993, 2147483648
  %v2995 = vmul.f32 %v2994, 1.442695
  %v2996 = vpow.pop %v2995
  %v2997 = vadd.f32 %v2996, 1.0
  %v2998 = vrcp.pop %v2997
  %v2999 = vmul.f32 1.0, %v2998
  %v3000 = vmul.f32 %v2992, %v2951
  %3002 = vrot.lane.b32.xlu0 %v3000, 64
  %v3003 = vpop.permute.xlu0 %3002
  %v3005 = vadd.f32 %v2912, %v3003
  %v3006 = vtanh.pop %v3005
  %v3007 = vsub.f32 1.0, %v2999
  %3009 = vrot.lane.b32.xlu0 %v3006, 96
  %v3010 = vpop.permute.xlu0 %3009
  %v3012 = vmul.f32 %v3007, %v3010
  %v3013 = vmul.f32 %v2999, %v2849
  %v3014 = vadd.f32 %v3012, %v3013
  %s3015 = scalar_lea.vmem %s2, 10
  %v3016 = vld [vmem:[%s3015] sm:$0x3]
  %v3017 = vpack.c.bf16 %v3016, %v3016
  %s3018 = scalar_lea.vmem %s3, 10
  %v3019 = vld [vmem:[%s3018] sm:$0x3]
  %v3020 = vpack.c.bf16 %v3019, %v3019
  %v3021 = vpack.c.bf16 %v2981, %v2981
  %v3022 = vpack.c.bf16 %v3014, %v3014
  %3024 = vrot.lane.b32.xlu0 %v3020, 32
  %v3025 = vpop.permute.xlu0 %3024
  %3027 = vrot.lane.b32.xlu0 %v3021, 32
  %v3028 = vpop.permute.xlu0 %3027
  %3030 = vrot.lane.b32.xlu0 %v3022, 96
  %v3031 = vpop.permute.xlu0 %3030
  %v3034 = vsel %vm96, %v3017, %v3025
  %v3036 = vsel %vm100, %v3034, %v3028
  %v3038 = vsel %vm103, %v3036, %v3031
  %3040 = vmatprep.subr.bf16.mxu0 %v2189
  %3041 = vmatpush1.bf16.msra.mxu0 %v2188
  %3042 = vmatprep.subr.bf16.mxu0 %v2186
  %3043 = vmatpush1.bf16.msra.mxu0 %v2185
  %3044 = vmatprep.subr.bf16.mxu0 %v2183
  %3045 = vmatpush1.bf16.msra.mxu0 %v2182
  %3046 = vmatprep.subr.bf16.mxu0 %v2180
  %3047 = vmatpush1.bf16.msra.mxu0 %v2179
  %3048 = vmatprep.subr.bf16.mxu0 %v2177
  %3049 = vmatpush1.bf16.msra.mxu0 %v2176
  %3050 = vmatprep.subr.bf16.mxu0 %v2174
  %3051 = vmatpush1.bf16.msra.mxu0 %v2173
  %3052 = vmatprep.subr.bf16.mxu0 %v2171
  %3053 = vmatpush1.bf16.msra.mxu0 %v2170
  %3054 = vmatprep.subr.bf16.mxu0 %v2168
  %3055 = vmatpush1.bf16.msra.mxu0 %v2167
  %3056 = vmatprep.subr.bf16.mxu0 0
  %3057 = vmatpush2.bf16.msra.mxu0 0
  %3058 = vmatprep.subr.bf16.mxu0 0
  %3059 = vmatpush2.bf16.msra.mxu0 0
  %3060 = vmatprep.subr.bf16.mxu0 0
  %3061 = vmatpush2.bf16.msra.mxu0 0
  %3062 = vmatprep.subr.bf16.mxu0 0
  %3063 = vmatpush2.bf16.msra.mxu0 0
  %3064 = vmatprep.subr.bf16.mxu0 0
  %3065 = vmatpush2.bf16.msra.mxu0 0
  %3066 = vmatprep.subr.bf16.mxu0 0
  %3067 = vmatpush2.bf16.msra.mxu0 0
  %3068 = vmatprep.subr.bf16.mxu0 0
  %3069 = vmatpush2.bf16.msra.mxu0 0
  %3070 = vmatprep.subr.bf16.mxu0 0
  %3071 = vmatpush2.bf16.msra.mxu0 0
  %3072 = vmatprep.mubr.bf16.mxu0 0
  %3073 = vmatmul.mubr.bf16.gmra.mxu0 %v3038
  %v3074 = vpop.f32.mrf.mxu0
  %v3075 = vadd.f32 %v2075, %v3074
  %v3076 = vpop.f32.mrf.mxu0
  %v3077 = vadd.f32 %v2079, %v3076
  %v3078 = vpop.f32.mrf.mxu0
  %v3079 = vpop.f32.mrf.mxu0
  %3080 = vdwg.mxu0
  %3081 = vmatprep.subr.bf16.mxu0 0
  %3082 = vmatpush1.bf16.msra.mxu0 %v2190
  %3083 = vmatprep.subr.bf16.mxu0 0
  %3084 = vmatpush1.bf16.msra.mxu0 %v2187
  %3085 = vmatprep.subr.bf16.mxu0 0
  %3086 = vmatpush1.bf16.msra.mxu0 %v2184
  %3087 = vmatprep.subr.bf16.mxu0 0
  %3088 = vmatpush1.bf16.msra.mxu0 %v2181
  %3089 = vmatprep.subr.bf16.mxu0 0
  %3090 = vmatpush1.bf16.msra.mxu0 %v2178
  %3091 = vmatprep.subr.bf16.mxu0 0
  %3092 = vmatpush1.bf16.msra.mxu0 %v2175
  %3093 = vmatprep.subr.bf16.mxu0 0
  %3094 = vmatpush1.bf16.msra.mxu0 %v2172
  %3095 = vmatprep.subr.bf16.mxu0 0
  %3096 = vmatpush1.bf16.msra.mxu0 %v2169
  %3097 = vmatprep.subr.bf16.mxu0 0
  %3098 = vmatpush2.bf16.msra.mxu0 0
  %3099 = vmatprep.subr.bf16.mxu0 0
  %3100 = vmatpush2.bf16.msra.mxu0 0
  %3101 = vmatprep.subr.bf16.mxu0 0
  %3102 = vmatpush2.bf16.msra.mxu0 0
  %3103 = vmatprep.subr.bf16.mxu0 0
  %3104 = vmatpush2.bf16.msra.mxu0 0
  %3105 = vmatprep.subr.bf16.mxu0 0
  %3106 = vmatpush2.bf16.msra.mxu0 0
  %3107 = vmatprep.subr.bf16.mxu0 0
  %3108 = vmatpush2.bf16.msra.mxu0 0
  %3109 = vmatprep.subr.bf16.mxu0 0
  %3110 = vmatpush2.bf16.msra.mxu0 0
  %3111 = vmatprep.subr.bf16.mxu0 0
  %3112 = vmatpush2.bf16.msra.mxu0 0
  %3113 = vmatprep.mubr.bf16.mxu0 0
  %3114 = vmatmul.mubr.bf16.gmra.mxu0 %v3038
  %v3115 = vpop.f32.mrf.mxu0
  %v3116 = vadd.f32 %v2083, %v3115
  %v3117 = vpop.f32.mrf.mxu0
  %v3118 = vpop.f32.mrf.mxu0
  %v3119 = vpop.f32.mrf.mxu0
  %3120 = vdwg.mxu0
  %3122 = vrot.lane.b32.xlu0 %v3077, 64
  %v3123 = vpop.permute.xlu0 %3122
  %v3125 = vadd.f32 %v3075, %v3123
  %v3126 = vxor.u32 %v3125, 2147483648
  %v3127 = vmul.f32 %v3126, 1.442695
  %v3128 = vpow.pop %v3127
  %v3129 = vadd.f32 %v3128, 1.0
  %v3130 = vrcp.pop %v3129
  %v3131 = vmul.f32 1.0, %v3130
  %v3132 = vmul.f32 %v3131, %v3116
  %3134 = vrot.lane.b32.xlu0 %v3132, 64
  %v3135 = vpop.permute.xlu0 %3134
  %v3137 = vadd.f32 %v3075, %v3135
  %v3138 = vtanh.pop %v3137
  %v3139 = vsub.f32 1.0, %v3131
  %3141 = vrot.lane.b32.xlu0 %v3138, 96
  %v3142 = vpop.permute.xlu0 %3141
  %v3144 = vmul.f32 %v3139, %v3142
  %v3145 = vmul.f32 %v3131, %v2981
  %v3146 = vadd.f32 %v3144, %v3145
  %3148 = vrot.lane.b32.xlu0 %v3116, 64
  %v3149 = vpop.permute.xlu0 %3148
  %v3151 = vadd.f32 %v3075, %v3149
  %v3152 = vxor.u32 %v3151, 2147483648
  %v3153 = vmul.f32 %v3152, 1.442695
  %v3154 = vpow.pop %v3153
  %v3155 = vadd.f32 %v3154, 1.0
  %v3156 = vrcp.pop %v3155
  %v3157 = vmul.f32 1.0, %v3156
  %v3158 = vadd.f32 %v3077, %v3149
  %v3159 = vxor.u32 %v3158, 2147483648
  %v3160 = vmul.f32 %v3159, 1.442695
  %v3161 = vpow.pop %v3160
  %v3162 = vadd.f32 %v3161, 1.0
  %v3163 = vrcp.pop %v3162
  %v3164 = vmul.f32 1.0, %v3163
  %v3165 = vmul.f32 %v3157, %v3116
  %3167 = vrot.lane.b32.xlu0 %v3165, 64
  %v3168 = vpop.permute.xlu0 %3167
  %v3170 = vadd.f32 %v3077, %v3168
  %v3171 = vtanh.pop %v3170
  %v3172 = vsub.f32 1.0, %v3164
  %3174 = vrot.lane.b32.xlu0 %v3171, 96
  %v3175 = vpop.permute.xlu0 %3174
  %v3177 = vmul.f32 %v3172, %v3175
  %v3178 = vmul.f32 %v3164, %v3014
  %v3179 = vadd.f32 %v3177, %v3178
  %s3180 = scalar_lea.vmem %s2, 12
  %v3181 = vld [vmem:[%s3180] sm:$0x3]
  %v3182 = vpack.c.bf16 %v3181, %v3181
  %s3183 = scalar_lea.vmem %s3, 12
  %v3184 = vld [vmem:[%s3183] sm:$0x3]
  %v3185 = vpack.c.bf16 %v3184, %v3184
  %v3186 = vpack.c.bf16 %v3146, %v3146
  %v3187 = vpack.c.bf16 %v3179, %v3179
  %3189 = vrot.lane.b32.xlu0 %v3185, 32
  %v3190 = vpop.permute.xlu0 %3189
  %3192 = vrot.lane.b32.xlu0 %v3186, 32
  %v3193 = vpop.permute.xlu0 %3192
  %3195 = vrot.lane.b32.xlu0 %v3187, 96
  %v3196 = vpop.permute.xlu0 %3195
  %v3199 = vsel %vm96, %v3182, %v3190
  %v3201 = vsel %vm100, %v3199, %v3193
  %v3203 = vsel %vm103, %v3201, %v3196
  %3205 = vmatprep.subr.bf16.mxu0 %v2189
  %3206 = vmatpush1.bf16.msra.mxu0 %v2188
  %3207 = vmatprep.subr.bf16.mxu0 %v2186
  %3208 = vmatpush1.bf16.msra.mxu0 %v2185
  %3209 = vmatprep.subr.bf16.mxu0 %v2183
  %3210 = vmatpush1.bf16.msra.mxu0 %v2182
  %3211 = vmatprep.subr.bf16.mxu0 %v2180
  %3212 = vmatpush1.bf16.msra.mxu0 %v2179
  %3213 = vmatprep.subr.bf16.mxu0 %v2177
  %3214 = vmatpush1.bf16.msra.mxu0 %v2176
  %3215 = vmatprep.subr.bf16.mxu0 %v2174
  %3216 = vmatpush1.bf16.msra.mxu0 %v2173
  %3217 = vmatprep.subr.bf16.mxu0 %v2171
  %3218 = vmatpush1.bf16.msra.mxu0 %v2170
  %3219 = vmatprep.subr.bf16.mxu0 %v2168
  %3220 = vmatpush1.bf16.msra.mxu0 %v2167
  %3221 = vmatprep.subr.bf16.mxu0 0
  %3222 = vmatpush2.bf16.msra.mxu0 0
  %3223 = vmatprep.subr.bf16.mxu0 0
  %3224 = vmatpush2.bf16.msra.mxu0 0
  %3225 = vmatprep.subr.bf16.mxu0 0
  %3226 = vmatpush2.bf16.msra.mxu0 0
  %3227 = vmatprep.subr.bf16.mxu0 0
  %3228 = vmatpush2.bf16.msra.mxu0 0
  %3229 = vmatprep.subr.bf16.mxu0 0
  %3230 = vmatpush2.bf16.msra.mxu0 0
  %3231 = vmatprep.subr.bf16.mxu0 0
  %3232 = vmatpush2.bf16.msra.mxu0 0
  %3233 = vmatprep.subr.bf16.mxu0 0
  %3234 = vmatpush2.bf16.msra.mxu0 0
  %3235 = vmatprep.subr.bf16.mxu0 0
  %3236 = vmatpush2.bf16.msra.mxu0 0
  %3237 = vmatprep.mubr.bf16.mxu0 0
  %3238 = vmatmul.mubr.bf16.gmra.mxu0 %v3203
  %v3239 = vpop.f32.mrf.mxu0
  %v3240 = vadd.f32 %v2075, %v3239
  %v3241 = vpop.f32.mrf.mxu0
  %v3242 = vadd.f32 %v2079, %v3241
  %v3243 = vpop.f32.mrf.mxu0
  %v3244 = vpop.f32.mrf.mxu0
  %3245 = vdwg.mxu0
  %3246 = vmatprep.subr.bf16.mxu0 0
  %3247 = vmatpush1.bf16.msra.mxu0 %v2190
  %3248 = vmatprep.subr.bf16.mxu0 0
  %3249 = vmatpush1.bf16.msra.mxu0 %v2187
  %3250 = vmatprep.subr.bf16.mxu0 0
  %3251 = vmatpush1.bf16.msra.mxu0 %v2184
  %3252 = vmatprep.subr.bf16.mxu0 0
  %3253 = vmatpush1.bf16.msra.mxu0 %v2181
  %3254 = vmatprep.subr.bf16.mxu0 0
  %3255 = vmatpush1.bf16.msra.mxu0 %v2178
  %3256 = vmatprep.subr.bf16.mxu0 0
  %3257 = vmatpush1.bf16.msra.mxu0 %v2175
  %3258 = vmatprep.subr.bf16.mxu0 0
  %3259 = vmatpush1.bf16.msra.mxu0 %v2172
  %3260 = vmatprep.subr.bf16.mxu0 0
  %3261 = vmatpush1.bf16.msra.mxu0 %v2169
  %3262 = vmatprep.subr.bf16.mxu0 0
  %3263 = vmatpush2.bf16.msra.mxu0 0
  %3264 = vmatprep.subr.bf16.mxu0 0
  %3265 = vmatpush2.bf16.msra.mxu0 0
  %3266 = vmatprep.subr.bf16.mxu0 0
  %3267 = vmatpush2.bf16.msra.mxu0 0
  %3268 = vmatprep.subr.bf16.mxu0 0
  %3269 = vmatpush2.bf16.msra.mxu0 0
  %3270 = vmatprep.subr.bf16.mxu0 0
  %3271 = vmatpush2.bf16.msra.mxu0 0
  %3272 = vmatprep.subr.bf16.mxu0 0
  %3273 = vmatpush2.bf16.msra.mxu0 0
  %3274 = vmatprep.subr.bf16.mxu0 0
  %3275 = vmatpush2.bf16.msra.mxu0 0
  %3276 = vmatprep.subr.bf16.mxu0 0
  %3277 = vmatpush2.bf16.msra.mxu0 0
  %3278 = vmatprep.mubr.bf16.mxu0 0
  %3279 = vmatmul.mubr.bf16.gmra.mxu0 %v3203
  %v3280 = vpop.f32.mrf.mxu0
  %v3281 = vadd.f32 %v2083, %v3280
  %v3282 = vpop.f32.mrf.mxu0
  %v3283 = vpop.f32.mrf.mxu0
  %v3284 = vpop.f32.mrf.mxu0
  %3285 = vdwg.mxu0
  %3287 = vrot.lane.b32.xlu0 %v3242, 64
  %v3288 = vpop.permute.xlu0 %3287
  %v3290 = vadd.f32 %v3240, %v3288
  %v3291 = vxor.u32 %v3290, 2147483648
  %v3292 = vmul.f32 %v3291, 1.442695
  %v3293 = vpow.pop %v3292
  %v3294 = vadd.f32 %v3293, 1.0
  %v3295 = vrcp.pop %v3294
  %v3296 = vmul.f32 1.0, %v3295
  %v3297 = vmul.f32 %v3296, %v3281
  %3299 = vrot.lane.b32.xlu0 %v3297, 64
  %v3300 = vpop.permute.xlu0 %3299
  %v3302 = vadd.f32 %v3240, %v3300
  %v3303 = vtanh.pop %v3302
  %v3304 = vsub.f32 1.0, %v3296
  %3306 = vrot.lane.b32.xlu0 %v3303, 96
  %v3307 = vpop.permute.xlu0 %3306
  %v3309 = vmul.f32 %v3304, %v3307
  %v3310 = vmul.f32 %v3296, %v3146
  %v3311 = vadd.f32 %v3309, %v3310
  %3313 = vrot.lane.b32.xlu0 %v3281, 64
  %v3314 = vpop.permute.xlu0 %3313
  %v3316 = vadd.f32 %v3240, %v3314
  %v3317 = vxor.u32 %v3316, 2147483648
  %v3318 = vmul.f32 %v3317, 1.442695
  %v3319 = vpow.pop %v3318
  %v3320 = vadd.f32 %v3319, 1.0
  %v3321 = vrcp.pop %v3320
  %v3322 = vmul.f32 1.0, %v3321
  %v3323 = vadd.f32 %v3242, %v3314
  %v3324 = vxor.u32 %v3323, 2147483648
  %v3325 = vmul.f32 %v3324, 1.442695
  %v3326 = vpow.pop %v3325
  %v3327 = vadd.f32 %v3326, 1.0
  %v3328 = vrcp.pop %v3327
  %v3329 = vmul.f32 1.0, %v3328
  %v3330 = vmul.f32 %v3322, %v3281
  %3332 = vrot.lane.b32.xlu0 %v3330, 64
  %v3333 = vpop.permute.xlu0 %3332
  %v3335 = vadd.f32 %v3242, %v3333
  %v3336 = vtanh.pop %v3335
  %v3337 = vsub.f32 1.0, %v3329
  %3339 = vrot.lane.b32.xlu0 %v3336, 96
  %v3340 = vpop.permute.xlu0 %3339
  %v3342 = vmul.f32 %v3337, %v3340
  %v3343 = vmul.f32 %v3329, %v3179
  %v3344 = vadd.f32 %v3342, %v3343
  %s3345 = scalar_lea.vmem %s2, 14
  %v3346 = vld [vmem:[%s3345] sm:$0x3]
  %v3347 = vpack.c.bf16 %v3346, %v3346
  %s3348 = scalar_lea.vmem %s3, 14
  %v3349 = vld [vmem:[%s3348] sm:$0x3]
  %v3350 = vpack.c.bf16 %v3349, %v3349
  %v3351 = vpack.c.bf16 %v3311, %v3311
  %v3352 = vpack.c.bf16 %v3344, %v3344
  %3354 = vrot.lane.b32.xlu0 %v3350, 32
  %v3355 = vpop.permute.xlu0 %3354
  %3357 = vrot.lane.b32.xlu0 %v3351, 32
  %v3358 = vpop.permute.xlu0 %3357
  %3360 = vrot.lane.b32.xlu0 %v3352, 96
  %v3361 = vpop.permute.xlu0 %3360
  %v3364 = vsel %vm96, %v3347, %v3355
  %v3366 = vsel %vm100, %v3364, %v3358
  %v3368 = vsel %vm103, %v3366, %v3361
  %3370 = vmatprep.subr.bf16.mxu0 %v2189
  %3371 = vmatpush1.bf16.msra.mxu0 %v2188
  %3372 = vmatprep.subr.bf16.mxu0 %v2186
  %3373 = vmatpush1.bf16.msra.mxu0 %v2185
  %3374 = vmatprep.subr.bf16.mxu0 %v2183
  %3375 = vmatpush1.bf16.msra.mxu0 %v2182
  %3376 = vmatprep.subr.bf16.mxu0 %v2180
  %3377 = vmatpush1.bf16.msra.mxu0 %v2179
  %3378 = vmatprep.subr.bf16.mxu0 %v2177
  %3379 = vmatpush1.bf16.msra.mxu0 %v2176
  %3380 = vmatprep.subr.bf16.mxu0 %v2174
  %3381 = vmatpush1.bf16.msra.mxu0 %v2173
  %3382 = vmatprep.subr.bf16.mxu0 %v2171
  %3383 = vmatpush1.bf16.msra.mxu0 %v2170
  %3384 = vmatprep.subr.bf16.mxu0 %v2168
  %3385 = vmatpush1.bf16.msra.mxu0 %v2167
  %3386 = vmatprep.subr.bf16.mxu0 0
  %3387 = vmatpush2.bf16.msra.mxu0 0
  %3388 = vmatprep.subr.bf16.mxu0 0
  %3389 = vmatpush2.bf16.msra.mxu0 0
  %3390 = vmatprep.subr.bf16.mxu0 0
  %3391 = vmatpush2.bf16.msra.mxu0 0
  %3392 = vmatprep.subr.bf16.mxu0 0
  %3393 = vmatpush2.bf16.msra.mxu0 0
  %3394 = vmatprep.subr.bf16.mxu0 0
  %3395 = vmatpush2.bf16.msra.mxu0 0
  %3396 = vmatprep.subr.bf16.mxu0 0
  %3397 = vmatpush2.bf16.msra.mxu0 0
  %3398 = vmatprep.subr.bf16.mxu0 0
  %3399 = vmatpush2.bf16.msra.mxu0 0
  %3400 = vmatprep.subr.bf16.mxu0 0
  %3401 = vmatpush2.bf16.msra.mxu0 0
  %3402 = vmatprep.mubr.bf16.mxu0 0
  %3403 = vmatmul.mubr.bf16.gmra.mxu0 %v3368
  %v3404 = vpop.f32.mrf.mxu0
  %v3405 = vadd.f32 %v2075, %v3404
  %v3406 = vpop.f32.mrf.mxu0
  %v3407 = vadd.f32 %v2079, %v3406
  %v3408 = vpop.f32.mrf.mxu0
  %v3409 = vpop.f32.mrf.mxu0
  %3410 = vdwg.mxu0
  %3411 = vmatprep.subr.bf16.mxu0 0
  %3412 = vmatpush1.bf16.msra.mxu0 %v2190
  %3413 = vmatprep.subr.bf16.mxu0 0
  %3414 = vmatpush1.bf16.msra.mxu0 %v2187
  %3415 = vmatprep.subr.bf16.mxu0 0
  %3416 = vmatpush1.bf16.msra.mxu0 %v2184
  %3417 = vmatprep.subr.bf16.mxu0 0
  %3418 = vmatpush1.bf16.msra.mxu0 %v2181
  %3419 = vmatprep.subr.bf16.mxu0 0
  %3420 = vmatpush1.bf16.msra.mxu0 %v2178
  %3421 = vmatprep.subr.bf16.mxu0 0
  %3422 = vmatpush1.bf16.msra.mxu0 %v2175
  %3423 = vmatprep.subr.bf16.mxu0 0
  %3424 = vmatpush1.bf16.msra.mxu0 %v2172
  %3425 = vmatprep.subr.bf16.mxu0 0
  %3426 = vmatpush1.bf16.msra.mxu0 %v2169
  %3427 = vmatprep.subr.bf16.mxu0 0
  %3428 = vmatpush2.bf16.msra.mxu0 0
  %3429 = vmatprep.subr.bf16.mxu0 0
  %3430 = vmatpush2.bf16.msra.mxu0 0
  %3431 = vmatprep.subr.bf16.mxu0 0
  %3432 = vmatpush2.bf16.msra.mxu0 0
  %3433 = vmatprep.subr.bf16.mxu0 0
  %3434 = vmatpush2.bf16.msra.mxu0 0
  %3435 = vmatprep.subr.bf16.mxu0 0
  %3436 = vmatpush2.bf16.msra.mxu0 0
  %3437 = vmatprep.subr.bf16.mxu0 0
  %3438 = vmatpush2.bf16.msra.mxu0 0
  %3439 = vmatprep.subr.bf16.mxu0 0
  %3440 = vmatpush2.bf16.msra.mxu0 0
  %3441 = vmatprep.subr.bf16.mxu0 0
  %3442 = vmatpush2.bf16.msra.mxu0 0
  %3443 = vmatprep.mubr.bf16.mxu0 0
  %3444 = vmatmul.mubr.bf16.gmra.mxu0 %v3368
  %v3445 = vpop.f32.mrf.mxu0
  %v3446 = vadd.f32 %v2083, %v3445
  %v3447 = vpop.f32.mrf.mxu0
  %v3448 = vpop.f32.mrf.mxu0
  %v3449 = vpop.f32.mrf.mxu0
  %3450 = vdwg.mxu0
  %3452 = vrot.lane.b32.xlu0 %v3407, 64
  %v3453 = vpop.permute.xlu0 %3452
  %v3455 = vadd.f32 %v3405, %v3453
  %v3456 = vxor.u32 %v3455, 2147483648
  %v3457 = vmul.f32 %v3456, 1.442695
  %v3458 = vpow.pop %v3457
  %v3459 = vadd.f32 %v3458, 1.0
  %v3460 = vrcp.pop %v3459
  %v3461 = vmul.f32 1.0, %v3460
  %v3462 = vmul.f32 %v3461, %v3446
  %3464 = vrot.lane.b32.xlu0 %v3462, 64
  %v3465 = vpop.permute.xlu0 %3464
  %v3467 = vadd.f32 %v3405, %v3465
  %v3468 = vtanh.pop %v3467
  %v3469 = vsub.f32 1.0, %v3461
  %3471 = vrot.lane.b32.xlu0 %v3468, 96
  %v3472 = vpop.permute.xlu0 %3471
  %v3474 = vmul.f32 %v3469, %v3472
  %v3475 = vmul.f32 %v3461, %v3311
  %v3476 = vadd.f32 %v3474, %v3475
  %3478 = vrot.lane.b32.xlu0 %v3446, 64
  %v3479 = vpop.permute.xlu0 %3478
  %v3481 = vadd.f32 %v3405, %v3479
  %v3482 = vxor.u32 %v3481, 2147483648
  %v3483 = vmul.f32 %v3482, 1.442695
  %v3484 = vpow.pop %v3483
  %v3485 = vadd.f32 %v3484, 1.0
  %v3486 = vrcp.pop %v3485
  %v3487 = vmul.f32 1.0, %v3486
  %v3488 = vadd.f32 %v3407, %v3479
  %v3489 = vxor.u32 %v3488, 2147483648
  %v3490 = vmul.f32 %v3489, 1.442695
  %v3491 = vpow.pop %v3490
  %v3492 = vadd.f32 %v3491, 1.0
  %v3493 = vrcp.pop %v3492
  %v3494 = vmul.f32 1.0, %v3493
  %v3495 = vmul.f32 %v3487, %v3446
  %3497 = vrot.lane.b32.xlu0 %v3495, 64
  %v3498 = vpop.permute.xlu0 %3497
  %v3500 = vadd.f32 %v3407, %v3498
  %v3501 = vtanh.pop %v3500
  %v3502 = vsub.f32 1.0, %v3494
  %3504 = vrot.lane.b32.xlu0 %v3501, 96
  %v3505 = vpop.permute.xlu0 %3504
  %v3507 = vmul.f32 %v3502, %v3505
  %v3508 = vmul.f32 %v3494, %v3344
  %v3509 = vadd.f32 %v3507, %v3508
  %s3510 = scalar_lea.vmem %s2, 16
  %v3511 = vld [vmem:[%s3510] sm:$0x3]
  %v3512 = vpack.c.bf16 %v3511, %v3511
  %s3513 = scalar_lea.vmem %s3, 16
  %v3514 = vld [vmem:[%s3513] sm:$0x3]
  %v3515 = vpack.c.bf16 %v3514, %v3514
  %v3516 = vpack.c.bf16 %v3476, %v3476
  %v3517 = vpack.c.bf16 %v3509, %v3509
  %3519 = vrot.lane.b32.xlu0 %v3515, 32
  %v3520 = vpop.permute.xlu0 %3519
  %3522 = vrot.lane.b32.xlu0 %v3516, 32
  %v3523 = vpop.permute.xlu0 %3522
  %3525 = vrot.lane.b32.xlu0 %v3517, 96
  %v3526 = vpop.permute.xlu0 %3525
  %v3529 = vsel %vm96, %v3512, %v3520
  %v3531 = vsel %vm100, %v3529, %v3523
  %v3533 = vsel %vm103, %v3531, %v3526
  %3535 = vmatprep.subr.bf16.mxu0 %v2189
  %3536 = vmatpush1.bf16.msra.mxu0 %v2188
  %3537 = vmatprep.subr.bf16.mxu0 %v2186
  %3538 = vmatpush1.bf16.msra.mxu0 %v2185
  %3539 = vmatprep.subr.bf16.mxu0 %v2183
  %3540 = vmatpush1.bf16.msra.mxu0 %v2182
  %3541 = vmatprep.subr.bf16.mxu0 %v2180
  %3542 = vmatpush1.bf16.msra.mxu0 %v2179
  %3543 = vmatprep.subr.bf16.mxu0 %v2177
  %3544 = vmatpush1.bf16.msra.mxu0 %v2176
  %3545 = vmatprep.subr.bf16.mxu0 %v2174
  %3546 = vmatpush1.bf16.msra.mxu0 %v2173
  %3547 = vmatprep.subr.bf16.mxu0 %v2171
  %3548 = vmatpush1.bf16.msra.mxu0 %v2170
  %3549 = vmatprep.subr.bf16.mxu0 %v2168
  %3550 = vmatpush1.bf16.msra.mxu0 %v2167
  %3551 = vmatprep.subr.bf16.mxu0 0
  %3552 = vmatpush2.bf16.msra.mxu0 0
  %3553 = vmatprep.subr.bf16.mxu0 0
  %3554 = vmatpush2.bf16.msra.mxu0 0
  %3555 = vmatprep.subr.bf16.mxu0 0
  %3556 = vmatpush2.bf16.msra.mxu0 0
  %3557 = vmatprep.subr.bf16.mxu0 0
  %3558 = vmatpush2.bf16.msra.mxu0 0
  %3559 = vmatprep.subr.bf16.mxu0 0
  %3560 = vmatpush2.bf16.msra.mxu0 0
  %3561 = vmatprep.subr.bf16.mxu0 0
  %3562 = vmatpush2.bf16.msra.mxu0 0
  %3563 = vmatprep.subr.bf16.mxu0 0
  %3564 = vmatpush2.bf16.msra.mxu0 0
  %3565 = vmatprep.subr.bf16.mxu0 0
  %3566 = vmatpush2.bf16.msra.mxu0 0
  %3567 = vmatprep.mubr.bf16.mxu0 0
  %3568 = vmatmul.mubr.bf16.gmra.mxu0 %v3533
  %v3569 = vpop.f32.mrf.mxu0
  %v3570 = vadd.f32 %v2075, %v3569
  %v3571 = vpop.f32.mrf.mxu0
  %v3572 = vadd.f32 %v2079, %v3571
  %v3573 = vpop.f32.mrf.mxu0
  %v3574 = vpop.f32.mrf.mxu0
  %3575 = vdwg.mxu0
  %3576 = vmatprep.subr.bf16.mxu0 0
  %3577 = vmatpush1.bf16.msra.mxu0 %v2190
  %3578 = vmatprep.subr.bf16.mxu0 0
  %3579 = vmatpush1.bf16.msra.mxu0 %v2187
  %3580 = vmatprep.subr.bf16.mxu0 0
  %3581 = vmatpush1.bf16.msra.mxu0 %v2184
  %3582 = vmatprep.subr.bf16.mxu0 0
  %3583 = vmatpush1.bf16.msra.mxu0 %v2181
  %3584 = vmatprep.subr.bf16.mxu0 0
  %3585 = vmatpush1.bf16.msra.mxu0 %v2178
  %3586 = vmatprep.subr.bf16.mxu0 0
  %3587 = vmatpush1.bf16.msra.mxu0 %v2175
  %3588 = vmatprep.subr.bf16.mxu0 0
  %3589 = vmatpush1.bf16.msra.mxu0 %v2172
  %3590 = vmatprep.subr.bf16.mxu0 0
  %3591 = vmatpush1.bf16.msra.mxu0 %v2169
  %3592 = vmatprep.subr.bf16.mxu0 0
  %3593 = vmatpush2.bf16.msra.mxu0 0
  %3594 = vmatprep.subr.bf16.mxu0 0
  %3595 = vmatpush2.bf16.msra.mxu0 0
  %3596 = vmatprep.subr.bf16.mxu0 0
  %3597 = vmatpush2.bf16.msra.mxu0 0
  %3598 = vmatprep.subr.bf16.mxu0 0
  %3599 = vmatpush2.bf16.msra.mxu0 0
  %3600 = vmatprep.subr.bf16.mxu0 0
  %3601 = vmatpush2.bf16.msra.mxu0 0
  %3602 = vmatprep.subr.bf16.mxu0 0
  %3603 = vmatpush2.bf16.msra.mxu0 0
  %3604 = vmatprep.subr.bf16.mxu0 0
  %3605 = vmatpush2.bf16.msra.mxu0 0
  %3606 = vmatprep.subr.bf16.mxu0 0
  %3607 = vmatpush2.bf16.msra.mxu0 0
  %3608 = vmatprep.mubr.bf16.mxu0 0
  %3609 = vmatmul.mubr.bf16.gmra.mxu0 %v3533
  %v3610 = vpop.f32.mrf.mxu0
  %v3611 = vadd.f32 %v2083, %v3610
  %v3612 = vpop.f32.mrf.mxu0
  %v3613 = vpop.f32.mrf.mxu0
  %v3614 = vpop.f32.mrf.mxu0
  %3615 = vdwg.mxu0
  %3617 = vrot.lane.b32.xlu0 %v3572, 64
  %v3618 = vpop.permute.xlu0 %3617
  %v3620 = vadd.f32 %v3570, %v3618
  %v3621 = vxor.u32 %v3620, 2147483648
  %v3622 = vmul.f32 %v3621, 1.442695
  %v3623 = vpow.pop %v3622
  %v3624 = vadd.f32 %v3623, 1.0
  %v3625 = vrcp.pop %v3624
  %v3626 = vmul.f32 1.0, %v3625
  %v3627 = vmul.f32 %v3626, %v3611
  %3629 = vrot.lane.b32.xlu0 %v3627, 64
  %v3630 = vpop.permute.xlu0 %3629
  %v3632 = vadd.f32 %v3570, %v3630
  %v3633 = vtanh.pop %v3632
  %v3634 = vsub.f32 1.0, %v3626
  %3636 = vrot.lane.b32.xlu0 %v3633, 96
  %v3637 = vpop.permute.xlu0 %3636
  %v3639 = vmul.f32 %v3634, %v3637
  %v3640 = vmul.f32 %v3626, %v3476
  %v3641 = vadd.f32 %v3639, %v3640
  %3643 = vrot.lane.b32.xlu0 %v3611, 64
  %v3644 = vpop.permute.xlu0 %3643
  %v3646 = vadd.f32 %v3570, %v3644
  %v3647 = vxor.u32 %v3646, 2147483648
  %v3648 = vmul.f32 %v3647, 1.442695
  %v3649 = vpow.pop %v3648
  %v3650 = vadd.f32 %v3649, 1.0
  %v3651 = vrcp.pop %v3650
  %v3652 = vmul.f32 1.0, %v3651
  %v3653 = vadd.f32 %v3572, %v3644
  %v3654 = vxor.u32 %v3653, 2147483648
  %v3655 = vmul.f32 %v3654, 1.442695
  %v3656 = vpow.pop %v3655
  %v3657 = vadd.f32 %v3656, 1.0
  %v3658 = vrcp.pop %v3657
  %v3659 = vmul.f32 1.0, %v3658
  %v3660 = vmul.f32 %v3652, %v3611
  %3662 = vrot.lane.b32.xlu0 %v3660, 64
  %v3663 = vpop.permute.xlu0 %3662
  %v3665 = vadd.f32 %v3572, %v3663
  %v3666 = vtanh.pop %v3665
  %v3667 = vsub.f32 1.0, %v3659
  %3669 = vrot.lane.b32.xlu0 %v3666, 96
  %v3670 = vpop.permute.xlu0 %3669
  %v3672 = vmul.f32 %v3667, %v3670
  %v3673 = vmul.f32 %v3659, %v3509
  %v3674 = vadd.f32 %v3672, %v3673
  %s3675 = scalar_lea.vmem %s2, 18
  %v3676 = vld [vmem:[%s3675] sm:$0x3]
  %v3677 = vpack.c.bf16 %v3676, %v3676
  %s3678 = scalar_lea.vmem %s3, 18
  %v3679 = vld [vmem:[%s3678] sm:$0x3]
  %v3680 = vpack.c.bf16 %v3679, %v3679
  %v3681 = vpack.c.bf16 %v3641, %v3641
  %v3682 = vpack.c.bf16 %v3674, %v3674
  %3684 = vrot.lane.b32.xlu0 %v3680, 32
  %v3685 = vpop.permute.xlu0 %3684
  %3687 = vrot.lane.b32.xlu0 %v3681, 32
  %v3688 = vpop.permute.xlu0 %3687
  %3690 = vrot.lane.b32.xlu0 %v3682, 96
  %v3691 = vpop.permute.xlu0 %3690
  %v3694 = vsel %vm96, %v3677, %v3685
  %v3696 = vsel %vm100, %v3694, %v3688
  %v3698 = vsel %vm103, %v3696, %v3691
  %3700 = vmatprep.subr.bf16.mxu0 %v2189
  %3701 = vmatpush1.bf16.msra.mxu0 %v2188
  %3702 = vmatprep.subr.bf16.mxu0 %v2186
  %3703 = vmatpush1.bf16.msra.mxu0 %v2185
  %3704 = vmatprep.subr.bf16.mxu0 %v2183
  %3705 = vmatpush1.bf16.msra.mxu0 %v2182
  %3706 = vmatprep.subr.bf16.mxu0 %v2180
  %3707 = vmatpush1.bf16.msra.mxu0 %v2179
  %3708 = vmatprep.subr.bf16.mxu0 %v2177
  %3709 = vmatpush1.bf16.msra.mxu0 %v2176
  %3710 = vmatprep.subr.bf16.mxu0 %v2174
  %3711 = vmatpush1.bf16.msra.mxu0 %v2173
  %3712 = vmatprep.subr.bf16.mxu0 %v2171
  %3713 = vmatpush1.bf16.msra.mxu0 %v2170
  %3714 = vmatprep.subr.bf16.mxu0 %v2168
  %3715 = vmatpush1.bf16.msra.mxu0 %v2167
  %3716 = vmatprep.subr.bf16.mxu0 0
  %3717 = vmatpush2.bf16.msra.mxu0 0
  %3718 = vmatprep.subr.bf16.mxu0 0
  %3719 = vmatpush2.bf16.msra.mxu0 0
  %3720 = vmatprep.subr.bf16.mxu0 0
  %3721 = vmatpush2.bf16.msra.mxu0 0
  %3722 = vmatprep.subr.bf16.mxu0 0
  %3723 = vmatpush2.bf16.msra.mxu0 0
  %3724 = vmatprep.subr.bf16.mxu0 0
  %3725 = vmatpush2.bf16.msra.mxu0 0
  %3726 = vmatprep.subr.bf16.mxu0 0
  %3727 = vmatpush2.bf16.msra.mxu0 0
  %3728 = vmatprep.subr.bf16.mxu0 0
  %3729 = vmatpush2.bf16.msra.mxu0 0
  %3730 = vmatprep.subr.bf16.mxu0 0
  %3731 = vmatpush2.bf16.msra.mxu0 0
  %3732 = vmatprep.mubr.bf16.mxu0 0
  %3733 = vmatmul.mubr.bf16.gmra.mxu0 %v3698
  %v3734 = vpop.f32.mrf.mxu0
  %v3735 = vadd.f32 %v2075, %v3734
  %v3736 = vpop.f32.mrf.mxu0
  %v3737 = vadd.f32 %v2079, %v3736
  %v3738 = vpop.f32.mrf.mxu0
  %v3739 = vpop.f32.mrf.mxu0
  %3740 = vdwg.mxu0
  %3741 = vmatprep.subr.bf16.mxu0 0
  %3742 = vmatpush1.bf16.msra.mxu0 %v2190
  %3743 = vmatprep.subr.bf16.mxu0 0
  %3744 = vmatpush1.bf16.msra.mxu0 %v2187
  %3745 = vmatprep.subr.bf16.mxu0 0
  %3746 = vmatpush1.bf16.msra.mxu0 %v2184
  %3747 = vmatprep.subr.bf16.mxu0 0
  %3748 = vmatpush1.bf16.msra.mxu0 %v2181
  %3749 = vmatprep.subr.bf16.mxu0 0
  %3750 = vmatpush1.bf16.msra.mxu0 %v2178
  %3751 = vmatprep.subr.bf16.mxu0 0
  %3752 = vmatpush1.bf16.msra.mxu0 %v2175
  %3753 = vmatprep.subr.bf16.mxu0 0
  %3754 = vmatpush1.bf16.msra.mxu0 %v2172
  %3755 = vmatprep.subr.bf16.mxu0 0
  %3756 = vmatpush1.bf16.msra.mxu0 %v2169
  %3757 = vmatprep.subr.bf16.mxu0 0
  %3758 = vmatpush2.bf16.msra.mxu0 0
  %3759 = vmatprep.subr.bf16.mxu0 0
  %3760 = vmatpush2.bf16.msra.mxu0 0
  %3761 = vmatprep.subr.bf16.mxu0 0
  %3762 = vmatpush2.bf16.msra.mxu0 0
  %3763 = vmatprep.subr.bf16.mxu0 0
  %3764 = vmatpush2.bf16.msra.mxu0 0
  %3765 = vmatprep.subr.bf16.mxu0 0
  %3766 = vmatpush2.bf16.msra.mxu0 0
  %3767 = vmatprep.subr.bf16.mxu0 0
  %3768 = vmatpush2.bf16.msra.mxu0 0
  %3769 = vmatprep.subr.bf16.mxu0 0
  %3770 = vmatpush2.bf16.msra.mxu0 0
  %3771 = vmatprep.subr.bf16.mxu0 0
  %3772 = vmatpush2.bf16.msra.mxu0 0
  %3773 = vmatprep.mubr.bf16.mxu0 0
  %3774 = vmatmul.mubr.bf16.gmra.mxu0 %v3698
  %v3775 = vpop.f32.mrf.mxu0
  %v3776 = vadd.f32 %v2083, %v3775
  %v3777 = vpop.f32.mrf.mxu0
  %v3778 = vpop.f32.mrf.mxu0
  %v3779 = vpop.f32.mrf.mxu0
  %3780 = vdwg.mxu0
  %3782 = vrot.lane.b32.xlu0 %v3737, 64
  %v3783 = vpop.permute.xlu0 %3782
  %v3785 = vadd.f32 %v3735, %v3783
  %v3786 = vxor.u32 %v3785, 2147483648
  %v3787 = vmul.f32 %v3786, 1.442695
  %v3788 = vpow.pop %v3787
  %v3789 = vadd.f32 %v3788, 1.0
  %v3790 = vrcp.pop %v3789
  %v3791 = vmul.f32 1.0, %v3790
  %v3792 = vmul.f32 %v3791, %v3776
  %3794 = vrot.lane.b32.xlu0 %v3792, 64
  %v3795 = vpop.permute.xlu0 %3794
  %v3797 = vadd.f32 %v3735, %v3795
  %v3798 = vtanh.pop %v3797
  %v3799 = vsub.f32 1.0, %v3791
  %3801 = vrot.lane.b32.xlu0 %v3798, 96
  %v3802 = vpop.permute.xlu0 %3801
  %v3804 = vmul.f32 %v3799, %v3802
  %v3805 = vmul.f32 %v3791, %v3641
  %v3806 = vadd.f32 %v3804, %v3805
  %3808 = vrot.lane.b32.xlu0 %v3776, 64
  %v3809 = vpop.permute.xlu0 %3808
  %v3811 = vadd.f32 %v3735, %v3809
  %v3812 = vxor.u32 %v3811, 2147483648
  %v3813 = vmul.f32 %v3812, 1.442695
  %v3814 = vpow.pop %v3813
  %v3815 = vadd.f32 %v3814, 1.0
  %v3816 = vrcp.pop %v3815
  %v3817 = vmul.f32 1.0, %v3816
  %v3818 = vadd.f32 %v3737, %v3809
  %v3819 = vxor.u32 %v3818, 2147483648
  %v3820 = vmul.f32 %v3819, 1.442695
  %v3821 = vpow.pop %v3820
  %v3822 = vadd.f32 %v3821, 1.0
  %v3823 = vrcp.pop %v3822
  %v3824 = vmul.f32 1.0, %v3823
  %v3825 = vmul.f32 %v3817, %v3776
  %3827 = vrot.lane.b32.xlu0 %v3825, 64
  %v3828 = vpop.permute.xlu0 %3827
  %v3830 = vadd.f32 %v3737, %v3828
  %v3831 = vtanh.pop %v3830
  %v3832 = vsub.f32 1.0, %v3824
  %3834 = vrot.lane.b32.xlu0 %v3831, 96
  %v3835 = vpop.permute.xlu0 %3834
  %v3837 = vmul.f32 %v3832, %v3835
  %v3838 = vmul.f32 %v3824, %v3674
  %v3839 = vadd.f32 %v3837, %v3838
  %3842 = vrot.lane.b32.xlu0 %v416, 96
  %v3843 = vpop.permute.xlu0 %3842
  %3844 = vrot.lane.b32.xlu0 %v417, 96
  %v3845 = vpop.permute.xlu0 %3844
  %3850 = vrot.lane.b32.xlu0 %v1627, 32
  %v3851 = vpop.permute.xlu0 %3850
  %3852 = vrot.lane.b32.xlu0 %v1628, 32
  %v3853 = vpop.permute.xlu0 %3852
  %v3856 = vsel %vm96, %v3843, %v3851
  %v3857 = vsel %vm96, %v3845, %v3853
  %3860 = vrot.lane.b32.xlu0 %v645, 96
  %v3861 = vpop.permute.xlu0 %3860
  %3862 = vrot.lane.b32.xlu0 %v646, 96
  %v3863 = vpop.permute.xlu0 %3862
  %3868 = vrot.lane.b32.xlu0 %v1398, 32
  %v3869 = vpop.permute.xlu0 %3868
  %3870 = vrot.lane.b32.xlu0 %v1399, 32
  %v3871 = vpop.permute.xlu0 %3870
  %v3874 = vsel %vm96, %v3861, %v3869
  %v3875 = vsel %vm96, %v3863, %v3871
  %3878 = vrot.lane.b32.xlu0 %v874, 96
  %v3879 = vpop.permute.xlu0 %3878
  %3880 = vrot.lane.b32.xlu0 %v875, 96
  %v3881 = vpop.permute.xlu0 %3880
  %3886 = vrot.lane.b32.xlu0 %v1169, 32
  %v3887 = vpop.permute.xlu0 %3886
  %3888 = vrot.lane.b32.xlu0 %v1170, 32
  %v3889 = vpop.permute.xlu0 %3888
  %v3892 = vsel %vm96, %v3879, %v3887
  %v3893 = vsel %vm96, %v3881, %v3889
  %3896 = vrot.lane.b32.xlu0 %v1103, 96
  %v3897 = vpop.permute.xlu0 %3896
  %3898 = vrot.lane.b32.xlu0 %v1104, 96
  %v3899 = vpop.permute.xlu0 %3898
  %3904 = vrot.lane.b32.xlu0 %v940, 32
  %v3905 = vpop.permute.xlu0 %3904
  %3906 = vrot.lane.b32.xlu0 %v941, 32
  %v3907 = vpop.permute.xlu0 %3906
  %v3910 = vsel %vm96, %v3897, %v3905
  %v3911 = vsel %vm96, %v3899, %v3907
  %3914 = vrot.lane.b32.xlu0 %v1332, 96
  %v3915 = vpop.permute.xlu0 %3914
  %3916 = vrot.lane.b32.xlu0 %v1333, 96
  %v3917 = vpop.permute.xlu0 %3916
  %3922 = vrot.lane.b32.xlu0 %v711, 32
  %v3923 = vpop.permute.xlu0 %3922
  %3924 = vrot.lane.b32.xlu0 %v712, 32
  %v3925 = vpop.permute.xlu0 %3924
  %v3928 = vsel %vm96, %v3915, %v3923
  %v3929 = vsel %vm96, %v3917, %v3925
  %3932 = vrot.lane.b32.xlu0 %v1561, 96
  %v3933 = vpop.permute.xlu0 %3932
  %3934 = vrot.lane.b32.xlu0 %v1562, 96
  %v3935 = vpop.permute.xlu0 %3934
  %3940 = vrot.lane.b32.xlu0 %v482, 32
  %v3941 = vpop.permute.xlu0 %3940
  %3942 = vrot.lane.b32.xlu0 %v483, 32
  %v3943 = vpop.permute.xlu0 %3942
  %v3946 = vsel %vm96, %v3933, %v3941
  %v3947 = vsel %vm96, %v3935, %v3943
  %vm3950 = vcmask 1045504
  %v3951 = vrot.slane %v3856, 2
  %v3952 = vrot.slane %v3857, 2
  %v3953 = vsel %vm3950, %v3951, %v3952
  %v3957 = vrot.slane %v3874, 2
  %v3958 = vrot.slane %v3875, 2
  %v3959 = vsel %vm3950, %v3957, %v3958
  %v3963 = vrot.slane %v3892, 2
  %v3964 = vrot.slane %v3893, 2
  %v3965 = vsel %vm3950, %v3963, %v3964
  %v3969 = vrot.slane %v3910, 2
  %v3970 = vrot.slane %v3911, 2
  %v3971 = vsel %vm3950, %v3969, %v3970
  %v3975 = vrot.slane %v3928, 2
  %v3976 = vrot.slane %v3929, 2
  %v3977 = vsel %vm3950, %v3975, %v3976
  %v3981 = vrot.slane %v3946, 2
  %v3982 = vrot.slane %v3947, 2
  %v3983 = vsel %vm3950, %v3981, %v3982
  %v3985 = vpack.c.bf16 %v3959, %v3953
  %v3986 = vpack.c.bf16 %v3971, %v3965
  %v3987 = vpack.c.bf16 %v3983, %v3977
  %v3988 = vld [vmem:[%s10] sm:$0xf]
  %v3989 = vld [vmem:[%s10 + $0x4] sm:$0xf]
  %v3990 = vld [vmem:[%s10 + $0x8] sm:$0xf]
  %v3991 = vld [vmem:[%s10 + $0xc] sm:$0xf]
  %v3992 = vld [vmem:[%s10 + $0x10] sm:$0xf]
  %v3993 = vld [vmem:[%s10 + $0x14] sm:$0xf]
  %v3994 = vld [vmem:[%s10 + $0x18] sm:$0xf]
  %v3995 = vld [vmem:[%s10 + $0x1c] sm:$0xf]
  %v3996 = vld [vmem:[%s11] sm:$0x1]
  %v3998 = vlaneseq
  %v3999 = vshrl.u32 %v3998, 7
  %v4000 = vsub.s32 0, %v3999
  %v4001 = vrot.slane %v3996, %v4000
  %v4011 = vunpack.c.l.b16 %v3988
  %v4012 = vunpack.c.l.b16 %v3989
  %v4013 = vunpack.c.l.b16 %v3990
  %v4014 = vunpack.c.l.b16 %v3991
  %v4015 = vunpack.c.l.b16 %v3992
  %v4016 = vunpack.c.l.b16 %v3993
  %v4017 = vunpack.c.l.b16 %v3994
  %v4018 = vunpack.c.l.b16 %v3995
  %v4019 = vpack.c.b16 %v4012, %v4011
  %v4020 = vpack.c.b16 %v4014, %v4013
  %v4021 = vpack.c.b16 %v4016, %v4015
  %v4022 = vpack.c.b16 %v4018, %v4017
  %v4028 = vsel %vm100, %v3985, 0
  %v4031 = vsel %vm100, %v3986, 0
  %v4034 = vsel %vm100, %v3987, 0
  %4036 = vmatprep.subr.bf16.mxu0 0
  %4037 = vmatpush1.bf16.msra.mxu0 0
  %4038 = vmatprep.subr.bf16.mxu0 0
  %4039 = vmatpush1.bf16.msra.mxu0 0
  %4040 = vmatprep.subr.bf16.mxu0 0
  %4041 = vmatpush1.bf16.msra.mxu0 0
  %4042 = vmatprep.subr.bf16.mxu0 0
  %4043 = vmatpush1.bf16.msra.mxu0 0
  %4044 = vmatprep.subr.bf16.mxu0 0
  %4045 = vmatpush1.bf16.msra.mxu0 %v4022
  %4046 = vmatprep.subr.bf16.mxu0 0
  %4047 = vmatpush1.bf16.msra.mxu0 %v4021
  %4048 = vmatprep.subr.bf16.mxu0 0
  %4049 = vmatpush1.bf16.msra.mxu0 %v4020
  %4050 = vmatprep.subr.bf16.mxu0 0
  %4051 = vmatpush1.bf16.msra.mxu0 %v4019
  %4052 = vmatprep.subr.bf16.mxu0 0
  %4053 = vmatpush2.bf16.msra.mxu0 0
  %4054 = vmatprep.subr.bf16.mxu0 0
  %4055 = vmatpush2.bf16.msra.mxu0 0
  %4056 = vmatprep.subr.bf16.mxu0 0
  %4057 = vmatpush2.bf16.msra.mxu0 0
  %4058 = vmatprep.subr.bf16.mxu0 0
  %4059 = vmatpush2.bf16.msra.mxu0 0
  %4060 = vmatprep.subr.bf16.mxu0 0
  %4061 = vmatpush2.bf16.msra.mxu0 0
  %4062 = vmatprep.subr.bf16.mxu0 0
  %4063 = vmatpush2.bf16.msra.mxu0 0
  %4064 = vmatprep.subr.bf16.mxu0 0
  %4065 = vmatpush2.bf16.msra.mxu0 0
  %4066 = vmatprep.subr.bf16.mxu0 0
  %4067 = vmatpush2.bf16.msra.mxu0 0
  %4068 = vmatprep.mubr.bf16.mxu0 0
  %4069 = vmatmul.mubr.bf16.gmra.mxu0 %v4028
  %v4070 = vpop.f32.mrf.mxu0
  %v4071 = vadd.f32 %v4001, %v4070
  %v4072 = vpop.f32.mrf.mxu0
  %v4073 = vpop.f32.mrf.mxu0
  %v4074 = vadd.f32 %v4001, %v4073
  %v4075 = vpop.f32.mrf.mxu0
  %4076 = vmatprep.mubr.bf16.mxu0 0
  %4077 = vmatmul.mubr.bf16.gmra.mxu0 %v4031
  %v4078 = vpop.f32.mrf.mxu0
  %v4079 = vadd.f32 %v4001, %v4078
  %v4080 = vpop.f32.mrf.mxu0
  %v4081 = vpop.f32.mrf.mxu0
  %v4082 = vadd.f32 %v4001, %v4081
  %v4083 = vpop.f32.mrf.mxu0
  %4084 = vmatprep.mubr.bf16.mxu0 0
  %4085 = vmatmul.mubr.bf16.gmra.mxu0 %v4034
  %v4086 = vpop.f32.mrf.mxu0
  %v4087 = vadd.f32 %v4001, %v4086
  %v4088 = vpop.f32.mrf.mxu0
  %v4089 = vpop.f32.mrf.mxu0
  %v4090 = vadd.f32 %v4001, %v4089
  %v4091 = vpop.f32.mrf.mxu0
  %4092 = vdwg.mxu0
  %v4093 = vmax.f32 %v4071, 0.0
  %v4094 = vmax.f32 %v4074, 0.0
  %v4095 = vmax.f32 %v4079, 0.0
  %v4096 = vmax.f32 %v4082, 0.0
  %v4097 = vmax.f32 %v4087, 0.0
  %v4098 = vmax.f32 %v4090, 0.0
  %v4099 = vld [vmem:[%s12] sm:$0x1]
  %v4101 = vlaneseq
  %v4102 = vshrl.u32 %v4101, 7
  %v4103 = vsub.s32 0, %v4102
  %v4104 = vrot.slane %v4099, %v4103
  %v4106 = vmul.f32 %v4093, %v4104
  %v4107 = vmul.f32 %v4094, %v4104
  %v4108 = vmul.f32 %v4095, %v4104
  %v4109 = vmul.f32 %v4096, %v4104
  %v4110 = vmul.f32 %v4097, %v4104
  %v4111 = vmul.f32 %v4098, %v4104
  %v4112 = vsel %vm96, %v4106, 0.0
  %4113 = vadd.xlane.f32.xlu0 %v4112
  %v4114 = vpop.xlane.xlu0 %4113
  %v4115 = vsel %vm96, %v4107, 0.0
  %4116 = vadd.xlane.f32.xlu0 %v4115
  %v4117 = vpop.xlane.xlu0 %4116
  %v4118 = vsel %vm96, %v4108, 0.0
  %4119 = vadd.xlane.f32.xlu0 %v4118
  %v4120 = vpop.xlane.xlu0 %4119
  %v4121 = vsel %vm96, %v4109, 0.0
  %4122 = vadd.xlane.f32.xlu0 %v4121
  %v4123 = vpop.xlane.xlu0 %4122
  %v4124 = vsel %vm96, %v4110, 0.0
  %4125 = vadd.xlane.f32.xlu0 %v4124
  %v4126 = vpop.xlane.xlu0 %4125
  %v4127 = vsel %vm96, %v4111, 0.0
  %4128 = vadd.xlane.f32.xlu0 %v4127
  %v4129 = vpop.xlane.xlu0 %4128
  %v4130 = vld [vmem:[#allocation2] sm:$0x1]
  %v4132 = vlaneseq
  %v4133 = vshrl.u32 %v4132, 7
  %v4134 = vsub.s32 0, %v4133
  %v4135 = vrot.slane %v4130, %v4134
  %v4137 = vadd.f32 %v4114, %v4135
  %v4138 = vadd.f32 %v4117, %v4135
  %v4139 = vadd.f32 %v4120, %v4135
  %v4140 = vadd.f32 %v4123, %v4135
  %v4141 = vadd.f32 %v4126, %v4135
  %v4142 = vadd.f32 %v4129, %v4135
  %4144 = vrot.lane.b32.xlu0 %v4138, 1
  %v4145 = vpop.permute.xlu0 %4144
  %4148 = vrot.lane.b32.xlu0 %v4139, 2
  %v4149 = vpop.permute.xlu0 %4148
  %4152 = vrot.lane.b32.xlu0 %v4140, 3
  %v4153 = vpop.permute.xlu0 %4152
  %4156 = vrot.lane.b32.xlu0 %v4141, 4
  %v4157 = vpop.permute.xlu0 %4156
  %4160 = vrot.lane.b32.xlu0 %v4142, 5
  %v4161 = vpop.permute.xlu0 %4160
  %vm4163 = vcmask 7168
  %v4164 = vsel %vm4163, %v4137, %v4145
  %vm4165 = vcmask 15360
  %v4166 = vsel %vm4165, %v4164, %v4149
  %vm4167 = vcmask 23552
  %v4168 = vsel %vm4167, %v4166, %v4153
  %vm4169 = vcmask 31744
  %v4170 = vsel %vm4169, %v4168, %v4157
  %vm4171 = vcmask 39936
  %v4172 = vsel %vm4171, %v4170, %v4161
  %v4173 = vld [vmem:[%s4] sm:$0xff]
  %vm4174 = vcmp.gt.f32.partialorder %v4173, 0.5
  %v4175 = vsel %vm4174, -1e+09, %v4172
  %vm4176 = vcmask 48128
  %v4177 = vsel %vm4176, %v4175, -inf
  %4178 = vmax.xlane.f32.xlu0 %v4177
  %v4179 = vpop.xlane.xlu0 %4178
  %v4180 = vsub.f32 %v4175, %v4179
  %v4181 = vmul.f32 %v4180, 1.442695
  %v4182 = vpow.pop %v4181
  %v4183 = vsel %vm4176, %v4182, 0.0
  %4184 = vadd.xlane.f32.xlu0 %v4183
  %v4185 = vpop.xlane.xlu0 %4184
  %v4186 = vrcp.pop %v4185
  %v4187 = vmul.f32 %v4182, %v4186
  %4189 = vset.pattern.permute.xlu0 0
  %4190 = vperm.xlu0 %4189, %v4187
  %v4191 = vpop.permute.xlu0 %4190
  %v4193 = vmul.f32 %v4191, %v3953
  %v4194 = vadd.f32 %v4193, 0.0
  %4195 = vset.pattern.permute.xlu0 1
  %4196 = vperm.xlu0 %4195, %v4187
  %v4197 = vpop.permute.xlu0 %4196
  %v4199 = vmul.f32 %v4197, %v3959
  %v4200 = vadd.f32 %v4194, %v4199
  %4201 = vset.pattern.permute.xlu0 2
  %4202 = vperm.xlu0 %4201, %v4187
  %v4203 = vpop.permute.xlu0 %4202
  %v4205 = vmul.f32 %v4203, %v3965
  %v4206 = vadd.f32 %v4200, %v4205
  %4207 = vset.pattern.permute.xlu0 3
  %4208 = vperm.xlu0 %4207, %v4187
  %v4209 = vpop.permute.xlu0 %4208
  %v4211 = vmul.f32 %v4209, %v3971
  %v4212 = vadd.f32 %v4206, %v4211
  %4213 = vset.pattern.permute.xlu0 4
  %4214 = vperm.xlu0 %4213, %v4187
  %v4215 = vpop.permute.xlu0 %4214
  %v4217 = vmul.f32 %v4215, %v3977
  %v4218 = vadd.f32 %v4212, %v4217
  %4219 = vset.pattern.permute.xlu0 5
  %4220 = vperm.xlu0 %4219, %v4187
  %v4221 = vpop.permute.xlu0 %4220
  %v4223 = vmul.f32 %v4221, %v3983
  %v4224 = vadd.f32 %v4218, %v4223
  %v4225 = vpack.c.bf16 %v4224, %v4224
  %v4226 = vld [vmem:[%s14] sm:$0xf]
  %v4227 = vld [vmem:[%s14 + $0x4] sm:$0xf]
  %v4228 = vld [vmem:[%s14 + $0x8] sm:$0xf]
  %v4229 = vld [vmem:[%s14 + $0xc] sm:$0xf]
  %v4230 = vld [vmem:[%s14 + $0x10] sm:$0xf]
  %v4231 = vld [vmem:[%s14 + $0x14] sm:$0xf]
  %v4232 = vld [vmem:[%s14 + $0x18] sm:$0xf]
  %v4233 = vld [vmem:[%s14 + $0x1c] sm:$0xf]
  %v4234 = vld [vmem:[%s15] sm:$0x1]
  %v4236 = vlaneseq
  %v4237 = vshrl.u32 %v4236, 7
  %v4238 = vsub.s32 0, %v4237
  %v4239 = vrot.slane %v4234, %v4238
  %v4249 = vunpack.c.l.b16 %v4226
  %v4250 = vunpack.c.l.b16 %v4227
  %v4251 = vunpack.c.l.b16 %v4228
  %v4252 = vunpack.c.l.b16 %v4229
  %v4253 = vunpack.c.l.b16 %v4230
  %v4254 = vunpack.c.l.b16 %v4231
  %v4255 = vunpack.c.l.b16 %v4232
  %v4256 = vunpack.c.l.b16 %v4233
  %v4257 = vpack.c.b16 %v4250, %v4249
  %v4258 = vpack.c.b16 %v4252, %v4251
  %v4259 = vpack.c.b16 %v4254, %v4253
  %v4260 = vpack.c.b16 %v4256, %v4255
  %v4266 = vsel %vm100, %v4225, 0
  %4268 = vmatprep.subr.bf16.mxu0 0
  %4269 = vmatpush1.bf16.msra.mxu0 0
  %4270 = vmatprep.subr.bf16.mxu0 0
  %4271 = vmatpush1.bf16.msra.mxu0 0
  %4272 = vmatprep.subr.bf16.mxu0 0
  %4273 = vmatpush1.bf16.msra.mxu0 0
  %4274 = vmatprep.subr.bf16.mxu0 0
  %4275 = vmatpush1.bf16.msra.mxu0 0
  %4276 = vmatprep.subr.bf16.mxu0 0
  %4277 = vmatpush1.bf16.msra.mxu0 %v4260
  %4278 = vmatprep.subr.bf16.mxu0 0
  %4279 = vmatpush1.bf16.msra.mxu0 %v4259
  %4280 = vmatprep.subr.bf16.mxu0 0
  %4281 = vmatpush1.bf16.msra.mxu0 %v4258
  %4282 = vmatprep.subr.bf16.mxu0 0
  %4283 = vmatpush1.bf16.msra.mxu0 %v4257
  %4284 = vmatprep.subr.bf16.mxu0 0
  %4285 = vmatpush2.bf16.msra.mxu0 0
  %4286 = vmatprep.subr.bf16.mxu0 0
  %4287 = vmatpush2.bf16.msra.mxu0 0
  %4288 = vmatprep.subr.bf16.mxu0 0
  %4289 = vmatpush2.bf16.msra.mxu0 0
  %4290 = vmatprep.subr.bf16.mxu0 0
  %4291 = vmatpush2.bf16.msra.mxu0 0
  %4292 = vmatprep.subr.bf16.mxu0 0
  %4293 = vmatpush2.bf16.msra.mxu0 0
  %4294 = vmatprep.subr.bf16.mxu0 0
  %4295 = vmatpush2.bf16.msra.mxu0 0
  %4296 = vmatprep.subr.bf16.mxu0 0
  %4297 = vmatpush2.bf16.msra.mxu0 0
  %4298 = vmatprep.subr.bf16.mxu0 0
  %4299 = vmatpush2.bf16.msra.mxu0 0
  %4300 = vmatprep.mubr.bf16.mxu0 0
  %4301 = vmatmul.mubr.bf16.gmra.mxu0 %v4266
  %v4302 = vpop.f32.mrf.mxu0
  %v4303 = vadd.f32 %v4239, %v4302
  %v4304 = vpop.f32.mrf.mxu0
  %v4305 = vpop.f32.mrf.mxu0
  %v4306 = vpop.f32.mrf.mxu0
  %4307 = vdwg.mxu0
  %4309 = vrot.lane.b32.xlu0 %v2024, 32
  %v4310 = vpop.permute.xlu0 %4309
  %v4312 = vsel %vm96, %v3843, %v4310
  %v4313 = vpack.c.bf16 %v4312, %v4312
  %v4314 = vld [vmem:[%s18] sm:$0xf]
  %v4315 = vld [vmem:[%s18 + $0x4] sm:$0xf]
  %v4316 = vld [vmem:[%s18 + $0x8] sm:$0xf]
  %v4317 = vld [vmem:[%s18 + $0xc] sm:$0xf]
  %v4318 = vld [vmem:[%s18 + $0x10] sm:$0xf]
  %v4319 = vld [vmem:[%s18 + $0x14] sm:$0xf]
  %v4320 = vld [vmem:[%s18 + $0x18] sm:$0xf]
  %v4321 = vld [vmem:[%s18 + $0x1c] sm:$0xf]
  %v4322 = vld [vmem:[%s19] sm:$0x1]
  %v4324 = vlaneseq
  %v4325 = vshrl.u32 %v4324, 7
  %v4326 = vsub.s32 0, %v4325
  %v4327 = vrot.slane %v4322, %v4326
  %v4337 = vunpack.c.l.b16 %v4314
  %v4338 = vunpack.c.l.b16 %v4315
  %v4339 = vunpack.c.l.b16 %v4316
  %v4340 = vunpack.c.l.b16 %v4317
  %v4341 = vunpack.c.l.b16 %v4318
  %v4342 = vunpack.c.l.b16 %v4319
  %v4343 = vunpack.c.l.b16 %v4320
  %v4344 = vunpack.c.l.b16 %v4321
  %v4345 = vpack.c.b16 %v4338, %v4337
  %v4346 = vpack.c.b16 %v4340, %v4339
  %v4347 = vpack.c.b16 %v4342, %v4341
  %v4348 = vpack.c.b16 %v4344, %v4343
  %v4354 = vsel %vm100, %v4313, 0
  %4356 = vmatprep.subr.bf16.mxu0 0
  %4357 = vmatpush1.bf16.msra.mxu0 0
  %4358 = vmatprep.subr.bf16.mxu0 0
  %4359 = vmatpush1.bf16.msra.mxu0 0
  %4360 = vmatprep.subr.bf16.mxu0 0
  %4361 = vmatpush1.bf16.msra.mxu0 0
  %4362 = vmatprep.subr.bf16.mxu0 0
  %4363 = vmatpush1.bf16.msra.mxu0 0
  %4364 = vmatprep.subr.bf16.mxu0 0
  %4365 = vmatpush1.bf16.msra.mxu0 %v4348
  %4366 = vmatprep.subr.bf16.mxu0 0
  %4367 = vmatpush1.bf16.msra.mxu0 %v4347
  %4368 = vmatprep.subr.bf16.mxu0 0
  %4369 = vmatpush1.bf16.msra.mxu0 %v4346
  %4370 = vmatprep.subr.bf16.mxu0 0
  %4371 = vmatpush1.bf16.msra.mxu0 %v4345
  %4372 = vmatprep.subr.bf16.mxu0 0
  %4373 = vmatpush2.bf16.msra.mxu0 0
  %4374 = vmatprep.subr.bf16.mxu0 0
  %4375 = vmatpush2.bf16.msra.mxu0 0
  %4376 = vmatprep.subr.bf16.mxu0 0
  %4377 = vmatpush2.bf16.msra.mxu0 0
  %4378 = vmatprep.subr.bf16.mxu0 0
  %4379 = vmatpush2.bf16.msra.mxu0 0
  %4380 = vmatprep.subr.bf16.mxu0 0
  %4381 = vmatpush2.bf16.msra.mxu0 0
  %4382 = vmatprep.subr.bf16.mxu0 0
  %4383 = vmatpush2.bf16.msra.mxu0 0
  %4384 = vmatprep.subr.bf16.mxu0 0
  %4385 = vmatpush2.bf16.msra.mxu0 0
  %4386 = vmatprep.subr.bf16.mxu0 0
  %4387 = vmatpush2.bf16.msra.mxu0 0
  %4388 = vmatprep.mubr.bf16.mxu0 0
  %4389 = vmatmul.mubr.bf16.gmra.mxu0 %v4354
  %v4390 = vpop.f32.mrf.mxu0
  %v4391 = vadd.f32 %v4327, %v4390
  %v4392 = vpop.f32.mrf.mxu0
  %v4393 = vpop.f32.mrf.mxu0
  %v4394 = vpop.f32.mrf.mxu0
  %4395 = vdwg.mxu0
  %v4396 = vmax.f32 %v4391, 0.0
  %v4397 = vadd.f32 %v4396, 0.0
  %4399 = vrot.lane.b32.xlu0 %v1856, 32
  %v4400 = vpop.permute.xlu0 %4399
  %v4402 = vsel %vm96, %v3861, %v4400
  %v4403 = vpack.c.bf16 %v4402, %v4402
  %v4405 = vsel %vm100, %v4403, 0
  %4407 = vmatprep.subr.bf16.mxu0 0
  %4408 = vmatpush1.bf16.msra.mxu0 0
  %4409 = vmatprep.subr.bf16.mxu0 0
  %4410 = vmatpush1.bf16.msra.mxu0 0
  %4411 = vmatprep.subr.bf16.mxu0 0
  %4412 = vmatpush1.bf16.msra.mxu0 0
  %4413 = vmatprep.subr.bf16.mxu0 0
  %4414 = vmatpush1.bf16.msra.mxu0 0
  %4415 = vmatprep.subr.bf16.mxu0 0
  %4416 = vmatpush1.bf16.msra.mxu0 %v4348
  %4417 = vmatprep.subr.bf16.mxu0 0
  %4418 = vmatpush1.bf16.msra.mxu0 %v4347
  %4419 = vmatprep.subr.bf16.mxu0 0
  %4420 = vmatpush1.bf16.msra.mxu0 %v4346
  %4421 = vmatprep.subr.bf16.mxu0 0
  %4422 = vmatpush1.bf16.msra.mxu0 %v4345
  %4423 = vmatprep.subr.bf16.mxu0 0
  %4424 = vmatpush2.bf16.msra.mxu0 0
  %4425 = vmatprep.subr.bf16.mxu0 0
  %4426 = vmatpush2.bf16.msra.mxu0 0
  %4427 = vmatprep.subr.bf16.mxu0 0
  %4428 = vmatpush2.bf16.msra.mxu0 0
  %4429 = vmatprep.subr.bf16.mxu0 0
  %4430 = vmatpush2.bf16.msra.mxu0 0
  %4431 = vmatprep.subr.bf16.mxu0 0
  %4432 = vmatpush2.bf16.msra.mxu0 0
  %4433 = vmatprep.subr.bf16.mxu0 0
  %4434 = vmatpush2.bf16.msra.mxu0 0
  %4435 = vmatprep.subr.bf16.mxu0 0
  %4436 = vmatpush2.bf16.msra.mxu0 0
  %4437 = vmatprep.subr.bf16.mxu0 0
  %4438 = vmatpush2.bf16.msra.mxu0 0
  %4439 = vmatprep.mubr.bf16.mxu0 0
  %4440 = vmatmul.mubr.bf16.gmra.mxu0 %v4405
  %v4441 = vpop.f32.mrf.mxu0
  %v4442 = vadd.f32 %v4327, %v4441
  %v4443 = vpop.f32.mrf.mxu0
  %v4444 = vpop.f32.mrf.mxu0
  %v4445 = vpop.f32.mrf.mxu0
  %4446 = vdwg.mxu0
  %v4447 = vmax.f32 %v4442, 0.0
  %v4448 = vadd.f32 %v4397, %v4447
  %v4449 = vsel %vm96, %v3879, %v3851
  %v4450 = vpack.c.bf16 %v4449, %v4449
  %v4452 = vsel %vm100, %v4450, 0
  %4454 = vmatprep.subr.bf16.mxu0 0
  %4455 = vmatpush1.bf16.msra.mxu0 0
  %4456 = vmatprep.subr.bf16.mxu0 0
  %4457 = vmatpush1.bf16.msra.mxu0 0
  %4458 = vmatprep.subr.bf16.mxu0 0
  %4459 = vmatpush1.bf16.msra.mxu0 0
  %4460 = vmatprep.subr.bf16.mxu0 0
  %4461 = vmatpush1.bf16.msra.mxu0 0
  %4462 = vmatprep.subr.bf16.mxu0 0
  %4463 = vmatpush1.bf16.msra.mxu0 %v4348
  %4464 = vmatprep.subr.bf16.mxu0 0
  %4465 = vmatpush1.bf16.msra.mxu0 %v4347
  %4466 = vmatprep.subr.bf16.mxu0 0
  %4467 = vmatpush1.bf16.msra.mxu0 %v4346
  %4468 = vmatprep.subr.bf16.mxu0 0
  %4469 = vmatpush1.bf16.msra.mxu0 %v4345
  %4470 = vmatprep.subr.bf16.mxu0 0
  %4471 = vmatpush2.bf16.msra.mxu0 0
  %4472 = vmatprep.subr.bf16.mxu0 0
  %4473 = vmatpush2.bf16.msra.mxu0 0
  %4474 = vmatprep.subr.bf16.mxu0 0
  %4475 = vmatpush2.bf16.msra.mxu0 0
  %4476 = vmatprep.subr.bf16.mxu0 0
  %4477 = vmatpush2.bf16.msra.mxu0 0
  %4478 = vmatprep.subr.bf16.mxu0 0
  %4479 = vmatpush2.bf16.msra.mxu0 0
  %4480 = vmatprep.subr.bf16.mxu0 0
  %4481 = vmatpush2.bf16.msra.mxu0 0
  %4482 = vmatprep.subr.bf16.mxu0 0
  %4483 = vmatpush2.bf16.msra.mxu0 0
  %4484 = vmatprep.subr.bf16.mxu0 0
  %4485 = vmatpush2.bf16.msra.mxu0 0
  %4486 = vmatprep.mubr.bf16.mxu0 0
  %4487 = vmatmul.mubr.bf16.gmra.mxu0 %v4452
  %v4488 = vpop.f32.mrf.mxu0
  %v4489 = vadd.f32 %v4327, %v4488
  %v4490 = vpop.f32.mrf.mxu0
  %v4491 = vpop.f32.mrf.mxu0
  %v4492 = vpop.f32.mrf.mxu0
  %4493 = vdwg.mxu0
  %v4494 = vmax.f32 %v4489, 0.0
  %v4495 = vadd.f32 %v4448, %v4494
  %v4496 = vsel %vm96, %v3897, %v3869
  %v4497 = vpack.c.bf16 %v4496, %v4496
  %v4499 = vsel %vm100, %v4497, 0
  %4501 = vmatprep.subr.bf16.mxu0 0
  %4502 = vmatpush1.bf16.msra.mxu0 0
  %4503 = vmatprep.subr.bf16.mxu0 0
  %4504 = vmatpush1.bf16.msra.mxu0 0
  %4505 = vmatprep.subr.bf16.mxu0 0
  %4506 = vmatpush1.bf16.msra.mxu0 0
  %4507 = vmatprep.subr.bf16.mxu0 0
  %4508 = vmatpush1.bf16.msra.mxu0 0
  %4509 = vmatprep.subr.bf16.mxu0 0
  %4510 = vmatpush1.bf16.msra.mxu0 %v4348
  %4511 = vmatprep.subr.bf16.mxu0 0
  %4512 = vmatpush1.bf16.msra.mxu0 %v4347
  %4513 = vmatprep.subr.bf16.mxu0 0
  %4514 = vmatpush1.bf16.msra.mxu0 %v4346
  %4515 = vmatprep.subr.bf16.mxu0 0
  %4516 = vmatpush1.bf16.msra.mxu0 %v4345
  %4517 = vmatprep.subr.bf16.mxu0 0
  %4518 = vmatpush2.bf16.msra.mxu0 0
  %4519 = vmatprep.subr.bf16.mxu0 0
  %4520 = vmatpush2.bf16.msra.mxu0 0
  %4521 = vmatprep.subr.bf16.mxu0 0
  %4522 = vmatpush2.bf16.msra.mxu0 0
  %4523 = vmatprep.subr.bf16.mxu0 0
  %4524 = vmatpush2.bf16.msra.mxu0 0
  %4525 = vmatprep.subr.bf16.mxu0 0
  %4526 = vmatpush2.bf16.msra.mxu0 0
  %4527 = vmatprep.subr.bf16.mxu0 0
  %4528 = vmatpush2.bf16.msra.mxu0 0
  %4529 = vmatprep.subr.bf16.mxu0 0
  %4530 = vmatpush2.bf16.msra.mxu0 0
  %4531 = vmatprep.subr.bf16.mxu0 0
  %4532 = vmatpush2.bf16.msra.mxu0 0
  %4533 = vmatprep.mubr.bf16.mxu0 0
  %4534 = vmatmul.mubr.bf16.gmra.mxu0 %v4499
  %v4535 = vpop.f32.mrf.mxu0
  %v4536 = vadd.f32 %v4327, %v4535
  %v4537 = vpop.f32.mrf.mxu0
  %v4538 = vpop.f32.mrf.mxu0
  %v4539 = vpop.f32.mrf.mxu0
  %4540 = vdwg.mxu0
  %v4541 = vmax.f32 %v4536, 0.0
  %v4542 = vadd.f32 %v4495, %v4541
  %v4543 = vsel %vm96, %v3915, %v3887
  %v4544 = vpack.c.bf16 %v4543, %v4543
  %v4546 = vsel %vm100, %v4544, 0
  %4548 = vmatprep.subr.bf16.mxu0 0
  %4549 = vmatpush1.bf16.msra.mxu0 0
  %4550 = vmatprep.subr.bf16.mxu0 0
  %4551 = vmatpush1.bf16.msra.mxu0 0
  %4552 = vmatprep.subr.bf16.mxu0 0
  %4553 = vmatpush1.bf16.msra.mxu0 0
  %4554 = vmatprep.subr.bf16.mxu0 0
  %4555 = vmatpush1.bf16.msra.mxu0 0
  %4556 = vmatprep.subr.bf16.mxu0 0
  %4557 = vmatpush1.bf16.msra.mxu0 %v4348
  %4558 = vmatprep.subr.bf16.mxu0 0
  %4559 = vmatpush1.bf16.msra.mxu0 %v4347
  %4560 = vmatprep.subr.bf16.mxu0 0
  %4561 = vmatpush1.bf16.msra.mxu0 %v4346
  %4562 = vmatprep.subr.bf16.mxu0 0
  %4563 = vmatpush1.bf16.msra.mxu0 %v4345
  %4564 = vmatprep.subr.bf16.mxu0 0
  %4565 = vmatpush2.bf16.msra.mxu0 0
  %4566 = vmatprep.subr.bf16.mxu0 0
  %4567 = vmatpush2.bf16.msra.mxu0 0
  %4568 = vmatprep.subr.bf16.mxu0 0
  %4569 = vmatpush2.bf16.msra.mxu0 0
  %4570 = vmatprep.subr.bf16.mxu0 0
  %4571 = vmatpush2.bf16.msra.mxu0 0
  %4572 = vmatprep.subr.bf16.mxu0 0
  %4573 = vmatpush2.bf16.msra.mxu0 0
  %4574 = vmatprep.subr.bf16.mxu0 0
  %4575 = vmatpush2.bf16.msra.mxu0 0
  %4576 = vmatprep.subr.bf16.mxu0 0
  %4577 = vmatpush2.bf16.msra.mxu0 0
  %4578 = vmatprep.subr.bf16.mxu0 0
  %4579 = vmatpush2.bf16.msra.mxu0 0
  %4580 = vmatprep.mubr.bf16.mxu0 0
  %4581 = vmatmul.mubr.bf16.gmra.mxu0 %v4546
  %v4582 = vpop.f32.mrf.mxu0
  %v4583 = vadd.f32 %v4327, %v4582
  %v4584 = vpop.f32.mrf.mxu0
  %v4585 = vpop.f32.mrf.mxu0
  %v4586 = vpop.f32.mrf.mxu0
  %4587 = vdwg.mxu0
  %v4588 = vmax.f32 %v4583, 0.0
  %v4589 = vadd.f32 %v4542, %v4588
  %v4590 = vsel %vm96, %v3933, %v3905
  %v4591 = vpack.c.bf16 %v4590, %v4590
  %v4593 = vsel %vm100, %v4591, 0
  %4595 = vmatprep.subr.bf16.mxu0 0
  %4596 = vmatpush1.bf16.msra.mxu0 0
  %4597 = vmatprep.subr.bf16.mxu0 0
  %4598 = vmatpush1.bf16.msra.mxu0 0
  %4599 = vmatprep.subr.bf16.mxu0 0
  %4600 = vmatpush1.bf16.msra.mxu0 0
  %4601 = vmatprep.subr.bf16.mxu0 0
  %4602 = vmatpush1.bf16.msra.mxu0 0
  %4603 = vmatprep.subr.bf16.mxu0 0
  %4604 = vmatpush1.bf16.msra.mxu0 %v4348
  %4605 = vmatprep.subr.bf16.mxu0 0
  %4606 = vmatpush1.bf16.msra.mxu0 %v4347
  %4607 = vmatprep.subr.bf16.mxu0 0
  %4608 = vmatpush1.bf16.msra.mxu0 %v4346
  %4609 = vmatprep.subr.bf16.mxu0 0
  %4610 = vmatpush1.bf16.msra.mxu0 %v4345
  %4611 = vmatprep.subr.bf16.mxu0 0
  %4612 = vmatpush2.bf16.msra.mxu0 0
  %4613 = vmatprep.subr.bf16.mxu0 0
  %4614 = vmatpush2.bf16.msra.mxu0 0
  %4615 = vmatprep.subr.bf16.mxu0 0
  %4616 = vmatpush2.bf16.msra.mxu0 0
  %4617 = vmatprep.subr.bf16.mxu0 0
  %4618 = vmatpush2.bf16.msra.mxu0 0
  %4619 = vmatprep.subr.bf16.mxu0 0
  %4620 = vmatpush2.bf16.msra.mxu0 0
  %4621 = vmatprep.subr.bf16.mxu0 0
  %4622 = vmatpush2.bf16.msra.mxu0 0
  %4623 = vmatprep.subr.bf16.mxu0 0
  %4624 = vmatpush2.bf16.msra.mxu0 0
  %4625 = vmatprep.subr.bf16.mxu0 0
  %4626 = vmatpush2.bf16.msra.mxu0 0
  %4627 = vmatprep.mubr.bf16.mxu0 0
  %4628 = vmatmul.mubr.bf16.gmra.mxu0 %v4593
  %v4629 = vpop.f32.mrf.mxu0
  %v4630 = vadd.f32 %v4327, %v4629
  %v4631 = vpop.f32.mrf.mxu0
  %v4632 = vpop.f32.mrf.mxu0
  %v4633 = vpop.f32.mrf.mxu0
  %4634 = vdwg.mxu0
  %v4635 = vmax.f32 %v4630, 0.0
  %v4636 = vadd.f32 %v4589, %v4635
  %4638 = vrot.lane.b32.xlu0 %v1790, 96
  %v4639 = vpop.permute.xlu0 %4638
  %v4641 = vsel %vm96, %v4639, %v3923
  %v4642 = vpack.c.bf16 %v4641, %v4641
  %v4644 = vsel %vm100, %v4642, 0
  %4646 = vmatprep.subr.bf16.mxu0 0
  %4647 = vmatpush1.bf16.msra.mxu0 0
  %4648 = vmatprep.subr.bf16.mxu0 0
  %4649 = vmatpush1.bf16.msra.mxu0 0
  %4650 = vmatprep.subr.bf16.mxu0 0
  %4651 = vmatpush1.bf16.msra.mxu0 0
  %4652 = vmatprep.subr.bf16.mxu0 0
  %4653 = vmatpush1.bf16.msra.mxu0 0
  %4654 = vmatprep.subr.bf16.mxu0 0
  %4655 = vmatpush1.bf16.msra.mxu0 %v4348
  %4656 = vmatprep.subr.bf16.mxu0 0
  %4657 = vmatpush1.bf16.msra.mxu0 %v4347
  %4658 = vmatprep.subr.bf16.mxu0 0
  %4659 = vmatpush1.bf16.msra.mxu0 %v4346
  %4660 = vmatprep.subr.bf16.mxu0 0
  %4661 = vmatpush1.bf16.msra.mxu0 %v4345
  %4662 = vmatprep.subr.bf16.mxu0 0
  %4663 = vmatpush2.bf16.msra.mxu0 0
  %4664 = vmatprep.subr.bf16.mxu0 0
  %4665 = vmatpush2.bf16.msra.mxu0 0
  %4666 = vmatprep.subr.bf16.mxu0 0
  %4667 = vmatpush2.bf16.msra.mxu0 0
  %4668 = vmatprep.subr.bf16.mxu0 0
  %4669 = vmatpush2.bf16.msra.mxu0 0
  %4670 = vmatprep.subr.bf16.mxu0 0
  %4671 = vmatpush2.bf16.msra.mxu0 0
  %4672 = vmatprep.subr.bf16.mxu0 0
  %4673 = vmatpush2.bf16.msra.mxu0 0
  %4674 = vmatprep.subr.bf16.mxu0 0
  %4675 = vmatpush2.bf16.msra.mxu0 0
  %4676 = vmatprep.subr.bf16.mxu0 0
  %4677 = vmatpush2.bf16.msra.mxu0 0
  %4678 = vmatprep.mubr.bf16.mxu0 0
  %4679 = vmatmul.mubr.bf16.gmra.mxu0 %v4644
  %v4680 = vpop.f32.mrf.mxu0
  %v4681 = vadd.f32 %v4327, %v4680
  %v4682 = vpop.f32.mrf.mxu0
  %v4683 = vpop.f32.mrf.mxu0
  %v4684 = vpop.f32.mrf.mxu0
  %4685 = vdwg.mxu0
  %v4686 = vmax.f32 %v4681, 0.0
  %v4687 = vadd.f32 %v4636, %v4686
  %4689 = vrot.lane.b32.xlu0 %v1991, 96
  %v4690 = vpop.permute.xlu0 %4689
  %v4692 = vsel %vm96, %v4690, %v3941
  %v4693 = vpack.c.bf16 %v4692, %v4692
  %v4695 = vsel %vm100, %v4693, 0
  %4697 = vmatprep.subr.bf16.mxu0 0
  %4698 = vmatpush1.bf16.msra.mxu0 0
  %4699 = vmatprep.subr.bf16.mxu0 0
  %4700 = vmatpush1.bf16.msra.mxu0 0
  %4701 = vmatprep.subr.bf16.mxu0 0
  %4702 = vmatpush1.bf16.msra.mxu0 0
  %4703 = vmatprep.subr.bf16.mxu0 0
  %4704 = vmatpush1.bf16.msra.mxu0 0
  %4705 = vmatprep.subr.bf16.mxu0 0
  %4706 = vmatpush1.bf16.msra.mxu0 %v4348
  %4707 = vmatprep.subr.bf16.mxu0 0
  %4708 = vmatpush1.bf16.msra.mxu0 %v4347
  %4709 = vmatprep.subr.bf16.mxu0 0
  %4710 = vmatpush1.bf16.msra.mxu0 %v4346
  %4711 = vmatprep.subr.bf16.mxu0 0
  %4712 = vmatpush1.bf16.msra.mxu0 %v4345
  %4713 = vmatprep.subr.bf16.mxu0 0
  %4714 = vmatpush2.bf16.msra.mxu0 0
  %4715 = vmatprep.subr.bf16.mxu0 0
  %4716 = vmatpush2.bf16.msra.mxu0 0
  %4717 = vmatprep.subr.bf16.mxu0 0
  %4718 = vmatpush2.bf16.msra.mxu0 0
  %4719 = vmatprep.subr.bf16.mxu0 0
  %4720 = vmatpush2.bf16.msra.mxu0 0
  %4721 = vmatprep.subr.bf16.mxu0 0
  %4722 = vmatpush2.bf16.msra.mxu0 0
  %4723 = vmatprep.subr.bf16.mxu0 0
  %4724 = vmatpush2.bf16.msra.mxu0 0
  %4725 = vmatprep.subr.bf16.mxu0 0
  %4726 = vmatpush2.bf16.msra.mxu0 0
  %4727 = vmatprep.subr.bf16.mxu0 0
  %4728 = vmatpush2.bf16.msra.mxu0 0
  %4729 = vmatprep.mubr.bf16.mxu0 0
  %4730 = vmatmul.mubr.bf16.gmra.mxu0 %v4695
  %v4731 = vpop.f32.mrf.mxu0
  %v4732 = vadd.f32 %v4327, %v4731
  %v4733 = vpop.f32.mrf.mxu0
  %v4734 = vpop.f32.mrf.mxu0
  %v4735 = vpop.f32.mrf.mxu0
  %4736 = vdwg.mxu0
  %v4737 = vmax.f32 %v4732, 0.0
  %v4738 = vadd.f32 %v4687, %v4737
  %4740 = vrot.lane.b32.xlu0 %v2321, 96
  %v4741 = vpop.permute.xlu0 %4740
  %4744 = vrot.lane.b32.xlu0 %v3839, 32
  %v4745 = vpop.permute.xlu0 %4744
  %v4747 = vsel %vm96, %v4741, %v4745
  %v4748 = vadd.f32 %v4747, 0.0
  %4750 = vrot.lane.b32.xlu0 %v2486, 96
  %v4751 = vpop.permute.xlu0 %4750
  %4754 = vrot.lane.b32.xlu0 %v3674, 32
  %v4755 = vpop.permute.xlu0 %4754
  %v4757 = vsel %vm96, %v4751, %v4755
  %v4758 = vadd.f32 %v4748, %v4757
  %4760 = vrot.lane.b32.xlu0 %v2651, 96
  %v4761 = vpop.permute.xlu0 %4760
  %4764 = vrot.lane.b32.xlu0 %v3509, 32
  %v4765 = vpop.permute.xlu0 %4764
  %v4767 = vsel %vm96, %v4761, %v4765
  %v4768 = vadd.f32 %v4758, %v4767
  %4770 = vrot.lane.b32.xlu0 %v2816, 96
  %v4771 = vpop.permute.xlu0 %4770
  %4774 = vrot.lane.b32.xlu0 %v3344, 32
  %v4775 = vpop.permute.xlu0 %4774
  %v4777 = vsel %vm96, %v4771, %v4775
  %v4778 = vadd.f32 %v4768, %v4777
  %4780 = vrot.lane.b32.xlu0 %v2981, 96
  %v4781 = vpop.permute.xlu0 %4780
  %4784 = vrot.lane.b32.xlu0 %v3179, 32
  %v4785 = vpop.permute.xlu0 %4784
  %v4787 = vsel %vm96, %v4781, %v4785
  %v4788 = vadd.f32 %v4778, %v4787
  %4790 = vrot.lane.b32.xlu0 %v3146, 96
  %v4791 = vpop.permute.xlu0 %4790
  %4794 = vrot.lane.b32.xlu0 %v3014, 32
  %v4795 = vpop.permute.xlu0 %4794
  %v4797 = vsel %vm96, %v4791, %v4795
  %v4798 = vadd.f32 %v4788, %v4797
  %4800 = vrot.lane.b32.xlu0 %v3311, 96
  %v4801 = vpop.permute.xlu0 %4800
  %4804 = vrot.lane.b32.xlu0 %v2849, 32
  %v4805 = vpop.permute.xlu0 %4804
  %v4807 = vsel %vm96, %v4801, %v4805
  %v4808 = vadd.f32 %v4798, %v4807
  %4810 = vrot.lane.b32.xlu0 %v3476, 96
  %v4811 = vpop.permute.xlu0 %4810
  %4814 = vrot.lane.b32.xlu0 %v2684, 32
  %v4815 = vpop.permute.xlu0 %4814
  %v4817 = vsel %vm96, %v4811, %v4815
  %v4818 = vadd.f32 %v4808, %v4817
  %4820 = vrot.lane.b32.xlu0 %v3641, 96
  %v4821 = vpop.permute.xlu0 %4820
  %4824 = vrot.lane.b32.xlu0 %v2519, 32
  %v4825 = vpop.permute.xlu0 %4824
  %v4827 = vsel %vm96, %v4821, %v4825
  %v4828 = vadd.f32 %v4818, %v4827
  %4830 = vrot.lane.b32.xlu0 %v3806, 96
  %v4831 = vpop.permute.xlu0 %4830
  %4834 = vrot.lane.b32.xlu0 %v2354, 32
  %v4835 = vpop.permute.xlu0 %4834
  %v4837 = vsel %vm96, %v4831, %v4835
  %v4838 = vadd.f32 %v4828, %v4837
  %v4839 = vmul.f32 %v4838, 0.1
  %v4840 = vpack.c.bf16 %v4839, %v4839
  %v4841 = vld [vmem:[%s22] sm:$0xf]
  %v4842 = vld [vmem:[%s22 + $0x4] sm:$0xf]
  %v4843 = vld [vmem:[%s22 + $0x8] sm:$0xf]
  %v4844 = vld [vmem:[%s22 + $0xc] sm:$0xf]
  %v4845 = vld [vmem:[%s22 + $0x10] sm:$0xf]
  %v4846 = vld [vmem:[%s22 + $0x14] sm:$0xf]
  %v4847 = vld [vmem:[%s22 + $0x18] sm:$0xf]
  %v4848 = vld [vmem:[%s22 + $0x1c] sm:$0xf]
  %v4849 = vld [vmem:[%s23] sm:$0x1]
  %v4851 = vlaneseq
  %v4852 = vshrl.u32 %v4851, 7
  %v4853 = vsub.s32 0, %v4852
  %v4854 = vrot.slane %v4849, %v4853
  %v4864 = vunpack.c.l.b16 %v4841
  %v4865 = vunpack.c.l.b16 %v4842
  %v4866 = vunpack.c.l.b16 %v4843
  %v4867 = vunpack.c.l.b16 %v4844
  %v4868 = vunpack.c.l.b16 %v4845
  %v4869 = vunpack.c.l.b16 %v4846
  %v4870 = vunpack.c.l.b16 %v4847
  %v4871 = vunpack.c.l.b16 %v4848
  %v4872 = vpack.c.b16 %v4865, %v4864
  %v4873 = vpack.c.b16 %v4867, %v4866
  %v4874 = vpack.c.b16 %v4869, %v4868
  %v4875 = vpack.c.b16 %v4871, %v4870
  %v4881 = vsel %vm100, %v4840, 0
  %4883 = vmatprep.subr.bf16.mxu0 0
  %4884 = vmatpush1.bf16.msra.mxu0 0
  %4885 = vmatprep.subr.bf16.mxu0 0
  %4886 = vmatpush1.bf16.msra.mxu0 0
  %4887 = vmatprep.subr.bf16.mxu0 0
  %4888 = vmatpush1.bf16.msra.mxu0 0
  %4889 = vmatprep.subr.bf16.mxu0 0
  %4890 = vmatpush1.bf16.msra.mxu0 0
  %4891 = vmatprep.subr.bf16.mxu0 0
  %4892 = vmatpush1.bf16.msra.mxu0 %v4875
  %4893 = vmatprep.subr.bf16.mxu0 0
  %4894 = vmatpush1.bf16.msra.mxu0 %v4874
  %4895 = vmatprep.subr.bf16.mxu0 0
  %4896 = vmatpush1.bf16.msra.mxu0 %v4873
  %4897 = vmatprep.subr.bf16.mxu0 0
  %4898 = vmatpush1.bf16.msra.mxu0 %v4872
  %4899 = vmatprep.subr.bf16.mxu0 0
  %4900 = vmatpush2.bf16.msra.mxu0 0
  %4901 = vmatprep.subr.bf16.mxu0 0
  %4902 = vmatpush2.bf16.msra.mxu0 0
  %4903 = vmatprep.subr.bf16.mxu0 0
  %4904 = vmatpush2.bf16.msra.mxu0 0
  %4905 = vmatprep.subr.bf16.mxu0 0
  %4906 = vmatpush2.bf16.msra.mxu0 0
  %4907 = vmatprep.subr.bf16.mxu0 0
  %4908 = vmatpush2.bf16.msra.mxu0 0
  %4909 = vmatprep.subr.bf16.mxu0 0
  %4910 = vmatpush2.bf16.msra.mxu0 0
  %4911 = vmatprep.subr.bf16.mxu0 0
  %4912 = vmatpush2.bf16.msra.mxu0 0
  %4913 = vmatprep.subr.bf16.mxu0 0
  %4914 = vmatpush2.bf16.msra.mxu0 0
  %4915 = vmatprep.mubr.bf16.mxu0 0
  %4916 = vmatmul.mubr.bf16.gmra.mxu0 %v4881
  %v4917 = vpop.f32.mrf.mxu0
  %v4918 = vadd.f32 %v4854, %v4917
  %v4919 = vpop.f32.mrf.mxu0
  %v4920 = vpop.f32.mrf.mxu0
  %v4921 = vpop.f32.mrf.mxu0
  %4922 = vdwg.mxu0
  %v4923 = vld [vmem:[%s5] sm:$0xff]
  %v4924 = vld [vmem:[%s5 + $0x8] sm:$0xf]
  %v4927 = vcombine.high %v4923, %v4923
  %v4929 = vunpack.c.l.s4 1983009808
  %v4930 = vunpack.c.0.s8 %v4929
  %v4931 = vlaneseq
  %v4932 = vshrl.u32 %v4931, 7
  %v4933 = vsub.s32 %v4930, %v4932
  %v4934 = vrot.slane %v4923, %v4933
  %v4936 = vunpack.c.l.s4 1983009808
  %v4937 = vunpack.c.0.s8 %v4936
  %v4938 = vlaneseq
  %v4939 = vshrl.u32 %v4938, 7
  %v4940 = vsub.s32 %v4937, %v4939
  %v4941 = vrot.slane %v4927, %v4940
  %v4942 = vcombine.high %v4934, %v4934
  %v4943 = vcombine.high %v4941, %v4941
  %v4945 = vunpack.c.l.s4 1983009808
  %v4946 = vunpack.c.0.s8 %v4945
  %v4947 = vlaneseq
  %v4948 = vshrl.u32 %v4947, 7
  %v4949 = vsub.s32 %v4946, %v4948
  %v4950 = vrot.slane %v4924, %v4949
  %v4951 = vcombine.high %v4950, %v4950
  %v4958 = vpack.c.bf16 %v4934, %v4934
  %v4959 = vpack.c.bf16 %v4942, %v4942
  %v4960 = vpack.c.bf16 %v4941, %v4941
  %v4961 = vpack.c.bf16 %v4943, %v4943
  %v4962 = vpack.c.bf16 %v4950, %v4950
  %v4963 = vpack.c.bf16 %v4951, %v4951
  %v4964 = vld [vmem:[%s16] sm:$0xf]
  %v4965 = vld [vmem:[%s16 + $0x4] sm:$0xf]
  %v4966 = vld [vmem:[%s16 + $0x8] sm:$0xf]
  %v4967 = vld [vmem:[%s16 + $0xc] sm:$0xf]
  %v4968 = vld [vmem:[%s16 + $0x10] sm:$0xf]
  %v4969 = vld [vmem:[%s16 + $0x14] sm:$0xf]
  %v4970 = vld [vmem:[%s16 + $0x18] sm:$0xf]
  %v4971 = vld [vmem:[%s16 + $0x1c] sm:$0xf]
  %v4972 = vld [vmem:[%s16 + $0x20] sm:$0xf]
  %v4973 = vld [vmem:[%s16 + $0x24] sm:$0xf]
  %v4974 = vld [vmem:[%s16 + $0x28] sm:$0xf]
  %v4975 = vld [vmem:[%s16 + $0x2c] sm:$0xf]
  %v4976 = vld [vmem:[%s16 + $0x30] sm:$0xf]
  %v4977 = vld [vmem:[%s16 + $0x34] sm:$0xf]
  %v4978 = vld [vmem:[%s16 + $0x38] sm:$0xf]
  %v4979 = vld [vmem:[%s16 + $0x3c] sm:$0xf]
  %v4980 = vld [vmem:[%s16 + $0x40] sm:$0xf]
  %v4981 = vld [vmem:[%s16 + $0x44] sm:$0xf]
  %v4982 = vld [vmem:[%s16 + $0x48] sm:$0xf]
  %v4983 = vld [vmem:[%s16 + $0x4c] sm:$0xf]
  %v4984 = vld [vmem:[%s16 + $0x50] sm:$0xf]
  %v4985 = vld [vmem:[%s16 + $0x54] sm:$0xf]
  %v4986 = vld [vmem:[%s16 + $0x58] sm:$0xf]
  %v4987 = vld [vmem:[%s16 + $0x5c] sm:$0xf]
  %v4988 = vld [vmem:[%s16 + $0x60] sm:$0xf]
  %v4989 = vld [vmem:[%s16 + $0x64] sm:$0xf]
  %v4990 = vld [vmem:[%s16 + $0x68] sm:$0xf]
  %v4991 = vld [vmem:[%s16 + $0x6c] sm:$0xf]
  %v4992 = vld [vmem:[%s16 + $0x70] sm:$0xf]
  %v4993 = vld [vmem:[%s16 + $0x74] sm:$0xf]
  %v4994 = vld [vmem:[%s16 + $0x78] sm:$0xf]
  %v4995 = vld [vmem:[%s16 + $0x7c] sm:$0xf]
  %v4996 = vld [vmem:[%s16 + $0x80] sm:$0xf]
  %v4997 = vld [vmem:[%s16 + $0x84] sm:$0xf]
  %v4998 = vld [vmem:[%s16 + $0x88] sm:$0xf]
  %v4999 = vld [vmem:[%s16 + $0x8c] sm:$0xf]
  %v5000 = vld [vmem:[%s16 + $0x90] sm:$0xf]
  %v5001 = vld [vmem:[%s16 + $0x94] sm:$0xf]
  %v5002 = vld [vmem:[%s16 + $0x98] sm:$0xf]
  %v5003 = vld [vmem:[%s16 + $0x9c] sm:$0xf]
  %v5004 = vld [vmem:[%s16 + $0xa0] sm:$0xf]
  %v5005 = vld [vmem:[%s16 + $0xa4] sm:$0xf]
  %v5006 = vld [vmem:[%s16 + $0xa8] sm:$0xf]
  %v5007 = vld [vmem:[%s16 + $0xac] sm:$0xf]
  %v5008 = vld [vmem:[%s16 + $0xb0] sm:$0xf]
  %v5009 = vld [vmem:[%s16 + $0xb4] sm:$0xf]
  %v5010 = vld [vmem:[%s16 + $0xb8] sm:$0xf]
  %v5011 = vld [vmem:[%s16 + $0xbc] sm:$0xf]
  %v5012 = vld [vmem:[%s16 + $0xc0] sm:$0xf]
  %v5013 = vld [vmem:[%s16 + $0xc4] sm:$0xf]
  %v5014 = vld [vmem:[%s16 + $0xc8] sm:$0xf]
  %v5015 = vld [vmem:[%s16 + $0xcc] sm:$0xf]
  %v5016 = vld [vmem:[%s16 + $0xd0] sm:$0xf]
  %v5017 = vld [vmem:[%s16 + $0xd4] sm:$0xf]
  %v5018 = vld [vmem:[%s16 + $0xd8] sm:$0xf]
  %v5019 = vld [vmem:[%s16 + $0xdc] sm:$0xf]
  %v5020 = vld [vmem:[%s16 + $0xe0] sm:$0xf]
  %v5021 = vld [vmem:[%s16 + $0xe4] sm:$0xf]
  %v5022 = vld [vmem:[%s16 + $0xe8] sm:$0xf]
  %v5023 = vld [vmem:[%s16 + $0xec] sm:$0xf]
  %v5024 = vld [vmem:[%s16 + $0xf0] sm:$0xf]
  %v5025 = vld [vmem:[%s16 + $0xf4] sm:$0xf]
  %v5026 = vld [vmem:[%s16 + $0xf8] sm:$0xf]
  %v5027 = vld [vmem:[%s16 + $0xfc] sm:$0xf]
  %v5028 = vld [vmem:[%s16 + $0x100] sm:$0xf]
  %v5029 = vld [vmem:[%s16 + $0x104] sm:$0xf]
  %v5030 = vld [vmem:[%s16 + $0x108] sm:$0xf]
  %v5031 = vld [vmem:[%s16 + $0x10c] sm:$0xf]
  %v5032 = vld [vmem:[%s16 + $0x110] sm:$0xf]
  %v5033 = vld [vmem:[%s16 + $0x114] sm:$0xf]
  %v5034 = vld [vmem:[%s16 + $0x118] sm:$0xf]
  %v5035 = vld [vmem:[%s16 + $0x11c] sm:$0xf]
  %v5036 = vld [vmem:[%s16 + $0x120] sm:$0xf]
  %v5037 = vld [vmem:[%s16 + $0x124] sm:$0xf]
  %v5038 = vld [vmem:[%s16 + $0x128] sm:$0xf]
  %v5039 = vld [vmem:[%s16 + $0x12c] sm:$0xf]
  %v5040 = vld [vmem:[%s16 + $0x130] sm:$0xf]
  %v5041 = vld [vmem:[%s16 + $0x134] sm:$0xf]
  %v5042 = vld [vmem:[%s16 + $0x138] sm:$0xf]
  %v5043 = vld [vmem:[%s16 + $0x13c] sm:$0xf]
  %v5044 = vld [vmem:[%s16 + $0x140] sm:$0xf]
  %v5045 = vld [vmem:[%s16 + $0x144] sm:$0xf]
  %v5046 = vld [vmem:[%s16 + $0x148] sm:$0xf]
  %v5047 = vld [vmem:[%s16 + $0x14c] sm:$0xf]
  %v5048 = vld [vmem:[%s16 + $0x150] sm:$0xf]
  %v5049 = vld [vmem:[%s16 + $0x154] sm:$0xf]
  %v5050 = vld [vmem:[%s16 + $0x158] sm:$0xf]
  %v5051 = vld [vmem:[%s16 + $0x15c] sm:$0xf]
  %v5052 = vld [vmem:[%s16 + $0x160] sm:$0xf]
  %v5053 = vld [vmem:[%s16 + $0x164] sm:$0xf]
  %v5054 = vld [vmem:[%s16 + $0x168] sm:$0xf]
  %v5055 = vld [vmem:[%s16 + $0x16c] sm:$0xf]
  %v5056 = vld [vmem:[%s16 + $0x170] sm:$0xf]
  %v5057 = vld [vmem:[%s16 + $0x174] sm:$0xf]
  %v5058 = vld [vmem:[%s16 + $0x178] sm:$0xf]
  %v5059 = vld [vmem:[%s16 + $0x17c] sm:$0xf]
  %v5060 = vld [vmem:[%s17] sm:$0x1]
  %v5062 = vlaneseq
  %v5063 = vshrl.u32 %v5062, 7
  %v5064 = vsub.s32 0, %v5063
  %v5065 = vrot.slane %v5060, %v5064
  %v5163 = vunpack.c.l.b16 %v4964
  %v5164 = vunpack.c.l.b16 %v4965
  %v5165 = vunpack.c.l.b16 %v4966
  %v5166 = vunpack.c.l.b16 %v4967
  %v5167 = vunpack.c.l.b16 %v4968
  %v5168 = vunpack.c.l.b16 %v4969
  %v5169 = vunpack.c.l.b16 %v4970
  %v5170 = vunpack.c.l.b16 %v4971
  %v5171 = vunpack.c.l.b16 %v4972
  %v5172 = vunpack.c.l.b16 %v4973
  %v5173 = vunpack.c.l.b16 %v4974
  %v5174 = vunpack.c.l.b16 %v4975
  %v5175 = vunpack.c.l.b16 %v4976
  %v5176 = vunpack.c.l.b16 %v4977
  %v5177 = vunpack.c.l.b16 %v4978
  %v5178 = vunpack.c.l.b16 %v4979
  %v5179 = vunpack.c.l.b16 %v4980
  %v5180 = vunpack.c.l.b16 %v4981
  %v5181 = vunpack.c.l.b16 %v4982
  %v5182 = vunpack.c.l.b16 %v4983
  %v5183 = vunpack.c.l.b16 %v4984
  %v5184 = vunpack.c.l.b16 %v4985
  %v5185 = vunpack.c.l.b16 %v4986
  %v5186 = vunpack.c.l.b16 %v4987
  %v5187 = vunpack.c.l.b16 %v4988
  %v5188 = vunpack.c.l.b16 %v4989
  %v5189 = vunpack.c.l.b16 %v4990
  %v5190 = vunpack.c.l.b16 %v4991
  %v5191 = vunpack.c.l.b16 %v4992
  %v5192 = vunpack.c.l.b16 %v4993
  %v5193 = vunpack.c.l.b16 %v4994
  %v5194 = vunpack.c.l.b16 %v4995
  %v5195 = vunpack.c.l.b16 %v4996
  %v5196 = vunpack.c.l.b16 %v4997
  %v5197 = vunpack.c.l.b16 %v4998
  %v5198 = vunpack.c.l.b16 %v4999
  %v5199 = vunpack.c.l.b16 %v5000
  %v5200 = vunpack.c.l.b16 %v5001
  %v5201 = vunpack.c.l.b16 %v5002
  %v5202 = vunpack.c.l.b16 %v5003
  %v5203 = vunpack.c.l.b16 %v5004
  %v5204 = vunpack.c.l.b16 %v5005
  %v5205 = vunpack.c.l.b16 %v5006
  %v5206 = vunpack.c.l.b16 %v5007
  %v5207 = vunpack.c.l.b16 %v5008
  %v5208 = vunpack.c.l.b16 %v5009
  %v5209 = vunpack.c.l.b16 %v5010
  %v5210 = vunpack.c.l.b16 %v5011
  %v5211 = vunpack.c.l.b16 %v5012
  %v5212 = vunpack.c.l.b16 %v5013
  %v5213 = vunpack.c.l.b16 %v5014
  %v5214 = vunpack.c.l.b16 %v5015
  %v5215 = vunpack.c.l.b16 %v5016
  %v5216 = vunpack.c.l.b16 %v5017
  %v5217 = vunpack.c.l.b16 %v5018
  %v5218 = vunpack.c.l.b16 %v5019
  %v5219 = vunpack.c.l.b16 %v5020
  %v5220 = vunpack.c.l.b16 %v5021
  %v5221 = vunpack.c.l.b16 %v5022
  %v5222 = vunpack.c.l.b16 %v5023
  %v5223 = vunpack.c.l.b16 %v5024
  %v5224 = vunpack.c.l.b16 %v5025
  %v5225 = vunpack.c.l.b16 %v5026
  %v5226 = vunpack.c.l.b16 %v5027
  %v5227 = vunpack.c.l.b16 %v5028
  %v5228 = vunpack.c.l.b16 %v5029
  %v5229 = vunpack.c.l.b16 %v5030
  %v5230 = vunpack.c.l.b16 %v5031
  %v5231 = vunpack.c.l.b16 %v5032
  %v5232 = vunpack.c.l.b16 %v5033
  %v5233 = vunpack.c.l.b16 %v5034
  %v5234 = vunpack.c.l.b16 %v5035
  %v5235 = vunpack.c.l.b16 %v5036
  %v5236 = vunpack.c.l.b16 %v5037
  %v5237 = vunpack.c.l.b16 %v5038
  %v5238 = vunpack.c.l.b16 %v5039
  %v5239 = vunpack.c.l.b16 %v5040
  %v5240 = vunpack.c.l.b16 %v5041
  %v5241 = vunpack.c.l.b16 %v5042
  %v5242 = vunpack.c.l.b16 %v5043
  %v5243 = vunpack.c.l.b16 %v5044
  %v5244 = vunpack.c.l.b16 %v5045
  %v5245 = vunpack.c.l.b16 %v5046
  %v5246 = vunpack.c.l.b16 %v5047
  %v5247 = vunpack.c.l.b16 %v5048
  %v5248 = vunpack.c.l.b16 %v5049
  %v5249 = vunpack.c.l.b16 %v5050
  %v5250 = vunpack.c.l.b16 %v5051
  %v5251 = vunpack.c.l.b16 %v5052
  %v5252 = vunpack.c.l.b16 %v5053
  %v5253 = vunpack.c.l.b16 %v5054
  %v5254 = vunpack.c.l.b16 %v5055
  %v5255 = vunpack.c.l.b16 %v5056
  %v5256 = vunpack.c.l.b16 %v5057
  %v5257 = vunpack.c.l.b16 %v5058
  %v5258 = vunpack.c.l.b16 %v5059
  %v5259 = vpack.c.b16 %v5164, %v5163
  %v5260 = vpack.c.b16 %v5166, %v5165
  %v5261 = vpack.c.b16 %v5168, %v5167
  %v5262 = vpack.c.b16 %v5170, %v5169
  %v5263 = vpack.c.b16 %v5172, %v5171
  %v5264 = vpack.c.b16 %v5174, %v5173
  %v5265 = vpack.c.b16 %v5176, %v5175
  %v5266 = vpack.c.b16 %v5178, %v5177
  %v5267 = vpack.c.b16 %v5180, %v5179
  %v5268 = vpack.c.b16 %v5182, %v5181
  %v5269 = vpack.c.b16 %v5184, %v5183
  %v5270 = vpack.c.b16 %v5186, %v5185
  %v5271 = vpack.c.b16 %v5188, %v5187
  %v5272 = vpack.c.b16 %v5190, %v5189
  %v5273 = vpack.c.b16 %v5192, %v5191
  %v5274 = vpack.c.b16 %v5194, %v5193
  %v5275 = vpack.c.b16 %v5196, %v5195
  %v5276 = vpack.c.b16 %v5198, %v5197
  %v5277 = vpack.c.b16 %v5200, %v5199
  %v5278 = vpack.c.b16 %v5202, %v5201
  %v5279 = vpack.c.b16 %v5204, %v5203
  %v5280 = vpack.c.b16 %v5206, %v5205
  %v5281 = vpack.c.b16 %v5208, %v5207
  %v5282 = vpack.c.b16 %v5210, %v5209
  %v5283 = vpack.c.b16 %v5212, %v5211
  %v5284 = vpack.c.b16 %v5214, %v5213
  %v5285 = vpack.c.b16 %v5216, %v5215
  %v5286 = vpack.c.b16 %v5218, %v5217
  %v5287 = vpack.c.b16 %v5220, %v5219
  %v5288 = vpack.c.b16 %v5222, %v5221
  %v5289 = vpack.c.b16 %v5224, %v5223
  %v5290 = vpack.c.b16 %v5226, %v5225
  %v5291 = vpack.c.b16 %v5228, %v5227
  %v5292 = vpack.c.b16 %v5230, %v5229
  %v5293 = vpack.c.b16 %v5232, %v5231
  %v5294 = vpack.c.b16 %v5234, %v5233
  %v5295 = vpack.c.b16 %v5236, %v5235
  %v5296 = vpack.c.b16 %v5238, %v5237
  %v5297 = vpack.c.b16 %v5240, %v5239
  %v5298 = vpack.c.b16 %v5242, %v5241
  %v5299 = vpack.c.b16 %v5244, %v5243
  %v5300 = vpack.c.b16 %v5246, %v5245
  %v5301 = vpack.c.b16 %v5248, %v5247
  %v5302 = vpack.c.b16 %v5250, %v5249
  %v5303 = vpack.c.b16 %v5252, %v5251
  %v5304 = vpack.c.b16 %v5254, %v5253
  %v5305 = vpack.c.b16 %v5256, %v5255
  %v5306 = vpack.c.b16 %v5258, %v5257
  %5355 = vmatprep.subr.bf16.mxu0 0
  %5356 = vmatpush1.bf16.msra.mxu0 %v5266
  %5357 = vmatprep.subr.bf16.mxu0 0
  %5358 = vmatpush1.bf16.msra.mxu0 %v5265
  %5359 = vmatprep.subr.bf16.mxu0 0
  %5360 = vmatpush1.bf16.msra.mxu0 %v5264
  %5361 = vmatprep.subr.bf16.mxu0 0
  %5362 = vmatpush1.bf16.msra.mxu0 %v5263
  %5363 = vmatprep.subr.bf16.mxu0 0
  %5364 = vmatpush1.bf16.msra.mxu0 %v5262
  %5365 = vmatprep.subr.bf16.mxu0 0
  %5366 = vmatpush1.bf16.msra.mxu0 %v5261
  %5367 = vmatprep.subr.bf16.mxu0 0
  %5368 = vmatpush1.bf16.msra.mxu0 %v5260
  %5369 = vmatprep.subr.bf16.mxu0 0
  %5370 = vmatpush1.bf16.msra.mxu0 %v5259
  %5371 = vmatprep.subr.bf16.mxu0 0
  %5372 = vmatpush2.bf16.msra.mxu0 %v5274
  %5373 = vmatprep.subr.bf16.mxu0 0
  %5374 = vmatpush2.bf16.msra.mxu0 %v5273
  %5375 = vmatprep.subr.bf16.mxu0 0
  %5376 = vmatpush2.bf16.msra.mxu0 %v5272
  %5377 = vmatprep.subr.bf16.mxu0 0
  %5378 = vmatpush2.bf16.msra.mxu0 %v5271
  %5379 = vmatprep.subr.bf16.mxu0 0
  %5380 = vmatpush2.bf16.msra.mxu0 %v5270
  %5381 = vmatprep.subr.bf16.mxu0 0
  %5382 = vmatpush2.bf16.msra.mxu0 %v5269
  %5383 = vmatprep.subr.bf16.mxu0 0
  %5384 = vmatpush2.bf16.msra.mxu0 %v5268
  %5385 = vmatprep.subr.bf16.mxu0 0
  %5386 = vmatpush2.bf16.msra.mxu0 %v5267
  %5387 = vmatprep.mubr.bf16.mxu0 %v4959
  %5388 = vmatmul.mubr.bf16.gmra.mxu0 %v4958
  %v5389 = vpop.f32.mrf.mxu0
  %v5390 = vadd.f32 %v5065, %v5389
  %v5391 = vpop.f32.mrf.mxu0
  %v5392 = vpop.f32.mrf.mxu0
  %v5393 = vpop.f32.mrf.mxu0
  %5394 = vdwg.mxu0
  %5395 = vmatprep.subr.bf16.mxu0 0
  %5396 = vmatpush1.bf16.msra.mxu0 %v5282
  %5397 = vmatprep.subr.bf16.mxu0 0
  %5398 = vmatpush1.bf16.msra.mxu0 %v5281
  %5399 = vmatprep.subr.bf16.mxu0 0
  %5400 = vmatpush1.bf16.msra.mxu0 %v5280
  %5401 = vmatprep.subr.bf16.mxu0 0
  %5402 = vmatpush1.bf16.msra.mxu0 %v5279
  %5403 = vmatprep.subr.bf16.mxu0 0
  %5404 = vmatpush1.bf16.msra.mxu0 %v5278
  %5405 = vmatprep.subr.bf16.mxu0 0
  %5406 = vmatpush1.bf16.msra.mxu0 %v5277
  %5407 = vmatprep.subr.bf16.mxu0 0
  %5408 = vmatpush1.bf16.msra.mxu0 %v5276
  %5409 = vmatprep.subr.bf16.mxu0 0
  %5410 = vmatpush1.bf16.msra.mxu0 %v5275
  %5411 = vmatprep.subr.bf16.mxu0 0
  %5412 = vmatpush2.bf16.msra.mxu0 %v5290
  %5413 = vmatprep.subr.bf16.mxu0 0
  %5414 = vmatpush2.bf16.msra.mxu0 %v5289
  %5415 = vmatprep.subr.bf16.mxu0 0
  %5416 = vmatpush2.bf16.msra.mxu0 %v5288
  %5417 = vmatprep.subr.bf16.mxu0 0
  %5418 = vmatpush2.bf16.msra.mxu0 %v5287
  %5419 = vmatprep.subr.bf16.mxu0 0
  %5420 = vmatpush2.bf16.msra.mxu0 %v5286
  %5421 = vmatprep.subr.bf16.mxu0 0
  %5422 = vmatpush2.bf16.msra.mxu0 %v5285
  %5423 = vmatprep.subr.bf16.mxu0 0
  %5424 = vmatpush2.bf16.msra.mxu0 %v5284
  %5425 = vmatprep.subr.bf16.mxu0 0
  %5426 = vmatpush2.bf16.msra.mxu0 %v5283
  %5427 = vmatprep.mubr.bf16.mxu0 %v4961
  %5428 = vmatmul.mubr.bf16.gmra.mxu0 %v4960
  %v5429 = vpop.f32.mrf.mxu0
  %v5430 = vadd.f32 %v5390, %v5429
  %v5431 = vpop.f32.mrf.mxu0
  %v5432 = vpop.f32.mrf.mxu0
  %v5433 = vpop.f32.mrf.mxu0
  %5434 = vdwg.mxu0
  %5435 = vmatprep.subr.bf16.mxu0 0
  %5436 = vmatpush1.bf16.msra.mxu0 %v5298
  %5437 = vmatprep.subr.bf16.mxu0 0
  %5438 = vmatpush1.bf16.msra.mxu0 %v5297
  %5439 = vmatprep.subr.bf16.mxu0 0
  %5440 = vmatpush1.bf16.msra.mxu0 %v5296
  %5441 = vmatprep.subr.bf16.mxu0 0
  %5442 = vmatpush1.bf16.msra.mxu0 %v5295
  %5443 = vmatprep.subr.bf16.mxu0 0
  %5444 = vmatpush1.bf16.msra.mxu0 %v5294
  %5445 = vmatprep.subr.bf16.mxu0 0
  %5446 = vmatpush1.bf16.msra.mxu0 %v5293
  %5447 = vmatprep.subr.bf16.mxu0 0
  %5448 = vmatpush1.bf16.msra.mxu0 %v5292
  %5449 = vmatprep.subr.bf16.mxu0 0
  %5450 = vmatpush1.bf16.msra.mxu0 %v5291
  %5451 = vmatprep.subr.bf16.mxu0 0
  %5452 = vmatpush2.bf16.msra.mxu0 %v5306
  %5453 = vmatprep.subr.bf16.mxu0 0
  %5454 = vmatpush2.bf16.msra.mxu0 %v5305
  %5455 = vmatprep.subr.bf16.mxu0 0
  %5456 = vmatpush2.bf16.msra.mxu0 %v5304
  %5457 = vmatprep.subr.bf16.mxu0 0
  %5458 = vmatpush2.bf16.msra.mxu0 %v5303
  %5459 = vmatprep.subr.bf16.mxu0 0
  %5460 = vmatpush2.bf16.msra.mxu0 %v5302
  %5461 = vmatprep.subr.bf16.mxu0 0
  %5462 = vmatpush2.bf16.msra.mxu0 %v5301
  %5463 = vmatprep.subr.bf16.mxu0 0
  %5464 = vmatpush2.bf16.msra.mxu0 %v5300
  %5465 = vmatprep.subr.bf16.mxu0 0
  %5466 = vmatpush2.bf16.msra.mxu0 %v5299
  %5467 = vmatprep.mubr.bf16.mxu0 %v4963
  %5468 = vmatmul.mubr.bf16.gmra.mxu0 %v4962
  %v5469 = vpop.f32.mrf.mxu0
  %v5470 = vadd.f32 %v5430, %v5469
  %v5471 = vpop.f32.mrf.mxu0
  %v5472 = vpop.f32.mrf.mxu0
  %v5473 = vpop.f32.mrf.mxu0
  %5474 = vdwg.mxu0
  %v5475 = vmax.f32 %v5470, 0.0
  %v5476 = vpack.c.bf16 %v5475, %v5475
  %v5477 = vld [vmem:[%s20] sm:$0xf]
  %v5478 = vld [vmem:[%s20 + $0x4] sm:$0xf]
  %v5479 = vld [vmem:[%s20 + $0x8] sm:$0xf]
  %v5480 = vld [vmem:[%s20 + $0xc] sm:$0xf]
  %v5481 = vld [vmem:[%s21] sm:$0x1]
  %v5483 = vlaneseq
  %v5484 = vshrl.u32 %v5483, 7
  %v5485 = vsub.s32 0, %v5484
  %v5486 = vrot.slane %v5481, %v5485
  %v5492 = vunpack.c.l.b16 %v5477
  %v5493 = vunpack.c.l.b16 %v5478
  %v5494 = vunpack.c.l.b16 %v5479
  %v5495 = vunpack.c.l.b16 %v5480
  %v5496 = vpack.c.b16 %v5493, %v5492
  %v5497 = vpack.c.b16 %v5495, %v5494
  %v5501 = vsel %vm96, %v5476, 0
  %5503 = vmatprep.subr.bf16.mxu0 0
  %5504 = vmatpush1.bf16.msra.mxu0 0
  %5505 = vmatprep.subr.bf16.mxu0 0
  %5506 = vmatpush1.bf16.msra.mxu0 0
  %5507 = vmatprep.subr.bf16.mxu0 0
  %5508 = vmatpush1.bf16.msra.mxu0 0
  %5509 = vmatprep.subr.bf16.mxu0 0
  %5510 = vmatpush1.bf16.msra.mxu0 0
  %5511 = vmatprep.subr.bf16.mxu0 0
  %5512 = vmatpush1.bf16.msra.mxu0 0
  %5513 = vmatprep.subr.bf16.mxu0 0
  %5514 = vmatpush1.bf16.msra.mxu0 0
  %5515 = vmatprep.subr.bf16.mxu0 0
  %5516 = vmatpush1.bf16.msra.mxu0 %v5497
  %5517 = vmatprep.subr.bf16.mxu0 0
  %5518 = vmatpush1.bf16.msra.mxu0 %v5496
  %5519 = vmatprep.subr.bf16.mxu0 0
  %5520 = vmatpush2.bf16.msra.mxu0 0
  %5521 = vmatprep.subr.bf16.mxu0 0
  %5522 = vmatpush2.bf16.msra.mxu0 0
  %5523 = vmatprep.subr.bf16.mxu0 0
  %5524 = vmatpush2.bf16.msra.mxu0 0
  %5525 = vmatprep.subr.bf16.mxu0 0
  %5526 = vmatpush2.bf16.msra.mxu0 0
  %5527 = vmatprep.subr.bf16.mxu0 0
  %5528 = vmatpush2.bf16.msra.mxu0 0
  %5529 = vmatprep.subr.bf16.mxu0 0
  %5530 = vmatpush2.bf16.msra.mxu0 0
  %5531 = vmatprep.subr.bf16.mxu0 0
  %5532 = vmatpush2.bf16.msra.mxu0 0
  %5533 = vmatprep.subr.bf16.mxu0 0
  %5534 = vmatpush2.bf16.msra.mxu0 0
  %5535 = vmatprep.mubr.bf16.mxu0 0
  %5536 = vmatmul.mubr.bf16.gmra.mxu0 %v5501
  %v5537 = vpop.f32.mrf.mxu0
  %v5538 = vadd.f32 %v5486, %v5537
  %v5539 = vpop.f32.mrf.mxu0
  %v5540 = vpop.f32.mrf.mxu0
  %v5541 = vpop.f32.mrf.mxu0
  %5542 = vdwg.mxu0
  %v5543 = vxor.u32 %v5538, 2147483648
  %v5544 = vmul.f32 %v5543, 1.442695
  %v5545 = vpow.pop %v5544
  %v5546 = vadd.f32 %v5545, 1.0
  %v5547 = vrcp.pop %v5546
  %v5548 = vmul.f32 1.0, %v5547
  %v5549 = vxor.u32 %v4918, 2147483648
  %v5550 = vmul.f32 %v5549, 1.442695
  %v5551 = vpow.pop %v5550
  %v5552 = vadd.f32 %v5551, 1.0
  %v5553 = vrcp.pop %v5552
  %v5554 = vmul.f32 1.0, %v5553
  %v5555 = vadd.f32 %v5548, %v5554
  %v5556 = vmul.f32 %v4738, %v5555
  %v5557 = vpack.c.bf16 %v5556, %v5556
  %v5558 = vld [vmem:[%s24] sm:$0xf]
  %v5559 = vld [vmem:[%s24 + $0x4] sm:$0xf]
  %v5560 = vld [vmem:[%s24 + $0x8] sm:$0xf]
  %v5561 = vld [vmem:[%s24 + $0xc] sm:$0xf]
  %v5562 = vld [vmem:[%s25] sm:$0x1]
  %v5564 = vlaneseq
  %v5565 = vshrl.u32 %v5564, 7
  %v5566 = vsub.s32 0, %v5565
  %v5567 = vrot.slane %v5562, %v5566
  %v5573 = vunpack.c.l.b16 %v5558
  %v5574 = vunpack.c.l.b16 %v5559
  %v5575 = vunpack.c.l.b16 %v5560
  %v5576 = vunpack.c.l.b16 %v5561
  %v5577 = vpack.c.b16 %v5574, %v5573
  %v5578 = vpack.c.b16 %v5576, %v5575
  %v5582 = vsel %vm96, %v5557, 0
  %5584 = vmatprep.subr.bf16.mxu0 0
  %5585 = vmatpush1.bf16.msra.mxu0 0
  %5586 = vmatprep.subr.bf16.mxu0 0
  %5587 = vmatpush1.bf16.msra.mxu0 0
  %5588 = vmatprep.subr.bf16.mxu0 0
  %5589 = vmatpush1.bf16.msra.mxu0 0
  %5590 = vmatprep.subr.bf16.mxu0 0
  %5591 = vmatpush1.bf16.msra.mxu0 0
  %5592 = vmatprep.subr.bf16.mxu0 0
  %5593 = vmatpush1.bf16.msra.mxu0 0
  %5594 = vmatprep.subr.bf16.mxu0 0
  %5595 = vmatpush1.bf16.msra.mxu0 0
  %5596 = vmatprep.subr.bf16.mxu0 0
  %5597 = vmatpush1.bf16.msra.mxu0 %v5578
  %5598 = vmatprep.subr.bf16.mxu0 0
  %5599 = vmatpush1.bf16.msra.mxu0 %v5577
  %5600 = vmatprep.subr.bf16.mxu0 0
  %5601 = vmatpush2.bf16.msra.mxu0 0
  %5602 = vmatprep.subr.bf16.mxu0 0
  %5603 = vmatpush2.bf16.msra.mxu0 0
  %5604 = vmatprep.subr.bf16.mxu0 0
  %5605 = vmatpush2.bf16.msra.mxu0 0
  %5606 = vmatprep.subr.bf16.mxu0 0
  %5607 = vmatpush2.bf16.msra.mxu0 0
  %5608 = vmatprep.subr.bf16.mxu0 0
  %5609 = vmatpush2.bf16.msra.mxu0 0
  %5610 = vmatprep.subr.bf16.mxu0 0
  %5611 = vmatpush2.bf16.msra.mxu0 0
  %5612 = vmatprep.subr.bf16.mxu0 0
  %5613 = vmatpush2.bf16.msra.mxu0 0
  %5614 = vmatprep.subr.bf16.mxu0 0
  %5615 = vmatpush2.bf16.msra.mxu0 0
  %5616 = vmatprep.mubr.bf16.mxu0 0
  %5617 = vmatmul.mubr.bf16.gmra.mxu0 %v5582
  %v5618 = vpop.f32.mrf.mxu0
  %v5619 = vadd.f32 %v5567, %v5618
  %v5620 = vpop.f32.mrf.mxu0
  %v5621 = vpop.f32.mrf.mxu0
  %v5622 = vpop.f32.mrf.mxu0
  %5623 = vdwg.mxu0
  %v5624 = vmax.f32 %v5619, 0.0
  %v5626 = vrot.slane %v5624, 7
  %v5628 = vrot.slane %v5624, 6
  %v5630 = vrot.slane %v5624, 5
  %v5632 = vrot.slane %v5624, 4
  %v5634 = vrot.slane %v5624, 3
  %v5636 = vrot.slane %v5624, 2
  %vm5638 = vcmask 1040384
  %v5639 = vsel %vm5638, %v5624, %v5626
  %vm5640 = vcmask 1041408
  %v5641 = vsel %vm5640, %v5639, %v5628
  %vm5642 = vcmask 1042432
  %v5643 = vsel %vm5642, %v5641, %v5630
  %vm5644 = vcmask 1043456
  %v5645 = vsel %vm5644, %v5643, %v5630
  %vm5646 = vcmask 1044480
  %v5647 = vsel %vm5646, %v5645, %v5632
  %v5648 = vsel %vm3950, %v5647, %v5634
  %vm5649 = vcmask 1046528
  %v5650 = vsel %vm5649, %v5648, %v5636
  %v5651 = vmul.f32 %v4303, %v5650
  %v5652 = vsel %vm96, %v5651, 0.0
  %5653 = vadd.xlane.f32.xlu0 %v5652
  %v5654 = vpop.xlane.xlu0 %5653
  %v5655 = vmul.f32 %v4303, %v4303
  %v5656 = vsel %vm96, %v5655, 0.0
  %5657 = vadd.xlane.f32.xlu0 %v5656
  %v5658 = vpop.xlane.xlu0 %5657
  %v5659 = vrsqrt.pop %v5658
  %v5660 = vmul.f32 %v5658, %v5659
  %vm5661 = vcmp.eq.f32.partialorder %v5658, inf
  %v5662 = vsel %vm5661, %v5658, %v5660
  %vm5663 = vcmp.eq.f32.partialorder %v5658, 0.0
  %v5664 = vand.u32 %v5658, 2147483648
  %v5665 = vsel %vm5663, %v5664, %v5662
  %v5666 = vmul.f32 %v5650, %v5650
  %v5667 = vsel %vm96, %v5666, 0.0
  %5668 = vadd.xlane.f32.xlu0 %v5667
  %v5669 = vpop.xlane.xlu0 %5668
  %v5670 = vrsqrt.pop %v5669
  %v5671 = vmul.f32 %v5669, %v5670
  %vm5672 = vcmp.eq.f32.partialorder %v5669, inf
  %v5673 = vsel %vm5672, %v5669, %v5671
  %vm5674 = vcmp.eq.f32.partialorder %v5669, 0.0
  %v5675 = vand.u32 %v5669, 2147483648
  %v5676 = vsel %vm5674, %v5675, %v5673
  %v5677 = vmax.f32 %v5665, 1e-08
  %v5678 = vmax.f32 %v5676, 1e-08
  %v5679 = vmul.f32 %v5677, %v5678
  %v5680 = vrcp.pop %v5679
  %v5681 = vmul.f32 %v5654, %v5680
  %5682 = vst.msk [vmem:[%s26] sm:$0xff] %vm4163, %v5681
  // Predicated region
  $region106: #{net_forward.1} parent=0 // pred_check
    _
  $region107: #{net_forward.1} parent=0 // pred_check_branch
    %5684 = sbr.rel (0) target = $region109
  $region108: #{net_forward.1} parent=0 // pred_region
    _
  $region109: #{net_forward.1} parent=0 // pred_fallthru
    _
  // Predicated region
  $region110: #{net_forward.1} parent=0 // pred_check
    _
  $region111: #{net_forward.1} parent=0 // pred_check_branch
    %5686 = sbr.rel (0) target = $region113
  $region112: #{net_forward.1} parent=0 // pred_region
    _
  $region113: #{net_forward.1} parent=0 // pred_fallthru
    _

</llo_original>
